<compile_context>
chip_gen: v6e
topology: v6e:2x2x1
jax: 0.10.0
libtpu: 0.0.40
codegen_flags: <defaults>
</compile_context>

<pallas_src>
import functools

import jax
import jax.numpy as jnp
from jax import lax
from jax.experimental import pallas as pl
from jax.experimental.pallas import tpu as pltpu


def _round_up(x, m):
    return (x + m - 1) // m * m


# ---------------------------------------------------------------------------
# Fused Pallas kernel
# ---------------------------------------------------------------------------
def _fused_bottleneck_kernel(x_ref, res_ref, mask_ref, w1_ref, b1_ref,
                             w2_ref, b2_ref, w3_ref, b3_ref, o_ref, acc_ref,
                             *, Hp, Wp, D):
    """One batch element per grid step; all intermediates stay in VMEM.

    x_ref   : (1, Mext, Cio_p)  bf16, zero-padded flattened (Dp*Hp*Wp) grid
    res_ref : (1, Mv, Cio_p)    f32, pre-shifted residual (x at the centre tap)
    mask_ref: (Mext, 1)         f32, 1.0 at interior voxels, 0.0 at padding rows
    w1_ref  : (Cio_p, Cmid_p)   bf16 conv1 weight (BN1 scale folded)
    w2_ref  : (27, Cmid_p, Cmid_p) bf16 dense block-diagonal grouped conv2 weight
    w3_ref  : (Cmid_p, Cio_p)   bf16 conv3 weight (BN3 scale folded)
    o_ref   : (1, Mv, Cio_p)    f32, lane-dense output slab (cropped by wrapper)
    acc_ref : (Mv, Cmid_p)      f32 VMEM scratch accumulator
    """
    HpWp = Hp * Wp
    Mv = D * HpWp
    Lb = Mv + 2 * HpWp + 2 * Wp

    x = x_ref[0]                                               # (Mext, Cio_p) bf16

    # ---- conv1 (1x1x1, BN1 folded) + ReLU ---------------------------------
    # Padding rows of x are exactly zero, so gating only the *bias* with the
    # narrow mask column keeps h1 == 0 there (conv zero-padding semantics).
    h1 = jnp.dot(x, w1_ref[...], preferred_element_type=jnp.float32)
    h1 = jnp.maximum(h1 + b1_ref[...] * mask_ref[...], 0.0)
    h1 = h1.astype(jnp.bfloat16)                               # MXU input dtype

    # ---- conv2 (3x3x3 grouped -> dense block-diagonal, BN2 folded) + ReLU --
    # Wp is a multiple of 8, so every (kd,kh) offset below is sublane-aligned;
    # the kw = 0/1/2 shift is handled once by 3 pre-shifted base copies.
    bases = (h1, h1[1:1 + Lb, :], h1[2:2 + Lb, :])
    tap = 0
    for kd in range(3):
        for kh in range(3):
            off = kd * HpWp + kh * Wp                          # multiple of 8
            for kw in range(3):
                contrib = jnp.dot(bases[kw][off:off + Mv, :], w2_ref[tap],
                                  preferred_element_type=jnp.float32)
                if tap == 0:
                    acc_ref[...] = contrib
                else:
                    acc_ref[...] += contrib
                tap += 1
    h2 = jnp.maximum(acc_ref[...] + b2_ref[...], 0.0).astype(jnp.bfloat16)

    # ---- conv3 (1x1x1, BN3 folded) + residual + ReLU -----------------------
    y = jnp.dot(h2, w3_ref[...], preferred_element_type=jnp.float32)
    y = jnp.maximum(y + b3_ref[...] + res_ref[0], 0.0)
    o_ref[0] = y.astype(o_ref.dtype)                           # lane-dense store


# ---------------------------------------------------------------------------
# Host-side parameter helpers
# ---------------------------------------------------------------------------
def bn_fold(gamma, beta, mean, var, eps=1e-5):
    scale = gamma / jnp.sqrt(var + eps)
    return scale, beta - mean * scale


def build_dense_grouped_weight(w2, cardinality):
    """Grouped conv weight (Cout, Cin/g, 3,3,3) -> dense block-diagonal
    (27, Cin, Cout) weight, built with one einsum."""
    Cout, cin_g, a, b, c = w2.shape
    cout_g = Cout // cardinality
    w2r = w2.reshape(cardinality, cout_g, cin_g, a, b, c)       # g,o,i,a,b,c
    eye = jnp.eye(cardinality, dtype=w2.dtype)
    dense = jnp.einsum("goiabc,gG->abcGigo", w2r, eye)          # block-diag
    return dense.reshape(a * b * c, cardinality * cin_g, Cout)


# ---------------------------------------------------------------------------
# Public forward (PyTorch-style NCDHW in / out)
# ---------------------------------------------------------------------------
def resnext_bottleneck_forward(x_ncdhw, params, cardinality, eps=1e-5):
    x = jnp.transpose(x_ncdhw, (0, 2, 3, 4, 1)).astype(jnp.float32)  # NDHWC
    N, D, H, W, Cin = x.shape
    Cmid = params["w1"].shape[0]
    Cexp = params["w3"].shape[0]
    assert Cexp == Cin, "downsample=None requires inplanes == planes*expansion"

    Hp = H + 2
    Wp = _round_up(W + 2, 8)             # plane row stride -> aligned tap offsets
    Dp = D + 2
    HpWp = Hp * Wp
    Mp = Dp * HpWp                       # rows of the padded flattened grid
    Mv = D * HpWp                        # rows of the conv2/conv3 working grid
    Lb = Mv + 2 * HpWp + 2 * Wp          # rows needed by the shifted tap bases
    Mext = _round_up(Lb + 2, 16)         # total rows (extra zero rows, bf16-tile aligned)
    center = HpWp + Wp + 1               # residual = x at the centre tap offset
    Cmid_p = _round_up(max(Cmid, 128), 128)   # lane-dense mid channels
    Cio_p = _round_up(max(Cin, 128), 128)     # lane-dense in/out channels

    s1, b1 = bn_fold(params["g1"], params["be1"], params["m1"], params["v1"], eps)
    s2, b2 = bn_fold(params["g2"], params["be2"], params["m2"], params["v2"], eps)
    s3, b3 = bn_fold(params["g3"], params["be3"], params["m3"], params["v3"], eps)

    # Fold BN scales into the (bias-free) conv weights; pad channels; bf16 MXU inputs.
    w1 = params["w1"].reshape(Cmid, Cin).T * s1[None, :]                 # (Cin, Cmid)
    w1p = jnp.zeros((Cio_p, Cmid_p), jnp.float32).at[:Cin, :Cmid].set(w1)
    w1p = w1p.astype(jnp.bfloat16)
    b1p = jnp.zeros((1, Cmid_p), jnp.float32).at[0, :Cmid].set(b1)

    w2d = build_dense_grouped_weight(params["w2"], cardinality) * s2[None, None, :]
    w2p = jnp.zeros((27, Cmid_p, Cmid_p), jnp.float32).at[:, :Cmid, :Cmid].set(w2d)
    w2p = w2p.astype(jnp.bfloat16)
    b2p = jnp.zeros((1, Cmid_p), jnp.float32).at[0, :Cmid].set(b2)

    w3 = params["w3"].reshape(Cexp, Cmid).T * s3[None, :]                # (Cmid, Cexp)
    w3p = jnp.zeros((Cmid_p, Cio_p), jnp.float32).at[:Cmid, :Cexp].set(w3)
    w3p = w3p.astype(jnp.bfloat16)
    b3p = jnp.zeros((1, Cio_p), jnp.float32).at[0, :Cexp].set(b3)

    # Zero-padded, flattened spatial grid (channel- and row-padded), the
    # pre-shifted f32 residual and the narrow interior-mask column.
    xp = jnp.pad(x, ((0, 0), (1, 1), (1, 1), (1, Wp - W - 1), (0, Cio_p - Cin)))
    xf = jnp.pad(xp.reshape(N, Mp, Cio_p), ((0, 0), (0, Mext - Mp), (0, 0)))
    res = xf[:, center:center + Mv, :]                                   # f32
    xb = xf.astype(jnp.bfloat16)

    m = jnp.pad(jnp.ones((D, H, W), jnp.float32), ((1, 1), (1, 1), (1, Wp - W - 1)))
    mask = jnp.pad(m.reshape(Mp), (0, Mext - Mp)).reshape(Mext, 1)

    flops = 2 * N * (Mext * Cio_p * Cmid_p
                     + 27 * Mv * Cmid_p * Cmid_p
                     + Mv * Cmid_p * Cio_p)
    bytes_accessed = (N * Mext * Cio_p * 2          # xb (bf16)
                      + N * Mv * Cio_p * 4          # res (f32)
                      + Mext * 4                    # mask
                      + (Cio_p * Cmid_p + 27 * Cmid_p * Cmid_p + Cmid_p * Cio_p) * 2
                      + (2 * Cmid_p + Cio_p) * 4    # biases
                      + N * Mv * Cio_p * 4)         # output

    kernel = functools.partial(_fused_bottleneck_kernel, Hp=Hp, Wp=Wp, D=D)
    out3 = pl.pallas_call(
        kernel,
        out_shape=jax.ShapeDtypeStruct((N, Mv, Cio_p), jnp.float32),
        grid=(N,),
        in_specs=[
            pl.BlockSpec((1, Mext, Cio_p), lambda n: (n, 0, 0)),   # x (bf16)
            pl.BlockSpec((1, Mv, Cio_p), lambda n: (n, 0, 0)),     # residual (f32)
            pl.BlockSpec((Mext, 1), lambda n: (0, 0)),             # interior mask col
            pl.BlockSpec((Cio_p, Cmid_p), lambda n: (0, 0)),       # w1
            pl.BlockSpec((1, Cmid_p), lambda n: (0, 0)),           # b1
            pl.BlockSpec((27, Cmid_p, Cmid_p), lambda n: (0, 0, 0)),  # w2
            pl.BlockSpec((1, Cmid_p), lambda n: (0, 0)),           # b2
            pl.BlockSpec((Cmid_p, Cio_p), lambda n: (0, 0)),       # w3
            pl.BlockSpec((1, Cio_p), lambda n: (0, 0)),            # b3
        ],
        out_specs=pl.BlockSpec((1, Mv, Cio_p), lambda n: (n, 0, 0)),
        scratch_shapes=[pltpu.VMEM((Mv, Cmid_p), jnp.float32)],
        compiler_params=pltpu.CompilerParams(
            dimension_semantics=("parallel",),
            vmem_limit_bytes=48 * 1024 * 1024),
        cost_estimate=pl.CostEstimate(flops=flops, transcendentals=0,
                                      bytes_accessed=bytes_accessed),
    )(xb, res, mask, w1p, b1p, w2p, b2p, w3p, b3p)

    # Crop the padded rows/channels and return NCDHW (layout work outside the kernel).
    out = out3.reshape(N, D, Hp, Wp, Cio_p)[:, :, :H, :W, :Cexp]
    return jnp.transpose(out, (0, 4, 1, 2, 3))


# ---------------------------------------------------------------------------
# Pure-JAX reference (for verification)
# ---------------------------------------------------------------------------
def reference_forward(x_ncdhw, p, cardinality, eps=1e-5):
    x = jnp.transpose(x_ncdhw, (0, 2, 3, 4, 1)).astype(jnp.float32)

    def bn(y, g, be, m, v):
        return g * (y - m) / jnp.sqrt(v + eps) + be

    Cmid = p["w1"].shape[0]
    Cexp = p["w3"].shape[0]
    out = jnp.einsum("ndhwc,oc->ndhwo", x, p["w1"].reshape(Cmid, -1))
    out = jax.nn.relu(bn(out, p["g1"], p["be1"], p["m1"], p["v1"]))
    w2 = jnp.transpose(p["w2"], (2, 3, 4, 1, 0))  # DHWIO
    out = lax.conv_general_dilated(
        out, w2, window_strides=(1, 1, 1),
        padding=((1, 1), (1, 1), (1, 1)),
        dimension_numbers=("NDHWC", "DHWIO", "NDHWC"),
        feature_group_count=cardinality)
    out = jax.nn.relu(bn(out, p["g2"], p["be2"], p["m2"], p["v2"]))
    out = jnp.einsum("ndhwc,oc->ndhwo", out, p["w3"].reshape(Cexp, -1))
    out = bn(out, p["g3"], p["be3"], p["m3"], p["v3"])
    out = jax.nn.relu(out + x)
    return jnp.transpose(out, (0, 4, 1, 2, 3))


# ---------------------------------------------------------------------------
# Main
# ---------------------------------------------------------------------------
if __name__ == "__main__":
    # inplanes == planes * expansion so downsample=None is valid.
    inplanes, planes, cardinality, expansion = 64, 32, 4, 2
    mid = cardinality * (planes // 32)          # 4
    cexp = planes * expansion                   # 64
    N, D, H, W = 2, 4, 4, 4

    key = jax.random.PRNGKey(0)
    ks = jax.random.split(key, 16)

    params = {
        # conv weights (PyTorch shapes)
        "w1": 0.1 * jax.random.normal(ks[0], (mid, inplanes, 1, 1, 1), jnp.float32),
        "w2": 0.1 * jax.random.normal(ks[1], (mid, mid // cardinality, 3, 3, 3), jnp.float32),
        "w3": 0.1 * jax.random.normal(ks[2], (cexp, mid, 1, 1, 1), jnp.float32),
        # BN params (gamma, beta, running_mean, running_var)
        "g1": jax.random.uniform(ks[3], (mid,), jnp.float32, 0.5, 1.5),
        "be1": 0.1 * jax.random.normal(ks[4], (mid,), jnp.float32),
        "m1": 0.1 * jax.random.normal(ks[5], (mid,), jnp.float32),
        "v1": jax.random.uniform(ks[6], (mid,), jnp.float32, 0.5, 1.5),
        "g2": jax.random.uniform(ks[7], (mid,), jnp.float32, 0.5, 1.5),
        "be2": 0.1 * jax.random.normal(ks[8], (mid,), jnp.float32),
        "m2": 0.1 * jax.random.normal(ks[9], (mid,), jnp.float32),
        "v2": jax.random.uniform(ks[10], (mid,), jnp.float32, 0.5, 1.5),
        "g3": jax.random.uniform(ks[11], (cexp,), jnp.float32, 0.5, 1.5),
        "be3": 0.1 * jax.random.normal(ks[12], (cexp,), jnp.float32),
        "m3": 0.1 * jax.random.normal(ks[13], (cexp,), jnp.float32),
        "v3": jax.random.uniform(ks[14], (cexp,), jnp.float32, 0.5, 1.5),
    }

    x = jax.random.normal(ks[15], (N, inplanes, D, H, W), jnp.float32)

    out = resnext_bottleneck_forward(x, params, cardinality)
    out = jax.block_until_ready(out)

    ref = jax.block_until_ready(reference_forward(x, params, cardinality))
    err = float(jnp.max(jnp.abs(out - ref)))
    assert out.shape == (N, cexp, D, H, W), out.shape
    # bf16 MXU inputs with f32 accumulation: expect ~1e-2 relative error
    # (per perf review); reference is exact f32.
    assert err < 1e-1, f"max abs error {err}"

    print("KERNEL_OK")
</pallas_src>

<mosaic_0001>
module attributes {stable_mosaic.version = 11 : i64} {
  func.func @_fused_bottleneck_kernel(%arg0: i32, %arg1: memref<1x320x128xbf16, #tpu.memory_space<vmem>>, %arg2: memref<1x192x128xf32, #tpu.memory_space<vmem>>, %arg3: memref<320x1xf32, #tpu.memory_space<vmem>>, %arg4: memref<128x128xbf16, #tpu.memory_space<vmem>>, %arg5: memref<1x128xf32, #tpu.memory_space<vmem>>, %arg6: memref<27x128x128xbf16, #tpu.memory_space<vmem>>, %arg7: memref<1x128xf32, #tpu.memory_space<vmem>>, %arg8: memref<128x128xbf16, #tpu.memory_space<vmem>>, %arg9: memref<1x128xf32, #tpu.memory_space<vmem>>, %arg10: memref<1x192x128xf32, #tpu.memory_space<vmem>>, %arg11: memref<192x128xf32, #tpu.memory_space<vmem>>) attributes {dimension_semantics = [#tpu.dimension_semantics<parallel>], iteration_bounds = array<i64: 2>, scalar_prefetch = 0 : i64, scratch_operands = 1 : i64, tpu.core_type = #tpu.core_type<tc>, window_params = [{transform_indices = @transform_0, window_bounds = array<i64: 1, 320, 128>}, {transform_indices = @transform_1, window_bounds = array<i64: 1, 192, 128>}, {pipeline_mode = #tpu.pipeline_mode<synchronous>, transform_indices = @transform_2, window_bounds = array<i64: 320, 1>}, {pipeline_mode = #tpu.pipeline_mode<synchronous>, transform_indices = @transform_3, window_bounds = array<i64: 128, 128>}, {pipeline_mode = #tpu.pipeline_mode<synchronous>, transform_indices = @transform_4, window_bounds = array<i64: 1, 128>}, {pipeline_mode = #tpu.pipeline_mode<synchronous>, transform_indices = @transform_5, window_bounds = array<i64: 27, 128, 128>}, {pipeline_mode = #tpu.pipeline_mode<synchronous>, transform_indices = @transform_6, window_bounds = array<i64: 1, 128>}, {pipeline_mode = #tpu.pipeline_mode<synchronous>, transform_indices = @transform_7, window_bounds = array<i64: 128, 128>}, {pipeline_mode = #tpu.pipeline_mode<synchronous>, transform_indices = @transform_8, window_bounds = array<i64: 1, 128>}, {transform_indices = @transform_9, window_bounds = array<i64: 1, 192, 128>}]} {
    %c0 = arith.constant 0 : index
    %c0_0 = arith.constant 0 : index
    %c0_1 = arith.constant 0 : index
    %0 = vector.load %arg1[%c0, %c0_0, %c0_1] : memref<1x320x128xbf16, #tpu.memory_space<vmem>>, vector<1x320x128xbf16>
    %1 = vector.shape_cast %0 : vector<1x320x128xbf16> to vector<320x128xbf16>
    %c0_2 = arith.constant 0 : index
    %c0_3 = arith.constant 0 : index
    %2 = vector.load %arg4[%c0_2, %c0_3] : memref<128x128xbf16, #tpu.memory_space<vmem>>, vector<128x128xbf16>
    %cst = arith.constant dense<0.000000e+00> : vector<320x128xf32>
    %3 = tpu.matmul %1, %2, %cst {dimension_numbers = #tpu.dot_dimension_numbers<[1], [0], [0], [1], [0, 0, 1, 1], [], []>} : vector<320x128xbf16>, vector<128x128xbf16>, vector<320x128xf32> -> vector<320x128xf32>
    %c0_4 = arith.constant 0 : index
    %c0_5 = arith.constant 0 : index
    %4 = vector.load %arg5[%c0_4, %c0_5] : memref<1x128xf32, #tpu.memory_space<vmem>>, vector<1x128xf32>
    %c0_6 = arith.constant 0 : index
    %c0_7 = arith.constant 0 : index
    %5 = vector.load %arg3[%c0_6, %c0_7] : memref<320x1xf32, #tpu.memory_space<vmem>>, vector<320x1xf32>
    %6 = vector.broadcast %4 : vector<1x128xf32> to vector<320x128xf32>
    %7 = vector.broadcast %5 : vector<320x1xf32> to vector<320x128xf32>
    %8 = arith.mulf %6, %7 : vector<320x128xf32>
    %9 = arith.addf %3, %8 : vector<320x128xf32>
    %cst_8 = arith.constant 0.000000e+00 : f32
    %10 = vector.broadcast %cst_8 : f32 to vector<320x128xf32>
    %11 = arith.maximumf %9, %10 : vector<320x128xf32>
    %12 = arith.truncf %11 : vector<320x128xf32> to vector<320x128xbf16>
    %13 = vector.extract_strided_slice %12 {offsets = [1, 0], sizes = [304, 128], strides = [1, 1]} : vector<320x128xbf16> to vector<304x128xbf16>
    %14 = vector.extract_strided_slice %12 {offsets = [2, 0], sizes = [304, 128], strides = [1, 1]} : vector<320x128xbf16> to vector<304x128xbf16>
    %15 = vector.extract_strided_slice %12 {offsets = [0, 0], sizes = [192, 128], strides = [1, 1]} : vector<320x128xbf16> to vector<192x128xbf16>
    %c0_9 = arith.constant 0 : index
    %c0_10 = arith.constant 0 : index
    %c0_11 = arith.constant 0 : index
    %16 = vector.load %arg6[%c0_9, %c0_10, %c0_11] : memref<27x128x128xbf16, #tpu.memory_space<vmem>>, vector<1x128x128xbf16>
    %17 = vector.shape_cast %16 : vector<1x128x128xbf16> to vector<128x128xbf16>
    %cst_12 = arith.constant dense<0.000000e+00> : vector<192x128xf32>
    %18 = tpu.matmul %15, %17, %cst_12 {dimension_numbers = #tpu.dot_dimension_numbers<[1], [0], [0], [1], [0, 0, 1, 1], [], []>} : vector<192x128xbf16>, vector<128x128xbf16>, vector<192x128xf32> -> vector<192x128xf32>
    %c0_13 = arith.constant 0 : index
    %c0_14 = arith.constant 0 : index
    %19 = vector.load %arg11[%c0_13, %c0_14] : memref<192x128xf32, #tpu.memory_space<vmem>>, vector<192x128xf32>
    tpu.vector_store %arg11[%c0_13, %c0_14], %18 {strides = array<i32>} : memref<192x128xf32, #tpu.memory_space<vmem>>, vector<192x128xf32>,
    %20 = vector.extract_strided_slice %13 {offsets = [0, 0], sizes = [192, 128], strides = [1, 1]} : vector<304x128xbf16> to vector<192x128xbf16>
    %c1 = arith.constant 1 : index
    %c0_15 = arith.constant 0 : index
    %c0_16 = arith.constant 0 : index
    %21 = vector.load %arg6[%c1, %c0_15, %c0_16] : memref<27x128x128xbf16, #tpu.memory_space<vmem>>, vector<1x128x128xbf16>
    %22 = vector.shape_cast %21 : vector<1x128x128xbf16> to vector<128x128xbf16>
    %cst_17 = arith.constant dense<0.000000e+00> : vector<192x128xf32>
    %23 = tpu.matmul %20, %22, %cst_17 {dimension_numbers = #tpu.dot_dimension_numbers<[1], [0], [0], [1], [0, 0, 1, 1], [], []>} : vector<192x128xbf16>, vector<128x128xbf16>, vector<192x128xf32> -> vector<192x128xf32>
    %c0_18 = arith.constant 0 : index
    %c0_19 = arith.constant 0 : index
    %24 = vector.load %arg11[%c0_18, %c0_19] : memref<192x128xf32, #tpu.memory_space<vmem>>, vector<192x128xf32>
    %25 = arith.addf %24, %23 : vector<192x128xf32>
    %c0_20 = arith.constant 0 : index
    %c0_21 = arith.constant 0 : index
    %26 = vector.load %arg11[%c0_20, %c0_21] : memref<192x128xf32, #tpu.memory_space<vmem>>, vector<192x128xf32>
    tpu.vector_store %arg11[%c0_20, %c0_21], %25 {strides = array<i32>} : memref<192x128xf32, #tpu.memory_space<vmem>>, vector<192x128xf32>,
    %27 = vector.extract_strided_slice %14 {offsets = [0, 0], sizes = [192, 128], strides = [1, 1]} : vector<304x128xbf16> to vector<192x128xbf16>
    %c2 = arith.constant 2 : index
    %c0_22 = arith.constant 0 : index
    %c0_23 = arith.constant 0 : index
    %28 = vector.load %arg6[%c2, %c0_22, %c0_23] : memref<27x128x128xbf16, #tpu.memory_space<vmem>>, vector<1x128x128xbf16>
    %29 = vector.shape_cast %28 : vector<1x128x128xbf16> to vector<128x128xbf16>
    %cst_24 = arith.constant dense<0.000000e+00> : vector<192x128xf32>
    %30 = tpu.matmul %27, %29, %cst_24 {dimension_numbers = #tpu.dot_dimension_numbers<[1], [0], [0], [1], [0, 0, 1, 1], [], []>} : vector<192x128xbf16>, vector<128x128xbf16>, vector<192x128xf32> -> vector<192x128xf32>
    %c0_25 = arith.constant 0 : index
    %c0_26 = arith.constant 0 : index
    %31 = vector.load %arg11[%c0_25, %c0_26] : memref<192x128xf32, #tpu.memory_space<vmem>>, vector<192x128xf32>
    %32 = arith.addf %31, %30 : vector<192x128xf32>
    %c0_27 = arith.constant 0 : index
    %c0_28 = arith.constant 0 : index
    %33 = vector.load %arg11[%c0_27, %c0_28] : memref<192x128xf32, #tpu.memory_space<vmem>>, vector<192x128xf32>
    tpu.vector_store %arg11[%c0_27, %c0_28], %32 {strides = array<i32>} : memref<192x128xf32, #tpu.memory_space<vmem>>, vector<192x128xf32>,
    %34 = vector.extract_strided_slice %12 {offsets = [8, 0], sizes = [192, 128], strides = [1, 1]} : vector<320x128xbf16> to vector<192x128xbf16>
    %c3 = arith.constant 3 : index
    %c0_29 = arith.constant 0 : index
    %c0_30 = arith.constant 0 : index
    %35 = vector.load %arg6[%c3, %c0_29, %c0_30] : memref<27x128x128xbf16, #tpu.memory_space<vmem>>, vector<1x128x128xbf16>
    %36 = vector.shape_cast %35 : vector<1x128x128xbf16> to vector<128x128xbf16>
    %cst_31 = arith.constant dense<0.000000e+00> : vector<192x128xf32>
    %37 = tpu.matmul %34, %36, %cst_31 {dimension_numbers = #tpu.dot_dimension_numbers<[1], [0], [0], [1], [0, 0, 1, 1], [], []>} : vector<192x128xbf16>, vector<128x128xbf16>, vector<192x128xf32> -> vector<192x128xf32>
    %c0_32 = arith.constant 0 : index
    %c0_33 = arith.constant 0 : index
    %38 = vector.load %arg11[%c0_32, %c0_33] : memref<192x128xf32, #tpu.memory_space<vmem>>, vector<192x128xf32>
    %39 = arith.addf %38, %37 : vector<192x128xf32>
    %c0_34 = arith.constant 0 : index
    %c0_35 = arith.constant 0 : index
    %40 = vector.load %arg11[%c0_34, %c0_35] : memref<192x128xf32, #tpu.memory_space<vmem>>, vector<192x128xf32>
    tpu.vector_store %arg11[%c0_34, %c0_35], %39 {strides = array<i32>} : memref<192x128xf32, #tpu.memory_space<vmem>>, vector<192x128xf32>,
    %41 = vector.extract_strided_slice %13 {offsets = [8, 0], sizes = [192, 128], strides = [1, 1]} : vector<304x128xbf16> to vector<192x128xbf16>
    %c4 = arith.constant 4 : index
    %c0_36 = arith.constant 0 : index
    %c0_37 = arith.constant 0 : index
    %42 = vector.load %arg6[%c4, %c0_36, %c0_37] : memref<27x128x128xbf16, #tpu.memory_space<vmem>>, vector<1x128x128xbf16>
    %43 = vector.shape_cast %42 : vector<1x128x128xbf16> to vector<128x128xbf16>
    %cst_38 = arith.constant dense<0.000000e+00> : vector<192x128xf32>
    %44 = tpu.matmul %41, %43, %cst_38 {dimension_numbers = #tpu.dot_dimension_numbers<[1], [0], [0], [1], [0, 0, 1, 1], [], []>} : vector<192x128xbf16>, vector<128x128xbf16>, vector<192x128xf32> -> vector<192x128xf32>
    %c0_39 = arith.constant 0 : index
    %c0_40 = arith.constant 0 : index
    %45 = vector.load %arg11[%c0_39, %c0_40] : memref<192x128xf32, #tpu.memory_space<vmem>>, vector<192x128xf32>
    %46 = arith.addf %45, %44 : vector<192x128xf32>
    %c0_41 = arith.constant 0 : index
    %c0_42 = arith.constant 0 : index
    %47 = vector.load %arg11[%c0_41, %c0_42] : memref<192x128xf32, #tpu.memory_space<vmem>>, vector<192x128xf32>
    tpu.vector_store %arg11[%c0_41, %c0_42], %46 {strides = array<i32>} : memref<192x128xf32, #tpu.memory_space<vmem>>, vector<192x128xf32>,
    %48 = vector.extract_strided_slice %14 {offsets = [8, 0], sizes = [192, 128], strides = [1, 1]} : vector<304x128xbf16> to vector<192x128xbf16>
    %c5 = arith.constant 5 : index
    %c0_43 = arith.constant 0 : index
    %c0_44 = arith.constant 0 : index
    %49 = vector.load %arg6[%c5, %c0_43, %c0_44] : memref<27x128x128xbf16, #tpu.memory_space<vmem>>, vector<1x128x128xbf16>
    %50 = vector.shape_cast %49 : vector<1x128x128xbf16> to vector<128x128xbf16>
    %cst_45 = arith.constant dense<0.000000e+00> : vector<192x128xf32>
    %51 = tpu.matmul %48, %50, %cst_45 {dimension_numbers = #tpu.dot_dimension_numbers<[1], [0], [0], [1], [0, 0, 1, 1], [], []>} : vector<192x128xbf16>, vector<128x128xbf16>, vector<192x128xf32> -> vector<192x128xf32>
    %c0_46 = arith.constant 0 : index
    %c0_47 = arith.constant 0 : index
    %52 = vector.load %arg11[%c0_46, %c0_47] : memref<192x128xf32, #tpu.memory_space<vmem>>, vector<192x128xf32>
    %53 = arith.addf %52, %51 : vector<192x128xf32>
    %c0_48 = arith.constant 0 : index
    %c0_49 = arith.constant 0 : index
    %54 = vector.load %arg11[%c0_48, %c0_49] : memref<192x128xf32, #tpu.memory_space<vmem>>, vector<192x128xf32>
    tpu.vector_store %arg11[%c0_48, %c0_49], %53 {strides = array<i32>} : memref<192x128xf32, #tpu.memory_space<vmem>>, vector<192x128xf32>,
    %55 = vector.extract_strided_slice %12 {offsets = [16, 0], sizes = [192, 128], strides = [1, 1]} : vector<320x128xbf16> to vector<192x128xbf16>
    %c6 = arith.constant 6 : index
    %c0_50 = arith.constant 0 : index
    %c0_51 = arith.constant 0 : index
    %56 = vector.load %arg6[%c6, %c0_50, %c0_51] : memref<27x128x128xbf16, #tpu.memory_space<vmem>>, vector<1x128x128xbf16>
    %57 = vector.shape_cast %56 : vector<1x128x128xbf16> to vector<128x128xbf16>
    %cst_52 = arith.constant dense<0.000000e+00> : vector<192x128xf32>
    %58 = tpu.matmul %55, %57, %cst_52 {dimension_numbers = #tpu.dot_dimension_numbers<[1], [0], [0], [1], [0, 0, 1, 1], [], []>} : vector<192x128xbf16>, vector<128x128xbf16>, vector<192x128xf32> -> vector<192x128xf32>
    %c0_53 = arith.constant 0 : index
    %c0_54 = arith.constant 0 : index
    %59 = vector.load %arg11[%c0_53, %c0_54] : memref<192x128xf32, #tpu.memory_space<vmem>>, vector<192x128xf32>
    %60 = arith.addf %59, %58 : vector<192x128xf32>
    %c0_55 = arith.constant 0 : index
    %c0_56 = arith.constant 0 : index
    %61 = vector.load %arg11[%c0_55, %c0_56] : memref<192x128xf32, #tpu.memory_space<vmem>>, vector<192x128xf32>
    tpu.vector_store %arg11[%c0_55, %c0_56], %60 {strides = array<i32>} : memref<192x128xf32, #tpu.memory_space<vmem>>, vector<192x128xf32>,
    %62 = vector.extract_strided_slice %13 {offsets = [16, 0], sizes = [192, 128], strides = [1, 1]} : vector<304x128xbf16> to vector<192x128xbf16>
    %c7 = arith.constant 7 : index
    %c0_57 = arith.constant 0 : index
    %c0_58 = arith.constant 0 : index
    %63 = vector.load %arg6[%c7, %c0_57, %c0_58] : memref<27x128x128xbf16, #tpu.memory_space<vmem>>, vector<1x128x128xbf16>
    %64 = vector.shape_cast %63 : vector<1x128x128xbf16> to vector<128x128xbf16>
    %cst_59 = arith.constant dense<0.000000e+00> : vector<192x128xf32>
    %65 = tpu.matmul %62, %64, %cst_59 {dimension_numbers = #tpu.dot_dimension_numbers<[1], [0], [0], [1], [0, 0, 1, 1], [], []>} : vector<192x128xbf16>, vector<128x128xbf16>, vector<192x128xf32> -> vector<192x128xf32>
    %c0_60 = arith.constant 0 : index
    %c0_61 = arith.constant 0 : index
    %66 = vector.load %arg11[%c0_60, %c0_61] : memref<192x128xf32, #tpu.memory_space<vmem>>, vector<192x128xf32>
    %67 = arith.addf %66, %65 : vector<192x128xf32>
    %c0_62 = arith.constant 0 : index
    %c0_63 = arith.constant 0 : index
    %68 = vector.load %arg11[%c0_62, %c0_63] : memref<192x128xf32, #tpu.memory_space<vmem>>, vector<192x128xf32>
    tpu.vector_store %arg11[%c0_62, %c0_63], %67 {strides = array<i32>} : memref<192x128xf32, #tpu.memory_space<vmem>>, vector<192x128xf32>,
    %69 = vector.extract_strided_slice %14 {offsets = [16, 0], sizes = [192, 128], strides = [1, 1]} : vector<304x128xbf16> to vector<192x128xbf16>
    %c8 = arith.constant 8 : index
    %c0_64 = arith.constant 0 : index
    %c0_65 = arith.constant 0 : index
    %70 = vector.load %arg6[%c8, %c0_64, %c0_65] : memref<27x128x128xbf16, #tpu.memory_space<vmem>>, vector<1x128x128xbf16>
    %71 = vector.shape_cast %70 : vector<1x128x128xbf16> to vector<128x128xbf16>
    %cst_66 = arith.constant dense<0.000000e+00> : vector<192x128xf32>
    %72 = tpu.matmul %69, %71, %cst_66 {dimension_numbers = #tpu.dot_dimension_numbers<[1], [0], [0], [1], [0, 0, 1, 1], [], []>} : vector<192x128xbf16>, vector<128x128xbf16>, vector<192x128xf32> -> vector<192x128xf32>
    %c0_67 = arith.constant 0 : index
    %c0_68 = arith.constant 0 : index
    %73 = vector.load %arg11[%c0_67, %c0_68] : memref<192x128xf32, #tpu.memory_space<vmem>>, vector<192x128xf32>
    %74 = arith.addf %73, %72 : vector<192x128xf32>
    %c0_69 = arith.constant 0 : index
    %c0_70 = arith.constant 0 : index
    %75 = vector.load %arg11[%c0_69, %c0_70] : memref<192x128xf32, #tpu.memory_space<vmem>>, vector<192x128xf32>
    tpu.vector_store %arg11[%c0_69, %c0_70], %74 {strides = array<i32>} : memref<192x128xf32, #tpu.memory_space<vmem>>, vector<192x128xf32>,
    %76 = vector.extract_strided_slice %12 {offsets = [48, 0], sizes = [192, 128], strides = [1, 1]} : vector<320x128xbf16> to vector<192x128xbf16>
    %c9 = arith.constant 9 : index
    %c0_71 = arith.constant 0 : index
    %c0_72 = arith.constant 0 : index
    %77 = vector.load %arg6[%c9, %c0_71, %c0_72] : memref<27x128x128xbf16, #tpu.memory_space<vmem>>, vector<1x128x128xbf16>
    %78 = vector.shape_cast %77 : vector<1x128x128xbf16> to vector<128x128xbf16>
    %cst_73 = arith.constant dense<0.000000e+00> : vector<192x128xf32>
    %79 = tpu.matmul %76, %78, %cst_73 {dimension_numbers = #tpu.dot_dimension_numbers<[1], [0], [0], [1], [0, 0, 1, 1], [], []>} : vector<192x128xbf16>, vector<128x128xbf16>, vector<192x128xf32> -> vector<192x128xf32>
    %c0_74 = arith.constant 0 : index
    %c0_75 = arith.constant 0 : index
    %80 = vector.load %arg11[%c0_74, %c0_75] : memref<192x128xf32, #tpu.memory_space<vmem>>, vector<192x128xf32>
    %81 = arith.addf %80, %79 : vector<192x128xf32>
    %c0_76 = arith.constant 0 : index
    %c0_77 = arith.constant 0 : index
    %82 = vector.load %arg11[%c0_76, %c0_77] : memref<192x128xf32, #tpu.memory_space<vmem>>, vector<192x128xf32>
    tpu.vector_store %arg11[%c0_76, %c0_77], %81 {strides = array<i32>} : memref<192x128xf32, #tpu.memory_space<vmem>>, vector<192x128xf32>,
    %83 = vector.extract_strided_slice %13 {offsets = [48, 0], sizes = [192, 128], strides = [1, 1]} : vector<304x128xbf16> to vector<192x128xbf16>
    %c10 = arith.constant 10 : index
    %c0_78 = arith.constant 0 : index
    %c0_79 = arith.constant 0 : index
    %84 = vector.load %arg6[%c10, %c0_78, %c0_79] : memref<27x128x128xbf16, #tpu.memory_space<vmem>>, vector<1x128x128xbf16>
    %85 = vector.shape_cast %84 : vector<1x128x128xbf16> to vector<128x128xbf16>
    %cst_80 = arith.constant dense<0.000000e+00> : vector<192x128xf32>
    %86 = tpu.matmul %83, %85, %cst_80 {dimension_numbers = #tpu.dot_dimension_numbers<[1], [0], [0], [1], [0, 0, 1, 1], [], []>} : vector<192x128xbf16>, vector<128x128xbf16>, vector<192x128xf32> -> vector<192x128xf32>
    %c0_81 = arith.constant 0 : index
    %c0_82 = arith.constant 0 : index
    %87 = vector.load %arg11[%c0_81, %c0_82] : memref<192x128xf32, #tpu.memory_space<vmem>>, vector<192x128xf32>
    %88 = arith.addf %87, %86 : vector<192x128xf32>
    %c0_83 = arith.constant 0 : index
    %c0_84 = arith.constant 0 : index
    %89 = vector.load %arg11[%c0_83, %c0_84] : memref<192x128xf32, #tpu.memory_space<vmem>>, vector<192x128xf32>
    tpu.vector_store %arg11[%c0_83, %c0_84], %88 {strides = array<i32>} : memref<192x128xf32, #tpu.memory_space<vmem>>, vector<192x128xf32>,
    %90 = vector.extract_strided_slice %14 {offsets = [48, 0], sizes = [192, 128], strides = [1, 1]} : vector<304x128xbf16> to vector<192x128xbf16>
    %c11 = arith.constant 11 : index
    %c0_85 = arith.constant 0 : index
    %c0_86 = arith.constant 0 : index
    %91 = vector.load %arg6[%c11, %c0_85, %c0_86] : memref<27x128x128xbf16, #tpu.memory_space<vmem>>, vector<1x128x128xbf16>
    %92 = vector.shape_cast %91 : vector<1x128x128xbf16> to vector<128x128xbf16>
    %cst_87 = arith.constant dense<0.000000e+00> : vector<192x128xf32>
    %93 = tpu.matmul %90, %92, %cst_87 {dimension_numbers = #tpu.dot_dimension_numbers<[1], [0], [0], [1], [0, 0, 1, 1], [], []>} : vector<192x128xbf16>, vector<128x128xbf16>, vector<192x128xf32> -> vector<192x128xf32>
    %c0_88 = arith.constant 0 : index
    %c0_89 = arith.constant 0 : index
    %94 = vector.load %arg11[%c0_88, %c0_89] : memref<192x128xf32, #tpu.memory_space<vmem>>, vector<192x128xf32>
    %95 = arith.addf %94, %93 : vector<192x128xf32>
    %c0_90 = arith.constant 0 : index
    %c0_91 = arith.constant 0 : index
    %96 = vector.load %arg11[%c0_90, %c0_91] : memref<192x128xf32, #tpu.memory_space<vmem>>, vector<192x128xf32>
    tpu.vector_store %arg11[%c0_90, %c0_91], %95 {strides = array<i32>} : memref<192x128xf32, #tpu.memory_space<vmem>>, vector<192x128xf32>,
    %97 = vector.extract_strided_slice %12 {offsets = [56, 0], sizes = [192, 128], strides = [1, 1]} : vector<320x128xbf16> to vector<192x128xbf16>
    %c12 = arith.constant 12 : index
    %c0_92 = arith.constant 0 : index
    %c0_93 = arith.constant 0 : index
    %98 = vector.load %arg6[%c12, %c0_92, %c0_93] : memref<27x128x128xbf16, #tpu.memory_space<vmem>>, vector<1x128x128xbf16>
    %99 = vector.shape_cast %98 : vector<1x128x128xbf16> to vector<128x128xbf16>
    %cst_94 = arith.constant dense<0.000000e+00> : vector<192x128xf32>
    %100 = tpu.matmul %97, %99, %cst_94 {dimension_numbers = #tpu.dot_dimension_numbers<[1], [0], [0], [1], [0, 0, 1, 1], [], []>} : vector<192x128xbf16>, vector<128x128xbf16>, vector<192x128xf32> -> vector<192x128xf32>
    %c0_95 = arith.constant 0 : index
    %c0_96 = arith.constant 0 : index
    %101 = vector.load %arg11[%c0_95, %c0_96] : memref<192x128xf32, #tpu.memory_space<vmem>>, vector<192x128xf32>
    %102 = arith.addf %101, %100 : vector<192x128xf32>
    %c0_97 = arith.constant 0 : index
    %c0_98 = arith.constant 0 : index
    %103 = vector.load %arg11[%c0_97, %c0_98] : memref<192x128xf32, #tpu.memory_space<vmem>>, vector<192x128xf32>
    tpu.vector_store %arg11[%c0_97, %c0_98], %102 {strides = array<i32>} : memref<192x128xf32, #tpu.memory_space<vmem>>, vector<192x128xf32>,
    %104 = vector.extract_strided_slice %13 {offsets = [56, 0], sizes = [192, 128], strides = [1, 1]} : vector<304x128xbf16> to vector<192x128xbf16>
    %c13 = arith.constant 13 : index
    %c0_99 = arith.constant 0 : index
    %c0_100 = arith.constant 0 : index
    %105 = vector.load %arg6[%c13, %c0_99, %c0_100] : memref<27x128x128xbf16, #tpu.memory_space<vmem>>, vector<1x128x128xbf16>
    %106 = vector.shape_cast %105 : vector<1x128x128xbf16> to vector<128x128xbf16>
    %cst_101 = arith.constant dense<0.000000e+00> : vector<192x128xf32>
    %107 = tpu.matmul %104, %106, %cst_101 {dimension_numbers = #tpu.dot_dimension_numbers<[1], [0], [0], [1], [0, 0, 1, 1], [], []>} : vector<192x128xbf16>, vector<128x128xbf16>, vector<192x128xf32> -> vector<192x128xf32>
    %c0_102 = arith.constant 0 : index
    %c0_103 = arith.constant 0 : index
    %108 = vector.load %arg11[%c0_102, %c0_103] : memref<192x128xf32, #tpu.memory_space<vmem>>, vector<192x128xf32>
    %109 = arith.addf %108, %107 : vector<192x128xf32>
    %c0_104 = arith.constant 0 : index
    %c0_105 = arith.constant 0 : index
    %110 = vector.load %arg11[%c0_104, %c0_105] : memref<192x128xf32, #tpu.memory_space<vmem>>, vector<192x128xf32>
    tpu.vector_store %arg11[%c0_104, %c0_105], %109 {strides = array<i32>} : memref<192x128xf32, #tpu.memory_space<vmem>>, vector<192x128xf32>,
    %111 = vector.extract_strided_slice %14 {offsets = [56, 0], sizes = [192, 128], strides = [1, 1]} : vector<304x128xbf16> to vector<192x128xbf16>
    %c14 = arith.constant 14 : index
    %c0_106 = arith.constant 0 : index
    %c0_107 = arith.constant 0 : index
    %112 = vector.load %arg6[%c14, %c0_106, %c0_107] : memref<27x128x128xbf16, #tpu.memory_space<vmem>>, vector<1x128x128xbf16>
    %113 = vector.shape_cast %112 : vector<1x128x128xbf16> to vector<128x128xbf16>
    %cst_108 = arith.constant dense<0.000000e+00> : vector<192x128xf32>
    %114 = tpu.matmul %111, %113, %cst_108 {dimension_numbers = #tpu.dot_dimension_numbers<[1], [0], [0], [1], [0, 0, 1, 1], [], []>} : vector<192x128xbf16>, vector<128x128xbf16>, vector<192x128xf32> -> vector<192x128xf32>
    %c0_109 = arith.constant 0 : index
    %c0_110 = arith.constant 0 : index
    %115 = vector.load %arg11[%c0_109, %c0_110] : memref<192x128xf32, #tpu.memory_space<vmem>>, vector<192x128xf32>
    %116 = arith.addf %115, %114 : vector<192x128xf32>
    %c0_111 = arith.constant 0 : index
    %c0_112 = arith.constant 0 : index
    %117 = vector.load %arg11[%c0_111, %c0_112] : memref<192x128xf32, #tpu.memory_space<vmem>>, vector<192x128xf32>
    tpu.vector_store %arg11[%c0_111, %c0_112], %116 {strides = array<i32>} : memref<192x128xf32, #tpu.memory_space<vmem>>, vector<192x128xf32>,
    %118 = vector.extract_strided_slice %12 {offsets = [64, 0], sizes = [192, 128], strides = [1, 1]} : vector<320x128xbf16> to vector<192x128xbf16>
    %c15 = arith.constant 15 : index
    %c0_113 = arith.constant 0 : index
    %c0_114 = arith.constant 0 : index
    %119 = vector.load %arg6[%c15, %c0_113, %c0_114] : memref<27x128x128xbf16, #tpu.memory_space<vmem>>, vector<1x128x128xbf16>
    %120 = vector.shape_cast %119 : vector<1x128x128xbf16> to vector<128x128xbf16>
    %cst_115 = arith.constant dense<0.000000e+00> : vector<192x128xf32>
    %121 = tpu.matmul %118, %120, %cst_115 {dimension_numbers = #tpu.dot_dimension_numbers<[1], [0], [0], [1], [0, 0, 1, 1], [], []>} : vector<192x128xbf16>, vector<128x128xbf16>, vector<192x128xf32> -> vector<192x128xf32>
    %c0_116 = arith.constant 0 : index
    %c0_117 = arith.constant 0 : index
    %122 = vector.load %arg11[%c0_116, %c0_117] : memref<192x128xf32, #tpu.memory_space<vmem>>, vector<192x128xf32>
    %123 = arith.addf %122, %121 : vector<192x128xf32>
    %c0_118 = arith.constant 0 : index
    %c0_119 = arith.constant 0 : index
    %124 = vector.load %arg11[%c0_118, %c0_119] : memref<192x128xf32, #tpu.memory_space<vmem>>, vector<192x128xf32>
    tpu.vector_store %arg11[%c0_118, %c0_119], %123 {strides = array<i32>} : memref<192x128xf32, #tpu.memory_space<vmem>>, vector<192x128xf32>,
    %125 = vector.extract_strided_slice %13 {offsets = [64, 0], sizes = [192, 128], strides = [1, 1]} : vector<304x128xbf16> to vector<192x128xbf16>
    %c16 = arith.constant 16 : index
    %c0_120 = arith.constant 0 : index
    %c0_121 = arith.constant 0 : index
    %126 = vector.load %arg6[%c16, %c0_120, %c0_121] : memref<27x128x128xbf16, #tpu.memory_space<vmem>>, vector<1x128x128xbf16>
    %127 = vector.shape_cast %126 : vector<1x128x128xbf16> to vector<128x128xbf16>
    %cst_122 = arith.constant dense<0.000000e+00> : vector<192x128xf32>
    %128 = tpu.matmul %125, %127, %cst_122 {dimension_numbers = #tpu.dot_dimension_numbers<[1], [0], [0], [1], [0, 0, 1, 1], [], []>} : vector<192x128xbf16>, vector<128x128xbf16>, vector<192x128xf32> -> vector<192x128xf32>
    %c0_123 = arith.constant 0 : index
    %c0_124 = arith.constant 0 : index
    %129 = vector.load %arg11[%c0_123, %c0_124] : memref<192x128xf32, #tpu.memory_space<vmem>>, vector<192x128xf32>
    %130 = arith.addf %129, %128 : vector<192x128xf32>
    %c0_125 = arith.constant 0 : index
    %c0_126 = arith.constant 0 : index
    %131 = vector.load %arg11[%c0_125, %c0_126] : memref<192x128xf32, #tpu.memory_space<vmem>>, vector<192x128xf32>
    tpu.vector_store %arg11[%c0_125, %c0_126], %130 {strides = array<i32>} : memref<192x128xf32, #tpu.memory_space<vmem>>, vector<192x128xf32>,
    %132 = vector.extract_strided_slice %14 {offsets = [64, 0], sizes = [192, 128], strides = [1, 1]} : vector<304x128xbf16> to vector<192x128xbf16>
    %c17 = arith.constant 17 : index
    %c0_127 = arith.constant 0 : index
    %c0_128 = arith.constant 0 : index
    %133 = vector.load %arg6[%c17, %c0_127, %c0_128] : memref<27x128x128xbf16, #tpu.memory_space<vmem>>, vector<1x128x128xbf16>
    %134 = vector.shape_cast %133 : vector<1x128x128xbf16> to vector<128x128xbf16>
    %cst_129 = arith.constant dense<0.000000e+00> : vector<192x128xf32>
    %135 = tpu.matmul %132, %134, %cst_129 {dimension_numbers = #tpu.dot_dimension_numbers<[1], [0], [0], [1], [0, 0, 1, 1], [], []>} : vector<192x128xbf16>, vector<128x128xbf16>, vector<192x128xf32> -> vector<192x128xf32>
    %c0_130 = arith.constant 0 : index
    %c0_131 = arith.constant 0 : index
    %136 = vector.load %arg11[%c0_130, %c0_131] : memref<192x128xf32, #tpu.memory_space<vmem>>, vector<192x128xf32>
    %137 = arith.addf %136, %135 : vector<192x128xf32>
    %c0_132 = arith.constant 0 : index
    %c0_133 = arith.constant 0 : index
    %138 = vector.load %arg11[%c0_132, %c0_133] : memref<192x128xf32, #tpu.memory_space<vmem>>, vector<192x128xf32>
    tpu.vector_store %arg11[%c0_132, %c0_133], %137 {strides = array<i32>} : memref<192x128xf32, #tpu.memory_space<vmem>>, vector<192x128xf32>,
    %139 = vector.extract_strided_slice %12 {offsets = [96, 0], sizes = [192, 128], strides = [1, 1]} : vector<320x128xbf16> to vector<192x128xbf16>
    %c18 = arith.constant 18 : index
    %c0_134 = arith.constant 0 : index
    %c0_135 = arith.constant 0 : index
    %140 = vector.load %arg6[%c18, %c0_134, %c0_135] : memref<27x128x128xbf16, #tpu.memory_space<vmem>>, vector<1x128x128xbf16>
    %141 = vector.shape_cast %140 : vector<1x128x128xbf16> to vector<128x128xbf16>
    %cst_136 = arith.constant dense<0.000000e+00> : vector<192x128xf32>
    %142 = tpu.matmul %139, %141, %cst_136 {dimension_numbers = #tpu.dot_dimension_numbers<[1], [0], [0], [1], [0, 0, 1, 1], [], []>} : vector<192x128xbf16>, vector<128x128xbf16>, vector<192x128xf32> -> vector<192x128xf32>
    %c0_137 = arith.constant 0 : index
    %c0_138 = arith.constant 0 : index
    %143 = vector.load %arg11[%c0_137, %c0_138] : memref<192x128xf32, #tpu.memory_space<vmem>>, vector<192x128xf32>
    %144 = arith.addf %143, %142 : vector<192x128xf32>
    %c0_139 = arith.constant 0 : index
    %c0_140 = arith.constant 0 : index
    %145 = vector.load %arg11[%c0_139, %c0_140] : memref<192x128xf32, #tpu.memory_space<vmem>>, vector<192x128xf32>
    tpu.vector_store %arg11[%c0_139, %c0_140], %144 {strides = array<i32>} : memref<192x128xf32, #tpu.memory_space<vmem>>, vector<192x128xf32>,
    %146 = vector.extract_strided_slice %13 {offsets = [96, 0], sizes = [192, 128], strides = [1, 1]} : vector<304x128xbf16> to vector<192x128xbf16>
    %c19 = arith.constant 19 : index
    %c0_141 = arith.constant 0 : index
    %c0_142 = arith.constant 0 : index
    %147 = vector.load %arg6[%c19, %c0_141, %c0_142] : memref<27x128x128xbf16, #tpu.memory_space<vmem>>, vector<1x128x128xbf16>
    %148 = vector.shape_cast %147 : vector<1x128x128xbf16> to vector<128x128xbf16>
    %cst_143 = arith.constant dense<0.000000e+00> : vector<192x128xf32>
    %149 = tpu.matmul %146, %148, %cst_143 {dimension_numbers = #tpu.dot_dimension_numbers<[1], [0], [0], [1], [0, 0, 1, 1], [], []>} : vector<192x128xbf16>, vector<128x128xbf16>, vector<192x128xf32> -> vector<192x128xf32>
    %c0_144 = arith.constant 0 : index
    %c0_145 = arith.constant 0 : index
    %150 = vector.load %arg11[%c0_144, %c0_145] : memref<192x128xf32, #tpu.memory_space<vmem>>, vector<192x128xf32>
    %151 = arith.addf %150, %149 : vector<192x128xf32>
    %c0_146 = arith.constant 0 : index
    %c0_147 = arith.constant 0 : index
    %152 = vector.load %arg11[%c0_146, %c0_147] : memref<192x128xf32, #tpu.memory_space<vmem>>, vector<192x128xf32>
    tpu.vector_store %arg11[%c0_146, %c0_147], %151 {strides = array<i32>} : memref<192x128xf32, #tpu.memory_space<vmem>>, vector<192x128xf32>,
    %153 = vector.extract_strided_slice %14 {offsets = [96, 0], sizes = [192, 128], strides = [1, 1]} : vector<304x128xbf16> to vector<192x128xbf16>
    %c20 = arith.constant 20 : index
    %c0_148 = arith.constant 0 : index
    %c0_149 = arith.constant 0 : index
    %154 = vector.load %arg6[%c20, %c0_148, %c0_149] : memref<27x128x128xbf16, #tpu.memory_space<vmem>>, vector<1x128x128xbf16>
    %155 = vector.shape_cast %154 : vector<1x128x128xbf16> to vector<128x128xbf16>
    %cst_150 = arith.constant dense<0.000000e+00> : vector<192x128xf32>
    %156 = tpu.matmul %153, %155, %cst_150 {dimension_numbers = #tpu.dot_dimension_numbers<[1], [0], [0], [1], [0, 0, 1, 1], [], []>} : vector<192x128xbf16>, vector<128x128xbf16>, vector<192x128xf32> -> vector<192x128xf32>
    %c0_151 = arith.constant 0 : index
    %c0_152 = arith.constant 0 : index
    %157 = vector.load %arg11[%c0_151, %c0_152] : memref<192x128xf32, #tpu.memory_space<vmem>>, vector<192x128xf32>
    %158 = arith.addf %157, %156 : vector<192x128xf32>
    %c0_153 = arith.constant 0 : index
    %c0_154 = arith.constant 0 : index
    %159 = vector.load %arg11[%c0_153, %c0_154] : memref<192x128xf32, #tpu.memory_space<vmem>>, vector<192x128xf32>
    tpu.vector_store %arg11[%c0_153, %c0_154], %158 {strides = array<i32>} : memref<192x128xf32, #tpu.memory_space<vmem>>, vector<192x128xf32>,
    %160 = vector.extract_strided_slice %12 {offsets = [104, 0], sizes = [192, 128], strides = [1, 1]} : vector<320x128xbf16> to vector<192x128xbf16>
    %c21 = arith.constant 21 : index
    %c0_155 = arith.constant 0 : index
    %c0_156 = arith.constant 0 : index
    %161 = vector.load %arg6[%c21, %c0_155, %c0_156] : memref<27x128x128xbf16, #tpu.memory_space<vmem>>, vector<1x128x128xbf16>
    %162 = vector.shape_cast %161 : vector<1x128x128xbf16> to vector<128x128xbf16>
    %cst_157 = arith.constant dense<0.000000e+00> : vector<192x128xf32>
    %163 = tpu.matmul %160, %162, %cst_157 {dimension_numbers = #tpu.dot_dimension_numbers<[1], [0], [0], [1], [0, 0, 1, 1], [], []>} : vector<192x128xbf16>, vector<128x128xbf16>, vector<192x128xf32> -> vector<192x128xf32>
    %c0_158 = arith.constant 0 : index
    %c0_159 = arith.constant 0 : index
    %164 = vector.load %arg11[%c0_158, %c0_159] : memref<192x128xf32, #tpu.memory_space<vmem>>, vector<192x128xf32>
    %165 = arith.addf %164, %163 : vector<192x128xf32>
    %c0_160 = arith.constant 0 : index
    %c0_161 = arith.constant 0 : index
    %166 = vector.load %arg11[%c0_160, %c0_161] : memref<192x128xf32, #tpu.memory_space<vmem>>, vector<192x128xf32>
    tpu.vector_store %arg11[%c0_160, %c0_161], %165 {strides = array<i32>} : memref<192x128xf32, #tpu.memory_space<vmem>>, vector<192x128xf32>,
    %167 = vector.extract_strided_slice %13 {offsets = [104, 0], sizes = [192, 128], strides = [1, 1]} : vector<304x128xbf16> to vector<192x128xbf16>
    %c22 = arith.constant 22 : index
    %c0_162 = arith.constant 0 : index
    %c0_163 = arith.constant 0 : index
    %168 = vector.load %arg6[%c22, %c0_162, %c0_163] : memref<27x128x128xbf16, #tpu.memory_space<vmem>>, vector<1x128x128xbf16>
    %169 = vector.shape_cast %168 : vector<1x128x128xbf16> to vector<128x128xbf16>
    %cst_164 = arith.constant dense<0.000000e+00> : vector<192x128xf32>
    %170 = tpu.matmul %167, %169, %cst_164 {dimension_numbers = #tpu.dot_dimension_numbers<[1], [0], [0], [1], [0, 0, 1, 1], [], []>} : vector<192x128xbf16>, vector<128x128xbf16>, vector<192x128xf32> -> vector<192x128xf32>
    %c0_165 = arith.constant 0 : index
    %c0_166 = arith.constant 0 : index
    %171 = vector.load %arg11[%c0_165, %c0_166] : memref<192x128xf32, #tpu.memory_space<vmem>>, vector<192x128xf32>
    %172 = arith.addf %171, %170 : vector<192x128xf32>
    %c0_167 = arith.constant 0 : index
    %c0_168 = arith.constant 0 : index
    %173 = vector.load %arg11[%c0_167, %c0_168] : memref<192x128xf32, #tpu.memory_space<vmem>>, vector<192x128xf32>
    tpu.vector_store %arg11[%c0_167, %c0_168], %172 {strides = array<i32>} : memref<192x128xf32, #tpu.memory_space<vmem>>, vector<192x128xf32>,
    %174 = vector.extract_strided_slice %14 {offsets = [104, 0], sizes = [192, 128], strides = [1, 1]} : vector<304x128xbf16> to vector<192x128xbf16>
    %c23 = arith.constant 23 : index
    %c0_169 = arith.constant 0 : index
    %c0_170 = arith.constant 0 : index
    %175 = vector.load %arg6[%c23, %c0_169, %c0_170] : memref<27x128x128xbf16, #tpu.memory_space<vmem>>, vector<1x128x128xbf16>
    %176 = vector.shape_cast %175 : vector<1x128x128xbf16> to vector<128x128xbf16>
    %cst_171 = arith.constant dense<0.000000e+00> : vector<192x128xf32>
    %177 = tpu.matmul %174, %176, %cst_171 {dimension_numbers = #tpu.dot_dimension_numbers<[1], [0], [0], [1], [0, 0, 1, 1], [], []>} : vector<192x128xbf16>, vector<128x128xbf16>, vector<192x128xf32> -> vector<192x128xf32>
    %c0_172 = arith.constant 0 : index
    %c0_173 = arith.constant 0 : index
    %178 = vector.load %arg11[%c0_172, %c0_173] : memref<192x128xf32, #tpu.memory_space<vmem>>, vector<192x128xf32>
    %179 = arith.addf %178, %177 : vector<192x128xf32>
    %c0_174 = arith.constant 0 : index
    %c0_175 = arith.constant 0 : index
    %180 = vector.load %arg11[%c0_174, %c0_175] : memref<192x128xf32, #tpu.memory_space<vmem>>, vector<192x128xf32>
    tpu.vector_store %arg11[%c0_174, %c0_175], %179 {strides = array<i32>} : memref<192x128xf32, #tpu.memory_space<vmem>>, vector<192x128xf32>,
    %181 = vector.extract_strided_slice %12 {offsets = [112, 0], sizes = [192, 128], strides = [1, 1]} : vector<320x128xbf16> to vector<192x128xbf16>
    %c24 = arith.constant 24 : index
    %c0_176 = arith.constant 0 : index
    %c0_177 = arith.constant 0 : index
    %182 = vector.load %arg6[%c24, %c0_176, %c0_177] : memref<27x128x128xbf16, #tpu.memory_space<vmem>>, vector<1x128x128xbf16>
    %183 = vector.shape_cast %182 : vector<1x128x128xbf16> to vector<128x128xbf16>
    %cst_178 = arith.constant dense<0.000000e+00> : vector<192x128xf32>
    %184 = tpu.matmul %181, %183, %cst_178 {dimension_numbers = #tpu.dot_dimension_numbers<[1], [0], [0], [1], [0, 0, 1, 1], [], []>} : vector<192x128xbf16>, vector<128x128xbf16>, vector<192x128xf32> -> vector<192x128xf32>
    %c0_179 = arith.constant 0 : index
    %c0_180 = arith.constant 0 : index
    %185 = vector.load %arg11[%c0_179, %c0_180] : memref<192x128xf32, #tpu.memory_space<vmem>>, vector<192x128xf32>
    %186 = arith.addf %185, %184 : vector<192x128xf32>
    %c0_181 = arith.constant 0 : index
    %c0_182 = arith.constant 0 : index
    %187 = vector.load %arg11[%c0_181, %c0_182] : memref<192x128xf32, #tpu.memory_space<vmem>>, vector<192x128xf32>
    tpu.vector_store %arg11[%c0_181, %c0_182], %186 {strides = array<i32>} : memref<192x128xf32, #tpu.memory_space<vmem>>, vector<192x128xf32>,
    %188 = vector.extract_strided_slice %13 {offsets = [112, 0], sizes = [192, 128], strides = [1, 1]} : vector<304x128xbf16> to vector<192x128xbf16>
    %c25 = arith.constant 25 : index
    %c0_183 = arith.constant 0 : index
    %c0_184 = arith.constant 0 : index
    %189 = vector.load %arg6[%c25, %c0_183, %c0_184] : memref<27x128x128xbf16, #tpu.memory_space<vmem>>, vector<1x128x128xbf16>
    %190 = vector.shape_cast %189 : vector<1x128x128xbf16> to vector<128x128xbf16>
    %cst_185 = arith.constant dense<0.000000e+00> : vector<192x128xf32>
    %191 = tpu.matmul %188, %190, %cst_185 {dimension_numbers = #tpu.dot_dimension_numbers<[1], [0], [0], [1], [0, 0, 1, 1], [], []>} : vector<192x128xbf16>, vector<128x128xbf16>, vector<192x128xf32> -> vector<192x128xf32>
    %c0_186 = arith.constant 0 : index
    %c0_187 = arith.constant 0 : index
    %192 = vector.load %arg11[%c0_186, %c0_187] : memref<192x128xf32, #tpu.memory_space<vmem>>, vector<192x128xf32>
    %193 = arith.addf %192, %191 : vector<192x128xf32>
    %c0_188 = arith.constant 0 : index
    %c0_189 = arith.constant 0 : index
    %194 = vector.load %arg11[%c0_188, %c0_189] : memref<192x128xf32, #tpu.memory_space<vmem>>, vector<192x128xf32>
    tpu.vector_store %arg11[%c0_188, %c0_189], %193 {strides = array<i32>} : memref<192x128xf32, #tpu.memory_space<vmem>>, vector<192x128xf32>,
    %195 = vector.extract_strided_slice %14 {offsets = [112, 0], sizes = [192, 128], strides = [1, 1]} : vector<304x128xbf16> to vector<192x128xbf16>
    %c26 = arith.constant 26 : index
    %c0_190 = arith.constant 0 : index
    %c0_191 = arith.constant 0 : index
    %196 = vector.load %arg6[%c26, %c0_190, %c0_191] : memref<27x128x128xbf16, #tpu.memory_space<vmem>>, vector<1x128x128xbf16>
    %197 = vector.shape_cast %196 : vector<1x128x128xbf16> to vector<128x128xbf16>
    %cst_192 = arith.constant dense<0.000000e+00> : vector<192x128xf32>
    %198 = tpu.matmul %195, %197, %cst_192 {dimension_numbers = #tpu.dot_dimension_numbers<[1], [0], [0], [1], [0, 0, 1, 1], [], []>} : vector<192x128xbf16>, vector<128x128xbf16>, vector<192x128xf32> -> vector<192x128xf32>
    %c0_193 = arith.constant 0 : index
    %c0_194 = arith.constant 0 : index
    %199 = vector.load %arg11[%c0_193, %c0_194] : memref<192x128xf32, #tpu.memory_space<vmem>>, vector<192x128xf32>
    %200 = arith.addf %199, %198 : vector<192x128xf32>
    %c0_195 = arith.constant 0 : index
    %c0_196 = arith.constant 0 : index
    %201 = vector.load %arg11[%c0_195, %c0_196] : memref<192x128xf32, #tpu.memory_space<vmem>>, vector<192x128xf32>
    tpu.vector_store %arg11[%c0_195, %c0_196], %200 {strides = array<i32>} : memref<192x128xf32, #tpu.memory_space<vmem>>, vector<192x128xf32>,
    %c0_197 = arith.constant 0 : index
    %c0_198 = arith.constant 0 : index
    %202 = vector.load %arg11[%c0_197, %c0_198] : memref<192x128xf32, #tpu.memory_space<vmem>>, vector<192x128xf32>
    %c0_199 = arith.constant 0 : index
    %c0_200 = arith.constant 0 : index
    %203 = vector.load %arg7[%c0_199, %c0_200] : memref<1x128xf32, #tpu.memory_space<vmem>>, vector<1x128xf32>
    %204 = vector.broadcast %203 : vector<1x128xf32> to vector<192x128xf32>
    %205 = arith.addf %202, %204 : vector<192x128xf32>
    %cst_201 = arith.constant 0.000000e+00 : f32
    %206 = vector.broadcast %cst_201 : f32 to vector<192x128xf32>
    %207 = arith.maximumf %205, %206 : vector<192x128xf32>
    %208 = arith.truncf %207 : vector<192x128xf32> to vector<192x128xbf16>
    %c0_202 = arith.constant 0 : index
    %c0_203 = arith.constant 0 : index
    %209 = vector.load %arg8[%c0_202, %c0_203] : memref<128x128xbf16, #tpu.memory_space<vmem>>, vector<128x128xbf16>
    %cst_204 = arith.constant dense<0.000000e+00> : vector<192x128xf32>
    %210 = tpu.matmul %208, %209, %cst_204 {dimension_numbers = #tpu.dot_dimension_numbers<[1], [0], [0], [1], [0, 0, 1, 1], [], []>} : vector<192x128xbf16>, vector<128x128xbf16>, vector<192x128xf32> -> vector<192x128xf32>
    %c0_205 = arith.constant 0 : index
    %c0_206 = arith.constant 0 : index
    %211 = vector.load %arg9[%c0_205, %c0_206] : memref<1x128xf32, #tpu.memory_space<vmem>>, vector<1x128xf32>
    %212 = vector.broadcast %211 : vector<1x128xf32> to vector<192x128xf32>
    %213 = arith.addf %210, %212 : vector<192x128xf32>
    %c0_207 = arith.constant 0 : index
    %c0_208 = arith.constant 0 : index
    %c0_209 = arith.constant 0 : index
    %214 = vector.load %arg2[%c0_207, %c0_208, %c0_209] : memref<1x192x128xf32, #tpu.memory_space<vmem>>, vector<1x192x128xf32>
    %215 = vector.shape_cast %214 : vector<1x192x128xf32> to vector<192x128xf32>
    %216 = arith.addf %213, %215 : vector<192x128xf32>
    %cst_210 = arith.constant 0.000000e+00 : f32
    %217 = vector.broadcast %cst_210 : f32 to vector<192x128xf32>
    %218 = arith.maximumf %216, %217 : vector<192x128xf32>
    %c0_211 = arith.constant 0 : index
    %c0_212 = arith.constant 0 : index
    %c0_213 = arith.constant 0 : index
    %219 = vector.load %arg10[%c0_211, %c0_212, %c0_213] : memref<1x192x128xf32, #tpu.memory_space<vmem>>, vector<1x192x128xf32>
    %220 = vector.shape_cast %219 : vector<1x192x128xf32> to vector<192x128xf32>
    %221 = vector.shape_cast %218 : vector<192x128xf32> to vector<1x192x128xf32>
    tpu.vector_store %arg10[%c0_211, %c0_212, %c0_213], %221 {strides = array<i32>} : memref<1x192x128xf32, #tpu.memory_space<vmem>>, vector<1x192x128xf32>,
    return
  }
  func.func @transform_0(%arg0: i32) -> (i32, i32, i32) {
    %c0_i32 = arith.constant 0 : i32
    %c0_i32_0 = arith.constant 0 : i32
    %c0_i32_1 = arith.constant 0 : i32
    return %arg0, %c0_i32, %c0_i32_0 : i32, i32, i32
  }
  func.func @transform_1(%arg0: i32) -> (i32, i32, i32) {
    %c0_i32 = arith.constant 0 : i32
    %c0_i32_0 = arith.constant 0 : i32
    %c0_i32_1 = arith.constant 0 : i32
    return %arg0, %c0_i32, %c0_i32_0 : i32, i32, i32
  }
  func.func @transform_2(%arg0: i32) -> (i32, i32) {
    %c0_i32 = arith.constant 0 : i32
    %c0_i32_0 = arith.constant 0 : i32
    %c0_i32_1 = arith.constant 0 : i32
    return %c0_i32, %c0_i32_0 : i32, i32
  }
  func.func @transform_3(%arg0: i32) -> (i32, i32) {
    %c0_i32 = arith.constant 0 : i32
    %c0_i32_0 = arith.constant 0 : i32
    %c0_i32_1 = arith.constant 0 : i32
    return %c0_i32, %c0_i32_0 : i32, i32
  }
  func.func @transform_4(%arg0: i32) -> (i32, i32) {
    %c0_i32 = arith.constant 0 : i32
    %c0_i32_0 = arith.constant 0 : i32
    %c0_i32_1 = arith.constant 0 : i32
    return %c0_i32, %c0_i32_0 : i32, i32
  }
  func.func @transform_5(%arg0: i32) -> (i32, i32, i32) {
    %c0_i32 = arith.constant 0 : i32
    %c0_i32_0 = arith.constant 0 : i32
    %c0_i32_1 = arith.constant 0 : i32
    %c0_i32_2 = arith.constant 0 : i32
    return %c0_i32, %c0_i32_0, %c0_i32_1 : i32, i32, i32
  }
  func.func @transform_6(%arg0: i32) -> (i32, i32) {
    %c0_i32 = arith.constant 0 : i32
    %c0_i32_0 = arith.constant 0 : i32
    %c0_i32_1 = arith.constant 0 : i32
    return %c0_i32, %c0_i32_0 : i32, i32
  }
  func.func @transform_7(%arg0: i32) -> (i32, i32) {
    %c0_i32 = arith.constant 0 : i32
    %c0_i32_0 = arith.constant 0 : i32
    %c0_i32_1 = arith.constant 0 : i32
    return %c0_i32, %c0_i32_0 : i32, i32
  }
  func.func @transform_8(%arg0: i32) -> (i32, i32) {
    %c0_i32 = arith.constant 0 : i32
    %c0_i32_0 = arith.constant 0 : i32
    %c0_i32_1 = arith.constant 0 : i32
    return %c0_i32, %c0_i32_0 : i32, i32
  }
  func.func @transform_9(%arg0: i32) -> (i32, i32, i32) {
    %c0_i32 = arith.constant 0 : i32
    %c0_i32_0 = arith.constant 0 : i32
    %c0_i32_1 = arith.constant 0 : i32
    return %arg0, %c0_i32, %c0_i32_0 : i32, i32, i32
  }
}

</mosaic_0001>

<llo_original>
// kernel: tpu_custom_call.1
$region0: #{tpu_custom_call.1}
  #allocation0 [shape = 'u32[]', space=smem, size = 0x4, offset = 0x4, fixed_abs, tag = 'smem constant byte address 0x4 - core index']
  #allocation1 [shape = 'u32[144,128]{1,0:T(1,128)}', space=vmem, size = 0x12000, scoped, tag = 'internal scratch']
  #allocation2 [shape = 'f32[192,128]{1,0:T(8,128)}', space=vmem, size = 0x18000, scoped, tag = 'scratch operand']
  %s0 = inlined_call_operand.vmem [shape: bf16[2,320,128], index: 0, kind: input, shape index: {}]
  %s1 = inlined_call_operand.hbm [shape: f32[2,192,128], index: 1, kind: input, shape index: {}]
  %s2 = inlined_call_operand.vmem [shape: f32[320,1], index: 2, kind: input, shape index: {}]
  %s3 = inlined_call_operand.hbm [shape: bf16[128,128], index: 3, kind: input, shape index: {}]
  %s4 = inlined_call_operand.vmem [shape: f32[1,128], index: 4, kind: input, shape index: {}]
  %s5 = inlined_call_operand.hbm [shape: bf16[27,128,128], index: 5, kind: input, shape index: {}]
  %s6 = inlined_call_operand.vmem [shape: f32[1,128], index: 6, kind: input, shape index: {}]
  %s7 = inlined_call_operand.hbm [shape: bf16[128,128], index: 7, kind: input, shape index: {}]
  %s8 = inlined_call_operand.vmem [shape: f32[1,128], index: 8, kind: input, shape index: {}]
  %s9 = inlined_call_operand.hbm [shape: f32[2,192,128], index: 9, kind: output, shape index: {}]
  %s10 = sld [smem:[#allocation0]]
  $region85: #{tpu_custom_call.1} parent=0
    _
  %s12 = ssub.s32 1, %s10
  %s13 = scalar_select 0, %s12, %s10
  $region1: #{tpu_custom_call.1} parent=0
    #allocation3 [shape = 'u8[196608]{0}', space=vmem, size = 0x30000, scoped, tag = 'input window, operand 1']
    #allocation4 [shape = 's32[2]{0}', space=sflag, size = 0x8, scoped, tag = 'scoped memory for tpu_custom_call.1']
    #allocation5 [shape = 's32[2]{0}', space=sflag, size = 0x8, scoped, tag = 'scoped memory for tpu_custom_call.1']
    #allocation6 [shape = 'u8[32768]{0}', space=vmem, size = 0x8000, scoped, tag = 'input window, operand 3, single buffered']
    #allocation7 [shape = 's32[1]{0}', space=sflag, size = 0x4, scoped, tag = 'scoped memory for tpu_custom_call.1']
    #allocation8 [shape = 'u8[884736]{0}', space=vmem, size = 0xd8000, scoped, tag = 'input window, operand 5, single buffered']
    #allocation9 [shape = 'u8[32768]{0}', space=vmem, size = 0x8000, scoped, tag = 'input window, operand 7, single buffered']
    #allocation10 [shape = 's32[1]{0}', space=sflag, size = 0x4, scoped, tag = 'scoped memory for tpu_custom_call.1']
    #allocation11 [shape = 'u8[196608]{0}', space=vmem, size = 0x30000, scoped, tag = 'output window, operand 0']
    %14 = vsyncpa [#allocation4], 0
    %s15 = scalar_lea.sflag [#allocation4], 1
    %16 = vsyncpa %s15, 0
    %17 = vsyncpa [#allocation7], 0
    %18 = vsyncpa [#allocation10], 0
    %19 = vsyncpa [#allocation5], 0
    %s20 = scalar_lea.sflag [#allocation5], 1
    %21 = vsyncpa %s20, 0
    loop: start=0, step=1, limit=4
    $region2: #{tpu_custom_call.1} parent=1 // loop_pre_header
      _
    $region3: #{tpu_custom_call.1} parent=1 // loop_header
      %s23 = sphi 0, %s27
      %p24 = scmp.ge.s32.totalorder %s23, 4
      %s33 = sphi 0, %s35
      %s36 = sphi 0, %s33
      %s37 = sphi 0, %s36
      %s53 = sphi 0, %s37
      %s59 = sphi 0, %s61
      %s62 = sphi 0, %s59
      %s63 = sphi 0, %s62
      %s79 = sphi 0, %s63
      %s83 = sphi 0, %s83
      %s85 = sphi 0, %s83
      %s86 = sphi 0, %s85
      %s100 = sphi 0, %s86
      %s104 = sphi 0, %s104
      %s106 = sphi 0, %s104
      %s107 = sphi 0, %s106
      %s121 = sphi 0, %s107
      %s125 = sphi 0, %s125
      %s127 = sphi 0, %s125
      %s128 = sphi 0, %s127
      %s142 = sphi 0, %s128
      %s146 = sphi 0, %s146
      %s148 = sphi 0, %s146
      %s149 = sphi 0, %s148
      %s163 = sphi 0, %s149
      %s167 = sphi 0, %s167
      %s169 = sphi 0, %s167
      %s170 = sphi 0, %s169
      %s184 = sphi 0, %s170
      %s188 = sphi 0, %s188
      %s190 = sphi 0, %s188
      %s191 = sphi 0, %s190
      %s205 = sphi 0, %s191
      %s209 = sphi 0, %s209
      %s211 = sphi 0, %s209
      %s212 = sphi 0, %s211
      %s226 = sphi 0, %s212
      %s232 = sphi 0, %s234
      %s235 = sphi 0, %s232
      %s236 = sphi 0, %s235
      %s252 = sphi 0, %s236
    $region4: #{tpu_custom_call.1} parent=1 // loop_header_branch
      %26 = sbr.rel (%p24) target = $region8
    $region5: #{tpu_custom_call.1} parent=1 // loop_body
      %s28 = ssub.s32 %s23, 1
      %s29 = ssub.s32 %s23, 2
      %s30 = sadd.s32 %s23, 1
      %s31 = ssub.s32 %s23, %s30
      %p32 = scmp.eq.s32.totalorder %s31, 0
      %s34 = sadd.s32 %s33, 1
      %s35 = scalar_select %p32, %s33, %s34
      %p38 = pneg %p32
      %p39 = scmp.eq.s32.totalorder %s23, 1
      %p40 = por %p38, %p39
      %p41 = scmp.ne.s32.totalorder %s33, %s36
      %p42 = scmp.eq.s32.totalorder %s23, 0
      %p43 = por %p41, %p42
      %p44 = scmp.ne.s32.totalorder %s33, %s36
      %p45 = scmp.eq.s32.totalorder %s28, 1
      %p46 = por %p44, %p45
      %p47 = scmp.ne.s32.totalorder %s36, %s37
      %p48 = scmp.eq.s32.totalorder %s28, 0
      %p49 = por %p47, %p48
      %p50 = scmp.ne.s32.totalorder %s36, %s37
      %p51 = scmp.eq.s32.totalorder %s29, 1
      %p52 = por %p50, %p51
      %p54 = scmp.ne.s32.totalorder %s37, %s53
      %p55 = scmp.eq.s32.totalorder %s29, 0
      %p56 = por %p54, %p55
      %s57 = ssub.s32 %s23, %s30
      %p58 = scmp.eq.s32.totalorder %s57, 0
      %s60 = sadd.s32 %s59, 1
      %s61 = scalar_select %p58, %s59, %s60
      %p64 = pneg %p58
      %p65 = scmp.eq.s32.totalorder %s23, 1
      %p66 = por %p64, %p65
      %p67 = scmp.ne.s32.totalorder %s59, %s62
      %p68 = scmp.eq.s32.totalorder %s23, 0
      %p69 = por %p67, %p68
      %p70 = scmp.ne.s32.totalorder %s59, %s62
      %p71 = scmp.eq.s32.totalorder %s28, 1
      %p72 = por %p70, %p71
      %p73 = scmp.ne.s32.totalorder %s62, %s63
      %p74 = scmp.eq.s32.totalorder %s28, 0
      %p75 = por %p73, %p74
      %p76 = scmp.ne.s32.totalorder %s62, %s63
      %p77 = scmp.eq.s32.totalorder %s29, 1
      %p78 = por %p76, %p77
      %p80 = scmp.ne.s32.totalorder %s63, %s79
      %p81 = scmp.eq.s32.totalorder %s29, 0
      %p82 = por %p80, %p81
      %s84 = sadd.s32 %s83, 1
      %p87 = scmp.eq.s32.totalorder %s23, 1
      %p88 = scmp.ne.s32.totalorder %s83, %s85
      %p89 = scmp.eq.s32.totalorder %s23, 0
      %p90 = por %p88, %p89
      %p91 = scmp.ne.s32.totalorder %s83, %s85
      %p92 = scmp.eq.s32.totalorder %s28, 1
      %p93 = por %p91, %p92
      %p94 = scmp.ne.s32.totalorder %s85, %s86
      %p95 = scmp.eq.s32.totalorder %s28, 0
      %p96 = por %p94, %p95
      %p97 = scmp.ne.s32.totalorder %s85, %s86
      %p98 = scmp.eq.s32.totalorder %s29, 1
      %p99 = por %p97, %p98
      %p101 = scmp.ne.s32.totalorder %s86, %s100
      %p102 = scmp.eq.s32.totalorder %s29, 0
      %p103 = por %p101, %p102
      %s105 = sadd.s32 %s104, 1
      %p108 = scmp.eq.s32.totalorder %s23, 1
      %p109 = scmp.ne.s32.totalorder %s104, %s106
      %p110 = scmp.eq.s32.totalorder %s23, 0
      %p111 = por %p109, %p110
      %p112 = scmp.ne.s32.totalorder %s104, %s106
      %p113 = scmp.eq.s32.totalorder %s28, 1
      %p114 = por %p112, %p113
      %p115 = scmp.ne.s32.totalorder %s106, %s107
      %p116 = scmp.eq.s32.totalorder %s28, 0
      %p117 = por %p115, %p116
      %p118 = scmp.ne.s32.totalorder %s106, %s107
      %p119 = scmp.eq.s32.totalorder %s29, 1
      %p120 = por %p118, %p119
      %p122 = scmp.ne.s32.totalorder %s107, %s121
      %p123 = scmp.eq.s32.totalorder %s29, 0
      %p124 = por %p122, %p123
      %s126 = sadd.s32 %s125, 1
      %p129 = scmp.eq.s32.totalorder %s23, 1
      %p130 = scmp.ne.s32.totalorder %s125, %s127
      %p131 = scmp.eq.s32.totalorder %s23, 0
      %p132 = por %p130, %p131
      %p133 = scmp.ne.s32.totalorder %s125, %s127
      %p134 = scmp.eq.s32.totalorder %s28, 1
      %p135 = por %p133, %p134
      %p136 = scmp.ne.s32.totalorder %s127, %s128
      %p137 = scmp.eq.s32.totalorder %s28, 0
      %p138 = por %p136, %p137
      %p139 = scmp.ne.s32.totalorder %s127, %s128
      %p140 = scmp.eq.s32.totalorder %s29, 1
      %p141 = por %p139, %p140
      %p143 = scmp.ne.s32.totalorder %s128, %s142
      %p144 = scmp.eq.s32.totalorder %s29, 0
      %p145 = por %p143, %p144
      %s147 = sadd.s32 %s146, 1
      %p150 = scmp.eq.s32.totalorder %s23, 1
      %p151 = scmp.ne.s32.totalorder %s146, %s148
      %p152 = scmp.eq.s32.totalorder %s23, 0
      %p153 = por %p151, %p152
      %p154 = scmp.ne.s32.totalorder %s146, %s148
      %p155 = scmp.eq.s32.totalorder %s28, 1
      %p156 = por %p154, %p155
      %p157 = scmp.ne.s32.totalorder %s148, %s149
      %p158 = scmp.eq.s32.totalorder %s28, 0
      %p159 = por %p157, %p158
      %p160 = scmp.ne.s32.totalorder %s148, %s149
      %p161 = scmp.eq.s32.totalorder %s29, 1
      %p162 = por %p160, %p161
      %p164 = scmp.ne.s32.totalorder %s149, %s163
      %p165 = scmp.eq.s32.totalorder %s29, 0
      %p166 = por %p164, %p165
      %s168 = sadd.s32 %s167, 1
      %p171 = scmp.eq.s32.totalorder %s23, 1
      %p172 = scmp.ne.s32.totalorder %s167, %s169
      %p173 = scmp.eq.s32.totalorder %s23, 0
      %p174 = por %p172, %p173
      %p175 = scmp.ne.s32.totalorder %s167, %s169
      %p176 = scmp.eq.s32.totalorder %s28, 1
      %p177 = por %p175, %p176
      %p178 = scmp.ne.s32.totalorder %s169, %s170
      %p179 = scmp.eq.s32.totalorder %s28, 0
      %p180 = por %p178, %p179
      %p181 = scmp.ne.s32.totalorder %s169, %s170
      %p182 = scmp.eq.s32.totalorder %s29, 1
      %p183 = por %p181, %p182
      %p185 = scmp.ne.s32.totalorder %s170, %s184
      %p186 = scmp.eq.s32.totalorder %s29, 0
      %p187 = por %p185, %p186
      %s189 = sadd.s32 %s188, 1
      %p192 = scmp.eq.s32.totalorder %s23, 1
      %p193 = scmp.ne.s32.totalorder %s188, %s190
      %p194 = scmp.eq.s32.totalorder %s23, 0
      %p195 = por %p193, %p194
      %p196 = scmp.ne.s32.totalorder %s188, %s190
      %p197 = scmp.eq.s32.totalorder %s28, 1
      %p198 = por %p196, %p197
      %p199 = scmp.ne.s32.totalorder %s190, %s191
      %p200 = scmp.eq.s32.totalorder %s28, 0
      %p201 = por %p199, %p200
      %p202 = scmp.ne.s32.totalorder %s190, %s191
      %p203 = scmp.eq.s32.totalorder %s29, 1
      %p204 = por %p202, %p203
      %p206 = scmp.ne.s32.totalorder %s191, %s205
      %p207 = scmp.eq.s32.totalorder %s29, 0
      %p208 = por %p206, %p207
      %s210 = sadd.s32 %s209, 1
      %p213 = scmp.eq.s32.totalorder %s23, 1
      %p214 = scmp.ne.s32.totalorder %s209, %s211
      %p215 = scmp.eq.s32.totalorder %s23, 0
      %p216 = por %p214, %p215
      %p217 = scmp.ne.s32.totalorder %s209, %s211
      %p218 = scmp.eq.s32.totalorder %s28, 1
      %p219 = por %p217, %p218
      %p220 = scmp.ne.s32.totalorder %s211, %s212
      %p221 = scmp.eq.s32.totalorder %s28, 0
      %p222 = por %p220, %p221
      %p223 = scmp.ne.s32.totalorder %s211, %s212
      %p224 = scmp.eq.s32.totalorder %s29, 1
      %p225 = por %p223, %p224
      %p227 = scmp.ne.s32.totalorder %s212, %s226
      %p228 = scmp.eq.s32.totalorder %s29, 0
      %p229 = por %p227, %p228
      %s230 = ssub.s32 %s23, %s30
      %p231 = scmp.eq.s32.totalorder %s230, 0
      %s233 = sadd.s32 %s232, 1
      %s234 = scalar_select %p231, %s232, %s233
      %p237 = pneg %p231
      %p238 = scmp.eq.s32.totalorder %s23, 1
      %p239 = por %p237, %p238
      %p240 = scmp.ne.s32.totalorder %s232, %s235
      %p241 = scmp.eq.s32.totalorder %s23, 0
      %p242 = por %p240, %p241
      %p243 = scmp.ne.s32.totalorder %s232, %s235
      %p244 = scmp.eq.s32.totalorder %s28, 1
      %p245 = por %p243, %p244
      %p246 = scmp.ne.s32.totalorder %s235, %s236
      %p247 = scmp.eq.s32.totalorder %s28, 0
      %p248 = por %p246, %p247
      %p249 = scmp.ne.s32.totalorder %s235, %s236
      %p250 = scmp.eq.s32.totalorder %s29, 1
      %p251 = por %p249, %p250
      %p253 = scmp.ne.s32.totalorder %s236, %s252
      %p254 = scmp.eq.s32.totalorder %s29, 0
      %p255 = por %p253, %p254
      %p256 = scmp.le.s32.totalorder 1, %s23
      %p257 = scmp.lt.s32.totalorder %s23, 3
      %p258 = pnand %p256, %p257
      %p259 = pneg %p258
      // Predicated region
      $region9: #{tpu_custom_call.1} parent=5 // pred_check
        _
      $region10: #{tpu_custom_call.1} parent=5 // pred_check_branch
        %261 = sbr.rel (%p258) target = $region12
      $region11: #{tpu_custom_call.1} parent=5 // pred_region
        %s262 = ssub.s32 %s23, 1
        // Predicated region
        $region13: #{tpu_custom_call.1} parent=11 // pred_check
          %p263 = pneg %p96
        $region14: #{tpu_custom_call.1} parent=11 // pred_check_branch
          %265 = sbr.rel (%p263) target = $region16
        $region15: #{tpu_custom_call.1} parent=11 // pred_region
          _
        $region16: #{tpu_custom_call.1} parent=11 // pred_fallthru
          _
        // Predicated region
        $region17: #{tpu_custom_call.1} parent=11 // pred_check
          %p266 = pneg %p117
        $region18: #{tpu_custom_call.1} parent=11 // pred_check_branch
          %268 = sbr.rel (%p266) target = $region20
        $region19: #{tpu_custom_call.1} parent=11 // pred_region
          %s270 = ssub.s32 1024, 1024
          %271 = vsyncadd [#allocation7], %s270
          %s272 = sshll.u32 [#allocation6], 4
          %s273 = int_to_ptr.vmem [resolvable:$true] %s272
          %278 = dma.hbm_to_vmem [thread:$0]  %s3, 1024, %s273, [#allocation7], 64, 64, 4
        $region20: #{tpu_custom_call.1} parent=11 // pred_fallthru
          _
        // Predicated region
        $region21: #{tpu_custom_call.1} parent=11 // pred_check
          %p279 = pneg %p138
        $region22: #{tpu_custom_call.1} parent=11 // pred_check_branch
          %281 = sbr.rel (%p279) target = $region24
        $region23: #{tpu_custom_call.1} parent=11 // pred_region
          _
        $region24: #{tpu_custom_call.1} parent=11 // pred_fallthru
          _
        // Predicated region
        $region25: #{tpu_custom_call.1} parent=11 // pred_check
          %p282 = pneg %p159
        $region26: #{tpu_custom_call.1} parent=11 // pred_check_branch
          %284 = sbr.rel (%p282) target = $region28
        $region27: #{tpu_custom_call.1} parent=11 // pred_region
          %s286 = ssub.s32 27648, 27648
          %287 = vsyncadd [#allocation7], %s286
          %s288 = sshll.u32 [#allocation8], 4
          %s289 = int_to_ptr.vmem [resolvable:$true] %s288
          %294 = dma.hbm_to_vmem [thread:$0]  %s5, 27648, %s289, [#allocation7], 64, 64, 4
        $region28: #{tpu_custom_call.1} parent=11 // pred_fallthru
          _
        // Predicated region
        $region29: #{tpu_custom_call.1} parent=11 // pred_check
          %p295 = pneg %p180
        $region30: #{tpu_custom_call.1} parent=11 // pred_check_branch
          %297 = sbr.rel (%p295) target = $region32
        $region31: #{tpu_custom_call.1} parent=11 // pred_region
          _
        $region32: #{tpu_custom_call.1} parent=11 // pred_fallthru
          _
        // Predicated region
        $region33: #{tpu_custom_call.1} parent=11 // pred_check
          %p298 = pneg %p201
        $region34: #{tpu_custom_call.1} parent=11 // pred_check_branch
          %300 = sbr.rel (%p298) target = $region36
        $region35: #{tpu_custom_call.1} parent=11 // pred_region
          %s302 = ssub.s32 1024, 1024
          %303 = vsyncadd [#allocation10], %s302
          %s304 = sshll.u32 [#allocation9], 4
          %s305 = int_to_ptr.vmem [resolvable:$true] %s304
          %310 = dma.hbm_to_vmem [thread:$0]  %s7, 1024, %s305, [#allocation10], 64, 64, 4
        $region36: #{tpu_custom_call.1} parent=11 // pred_fallthru
          _
        // Predicated region
        $region37: #{tpu_custom_call.1} parent=11 // pred_check
          %p311 = pneg %p222
        $region38: #{tpu_custom_call.1} parent=11 // pred_check_branch
          %313 = sbr.rel (%p311) target = $region40
        $region39: #{tpu_custom_call.1} parent=11 // pred_region
          _
        $region40: #{tpu_custom_call.1} parent=11 // pred_fallthru
          _
      $region12: #{tpu_custom_call.1} parent=5 // pred_fallthru
        _
      %p314 = scmp.lt.s32.totalorder %s23, 2
      // Predicated region
      $region41: #{tpu_custom_call.1} parent=5 // pred_check
        %p315 = pneg %p314
      $region42: #{tpu_custom_call.1} parent=5 // pred_check_branch
        %317 = sbr.rel (%p315) target = $region44
      $region43: #{tpu_custom_call.1} parent=5 // pred_region
        // Predicated region
        $region45: #{tpu_custom_call.1} parent=43 // pred_check
          %p318 = pneg %p43
        $region46: #{tpu_custom_call.1} parent=43 // pred_check_branch
          %320 = sbr.rel (%p318) target = $region48
        $region47: #{tpu_custom_call.1} parent=43 // pred_region
          %p321 = scmp.lt.s32.totalorder %s23, 1
          %s322 = scalar_select %p321, %s23, 1
          %s323 = smul.addr %s322, 40
          %s324 = smul.addr %s323, 4
          %s325 = scalar_lea.vmem %s0, %s324
        $region48: #{tpu_custom_call.1} parent=43 // pred_fallthru
          _
        // Predicated region
        $region49: #{tpu_custom_call.1} parent=43 // pred_check
          %p326 = pneg %p69
        $region50: #{tpu_custom_call.1} parent=43 // pred_check_branch
          %328 = sbr.rel (%p326) target = $region52
        $region51: #{tpu_custom_call.1} parent=43 // pred_region
          %s329 = sand.u32 %s59, 1
          %s330 = scalar_lea.sflag [#allocation4], %s329
          %s331 = sand.u32 %s59, 1
          %s332 = smul.addr %s331, 192
          %s333 = scalar_lea.vmem [#allocation3], %s332
          %s335 = ssub.s32 3072, 3072
          %336 = vsyncadd %s330, %s335
          %s337 = smul.addr %s23, 24
          %s338 = smul.addr %s337, 128
          %s339 = scalar_lea.hbm %s1, %s338
          %s340 = sshll.u32 %s333, 4
          %s341 = int_to_ptr.vmem [resolvable:$true] %s340
          %346 = dma.hbm_to_vmem [thread:$0]  %s339, 3072, %s341, %s330, 128, 128, 8
        $region52: #{tpu_custom_call.1} parent=43 // pred_fallthru
          _
      $region44: #{tpu_custom_call.1} parent=5 // pred_fallthru
        _
      %p347 = scmp.le.s32.totalorder 1, %s23
      %p348 = scmp.lt.s32.totalorder %s23, 3
      %p349 = pnand %p347, %p348
      %p350 = pneg %p349
      // Predicated region
      $region53: #{tpu_custom_call.1} parent=5 // pred_check
        _
      $region54: #{tpu_custom_call.1} parent=5 // pred_check_branch
        %352 = sbr.rel (%p349) target = $region56
      $region55: #{tpu_custom_call.1} parent=5 // pred_region
        %s353 = ssub.s32 %s23, 1
        %s354 = sand.u32 %s62, 1
        %s355 = scalar_lea.sflag [#allocation4], %s354
        %s356 = sand.u32 %s62, 1
        %s357 = smul.addr %s356, 192
        %s358 = scalar_lea.vmem [#allocation3], %s357
        // Predicated region
        $region57: #{tpu_custom_call.1} parent=55 // pred_check
          %p359 = pneg %p75
        $region58: #{tpu_custom_call.1} parent=55 // pred_check_branch
          %361 = sbr.rel (%p359) target = $region60
        $region59: #{tpu_custom_call.1} parent=55 // pred_region
          %362 = dma.done %s355, 3072
        $region60: #{tpu_custom_call.1} parent=55 // pred_fallthru
          _
        // Predicated region
        $region61: #{tpu_custom_call.1} parent=55 // pred_check
          %p363 = pneg %p117
        $region62: #{tpu_custom_call.1} parent=55 // pred_check_branch
          %365 = sbr.rel (%p363) target = $region64
        $region63: #{tpu_custom_call.1} parent=55 // pred_region
          %366 = dma.done [#allocation7], 1024
        $region64: #{tpu_custom_call.1} parent=55 // pred_fallthru
          _
        // Predicated region
        $region65: #{tpu_custom_call.1} parent=55 // pred_check
          %p367 = pneg %p159
        $region66: #{tpu_custom_call.1} parent=55 // pred_check_branch
          %369 = sbr.rel (%p367) target = $region68
        $region67: #{tpu_custom_call.1} parent=55 // pred_region
          %370 = dma.done [#allocation7], 27648
        $region68: #{tpu_custom_call.1} parent=55 // pred_fallthru
          _
        // Predicated region
        $region69: #{tpu_custom_call.1} parent=55 // pred_check
          %p371 = pneg %p201
        $region70: #{tpu_custom_call.1} parent=55 // pred_check_branch
          %373 = sbr.rel (%p371) target = $region72
        $region71: #{tpu_custom_call.1} parent=55 // pred_region
          %374 = dma.done [#allocation10], 1024
        $region72: #{tpu_custom_call.1} parent=55 // pred_fallthru
          _
        %p375 = scmp.lt.s32.totalorder %s28, 1
        %s376 = scalar_select %p375, %s28, 1
        %s377 = smul.addr %s376, 40
        %s378 = smul.addr %s377, 4
        %s379 = scalar_lea.vmem %s0, %s378
        %p380 = pneg %p49
        %p381 = pneg %p46
        %s382 = sand.u32 %s62, 1
        %s383 = scalar_lea.sflag [#allocation4], %s382
        %s384 = sand.u32 %s62, 1
        %s385 = smul.addr %s384, 192
        %s386 = scalar_lea.vmem [#allocation3], %s385
        %p387 = pneg %p75
        %p388 = pneg %p72
        %p389 = pneg %p96
        %p390 = pneg %p93
        %p391 = pneg %p117
        %p392 = pneg %p114
        %p393 = pneg %p138
        %p394 = pneg %p135
        %p395 = pneg %p159
        %p396 = pneg %p156
        %p397 = pneg %p180
        %p398 = pneg %p177
        %p399 = pneg %p201
        %p400 = pneg %p198
        %p401 = pneg %p222
        %p402 = pneg %p219
        %p403 = pneg %p248
        %p404 = pneg %p245
        %s405 = sand.u32 %s235, 1
        %s406 = scalar_lea.sflag [#allocation5], %s405
        %s407 = sand.u32 %s235, 1
        %s408 = smul.addr %s407, 192
        %s409 = scalar_lea.vmem [#allocation11], %s408
        %p410 = scmp.lt.s32.totalorder %s28, 1
        %s411 = scalar_select %p410, %s28, 1
        %s412 = smul.addr %s411, 40
        %s413 = smul.addr %s412, 4
        %s414 = scalar_lea.vmem %s0, %s413
        %v416 = vld [vmem:[%s414] sm:$0xf]
        %v417 = vld [vmem:[%s414 + $0x4] sm:$0xf]
        %v418 = vld [vmem:[%s414 + $0x8] sm:$0xf]
        %v419 = vld [vmem:[%s414 + $0xc] sm:$0xf]
        %v420 = vld [vmem:[%s414 + $0x10] sm:$0xf]
        %v421 = vld [vmem:[%s414 + $0x14] sm:$0xf]
        %v422 = vld [vmem:[%s414 + $0x18] sm:$0xf]
        %v423 = vld [vmem:[%s414 + $0x1c] sm:$0xf]
        %v424 = vld [vmem:[%s414 + $0x20] sm:$0xf]
        %v425 = vld [vmem:[%s414 + $0x24] sm:$0xf]
        %v426 = vld [vmem:[%s414 + $0x28] sm:$0xf]
        %v427 = vld [vmem:[%s414 + $0x2c] sm:$0xf]
        %v428 = vld [vmem:[%s414 + $0x30] sm:$0xf]
        %v429 = vld [vmem:[%s414 + $0x34] sm:$0xf]
        %v430 = vld [vmem:[%s414 + $0x38] sm:$0xf]
        %v431 = vld [vmem:[%s414 + $0x3c] sm:$0xf]
        %v432 = vld [vmem:[%s414 + $0x40] sm:$0xf]
        %v433 = vld [vmem:[%s414 + $0x44] sm:$0xf]
        %v434 = vld [vmem:[%s414 + $0x48] sm:$0xf]
        %v435 = vld [vmem:[%s414 + $0x4c] sm:$0xf]
        %v436 = vld [vmem:[%s414 + $0x50] sm:$0xf]
        %v437 = vld [vmem:[%s414 + $0x54] sm:$0xf]
        %v438 = vld [vmem:[%s414 + $0x58] sm:$0xf]
        %v439 = vld [vmem:[%s414 + $0x5c] sm:$0xf]
        %v440 = vld [vmem:[%s414 + $0x60] sm:$0xf]
        %v441 = vld [vmem:[%s414 + $0x64] sm:$0xf]
        %v442 = vld [vmem:[%s414 + $0x68] sm:$0xf]
        %v443 = vld [vmem:[%s414 + $0x6c] sm:$0xf]
        %v444 = vld [vmem:[%s414 + $0x70] sm:$0xf]
        %v445 = vld [vmem:[%s414 + $0x74] sm:$0xf]
        %v446 = vld [vmem:[%s414 + $0x78] sm:$0xf]
        %v447 = vld [vmem:[%s414 + $0x7c] sm:$0xf]
        %v448 = vld [vmem:[%s414 + $0x80] sm:$0xf]
        %v449 = vld [vmem:[%s414 + $0x84] sm:$0xf]
        %v450 = vld [vmem:[%s414 + $0x88] sm:$0xf]
        %v451 = vld [vmem:[%s414 + $0x8c] sm:$0xf]
        %v452 = vld [vmem:[%s414 + $0x90] sm:$0xf]
        %v453 = vld [vmem:[%s414 + $0x94] sm:$0xf]
        %v454 = vld [vmem:[%s414 + $0x98] sm:$0xf]
        %v455 = vld [vmem:[%s414 + $0x9c] sm:$0xf]
        %v456 = vld [vmem:[#allocation6] sm:$0xf]
        %v457 = vld [vmem:[#allocation6 + $0x4] sm:$0xf]
        %v458 = vld [vmem:[#allocation6 + $0x8] sm:$0xf]
        %v459 = vld [vmem:[#allocation6 + $0xc] sm:$0xf]
        %v460 = vld [vmem:[#allocation6 + $0x10] sm:$0xf]
        %v461 = vld [vmem:[#allocation6 + $0x14] sm:$0xf]
        %v462 = vld [vmem:[#allocation6 + $0x18] sm:$0xf]
        %v463 = vld [vmem:[#allocation6 + $0x1c] sm:$0xf]
        %v464 = vld [vmem:[#allocation6 + $0x20] sm:$0xf]
        %v465 = vld [vmem:[#allocation6 + $0x24] sm:$0xf]
        %v466 = vld [vmem:[#allocation6 + $0x28] sm:$0xf]
        %v467 = vld [vmem:[#allocation6 + $0x2c] sm:$0xf]
        %v468 = vld [vmem:[#allocation6 + $0x30] sm:$0xf]
        %v469 = vld [vmem:[#allocation6 + $0x34] sm:$0xf]
        %v470 = vld [vmem:[#allocation6 + $0x38] sm:$0xf]
        %v471 = vld [vmem:[#allocation6 + $0x3c] sm:$0xf]
        %v472 = vld [vmem:[%s4] sm:$0x1]
        %v473 = vld [vmem:[%s2] sm:$0xff]
        %v474 = vld [vmem:[%s2 + $0x8] sm:$0xff]
        %v475 = vld [vmem:[%s2 + $0x10] sm:$0xff]
        %v476 = vld [vmem:[%s2 + $0x18] sm:$0xff]
        %v477 = vld [vmem:[%s2 + $0x20] sm:$0xff]
        %v478 = vld [vmem:[%s2 + $0x28] sm:$0xff]
        %v479 = vld [vmem:[%s2 + $0x30] sm:$0xff]
        %v480 = vld [vmem:[%s2 + $0x38] sm:$0xff]
        %v481 = vld [vmem:[%s2 + $0x40] sm:$0xff]
        %v482 = vld [vmem:[%s2 + $0x48] sm:$0xff]
        %v483 = vld [vmem:[%s2 + $0x50] sm:$0xff]
        %v484 = vld [vmem:[%s2 + $0x58] sm:$0xff]
        %v485 = vld [vmem:[%s2 + $0x60] sm:$0xff]
        %v486 = vld [vmem:[%s2 + $0x68] sm:$0xff]
        %v487 = vld [vmem:[%s2 + $0x70] sm:$0xff]
        %v488 = vld [vmem:[%s2 + $0x78] sm:$0xff]
        %v489 = vld [vmem:[%s2 + $0x80] sm:$0xff]
        %v490 = vld [vmem:[%s2 + $0x88] sm:$0xff]
        %v491 = vld [vmem:[%s2 + $0x90] sm:$0xff]
        %v492 = vld [vmem:[%s2 + $0x98] sm:$0xff]
        %v493 = vld [vmem:[%s2 + $0xa0] sm:$0xff]
        %v494 = vld [vmem:[%s2 + $0xa8] sm:$0xff]
        %v495 = vld [vmem:[%s2 + $0xb0] sm:$0xff]
        %v496 = vld [vmem:[%s2 + $0xb8] sm:$0xff]
        %v497 = vld [vmem:[%s2 + $0xc0] sm:$0xff]
        %v498 = vld [vmem:[%s2 + $0xc8] sm:$0xff]
        %v499 = vld [vmem:[%s2 + $0xd0] sm:$0xff]
        %v500 = vld [vmem:[%s2 + $0xd8] sm:$0xff]
        %v501 = vld [vmem:[%s2 + $0xe0] sm:$0xff]
        %v502 = vld [vmem:[%s2 + $0xe8] sm:$0xff]
        %v503 = vld [vmem:[%s2 + $0xf0] sm:$0xff]
        %v504 = vld [vmem:[%s2 + $0xf8] sm:$0xff]
        %v505 = vld [vmem:[%s2 + $0x100] sm:$0xff]
        %v506 = vld [vmem:[%s2 + $0x108] sm:$0xff]
        %v507 = vld [vmem:[%s2 + $0x110] sm:$0xff]
        %v508 = vld [vmem:[%s2 + $0x118] sm:$0xff]
        %v509 = vld [vmem:[%s2 + $0x120] sm:$0xff]
        %v510 = vld [vmem:[%s2 + $0x128] sm:$0xff]
        %v511 = vld [vmem:[%s2 + $0x130] sm:$0xff]
        %v512 = vld [vmem:[%s2 + $0x138] sm:$0xff]
        %v514 = vlaneseq
        %v515 = vshrl.u32 %v514, 7
        %v516 = vsub.s32 0, %v515
        %v517 = vrot.slane %v472, %v516
        %520 = vset.pattern.permute.xlu0 0
        %521 = vperm.xlu0 %520, %v473
        %v522 = vpop.permute.xlu0 %521
        %525 = vset.pattern.permute.xlu0 0
        %526 = vperm.xlu0 %525, %v474
        %v527 = vpop.permute.xlu0 %526
        %530 = vset.pattern.permute.xlu0 0
        %531 = vperm.xlu0 %530, %v475
        %v532 = vpop.permute.xlu0 %531
        %535 = vset.pattern.permute.xlu0 0
        %536 = vperm.xlu0 %535, %v476
        %v537 = vpop.permute.xlu0 %536
        %540 = vset.pattern.permute.xlu0 0
        %541 = vperm.xlu0 %540, %v477
        %v542 = vpop.permute.xlu0 %541
        %545 = vset.pattern.permute.xlu0 0
        %546 = vperm.xlu0 %545, %v478
        %v547 = vpop.permute.xlu0 %546
        %550 = vset.pattern.permute.xlu0 0
        %551 = vperm.xlu0 %550, %v479
        %v552 = vpop.permute.xlu0 %551
        %555 = vset.pattern.permute.xlu0 0
        %556 = vperm.xlu0 %555, %v480
        %v557 = vpop.permute.xlu0 %556
        %560 = vset.pattern.permute.xlu0 0
        %561 = vperm.xlu0 %560, %v481
        %v562 = vpop.permute.xlu0 %561
        %565 = vset.pattern.permute.xlu0 0
        %566 = vperm.xlu0 %565, %v482
        %v567 = vpop.permute.xlu0 %566
        %570 = vset.pattern.permute.xlu0 0
        %571 = vperm.xlu0 %570, %v483
        %v572 = vpop.permute.xlu0 %571
        %575 = vset.pattern.permute.xlu0 0
        %576 = vperm.xlu0 %575, %v484
        %v577 = vpop.permute.xlu0 %576
        %580 = vset.pattern.permute.xlu0 0
        %581 = vperm.xlu0 %580, %v485
        %v582 = vpop.permute.xlu0 %581
        %585 = vset.pattern.permute.xlu0 0
        %586 = vperm.xlu0 %585, %v486
        %v587 = vpop.permute.xlu0 %586
        %590 = vset.pattern.permute.xlu0 0
        %591 = vperm.xlu0 %590, %v487
        %v592 = vpop.permute.xlu0 %591
        %595 = vset.pattern.permute.xlu0 0
        %596 = vperm.xlu0 %595, %v488
        %v597 = vpop.permute.xlu0 %596
        %600 = vset.pattern.permute.xlu0 0
        %601 = vperm.xlu0 %600, %v489
        %v602 = vpop.permute.xlu0 %601
        %605 = vset.pattern.permute.xlu0 0
        %606 = vperm.xlu0 %605, %v490
        %v607 = vpop.permute.xlu0 %606
        %610 = vset.pattern.permute.xlu0 0
        %611 = vperm.xlu0 %610, %v491
        %v612 = vpop.permute.xlu0 %611
        %615 = vset.pattern.permute.xlu0 0
        %616 = vperm.xlu0 %615, %v492
        %v617 = vpop.permute.xlu0 %616
        %620 = vset.pattern.permute.xlu0 0
        %621 = vperm.xlu0 %620, %v493
        %v622 = vpop.permute.xlu0 %621
        %625 = vset.pattern.permute.xlu0 0
        %626 = vperm.xlu0 %625, %v494
        %v627 = vpop.permute.xlu0 %626
        %630 = vset.pattern.permute.xlu0 0
        %631 = vperm.xlu0 %630, %v495
        %v632 = vpop.permute.xlu0 %631
        %635 = vset.pattern.permute.xlu0 0
        %636 = vperm.xlu0 %635, %v496
        %v637 = vpop.permute.xlu0 %636
        %640 = vset.pattern.permute.xlu0 0
        %641 = vperm.xlu0 %640, %v497
        %v642 = vpop.permute.xlu0 %641
        %645 = vset.pattern.permute.xlu0 0
        %646 = vperm.xlu0 %645, %v498
        %v647 = vpop.permute.xlu0 %646
        %650 = vset.pattern.permute.xlu0 0
        %651 = vperm.xlu0 %650, %v499
        %v652 = vpop.permute.xlu0 %651
        %655 = vset.pattern.permute.xlu0 0
        %656 = vperm.xlu0 %655, %v500
        %v657 = vpop.permute.xlu0 %656
        %660 = vset.pattern.permute.xlu0 0
        %661 = vperm.xlu0 %660, %v501
        %v662 = vpop.permute.xlu0 %661
        %665 = vset.pattern.permute.xlu0 0
        %666 = vperm.xlu0 %665, %v502
        %v667 = vpop.permute.xlu0 %666
        %670 = vset.pattern.permute.xlu0 0
        %671 = vperm.xlu0 %670, %v503
        %v672 = vpop.permute.xlu0 %671
        %675 = vset.pattern.permute.xlu0 0
        %676 = vperm.xlu0 %675, %v504
        %v677 = vpop.permute.xlu0 %676
        %680 = vset.pattern.permute.xlu0 0
        %681 = vperm.xlu0 %680, %v505
        %v682 = vpop.permute.xlu0 %681
        %685 = vset.pattern.permute.xlu0 0
        %686 = vperm.xlu0 %685, %v506
        %v687 = vpop.permute.xlu0 %686
        %690 = vset.pattern.permute.xlu0 0
        %691 = vperm.xlu0 %690, %v507
        %v692 = vpop.permute.xlu0 %691
        %695 = vset.pattern.permute.xlu0 0
        %696 = vperm.xlu0 %695, %v508
        %v697 = vpop.permute.xlu0 %696
        %700 = vset.pattern.permute.xlu0 0
        %701 = vperm.xlu0 %700, %v509
        %v702 = vpop.permute.xlu0 %701
        %705 = vset.pattern.permute.xlu0 0
        %706 = vperm.xlu0 %705, %v510
        %v707 = vpop.permute.xlu0 %706
        %710 = vset.pattern.permute.xlu0 0
        %711 = vperm.xlu0 %710, %v511
        %v712 = vpop.permute.xlu0 %711
        %715 = vset.pattern.permute.xlu0 0
        %716 = vperm.xlu0 %715, %v512
        %v717 = vpop.permute.xlu0 %716
        %v719 = vmul.f32 %v517, %v522
        %v720 = vmul.f32 %v517, %v527
        %v721 = vmul.f32 %v517, %v532
        %v722 = vmul.f32 %v517, %v537
        %v723 = vmul.f32 %v517, %v542
        %v724 = vmul.f32 %v517, %v547
        %v725 = vmul.f32 %v517, %v552
        %v726 = vmul.f32 %v517, %v557
        %v727 = vmul.f32 %v517, %v562
        %v728 = vmul.f32 %v517, %v567
        %v729 = vmul.f32 %v517, %v572
        %v730 = vmul.f32 %v517, %v577
        %v731 = vmul.f32 %v517, %v582
        %v732 = vmul.f32 %v517, %v587
        %v733 = vmul.f32 %v517, %v592
        %v734 = vmul.f32 %v517, %v597
        %v735 = vmul.f32 %v517, %v602
        %v736 = vmul.f32 %v517, %v607
        %v737 = vmul.f32 %v517, %v612
        %v738 = vmul.f32 %v517, %v617
        %v739 = vmul.f32 %v517, %v622
        %v740 = vmul.f32 %v517, %v627
        %v741 = vmul.f32 %v517, %v632
        %v742 = vmul.f32 %v517, %v637
        %v743 = vmul.f32 %v517, %v642
        %v744 = vmul.f32 %v517, %v647
        %v745 = vmul.f32 %v517, %v652
        %v746 = vmul.f32 %v517, %v657
        %v747 = vmul.f32 %v517, %v662
        %v748 = vmul.f32 %v517, %v667
        %v749 = vmul.f32 %v517, %v672
        %v750 = vmul.f32 %v517, %v677
        %v751 = vmul.f32 %v517, %v682
        %v752 = vmul.f32 %v517, %v687
        %v753 = vmul.f32 %v517, %v692
        %v754 = vmul.f32 %v517, %v697
        %v755 = vmul.f32 %v517, %v702
        %v756 = vmul.f32 %v517, %v707
        %v757 = vmul.f32 %v517, %v712
        %v758 = vmul.f32 %v517, %v717
        %v799 = vunpack.c.l.b16 %v416
        %v800 = vunpack.c.l.b16 %v417
        %v801 = vunpack.c.l.b16 %v418
        %v802 = vunpack.c.l.b16 %v419
        %v803 = vunpack.c.l.b16 %v420
        %v804 = vunpack.c.l.b16 %v421
        %v805 = vunpack.c.l.b16 %v422
        %v806 = vunpack.c.l.b16 %v423
        %v807 = vunpack.c.l.b16 %v424
        %v808 = vunpack.c.l.b16 %v425
        %v809 = vunpack.c.l.b16 %v426
        %v810 = vunpack.c.l.b16 %v427
        %v811 = vunpack.c.l.b16 %v428
        %v812 = vunpack.c.l.b16 %v429
        %v813 = vunpack.c.l.b16 %v430
        %v814 = vunpack.c.l.b16 %v431
        %v815 = vunpack.c.l.b16 %v432
        %v816 = vunpack.c.l.b16 %v433
        %v817 = vunpack.c.l.b16 %v434
        %v818 = vunpack.c.l.b16 %v435
        %v819 = vunpack.c.l.b16 %v436
        %v820 = vunpack.c.l.b16 %v437
        %v821 = vunpack.c.l.b16 %v438
        %v822 = vunpack.c.l.b16 %v439
        %v823 = vunpack.c.l.b16 %v440
        %v824 = vunpack.c.l.b16 %v441
        %v825 = vunpack.c.l.b16 %v442
        %v826 = vunpack.c.l.b16 %v443
        %v827 = vunpack.c.l.b16 %v444
        %v828 = vunpack.c.l.b16 %v445
        %v829 = vunpack.c.l.b16 %v446
        %v830 = vunpack.c.l.b16 %v447
        %v831 = vunpack.c.l.b16 %v448
        %v832 = vunpack.c.l.b16 %v449
        %v833 = vunpack.c.l.b16 %v450
        %v834 = vunpack.c.l.b16 %v451
        %v835 = vunpack.c.l.b16 %v452
        %v836 = vunpack.c.l.b16 %v453
        %v837 = vunpack.c.l.b16 %v454
        %v838 = vunpack.c.l.b16 %v455
        %v839 = vpack.c.b16 %v800, %v799
        %v840 = vpack.c.b16 %v802, %v801
        %v841 = vpack.c.b16 %v804, %v803
        %v842 = vpack.c.b16 %v806, %v805
        %v843 = vpack.c.b16 %v808, %v807
        %v844 = vpack.c.b16 %v810, %v809
        %v845 = vpack.c.b16 %v812, %v811
        %v846 = vpack.c.b16 %v814, %v813
        %v847 = vpack.c.b16 %v816, %v815
        %v848 = vpack.c.b16 %v818, %v817
        %v849 = vpack.c.b16 %v820, %v819
        %v850 = vpack.c.b16 %v822, %v821
        %v851 = vpack.c.b16 %v824, %v823
        %v852 = vpack.c.b16 %v826, %v825
        %v853 = vpack.c.b16 %v828, %v827
        %v854 = vpack.c.b16 %v830, %v829
        %v855 = vpack.c.b16 %v832, %v831
        %v856 = vpack.c.b16 %v834, %v833
        %v857 = vpack.c.b16 %v836, %v835
        %v858 = vpack.c.b16 %v838, %v837
        %v895 = vunpack.c.l.b16 %v456
        %v896 = vunpack.c.l.b16 %v457
        %v897 = vunpack.c.l.b16 %v458
        %v898 = vunpack.c.l.b16 %v459
        %v899 = vunpack.c.l.b16 %v460
        %v900 = vunpack.c.l.b16 %v461
        %v901 = vunpack.c.l.b16 %v462
        %v902 = vunpack.c.l.b16 %v463
        %v903 = vunpack.c.l.b16 %v464
        %v904 = vunpack.c.l.b16 %v465
        %v905 = vunpack.c.l.b16 %v466
        %v906 = vunpack.c.l.b16 %v467
        %v907 = vunpack.c.l.b16 %v468
        %v908 = vunpack.c.l.b16 %v469
        %v909 = vunpack.c.l.b16 %v470
        %v910 = vunpack.c.l.b16 %v471
        %v911 = vpack.c.b16 %v896, %v895
        %v912 = vpack.c.b16 %v898, %v897
        %v913 = vpack.c.b16 %v900, %v899
        %v914 = vpack.c.b16 %v902, %v901
        %v915 = vpack.c.b16 %v904, %v903
        %v916 = vpack.c.b16 %v906, %v905
        %v917 = vpack.c.b16 %v908, %v907
        %v918 = vpack.c.b16 %v910, %v909
        %927 = vmatprep.subr.bf16.mxu0 0
        %928 = vmatpush1.bf16.msra.mxu0 %v918
        %929 = vmatprep.subr.bf16.mxu0 0
        %930 = vmatpush1.bf16.msra.mxu0 %v917
        %931 = vmatprep.subr.bf16.mxu0 0
        %932 = vmatpush1.bf16.msra.mxu0 %v916
        %933 = vmatprep.subr.bf16.mxu0 0
        %934 = vmatpush1.bf16.msra.mxu0 %v915
        %935 = vmatprep.subr.bf16.mxu0 0
        %936 = vmatpush1.bf16.msra.mxu0 %v914
        %937 = vmatprep.subr.bf16.mxu0 0
        %938 = vmatpush1.bf16.msra.mxu0 %v913
        %939 = vmatprep.subr.bf16.mxu0 0
        %940 = vmatpush1.bf16.msra.mxu0 %v912
        %941 = vmatprep.subr.bf16.mxu0 0
        %942 = vmatpush1.bf16.msra.mxu0 %v911
        %943 = vmatprep.subr.bf16.mxu0 0
        %944 = vmatpush2.bf16.msra.mxu0 0
        %945 = vmatprep.subr.bf16.mxu0 0
        %946 = vmatpush2.bf16.msra.mxu0 0
        %947 = vmatprep.subr.bf16.mxu0 0
        %948 = vmatpush2.bf16.msra.mxu0 0
        %949 = vmatprep.subr.bf16.mxu0 0
        %950 = vmatpush2.bf16.msra.mxu0 0
        %951 = vmatprep.subr.bf16.mxu0 0
        %952 = vmatpush2.bf16.msra.mxu0 0
        %953 = vmatprep.subr.bf16.mxu0 0
        %954 = vmatpush2.bf16.msra.mxu0 0
        %955 = vmatprep.subr.bf16.mxu0 0
        %956 = vmatpush2.bf16.msra.mxu0 0
        %957 = vmatprep.subr.bf16.mxu0 0
        %958 = vmatpush2.bf16.msra.mxu0 0
        %959 = vmatprep.mubr.bf16.mxu0 0
        %960 = vmatmul.mubr.bf16.gmra.mxu0 %v839
        %v961 = vpop.f32.mrf.mxu0
        %v962 = vadd.f32 %v719, %v961
        %v963 = vpop.f32.mrf.mxu0
        %v964 = vpop.f32.mrf.mxu0
        %v965 = vadd.f32 %v720, %v964
        %v966 = vpop.f32.mrf.mxu0
        %967 = vmatprep.mubr.bf16.mxu0 0
        %968 = vmatmul.mubr.bf16.gmra.mxu0 %v840
        %v969 = vpop.f32.mrf.mxu0
        %v970 = vadd.f32 %v721, %v969
        %v971 = vpop.f32.mrf.mxu0
        %v972 = vpop.f32.mrf.mxu0
        %v973 = vadd.f32 %v722, %v972
        %v974 = vpop.f32.mrf.mxu0
        %975 = vmatprep.mubr.bf16.mxu0 0
        %976 = vmatmul.mubr.bf16.gmra.mxu0 %v841
        %v977 = vpop.f32.mrf.mxu0
        %v978 = vadd.f32 %v723, %v977
        %v979 = vpop.f32.mrf.mxu0
        %v980 = vpop.f32.mrf.mxu0
        %v981 = vadd.f32 %v724, %v980
        %v982 = vpop.f32.mrf.mxu0
        %983 = vmatprep.mubr.bf16.mxu0 0
        %984 = vmatmul.mubr.bf16.gmra.mxu0 %v842
        %v985 = vpop.f32.mrf.mxu0
        %v986 = vadd.f32 %v725, %v985
        %v987 = vpop.f32.mrf.mxu0
        %v988 = vpop.f32.mrf.mxu0
        %v989 = vadd.f32 %v726, %v988
        %v990 = vpop.f32.mrf.mxu0
        %991 = vmatprep.mubr.bf16.mxu0 0
        %992 = vmatmul.mubr.bf16.gmra.mxu0 %v843
        %v993 = vpop.f32.mrf.mxu0
        %v994 = vadd.f32 %v727, %v993
        %v995 = vpop.f32.mrf.mxu0
        %v996 = vpop.f32.mrf.mxu0
        %v997 = vadd.f32 %v728, %v996
        %v998 = vpop.f32.mrf.mxu0
        %999 = vmatprep.mubr.bf16.mxu0 0
        %1000 = vmatmul.mubr.bf16.gmra.mxu0 %v844
        %v1001 = vpop.f32.mrf.mxu0
        %v1002 = vadd.f32 %v729, %v1001
        %v1003 = vpop.f32.mrf.mxu0
        %v1004 = vpop.f32.mrf.mxu0
        %v1005 = vadd.f32 %v730, %v1004
        %v1006 = vpop.f32.mrf.mxu0
        %1007 = vmatprep.mubr.bf16.mxu0 0
        %1008 = vmatmul.mubr.bf16.gmra.mxu0 %v845
        %v1009 = vpop.f32.mrf.mxu0
        %v1010 = vadd.f32 %v731, %v1009
        %v1011 = vpop.f32.mrf.mxu0
        %v1012 = vpop.f32.mrf.mxu0
        %v1013 = vadd.f32 %v732, %v1012
        %v1014 = vpop.f32.mrf.mxu0
        %1015 = vmatprep.mubr.bf16.mxu0 0
        %1016 = vmatmul.mubr.bf16.gmra.mxu0 %v846
        %v1017 = vpop.f32.mrf.mxu0
        %v1018 = vadd.f32 %v733, %v1017
        %v1019 = vpop.f32.mrf.mxu0
        %v1020 = vpop.f32.mrf.mxu0
        %v1021 = vadd.f32 %v734, %v1020
        %v1022 = vpop.f32.mrf.mxu0
        %1023 = vmatprep.mubr.bf16.mxu0 0
        %1024 = vmatmul.mubr.bf16.gmra.mxu0 %v847
        %v1025 = vpop.f32.mrf.mxu0
        %v1026 = vadd.f32 %v735, %v1025
        %v1027 = vpop.f32.mrf.mxu0
        %v1028 = vpop.f32.mrf.mxu0
        %v1029 = vadd.f32 %v736, %v1028
        %v1030 = vpop.f32.mrf.mxu0
        %1031 = vmatprep.mubr.bf16.mxu0 0
        %1032 = vmatmul.mubr.bf16.gmra.mxu0 %v848
        %v1033 = vpop.f32.mrf.mxu0
        %v1034 = vadd.f32 %v737, %v1033
        %v1035 = vpop.f32.mrf.mxu0
        %v1036 = vpop.f32.mrf.mxu0
        %v1037 = vadd.f32 %v738, %v1036
        %v1038 = vpop.f32.mrf.mxu0
        %1039 = vmatprep.mubr.bf16.mxu0 0
        %1040 = vmatmul.mubr.bf16.gmra.mxu0 %v849
        %v1041 = vpop.f32.mrf.mxu0
        %v1042 = vadd.f32 %v739, %v1041
        %v1043 = vpop.f32.mrf.mxu0
        %v1044 = vpop.f32.mrf.mxu0
        %v1045 = vadd.f32 %v740, %v1044
        %v1046 = vpop.f32.mrf.mxu0
        %1047 = vmatprep.mubr.bf16.mxu0 0
        %1048 = vmatmul.mubr.bf16.gmra.mxu0 %v850
        %v1049 = vpop.f32.mrf.mxu0
        %v1050 = vadd.f32 %v741, %v1049
        %v1051 = vpop.f32.mrf.mxu0
        %v1052 = vpop.f32.mrf.mxu0
        %v1053 = vadd.f32 %v742, %v1052
        %v1054 = vpop.f32.mrf.mxu0
        %1055 = vmatprep.mubr.bf16.mxu0 0
        %1056 = vmatmul.mubr.bf16.gmra.mxu0 %v851
        %v1057 = vpop.f32.mrf.mxu0
        %v1058 = vadd.f32 %v743, %v1057
        %v1059 = vpop.f32.mrf.mxu0
        %v1060 = vpop.f32.mrf.mxu0
        %v1061 = vadd.f32 %v744, %v1060
        %v1062 = vpop.f32.mrf.mxu0
        %1063 = vmatprep.mubr.bf16.mxu0 0
        %1064 = vmatmul.mubr.bf16.gmra.mxu0 %v852
        %v1065 = vpop.f32.mrf.mxu0
        %v1066 = vadd.f32 %v745, %v1065
        %v1067 = vpop.f32.mrf.mxu0
        %v1068 = vpop.f32.mrf.mxu0
        %v1069 = vadd.f32 %v746, %v1068
        %v1070 = vpop.f32.mrf.mxu0
        %1071 = vmatprep.mubr.bf16.mxu0 0
        %1072 = vmatmul.mubr.bf16.gmra.mxu0 %v853
        %v1073 = vpop.f32.mrf.mxu0
        %v1074 = vadd.f32 %v747, %v1073
        %v1075 = vpop.f32.mrf.mxu0
        %v1076 = vpop.f32.mrf.mxu0
        %v1077 = vadd.f32 %v748, %v1076
        %v1078 = vpop.f32.mrf.mxu0
        %1079 = vmatprep.mubr.bf16.mxu0 0
        %1080 = vmatmul.mubr.bf16.gmra.mxu0 %v854
        %v1081 = vpop.f32.mrf.mxu0
        %v1082 = vadd.f32 %v749, %v1081
        %v1083 = vpop.f32.mrf.mxu0
        %v1084 = vpop.f32.mrf.mxu0
        %v1085 = vadd.f32 %v750, %v1084
        %v1086 = vpop.f32.mrf.mxu0
        %1087 = vmatprep.mubr.bf16.mxu0 0
        %1088 = vmatmul.mubr.bf16.gmra.mxu0 %v855
        %v1089 = vpop.f32.mrf.mxu0
        %v1090 = vadd.f32 %v751, %v1089
        %v1091 = vpop.f32.mrf.mxu0
        %v1092 = vpop.f32.mrf.mxu0
        %v1093 = vadd.f32 %v752, %v1092
        %v1094 = vpop.f32.mrf.mxu0
        %1095 = vmatprep.mubr.bf16.mxu0 0
        %1096 = vmatmul.mubr.bf16.gmra.mxu0 %v856
        %v1097 = vpop.f32.mrf.mxu0
        %v1098 = vadd.f32 %v753, %v1097
        %v1099 = vpop.f32.mrf.mxu0
        %v1100 = vpop.f32.mrf.mxu0
        %v1101 = vadd.f32 %v754, %v1100
        %v1102 = vpop.f32.mrf.mxu0
        %1103 = vmatprep.mubr.bf16.mxu0 0
        %1104 = vmatmul.mubr.bf16.gmra.mxu0 %v857
        %v1105 = vpop.f32.mrf.mxu0
        %v1106 = vadd.f32 %v755, %v1105
        %v1107 = vpop.f32.mrf.mxu0
        %v1108 = vpop.f32.mrf.mxu0
        %v1109 = vadd.f32 %v756, %v1108
        %v1110 = vpop.f32.mrf.mxu0
        %1111 = vmatprep.mubr.bf16.mxu0 0
        %1112 = vmatmul.mubr.bf16.gmra.mxu0 %v858
        %v1113 = vpop.f32.mrf.mxu0
        %v1114 = vadd.f32 %v757, %v1113
        %v1115 = vpop.f32.mrf.mxu0
        %v1116 = vpop.f32.mrf.mxu0
        %v1117 = vadd.f32 %v758, %v1116
        %v1118 = vpop.f32.mrf.mxu0
        %1119 = vdwg.mxu0
        %v1120 = vmax.f32 %v962, 0.0
        %v1121 = vmax.f32 %v965, 0.0
        %v1122 = vmax.f32 %v970, 0.0
        %v1123 = vmax.f32 %v973, 0.0
        %v1124 = vmax.f32 %v978, 0.0
        %v1125 = vmax.f32 %v981, 0.0
        %v1126 = vmax.f32 %v986, 0.0
        %v1127 = vmax.f32 %v989, 0.0
        %v1128 = vmax.f32 %v994, 0.0
        %v1129 = vmax.f32 %v997, 0.0
        %v1130 = vmax.f32 %v1002, 0.0
        %v1131 = vmax.f32 %v1005, 0.0
        %v1132 = vmax.f32 %v1010, 0.0
        %v1133 = vmax.f32 %v1013, 0.0
        %v1134 = vmax.f32 %v1018, 0.0
        %v1135 = vmax.f32 %v1021, 0.0
        %v1136 = vmax.f32 %v1026, 0.0
        %v1137 = vmax.f32 %v1029, 0.0
        %v1138 = vmax.f32 %v1034, 0.0
        %v1139 = vmax.f32 %v1037, 0.0
        %v1140 = vmax.f32 %v1042, 0.0
        %v1141 = vmax.f32 %v1045, 0.0
        %v1142 = vmax.f32 %v1050, 0.0
        %v1143 = vmax.f32 %v1053, 0.0
        %v1144 = vmax.f32 %v1058, 0.0
        %v1145 = vmax.f32 %v1061, 0.0
        %v1146 = vmax.f32 %v1066, 0.0
        %v1147 = vmax.f32 %v1069, 0.0
        %v1148 = vmax.f32 %v1074, 0.0
        %v1149 = vmax.f32 %v1077, 0.0
        %v1150 = vmax.f32 %v1082, 0.0
        %v1151 = vmax.f32 %v1085, 0.0
        %v1152 = vmax.f32 %v1090, 0.0
        %v1153 = vmax.f32 %v1093, 0.0
        %v1154 = vmax.f32 %v1098, 0.0
        %v1155 = vmax.f32 %v1101, 0.0
        %v1156 = vmax.f32 %v1106, 0.0
        %v1157 = vmax.f32 %v1109, 0.0
        %v1158 = vmax.f32 %v1114, 0.0
        %v1159 = vmax.f32 %v1117, 0.0
        %v1160 = vpack.c.bf16 %v1121, %v1120
        %v1161 = vpack.c.bf16 %v1123, %v1122
        %v1162 = vpack.c.bf16 %v1125, %v1124
        %v1163 = vpack.c.bf16 %v1127, %v1126
        %v1164 = vpack.c.bf16 %v1129, %v1128
        %v1165 = vpack.c.bf16 %v1131, %v1130
        %v1166 = vpack.c.bf16 %v1133, %v1132
        %v1167 = vpack.c.bf16 %v1135, %v1134
        %v1168 = vpack.c.bf16 %v1137, %v1136
        %v1169 = vpack.c.bf16 %v1139, %v1138
        %v1170 = vpack.c.bf16 %v1141, %v1140
        %v1171 = vpack.c.bf16 %v1143, %v1142
        %v1172 = vpack.c.bf16 %v1145, %v1144
        %v1173 = vpack.c.bf16 %v1147, %v1146
        %v1174 = vpack.c.bf16 %v1149, %v1148
        %v1175 = vpack.c.bf16 %v1151, %v1150
        %v1176 = vpack.c.bf16 %v1153, %v1152
        %v1177 = vpack.c.bf16 %v1155, %v1154
        %v1178 = vpack.c.bf16 %v1157, %v1156
        %v1179 = vpack.c.bf16 %v1159, %v1158
        %v1180 = vld [vmem:[#allocation8] sm:$0xf]
        %v1181 = vld [vmem:[#allocation8 + $0x4] sm:$0xf]
        %v1182 = vld [vmem:[#allocation8 + $0x8] sm:$0xf]
        %v1183 = vld [vmem:[#allocation8 + $0xc] sm:$0xf]
        %v1184 = vld [vmem:[#allocation8 + $0x10] sm:$0xf]
        %v1185 = vld [vmem:[#allocation8 + $0x14] sm:$0xf]
        %v1186 = vld [vmem:[#allocation8 + $0x18] sm:$0xf]
        %v1187 = vld [vmem:[#allocation8 + $0x1c] sm:$0xf]
        %v1188 = vld [vmem:[#allocation8 + $0x20] sm:$0xf]
        %v1189 = vld [vmem:[#allocation8 + $0x24] sm:$0xf]
        %v1190 = vld [vmem:[#allocation8 + $0x28] sm:$0xf]
        %v1191 = vld [vmem:[#allocation8 + $0x2c] sm:$0xf]
        %v1192 = vld [vmem:[#allocation8 + $0x30] sm:$0xf]
        %v1193 = vld [vmem:[#allocation8 + $0x34] sm:$0xf]
        %v1194 = vld [vmem:[#allocation8 + $0x38] sm:$0xf]
        %v1195 = vld [vmem:[#allocation8 + $0x3c] sm:$0xf]
        %v1212 = vunpack.c.l.b16 %v1180
        %v1213 = vunpack.c.l.b16 %v1181
        %v1214 = vunpack.c.l.b16 %v1182
        %v1215 = vunpack.c.l.b16 %v1183
        %v1216 = vunpack.c.l.b16 %v1184
        %v1217 = vunpack.c.l.b16 %v1185
        %v1218 = vunpack.c.l.b16 %v1186
        %v1219 = vunpack.c.l.b16 %v1187
        %v1220 = vunpack.c.l.b16 %v1188
        %v1221 = vunpack.c.l.b16 %v1189
        %v1222 = vunpack.c.l.b16 %v1190
        %v1223 = vunpack.c.l.b16 %v1191
        %v1224 = vunpack.c.l.b16 %v1192
        %v1225 = vunpack.c.l.b16 %v1193
        %v1226 = vunpack.c.l.b16 %v1194
        %v1227 = vunpack.c.l.b16 %v1195
        %v1228 = vpack.c.b16 %v1213, %v1212
        %v1229 = vpack.c.b16 %v1215, %v1214
        %v1230 = vpack.c.b16 %v1217, %v1216
        %v1231 = vpack.c.b16 %v1219, %v1218
        %v1232 = vpack.c.b16 %v1221, %v1220
        %v1233 = vpack.c.b16 %v1223, %v1222
        %v1234 = vpack.c.b16 %v1225, %v1224
        %v1235 = vpack.c.b16 %v1227, %v1226
        %1244 = vmatprep.subr.bf16.mxu0 0
        %1245 = vmatpush1.bf16.msra.mxu0 %v1235
        %1246 = vmatprep.subr.bf16.mxu0 0
        %1247 = vmatpush1.bf16.msra.mxu0 %v1234
        %1248 = vmatprep.subr.bf16.mxu0 0
        %1249 = vmatpush1.bf16.msra.mxu0 %v1233
        %1250 = vmatprep.subr.bf16.mxu0 0
        %1251 = vmatpush1.bf16.msra.mxu0 %v1232
        %1252 = vmatprep.subr.bf16.mxu0 0
        %1253 = vmatpush1.bf16.msra.mxu0 %v1231
        %1254 = vmatprep.subr.bf16.mxu0 0
        %1255 = vmatpush1.bf16.msra.mxu0 %v1230
        %1256 = vmatprep.subr.bf16.mxu0 0
        %1257 = vmatpush1.bf16.msra.mxu0 %v1229
        %1258 = vmatprep.subr.bf16.mxu0 0
        %1259 = vmatpush1.bf16.msra.mxu0 %v1228
        %1260 = vmatprep.subr.bf16.mxu0 0
        %1261 = vmatpush2.bf16.msra.mxu0 0
        %1262 = vmatprep.subr.bf16.mxu0 0
        %1263 = vmatpush2.bf16.msra.mxu0 0
        %1264 = vmatprep.subr.bf16.mxu0 0
        %1265 = vmatpush2.bf16.msra.mxu0 0
        %1266 = vmatprep.subr.bf16.mxu0 0
        %1267 = vmatpush2.bf16.msra.mxu0 0
        %1268 = vmatprep.subr.bf16.mxu0 0
        %1269 = vmatpush2.bf16.msra.mxu0 0
        %1270 = vmatprep.subr.bf16.mxu0 0
        %1271 = vmatpush2.bf16.msra.mxu0 0
        %1272 = vmatprep.subr.bf16.mxu0 0
        %1273 = vmatpush2.bf16.msra.mxu0 0
        %1274 = vmatprep.subr.bf16.mxu0 0
        %1275 = vmatpush2.bf16.msra.mxu0 0
        %1276 = vmatprep.mubr.bf16.mxu0 0
        %1277 = vmatmul.mubr.bf16.gmra.mxu0 %v1160
        %v1278 = vpop.f32.mrf.mxu0
        %v1279 = vadd.f32 0.0, %v1278
        %v1280 = vpop.f32.mrf.mxu0
        %v1281 = vpop.f32.mrf.mxu0
        %v1282 = vadd.f32 0.0, %v1281
        %v1283 = vpop.f32.mrf.mxu0
        %1284 = vmatprep.mubr.bf16.mxu0 0
        %1285 = vmatmul.mubr.bf16.gmra.mxu0 %v1161
        %v1286 = vpop.f32.mrf.mxu0
        %v1287 = vadd.f32 0.0, %v1286
        %v1288 = vpop.f32.mrf.mxu0
        %v1289 = vpop.f32.mrf.mxu0
        %v1290 = vadd.f32 0.0, %v1289
        %v1291 = vpop.f32.mrf.mxu0
        %1292 = vmatprep.mubr.bf16.mxu0 0
        %1293 = vmatmul.mubr.bf16.gmra.mxu0 %v1162
        %v1294 = vpop.f32.mrf.mxu0
        %v1295 = vadd.f32 0.0, %v1294
        %v1296 = vpop.f32.mrf.mxu0
        %v1297 = vpop.f32.mrf.mxu0
        %v1298 = vadd.f32 0.0, %v1297
        %v1299 = vpop.f32.mrf.mxu0
        %1300 = vmatprep.mubr.bf16.mxu0 0
        %1301 = vmatmul.mubr.bf16.gmra.mxu0 %v1163
        %v1302 = vpop.f32.mrf.mxu0
        %v1303 = vadd.f32 0.0, %v1302
        %v1304 = vpop.f32.mrf.mxu0
        %v1305 = vpop.f32.mrf.mxu0
        %v1306 = vadd.f32 0.0, %v1305
        %v1307 = vpop.f32.mrf.mxu0
        %1308 = vmatprep.mubr.bf16.mxu0 0
        %1309 = vmatmul.mubr.bf16.gmra.mxu0 %v1164
        %v1310 = vpop.f32.mrf.mxu0
        %v1311 = vadd.f32 0.0, %v1310
        %v1312 = vpop.f32.mrf.mxu0
        %v1313 = vpop.f32.mrf.mxu0
        %v1314 = vadd.f32 0.0, %v1313
        %v1315 = vpop.f32.mrf.mxu0
        %1316 = vmatprep.mubr.bf16.mxu0 0
        %1317 = vmatmul.mubr.bf16.gmra.mxu0 %v1165
        %v1318 = vpop.f32.mrf.mxu0
        %v1319 = vadd.f32 0.0, %v1318
        %v1320 = vpop.f32.mrf.mxu0
        %v1321 = vpop.f32.mrf.mxu0
        %v1322 = vadd.f32 0.0, %v1321
        %v1323 = vpop.f32.mrf.mxu0
        %1324 = vmatprep.mubr.bf16.mxu0 0
        %1325 = vmatmul.mubr.bf16.gmra.mxu0 %v1166
        %v1326 = vpop.f32.mrf.mxu0
        %v1327 = vadd.f32 0.0, %v1326
        %v1328 = vpop.f32.mrf.mxu0
        %v1329 = vpop.f32.mrf.mxu0
        %v1330 = vadd.f32 0.0, %v1329
        %v1331 = vpop.f32.mrf.mxu0
        %1332 = vmatprep.mubr.bf16.mxu0 0
        %1333 = vmatmul.mubr.bf16.gmra.mxu0 %v1167
        %v1334 = vpop.f32.mrf.mxu0
        %v1335 = vadd.f32 0.0, %v1334
        %v1336 = vpop.f32.mrf.mxu0
        %v1337 = vpop.f32.mrf.mxu0
        %v1338 = vadd.f32 0.0, %v1337
        %v1339 = vpop.f32.mrf.mxu0
        %1340 = vmatprep.mubr.bf16.mxu0 0
        %1341 = vmatmul.mubr.bf16.gmra.mxu0 %v1168
        %v1342 = vpop.f32.mrf.mxu0
        %v1343 = vadd.f32 0.0, %v1342
        %v1344 = vpop.f32.mrf.mxu0
        %v1345 = vpop.f32.mrf.mxu0
        %v1346 = vadd.f32 0.0, %v1345
        %v1347 = vpop.f32.mrf.mxu0
        %1348 = vmatprep.mubr.bf16.mxu0 0
        %1349 = vmatmul.mubr.bf16.gmra.mxu0 %v1169
        %v1350 = vpop.f32.mrf.mxu0
        %v1351 = vadd.f32 0.0, %v1350
        %v1352 = vpop.f32.mrf.mxu0
        %v1353 = vpop.f32.mrf.mxu0
        %v1354 = vadd.f32 0.0, %v1353
        %v1355 = vpop.f32.mrf.mxu0
        %1356 = vmatprep.mubr.bf16.mxu0 0
        %1357 = vmatmul.mubr.bf16.gmra.mxu0 %v1170
        %v1358 = vpop.f32.mrf.mxu0
        %v1359 = vadd.f32 0.0, %v1358
        %v1360 = vpop.f32.mrf.mxu0
        %v1361 = vpop.f32.mrf.mxu0
        %v1362 = vadd.f32 0.0, %v1361
        %v1363 = vpop.f32.mrf.mxu0
        %1364 = vmatprep.mubr.bf16.mxu0 0
        %1365 = vmatmul.mubr.bf16.gmra.mxu0 %v1171
        %v1366 = vpop.f32.mrf.mxu0
        %v1367 = vadd.f32 0.0, %v1366
        %v1368 = vpop.f32.mrf.mxu0
        %v1369 = vpop.f32.mrf.mxu0
        %v1370 = vadd.f32 0.0, %v1369
        %v1371 = vpop.f32.mrf.mxu0
        %1372 = vdwg.mxu0
        %1373 = vst [vmem:[#allocation2] sm:$0xff] %v1279
        %1374 = vst [vmem:[#allocation2 + $0x8] sm:$0xff] %v1282
        %1375 = vst [vmem:[#allocation2 + $0x10] sm:$0xff] %v1287
        %1376 = vst [vmem:[#allocation2 + $0x18] sm:$0xff] %v1290
        %1377 = vst [vmem:[#allocation2 + $0x20] sm:$0xff] %v1295
        %1378 = vst [vmem:[#allocation2 + $0x28] sm:$0xff] %v1298
        %1379 = vst [vmem:[#allocation2 + $0x30] sm:$0xff] %v1303
        %1380 = vst [vmem:[#allocation2 + $0x38] sm:$0xff] %v1306
        %1381 = vst [vmem:[#allocation2 + $0x40] sm:$0xff] %v1311
        %1382 = vst [vmem:[#allocation2 + $0x48] sm:$0xff] %v1314
        %1383 = vst [vmem:[#allocation2 + $0x50] sm:$0xff] %v1319
        %1384 = vst [vmem:[#allocation2 + $0x58] sm:$0xff] %v1322
        %1385 = vst [vmem:[#allocation2 + $0x60] sm:$0xff] %v1327
        %1386 = vst [vmem:[#allocation2 + $0x68] sm:$0xff] %v1330
        %1387 = vst [vmem:[#allocation2 + $0x70] sm:$0xff] %v1335
        %1388 = vst [vmem:[#allocation2 + $0x78] sm:$0xff] %v1338
        %1389 = vst [vmem:[#allocation2 + $0x80] sm:$0xff] %v1343
        %1390 = vst [vmem:[#allocation2 + $0x88] sm:$0xff] %v1346
        %1391 = vst [vmem:[#allocation2 + $0x90] sm:$0xff] %v1351
        %1392 = vst [vmem:[#allocation2 + $0x98] sm:$0xff] %v1354
        %1393 = vst [vmem:[#allocation2 + $0xa0] sm:$0xff] %v1359
        %1394 = vst [vmem:[#allocation2 + $0xa8] sm:$0xff] %v1362
        %1395 = vst [vmem:[#allocation2 + $0xb0] sm:$0xff] %v1367
        %1396 = vst [vmem:[#allocation2 + $0xb8] sm:$0xff] %v1370
        %s1397 = scalar_lea.vmem [#allocation8], 64
        %v1398 = vld [vmem:[%s1397] sm:$0xf]
        %v1399 = vld [vmem:[%s1397 + $0x4] sm:$0xf]
        %v1400 = vld [vmem:[%s1397 + $0x8] sm:$0xf]
        %v1401 = vld [vmem:[%s1397 + $0xc] sm:$0xf]
        %v1402 = vld [vmem:[%s1397 + $0x10] sm:$0xf]
        %v1403 = vld [vmem:[%s1397 + $0x14] sm:$0xf]
        %v1404 = vld [vmem:[%s1397 + $0x18] sm:$0xf]
        %v1405 = vld [vmem:[%s1397 + $0x1c] sm:$0xf]
        %v1406 = vld [vmem:[%s1397 + $0x20] sm:$0xf]
        %v1407 = vld [vmem:[%s1397 + $0x24] sm:$0xf]
        %v1408 = vld [vmem:[%s1397 + $0x28] sm:$0xf]
        %v1409 = vld [vmem:[%s1397 + $0x2c] sm:$0xf]
        %v1410 = vld [vmem:[%s1397 + $0x30] sm:$0xf]
        %v1411 = vld [vmem:[%s1397 + $0x34] sm:$0xf]
        %v1412 = vld [vmem:[%s1397 + $0x38] sm:$0xf]
        %v1413 = vld [vmem:[%s1397 + $0x3c] sm:$0xf]
        %vm1414 = vsmask.f32 7424
        %v1416 = vshrl.u32 %v1160, 16
        %v1418 = vshll.u32 %v1160, 16
        %v1420 = vrot.slane %v1418, 1
        %v1421 = vor.u32 %v1416, %v1420
        %v1423 = vshll.u32 %v1161, 16
        %v1425 = vrot.slane %v1423, 1
        %v1426 = vsel %vm1414, %v1421, %v1425
        %v1427 = vshrl.u32 %v1161, 16
        %v1429 = vor.u32 %v1427, %v1425
        %v1431 = vshll.u32 %v1162, 16
        %v1433 = vrot.slane %v1431, 1
        %v1434 = vsel %vm1414, %v1429, %v1433
        %v1435 = vshrl.u32 %v1162, 16
        %v1437 = vor.u32 %v1435, %v1433
        %v1439 = vshll.u32 %v1163, 16
        %v1441 = vrot.slane %v1439, 1
        %v1442 = vsel %vm1414, %v1437, %v1441
        %v1443 = vshrl.u32 %v1163, 16
        %v1445 = vor.u32 %v1443, %v1441
        %v1447 = vshll.u32 %v1164, 16
        %v1449 = vrot.slane %v1447, 1
        %v1450 = vsel %vm1414, %v1445, %v1449
        %v1451 = vshrl.u32 %v1164, 16
        %v1453 = vor.u32 %v1451, %v1449
        %v1455 = vshll.u32 %v1165, 16
        %v1457 = vrot.slane %v1455, 1
        %v1458 = vsel %vm1414, %v1453, %v1457
        %v1459 = vshrl.u32 %v1165, 16
        %v1461 = vor.u32 %v1459, %v1457
        %v1463 = vshll.u32 %v1166, 16
        %v1465 = vrot.slane %v1463, 1
        %v1466 = vsel %vm1414, %v1461, %v1465
        %v1467 = vshrl.u32 %v1166, 16
        %v1469 = vor.u32 %v1467, %v1465
        %v1471 = vshll.u32 %v1167, 16
        %v1473 = vrot.slane %v1471, 1
        %v1474 = vsel %vm1414, %v1469, %v1473
        %v1475 = vshrl.u32 %v1167, 16
        %v1477 = vor.u32 %v1475, %v1473
        %v1479 = vshll.u32 %v1168, 16
        %v1481 = vrot.slane %v1479, 1
        %v1482 = vsel %vm1414, %v1477, %v1481
        %v1483 = vshrl.u32 %v1168, 16
        %v1485 = vor.u32 %v1483, %v1481
        %v1487 = vshll.u32 %v1169, 16
        %v1489 = vrot.slane %v1487, 1
        %v1490 = vsel %vm1414, %v1485, %v1489
        %v1491 = vshrl.u32 %v1169, 16
        %v1493 = vor.u32 %v1491, %v1489
        %v1495 = vshll.u32 %v1170, 16
        %v1497 = vrot.slane %v1495, 1
        %v1498 = vsel %vm1414, %v1493, %v1497
        %v1499 = vshrl.u32 %v1170, 16
        %v1501 = vor.u32 %v1499, %v1497
        %v1503 = vshll.u32 %v1171, 16
        %v1505 = vrot.slane %v1503, 1
        %v1506 = vsel %vm1414, %v1501, %v1505
        %v1507 = vshrl.u32 %v1171, 16
        %v1509 = vor.u32 %v1507, %v1505
        %v1511 = vshll.u32 %v1172, 16
        %v1513 = vrot.slane %v1511, 1
        %v1514 = vsel %vm1414, %v1509, %v1513
        %v1543 = vunpack.c.l.b16 %v1398
        %v1544 = vunpack.c.l.b16 %v1399
        %v1545 = vunpack.c.l.b16 %v1400
        %v1546 = vunpack.c.l.b16 %v1401
        %v1547 = vunpack.c.l.b16 %v1402
        %v1548 = vunpack.c.l.b16 %v1403
        %v1549 = vunpack.c.l.b16 %v1404
        %v1550 = vunpack.c.l.b16 %v1405
        %v1551 = vunpack.c.l.b16 %v1406
        %v1552 = vunpack.c.l.b16 %v1407
        %v1553 = vunpack.c.l.b16 %v1408
        %v1554 = vunpack.c.l.b16 %v1409
        %v1555 = vunpack.c.l.b16 %v1410
        %v1556 = vunpack.c.l.b16 %v1411
        %v1557 = vunpack.c.l.b16 %v1412
        %v1558 = vunpack.c.l.b16 %v1413
        %v1559 = vpack.c.b16 %v1544, %v1543
        %v1560 = vpack.c.b16 %v1546, %v1545
        %v1561 = vpack.c.b16 %v1548, %v1547
        %v1562 = vpack.c.b16 %v1550, %v1549
        %v1563 = vpack.c.b16 %v1552, %v1551
        %v1564 = vpack.c.b16 %v1554, %v1553
        %v1565 = vpack.c.b16 %v1556, %v1555
        %v1566 = vpack.c.b16 %v1558, %v1557
        %1575 = vmatprep.subr.bf16.mxu0 0
        %1576 = vmatpush1.bf16.msra.mxu0 %v1566
        %1577 = vmatprep.subr.bf16.mxu0 0
        %1578 = vmatpush1.bf16.msra.mxu0 %v1565
        %1579 = vmatprep.subr.bf16.mxu0 0
        %1580 = vmatpush1.bf16.msra.mxu0 %v1564
        %1581 = vmatprep.subr.bf16.mxu0 0
        %1582 = vmatpush1.bf16.msra.mxu0 %v1563
        %1583 = vmatprep.subr.bf16.mxu0 0
        %1584 = vmatpush1.bf16.msra.mxu0 %v1562
        %1585 = vmatprep.subr.bf16.mxu0 0
        %1586 = vmatpush1.bf16.msra.mxu0 %v1561
        %1587 = vmatprep.subr.bf16.mxu0 0
        %1588 = vmatpush1.bf16.msra.mxu0 %v1560
        %1589 = vmatprep.subr.bf16.mxu0 0
        %1590 = vmatpush1.bf16.msra.mxu0 %v1559
        %1591 = vmatprep.subr.bf16.mxu0 0
        %1592 = vmatpush2.bf16.msra.mxu0 0
        %1593 = vmatprep.subr.bf16.mxu0 0
        %1594 = vmatpush2.bf16.msra.mxu0 0
        %1595 = vmatprep.subr.bf16.mxu0 0
        %1596 = vmatpush2.bf16.msra.mxu0 0
        %1597 = vmatprep.subr.bf16.mxu0 0
        %1598 = vmatpush2.bf16.msra.mxu0 0
        %1599 = vmatprep.subr.bf16.mxu0 0
        %1600 = vmatpush2.bf16.msra.mxu0 0
        %1601 = vmatprep.subr.bf16.mxu0 0
        %1602 = vmatpush2.bf16.msra.mxu0 0
        %1603 = vmatprep.subr.bf16.mxu0 0
        %1604 = vmatpush2.bf16.msra.mxu0 0
        %1605 = vmatprep.subr.bf16.mxu0 0
        %1606 = vmatpush2.bf16.msra.mxu0 0
        %1607 = vmatprep.mubr.bf16.mxu0 0
        %1608 = vmatmul.mubr.bf16.gmra.mxu0 %v1426
        %v1609 = vpop.f32.mrf.mxu0
        %v1610 = vadd.f32 0.0, %v1609
        %v1611 = vpop.f32.mrf.mxu0
        %v1612 = vpop.f32.mrf.mxu0
        %v1613 = vadd.f32 0.0, %v1612
        %v1614 = vpop.f32.mrf.mxu0
        %1615 = vmatprep.mubr.bf16.mxu0 0
        %1616 = vmatmul.mubr.bf16.gmra.mxu0 %v1434
        %v1617 = vpop.f32.mrf.mxu0
        %v1618 = vadd.f32 0.0, %v1617
        %v1619 = vpop.f32.mrf.mxu0
        %v1620 = vpop.f32.mrf.mxu0
        %v1621 = vadd.f32 0.0, %v1620
        %v1622 = vpop.f32.mrf.mxu0
        %1623 = vmatprep.mubr.bf16.mxu0 0
        %1624 = vmatmul.mubr.bf16.gmra.mxu0 %v1442
        %v1625 = vpop.f32.mrf.mxu0
        %v1626 = vadd.f32 0.0, %v1625
        %v1627 = vpop.f32.mrf.mxu0
        %v1628 = vpop.f32.mrf.mxu0
        %v1629 = vadd.f32 0.0, %v1628
        %v1630 = vpop.f32.mrf.mxu0
        %1631 = vmatprep.mubr.bf16.mxu0 0
        %1632 = vmatmul.mubr.bf16.gmra.mxu0 %v1450
        %v1633 = vpop.f32.mrf.mxu0
        %v1634 = vadd.f32 0.0, %v1633
        %v1635 = vpop.f32.mrf.mxu0
        %v1636 = vpop.f32.mrf.mxu0
        %v1637 = vadd.f32 0.0, %v1636
        %v1638 = vpop.f32.mrf.mxu0
        %1639 = vmatprep.mubr.bf16.mxu0 0
        %1640 = vmatmul.mubr.bf16.gmra.mxu0 %v1458
        %v1641 = vpop.f32.mrf.mxu0
        %v1642 = vadd.f32 0.0, %v1641
        %v1643 = vpop.f32.mrf.mxu0
        %v1644 = vpop.f32.mrf.mxu0
        %v1645 = vadd.f32 0.0, %v1644
        %v1646 = vpop.f32.mrf.mxu0
        %1647 = vmatprep.mubr.bf16.mxu0 0
        %1648 = vmatmul.mubr.bf16.gmra.mxu0 %v1466
        %v1649 = vpop.f32.mrf.mxu0
        %v1650 = vadd.f32 0.0, %v1649
        %v1651 = vpop.f32.mrf.mxu0
        %v1652 = vpop.f32.mrf.mxu0
        %v1653 = vadd.f32 0.0, %v1652
        %v1654 = vpop.f32.mrf.mxu0
        %1655 = vmatprep.mubr.bf16.mxu0 0
        %1656 = vmatmul.mubr.bf16.gmra.mxu0 %v1474
        %v1657 = vpop.f32.mrf.mxu0
        %v1658 = vadd.f32 0.0, %v1657
        %v1659 = vpop.f32.mrf.mxu0
        %v1660 = vpop.f32.mrf.mxu0
        %v1661 = vadd.f32 0.0, %v1660
        %v1662 = vpop.f32.mrf.mxu0
        %1663 = vmatprep.mubr.bf16.mxu0 0
        %1664 = vmatmul.mubr.bf16.gmra.mxu0 %v1482
        %v1665 = vpop.f32.mrf.mxu0
        %v1666 = vadd.f32 0.0, %v1665
        %v1667 = vpop.f32.mrf.mxu0
        %v1668 = vpop.f32.mrf.mxu0
        %v1669 = vadd.f32 0.0, %v1668
        %v1670 = vpop.f32.mrf.mxu0
        %1671 = vmatprep.mubr.bf16.mxu0 0
        %1672 = vmatmul.mubr.bf16.gmra.mxu0 %v1490
        %v1673 = vpop.f32.mrf.mxu0
        %v1674 = vadd.f32 0.0, %v1673
        %v1675 = vpop.f32.mrf.mxu0
        %v1676 = vpop.f32.mrf.mxu0
        %v1677 = vadd.f32 0.0, %v1676
        %v1678 = vpop.f32.mrf.mxu0
        %1679 = vmatprep.mubr.bf16.mxu0 0
        %1680 = vmatmul.mubr.bf16.gmra.mxu0 %v1498
        %v1681 = vpop.f32.mrf.mxu0
        %v1682 = vadd.f32 0.0, %v1681
        %v1683 = vpop.f32.mrf.mxu0
        %v1684 = vpop.f32.mrf.mxu0
        %v1685 = vadd.f32 0.0, %v1684
        %v1686 = vpop.f32.mrf.mxu0
        %1687 = vmatprep.mubr.bf16.mxu0 0
        %1688 = vmatmul.mubr.bf16.gmra.mxu0 %v1506
        %v1689 = vpop.f32.mrf.mxu0
        %v1690 = vadd.f32 0.0, %v1689
        %v1691 = vpop.f32.mrf.mxu0
        %v1692 = vpop.f32.mrf.mxu0
        %v1693 = vadd.f32 0.0, %v1692
        %v1694 = vpop.f32.mrf.mxu0
        %1695 = vmatprep.mubr.bf16.mxu0 0
        %1696 = vmatmul.mubr.bf16.gmra.mxu0 %v1514
        %v1697 = vpop.f32.mrf.mxu0
        %v1698 = vadd.f32 0.0, %v1697
        %v1699 = vpop.f32.mrf.mxu0
        %v1700 = vpop.f32.mrf.mxu0
        %v1701 = vadd.f32 0.0, %v1700
        %v1702 = vpop.f32.mrf.mxu0
        %1703 = vdwg.mxu0
        %v1704 = vld [vmem:[#allocation2] sm:$0xff]
        %v1705 = vld [vmem:[#allocation2 + $0x8] sm:$0xff]
        %v1706 = vld [vmem:[#allocation2 + $0x10] sm:$0xff]
        %v1707 = vld [vmem:[#allocation2 + $0x18] sm:$0xff]
        %v1708 = vld [vmem:[#allocation2 + $0x20] sm:$0xff]
        %v1709 = vld [vmem:[#allocation2 + $0x28] sm:$0xff]
        %v1710 = vld [vmem:[#allocation2 + $0x30] sm:$0xff]
        %v1711 = vld [vmem:[#allocation2 + $0x38] sm:$0xff]
        %v1712 = vld [vmem:[#allocation2 + $0x40] sm:$0xff]
        %v1713 = vld [vmem:[#allocation2 + $0x48] sm:$0xff]
        %v1714 = vld [vmem:[#allocation2 + $0x50] sm:$0xff]
        %v1715 = vld [vmem:[#allocation2 + $0x58] sm:$0xff]
        %v1716 = vld [vmem:[#allocation2 + $0x60] sm:$0xff]
        %v1717 = vld [vmem:[#allocation2 + $0x68] sm:$0xff]
        %v1718 = vld [vmem:[#allocation2 + $0x70] sm:$0xff]
        %v1719 = vld [vmem:[#allocation2 + $0x78] sm:$0xff]
        %v1720 = vld [vmem:[#allocation2 + $0x80] sm:$0xff]
        %v1721 = vld [vmem:[#allocation2 + $0x88] sm:$0xff]
        %v1722 = vld [vmem:[#allocation2 + $0x90] sm:$0xff]
        %v1723 = vld [vmem:[#allocation2 + $0x98] sm:$0xff]
        %v1724 = vld [vmem:[#allocation2 + $0xa0] sm:$0xff]
        %v1725 = vld [vmem:[#allocation2 + $0xa8] sm:$0xff]
        %v1726 = vld [vmem:[#allocation2 + $0xb0] sm:$0xff]
        %v1727 = vld [vmem:[#allocation2 + $0xb8] sm:$0xff]
        %v1728 = vadd.f32 %v1704, %v1610
        %v1729 = vadd.f32 %v1705, %v1613
        %v1730 = vadd.f32 %v1706, %v1618
        %v1731 = vadd.f32 %v1707, %v1621
        %v1732 = vadd.f32 %v1708, %v1626
        %v1733 = vadd.f32 %v1709, %v1629
        %v1734 = vadd.f32 %v1710, %v1634
        %v1735 = vadd.f32 %v1711, %v1637
        %v1736 = vadd.f32 %v1712, %v1642
        %v1737 = vadd.f32 %v1713, %v1645
        %v1738 = vadd.f32 %v1714, %v1650
        %v1739 = vadd.f32 %v1715, %v1653
        %v1740 = vadd.f32 %v1716, %v1658
        %v1741 = vadd.f32 %v1717, %v1661
        %v1742 = vadd.f32 %v1718, %v1666
        %v1743 = vadd.f32 %v1719, %v1669
        %v1744 = vadd.f32 %v1720, %v1674
        %v1745 = vadd.f32 %v1721, %v1677
        %v1746 = vadd.f32 %v1722, %v1682
        %v1747 = vadd.f32 %v1723, %v1685
        %v1748 = vadd.f32 %v1724, %v1690
        %v1749 = vadd.f32 %v1725, %v1693
        %v1750 = vadd.f32 %v1726, %v1698
        %v1751 = vadd.f32 %v1727, %v1701
        %1752 = vst [vmem:[#allocation2] sm:$0xff] %v1728
        %1753 = vst [vmem:[#allocation2 + $0x8] sm:$0xff] %v1729
        %1754 = vst [vmem:[#allocation2 + $0x10] sm:$0xff] %v1730
        %1755 = vst [vmem:[#allocation2 + $0x18] sm:$0xff] %v1731
        %1756 = vst [vmem:[#allocation2 + $0x20] sm:$0xff] %v1732
        %1757 = vst [vmem:[#allocation2 + $0x28] sm:$0xff] %v1733
        %1758 = vst [vmem:[#allocation2 + $0x30] sm:$0xff] %v1734
        %1759 = vst [vmem:[#allocation2 + $0x38] sm:$0xff] %v1735
        %1760 = vst [vmem:[#allocation2 + $0x40] sm:$0xff] %v1736
        %1761 = vst [vmem:[#allocation2 + $0x48] sm:$0xff] %v1737
        %1762 = vst [vmem:[#allocation2 + $0x50] sm:$0xff] %v1738
        %1763 = vst [vmem:[#allocation2 + $0x58] sm:$0xff] %v1739
        %1764 = vst [vmem:[#allocation2 + $0x60] sm:$0xff] %v1740
        %1765 = vst [vmem:[#allocation2 + $0x68] sm:$0xff] %v1741
        %1766 = vst [vmem:[#allocation2 + $0x70] sm:$0xff] %v1742
        %1767 = vst [vmem:[#allocation2 + $0x78] sm:$0xff] %v1743
        %1768 = vst [vmem:[#allocation2 + $0x80] sm:$0xff] %v1744
        %1769 = vst [vmem:[#allocation2 + $0x88] sm:$0xff] %v1745
        %1770 = vst [vmem:[#allocation2 + $0x90] sm:$0xff] %v1746
        %1771 = vst [vmem:[#allocation2 + $0x98] sm:$0xff] %v1747
        %1772 = vst [vmem:[#allocation2 + $0xa0] sm:$0xff] %v1748
        %1773 = vst [vmem:[#allocation2 + $0xa8] sm:$0xff] %v1749
        %1774 = vst [vmem:[#allocation2 + $0xb0] sm:$0xff] %v1750
        %1775 = vst [vmem:[#allocation2 + $0xb8] sm:$0xff] %v1751
        %s1776 = scalar_lea.vmem [#allocation8], 128
        %v1777 = vld [vmem:[%s1776] sm:$0xf]
        %v1778 = vld [vmem:[%s1776 + $0x4] sm:$0xf]
        %v1779 = vld [vmem:[%s1776 + $0x8] sm:$0xf]
        %v1780 = vld [vmem:[%s1776 + $0xc] sm:$0xf]
        %v1781 = vld [vmem:[%s1776 + $0x10] sm:$0xf]
        %v1782 = vld [vmem:[%s1776 + $0x14] sm:$0xf]
        %v1783 = vld [vmem:[%s1776 + $0x18] sm:$0xf]
        %v1784 = vld [vmem:[%s1776 + $0x1c] sm:$0xf]
        %v1785 = vld [vmem:[%s1776 + $0x20] sm:$0xf]
        %v1786 = vld [vmem:[%s1776 + $0x24] sm:$0xf]
        %v1787 = vld [vmem:[%s1776 + $0x28] sm:$0xf]
        %v1788 = vld [vmem:[%s1776 + $0x2c] sm:$0xf]
        %v1789 = vld [vmem:[%s1776 + $0x30] sm:$0xf]
        %v1790 = vld [vmem:[%s1776 + $0x34] sm:$0xf]
        %v1791 = vld [vmem:[%s1776 + $0x38] sm:$0xf]
        %v1792 = vld [vmem:[%s1776 + $0x3c] sm:$0xf]
        %vm1806 = vcmask 1046528
        %v1807 = vrot.slane %v1160, 1
        %v1808 = vrot.slane %v1161, 1
        %v1809 = vsel %vm1806, %v1807, %v1808
        %v1810 = vrot.slane %v1162, 1
        %v1811 = vsel %vm1806, %v1808, %v1810
        %v1812 = vrot.slane %v1163, 1
        %v1813 = vsel %vm1806, %v1810, %v1812
        %v1814 = vrot.slane %v1164, 1
        %v1815 = vsel %vm1806, %v1812, %v1814
        %v1816 = vrot.slane %v1165, 1
        %v1817 = vsel %vm1806, %v1814, %v1816
        %v1818 = vrot.slane %v1166, 1
        %v1819 = vsel %vm1806, %v1816, %v1818
        %v1820 = vrot.slane %v1167, 1
        %v1821 = vsel %vm1806, %v1818, %v1820
        %v1822 = vrot.slane %v1168, 1
        %v1823 = vsel %vm1806, %v1820, %v1822
        %v1824 = vrot.slane %v1169, 1
        %v1825 = vsel %vm1806, %v1822, %v1824
        %v1826 = vrot.slane %v1170, 1
        %v1827 = vsel %vm1806, %v1824, %v1826
        %v1828 = vrot.slane %v1171, 1
        %v1829 = vsel %vm1806, %v1826, %v1828
        %v1830 = vrot.slane %v1172, 1
        %v1831 = vsel %vm1806, %v1828, %v1830
        %v1860 = vunpack.c.l.b16 %v1777
        %v1861 = vunpack.c.l.b16 %v1778
        %v1862 = vunpack.c.l.b16 %v1779
        %v1863 = vunpack.c.l.b16 %v1780
        %v1864 = vunpack.c.l.b16 %v1781
        %v1865 = vunpack.c.l.b16 %v1782
        %v1866 = vunpack.c.l.b16 %v1783
        %v1867 = vunpack.c.l.b16 %v1784
        %v1868 = vunpack.c.l.b16 %v1785
        %v1869 = vunpack.c.l.b16 %v1786
        %v1870 = vunpack.c.l.b16 %v1787
        %v1871 = vunpack.c.l.b16 %v1788
        %v1872 = vunpack.c.l.b16 %v1789
        %v1873 = vunpack.c.l.b16 %v1790
        %v1874 = vunpack.c.l.b16 %v1791
        %v1875 = vunpack.c.l.b16 %v1792
        %v1876 = vpack.c.b16 %v1861, %v1860
        %v1877 = vpack.c.b16 %v1863, %v1862
        %v1878 = vpack.c.b16 %v1865, %v1864
        %v1879 = vpack.c.b16 %v1867, %v1866
        %v1880 = vpack.c.b16 %v1869, %v1868
        %v1881 = vpack.c.b16 %v1871, %v1870
        %v1882 = vpack.c.b16 %v1873, %v1872
        %v1883 = vpack.c.b16 %v1875, %v1874
        %1892 = vmatprep.subr.bf16.mxu0 0
        %1893 = vmatpush1.bf16.msra.mxu0 %v1883
        %1894 = vmatprep.subr.bf16.mxu0 0
        %1895 = vmatpush1.bf16.msra.mxu0 %v1882
        %1896 = vmatprep.subr.bf16.mxu0 0
        %1897 = vmatpush1.bf16.msra.mxu0 %v1881
        %1898 = vmatprep.subr.bf16.mxu0 0
        %1899 = vmatpush1.bf16.msra.mxu0 %v1880
        %1900 = vmatprep.subr.bf16.mxu0 0
        %1901 = vmatpush1.bf16.msra.mxu0 %v1879
        %1902 = vmatprep.subr.bf16.mxu0 0
        %1903 = vmatpush1.bf16.msra.mxu0 %v1878
        %1904 = vmatprep.subr.bf16.mxu0 0
        %1905 = vmatpush1.bf16.msra.mxu0 %v1877
        %1906 = vmatprep.subr.bf16.mxu0 0
        %1907 = vmatpush1.bf16.msra.mxu0 %v1876
        %1908 = vmatprep.subr.bf16.mxu0 0
        %1909 = vmatpush2.bf16.msra.mxu0 0
        %1910 = vmatprep.subr.bf16.mxu0 0
        %1911 = vmatpush2.bf16.msra.mxu0 0
        %1912 = vmatprep.subr.bf16.mxu0 0
        %1913 = vmatpush2.bf16.msra.mxu0 0
        %1914 = vmatprep.subr.bf16.mxu0 0
        %1915 = vmatpush2.bf16.msra.mxu0 0
        %1916 = vmatprep.subr.bf16.mxu0 0
        %1917 = vmatpush2.bf16.msra.mxu0 0
        %1918 = vmatprep.subr.bf16.mxu0 0
        %1919 = vmatpush2.bf16.msra.mxu0 0
        %1920 = vmatprep.subr.bf16.mxu0 0
        %1921 = vmatpush2.bf16.msra.mxu0 0
        %1922 = vmatprep.subr.bf16.mxu0 0
        %1923 = vmatpush2.bf16.msra.mxu0 0
        %1924 = vmatprep.mubr.bf16.mxu0 0
        %1925 = vmatmul.mubr.bf16.gmra.mxu0 %v1809
        %v1926 = vpop.f32.mrf.mxu0
        %v1927 = vadd.f32 0.0, %v1926
        %v1928 = vpop.f32.mrf.mxu0
        %v1929 = vpop.f32.mrf.mxu0
        %v1930 = vadd.f32 0.0, %v1929
        %v1931 = vpop.f32.mrf.mxu0
        %1932 = vmatprep.mubr.bf16.mxu0 0
        %1933 = vmatmul.mubr.bf16.gmra.mxu0 %v1811
        %v1934 = vpop.f32.mrf.mxu0
        %v1935 = vadd.f32 0.0, %v1934
        %v1936 = vpop.f32.mrf.mxu0
        %v1937 = vpop.f32.mrf.mxu0
        %v1938 = vadd.f32 0.0, %v1937
        %v1939 = vpop.f32.mrf.mxu0
        %1940 = vmatprep.mubr.bf16.mxu0 0
        %1941 = vmatmul.mubr.bf16.gmra.mxu0 %v1813
        %v1942 = vpop.f32.mrf.mxu0
        %v1943 = vadd.f32 0.0, %v1942
        %v1944 = vpop.f32.mrf.mxu0
        %v1945 = vpop.f32.mrf.mxu0
        %v1946 = vadd.f32 0.0, %v1945
        %v1947 = vpop.f32.mrf.mxu0
        %1948 = vmatprep.mubr.bf16.mxu0 0
        %1949 = vmatmul.mubr.bf16.gmra.mxu0 %v1815
        %v1950 = vpop.f32.mrf.mxu0
        %v1951 = vadd.f32 0.0, %v1950
        %v1952 = vpop.f32.mrf.mxu0
        %v1953 = vpop.f32.mrf.mxu0
        %v1954 = vadd.f32 0.0, %v1953
        %v1955 = vpop.f32.mrf.mxu0
        %1956 = vmatprep.mubr.bf16.mxu0 0
        %1957 = vmatmul.mubr.bf16.gmra.mxu0 %v1817
        %v1958 = vpop.f32.mrf.mxu0
        %v1959 = vadd.f32 0.0, %v1958
        %v1960 = vpop.f32.mrf.mxu0
        %v1961 = vpop.f32.mrf.mxu0
        %v1962 = vadd.f32 0.0, %v1961
        %v1963 = vpop.f32.mrf.mxu0
        %1964 = vmatprep.mubr.bf16.mxu0 0
        %1965 = vmatmul.mubr.bf16.gmra.mxu0 %v1819
        %v1966 = vpop.f32.mrf.mxu0
        %v1967 = vadd.f32 0.0, %v1966
        %v1968 = vpop.f32.mrf.mxu0
        %v1969 = vpop.f32.mrf.mxu0
        %v1970 = vadd.f32 0.0, %v1969
        %v1971 = vpop.f32.mrf.mxu0
        %1972 = vmatprep.mubr.bf16.mxu0 0
        %1973 = vmatmul.mubr.bf16.gmra.mxu0 %v1821
        %v1974 = vpop.f32.mrf.mxu0
        %v1975 = vadd.f32 0.0, %v1974
        %v1976 = vpop.f32.mrf.mxu0
        %v1977 = vpop.f32.mrf.mxu0
        %v1978 = vadd.f32 0.0, %v1977
        %v1979 = vpop.f32.mrf.mxu0
        %1980 = vmatprep.mubr.bf16.mxu0 0
        %1981 = vmatmul.mubr.bf16.gmra.mxu0 %v1823
        %v1982 = vpop.f32.mrf.mxu0
        %v1983 = vadd.f32 0.0, %v1982
        %v1984 = vpop.f32.mrf.mxu0
        %v1985 = vpop.f32.mrf.mxu0
        %v1986 = vadd.f32 0.0, %v1985
        %v1987 = vpop.f32.mrf.mxu0
        %1988 = vmatprep.mubr.bf16.mxu0 0
        %1989 = vmatmul.mubr.bf16.gmra.mxu0 %v1825
        %v1990 = vpop.f32.mrf.mxu0
        %v1991 = vadd.f32 0.0, %v1990
        %v1992 = vpop.f32.mrf.mxu0
        %v1993 = vpop.f32.mrf.mxu0
        %v1994 = vadd.f32 0.0, %v1993
        %v1995 = vpop.f32.mrf.mxu0
        %1996 = vmatprep.mubr.bf16.mxu0 0
        %1997 = vmatmul.mubr.bf16.gmra.mxu0 %v1827
        %v1998 = vpop.f32.mrf.mxu0
        %v1999 = vadd.f32 0.0, %v1998
        %v2000 = vpop.f32.mrf.mxu0
        %v2001 = vpop.f32.mrf.mxu0
        %v2002 = vadd.f32 0.0, %v2001
        %v2003 = vpop.f32.mrf.mxu0
        %2004 = vmatprep.mubr.bf16.mxu0 0
        %2005 = vmatmul.mubr.bf16.gmra.mxu0 %v1829
        %v2006 = vpop.f32.mrf.mxu0
        %v2007 = vadd.f32 0.0, %v2006
        %v2008 = vpop.f32.mrf.mxu0
        %v2009 = vpop.f32.mrf.mxu0
        %v2010 = vadd.f32 0.0, %v2009
        %v2011 = vpop.f32.mrf.mxu0
        %2012 = vmatprep.mubr.bf16.mxu0 0
        %2013 = vmatmul.mubr.bf16.gmra.mxu0 %v1831
        %v2014 = vpop.f32.mrf.mxu0
        %v2015 = vadd.f32 0.0, %v2014
        %v2016 = vpop.f32.mrf.mxu0
        %v2017 = vpop.f32.mrf.mxu0
        %v2018 = vadd.f32 0.0, %v2017
        %v2019 = vpop.f32.mrf.mxu0
        %2020 = vdwg.mxu0
        %v2021 = vld [vmem:[#allocation2] sm:$0xff]
        %v2022 = vld [vmem:[#allocation2 + $0x8] sm:$0xff]
        %v2023 = vld [vmem:[#allocation2 + $0x10] sm:$0xff]
        %v2024 = vld [vmem:[#allocation2 + $0x18] sm:$0xff]
        %v2025 = vld [vmem:[#allocation2 + $0x20] sm:$0xff]
        %v2026 = vld [vmem:[#allocation2 + $0x28] sm:$0xff]
        %v2027 = vld [vmem:[#allocation2 + $0x30] sm:$0xff]
        %v2028 = vld [vmem:[#allocation2 + $0x38] sm:$0xff]
        %v2029 = vld [vmem:[#allocation2 + $0x40] sm:$0xff]
        %v2030 = vld [vmem:[#allocation2 + $0x48] sm:$0xff]
        %v2031 = vld [vmem:[#allocation2 + $0x50] sm:$0xff]
        %v2032 = vld [vmem:[#allocation2 + $0x58] sm:$0xff]
        %v2033 = vld [vmem:[#allocation2 + $0x60] sm:$0xff]
        %v2034 = vld [vmem:[#allocation2 + $0x68] sm:$0xff]
        %v2035 = vld [vmem:[#allocation2 + $0x70] sm:$0xff]
        %v2036 = vld [vmem:[#allocation2 + $0x78] sm:$0xff]
        %v2037 = vld [vmem:[#allocation2 + $0x80] sm:$0xff]
        %v2038 = vld [vmem:[#allocation2 + $0x88] sm:$0xff]
        %v2039 = vld [vmem:[#allocation2 + $0x90] sm:$0xff]
        %v2040 = vld [vmem:[#allocation2 + $0x98] sm:$0xff]
        %v2041 = vld [vmem:[#allocation2 + $0xa0] sm:$0xff]
        %v2042 = vld [vmem:[#allocation2 + $0xa8] sm:$0xff]
        %v2043 = vld [vmem:[#allocation2 + $0xb0] sm:$0xff]
        %v2044 = vld [vmem:[#allocation2 + $0xb8] sm:$0xff]
        %v2045 = vadd.f32 %v2021, %v1927
        %v2046 = vadd.f32 %v2022, %v1930
        %v2047 = vadd.f32 %v2023, %v1935
        %v2048 = vadd.f32 %v2024, %v1938
        %v2049 = vadd.f32 %v2025, %v1943
        %v2050 = vadd.f32 %v2026, %v1946
        %v2051 = vadd.f32 %v2027, %v1951
        %v2052 = vadd.f32 %v2028, %v1954
        %v2053 = vadd.f32 %v2029, %v1959
        %v2054 = vadd.f32 %v2030, %v1962
        %v2055 = vadd.f32 %v2031, %v1967
        %v2056 = vadd.f32 %v2032, %v1970
        %v2057 = vadd.f32 %v2033, %v1975
        %v2058 = vadd.f32 %v2034, %v1978
        %v2059 = vadd.f32 %v2035, %v1983
        %v2060 = vadd.f32 %v2036, %v1986
        %v2061 = vadd.f32 %v2037, %v1991
        %v2062 = vadd.f32 %v2038, %v1994
        %v2063 = vadd.f32 %v2039, %v1999
        %v2064 = vadd.f32 %v2040, %v2002
        %v2065 = vadd.f32 %v2041, %v2007
        %v2066 = vadd.f32 %v2042, %v2010
        %v2067 = vadd.f32 %v2043, %v2015
        %v2068 = vadd.f32 %v2044, %v2018
        %2069 = vst [vmem:[#allocation2] sm:$0xff] %v2045
        %2070 = vst [vmem:[#allocation2 + $0x8] sm:$0xff] %v2046
        %2071 = vst [vmem:[#allocation2 + $0x10] sm:$0xff] %v2047
        %2072 = vst [vmem:[#allocation2 + $0x18] sm:$0xff] %v2048
        %2073 = vst [vmem:[#allocation2 + $0x20] sm:$0xff] %v2049
        %2074 = vst [vmem:[#allocation2 + $0x28] sm:$0xff] %v2050
        %2075 = vst [vmem:[#allocation2 + $0x30] sm:$0xff] %v2051
        %2076 = vst [vmem:[#allocation2 + $0x38] sm:$0xff] %v2052
        %2077 = vst [vmem:[#allocation2 + $0x40] sm:$0xff] %v2053
        %2078 = vst [vmem:[#allocation2 + $0x48] sm:$0xff] %v2054
        %2079 = vst [vmem:[#allocation2 + $0x50] sm:$0xff] %v2055
        %2080 = vst [vmem:[#allocation2 + $0x58] sm:$0xff] %v2056
        %2081 = vst [vmem:[#allocation2 + $0x60] sm:$0xff] %v2057
        %2082 = vst [vmem:[#allocation2 + $0x68] sm:$0xff] %v2058
        %2083 = vst [vmem:[#allocation2 + $0x70] sm:$0xff] %v2059
        %2084 = vst [vmem:[#allocation2 + $0x78] sm:$0xff] %v2060
        %2085 = vst [vmem:[#allocation2 + $0x80] sm:$0xff] %v2061
        %2086 = vst [vmem:[#allocation2 + $0x88] sm:$0xff] %v2062
        %2087 = vst [vmem:[#allocation2 + $0x90] sm:$0xff] %v2063
        %2088 = vst [vmem:[#allocation2 + $0x98] sm:$0xff] %v2064
        %2089 = vst [vmem:[#allocation2 + $0xa0] sm:$0xff] %v2065
        %2090 = vst [vmem:[#allocation2 + $0xa8] sm:$0xff] %v2066
        %2091 = vst [vmem:[#allocation2 + $0xb0] sm:$0xff] %v2067
        %2092 = vst [vmem:[#allocation2 + $0xb8] sm:$0xff] %v2068
        %s2093 = scalar_lea.vmem [#allocation8], 192
        %v2094 = vld [vmem:[%s2093] sm:$0xf]
        %v2095 = vld [vmem:[%s2093 + $0x4] sm:$0xf]
        %v2096 = vld [vmem:[%s2093 + $0x8] sm:$0xf]
        %v2097 = vld [vmem:[%s2093 + $0xc] sm:$0xf]
        %v2098 = vld [vmem:[%s2093 + $0x10] sm:$0xf]
        %v2099 = vld [vmem:[%s2093 + $0x14] sm:$0xf]
        %v2100 = vld [vmem:[%s2093 + $0x18] sm:$0xf]
        %v2101 = vld [vmem:[%s2093 + $0x1c] sm:$0xf]
        %v2102 = vld [vmem:[%s2093 + $0x20] sm:$0xf]
        %v2103 = vld [vmem:[%s2093 + $0x24] sm:$0xf]
        %v2104 = vld [vmem:[%s2093 + $0x28] sm:$0xf]
        %v2105 = vld [vmem:[%s2093 + $0x2c] sm:$0xf]
        %v2106 = vld [vmem:[%s2093 + $0x30] sm:$0xf]
        %v2107 = vld [vmem:[%s2093 + $0x34] sm:$0xf]
        %v2108 = vld [vmem:[%s2093 + $0x38] sm:$0xf]
        %v2109 = vld [vmem:[%s2093 + $0x3c] sm:$0xf]
        %vm2110 = vcmask 1043456
        %v2111 = vrot.slane %v1160, 4
        %v2112 = vrot.slane %v1161, 4
        %v2113 = vsel %vm2110, %v2111, %v2112
        %v2114 = vrot.slane %v1162, 4
        %v2115 = vsel %vm2110, %v2112, %v2114
        %v2116 = vrot.slane %v1163, 4
        %v2117 = vsel %vm2110, %v2114, %v2116
        %v2118 = vrot.slane %v1164, 4
        %v2119 = vsel %vm2110, %v2116, %v2118
        %v2120 = vrot.slane %v1165, 4
        %v2121 = vsel %vm2110, %v2118, %v2120
        %v2122 = vrot.slane %v1166, 4
        %v2123 = vsel %vm2110, %v2120, %v2122
        %v2124 = vrot.slane %v1167, 4
        %v2125 = vsel %vm2110, %v2122, %v2124
        %v2126 = vrot.slane %v1168, 4
        %v2127 = vsel %vm2110, %v2124, %v2126
        %v2128 = vrot.slane %v1169, 4
        %v2129 = vsel %vm2110, %v2126, %v2128
        %v2130 = vrot.slane %v1170, 4
        %v2131 = vsel %vm2110, %v2128, %v2130
        %v2132 = vrot.slane %v1171, 4
        %v2133 = vsel %vm2110, %v2130, %v2132
        %v2134 = vrot.slane %v1172, 4
        %v2135 = vsel %vm2110, %v2132, %v2134
        %v2164 = vunpack.c.l.b16 %v2094
        %v2165 = vunpack.c.l.b16 %v2095
        %v2166 = vunpack.c.l.b16 %v2096
        %v2167 = vunpack.c.l.b16 %v2097
        %v2168 = vunpack.c.l.b16 %v2098
        %v2169 = vunpack.c.l.b16 %v2099
        %v2170 = vunpack.c.l.b16 %v2100
        %v2171 = vunpack.c.l.b16 %v2101
        %v2172 = vunpack.c.l.b16 %v2102
        %v2173 = vunpack.c.l.b16 %v2103
        %v2174 = vunpack.c.l.b16 %v2104
        %v2175 = vunpack.c.l.b16 %v2105
        %v2176 = vunpack.c.l.b16 %v2106
        %v2177 = vunpack.c.l.b16 %v2107
        %v2178 = vunpack.c.l.b16 %v2108
        %v2179 = vunpack.c.l.b16 %v2109
        %v2180 = vpack.c.b16 %v2165, %v2164
        %v2181 = vpack.c.b16 %v2167, %v2166
        %v2182 = vpack.c.b16 %v2169, %v2168
        %v2183 = vpack.c.b16 %v2171, %v2170
        %v2184 = vpack.c.b16 %v2173, %v2172
        %v2185 = vpack.c.b16 %v2175, %v2174
        %v2186 = vpack.c.b16 %v2177, %v2176
        %v2187 = vpack.c.b16 %v2179, %v2178
        %2196 = vmatprep.subr.bf16.mxu0 0
        %2197 = vmatpush1.bf16.msra.mxu0 %v2187
        %2198 = vmatprep.subr.bf16.mxu0 0
        %2199 = vmatpush1.bf16.msra.mxu0 %v2186
        %2200 = vmatprep.subr.bf16.mxu0 0
        %2201 = vmatpush1.bf16.msra.mxu0 %v2185
        %2202 = vmatprep.subr.bf16.mxu0 0
        %2203 = vmatpush1.bf16.msra.mxu0 %v2184
        %2204 = vmatprep.subr.bf16.mxu0 0
        %2205 = vmatpush1.bf16.msra.mxu0 %v2183
        %2206 = vmatprep.subr.bf16.mxu0 0
        %2207 = vmatpush1.bf16.msra.mxu0 %v2182
        %2208 = vmatprep.subr.bf16.mxu0 0
        %2209 = vmatpush1.bf16.msra.mxu0 %v2181
        %2210 = vmatprep.subr.bf16.mxu0 0
        %2211 = vmatpush1.bf16.msra.mxu0 %v2180
        %2212 = vmatprep.subr.bf16.mxu0 0
        %2213 = vmatpush2.bf16.msra.mxu0 0
        %2214 = vmatprep.subr.bf16.mxu0 0
        %2215 = vmatpush2.bf16.msra.mxu0 0
        %2216 = vmatprep.subr.bf16.mxu0 0
        %2217 = vmatpush2.bf16.msra.mxu0 0
        %2218 = vmatprep.subr.bf16.mxu0 0
        %2219 = vmatpush2.bf16.msra.mxu0 0
        %2220 = vmatprep.subr.bf16.mxu0 0
        %2221 = vmatpush2.bf16.msra.mxu0 0
        %2222 = vmatprep.subr.bf16.mxu0 0
        %2223 = vmatpush2.bf16.msra.mxu0 0
        %2224 = vmatprep.subr.bf16.mxu0 0
        %2225 = vmatpush2.bf16.msra.mxu0 0
        %2226 = vmatprep.subr.bf16.mxu0 0
        %2227 = vmatpush2.bf16.msra.mxu0 0
        %2228 = vmatprep.mubr.bf16.mxu0 0
        %2229 = vmatmul.mubr.bf16.gmra.mxu0 %v2113
        %v2230 = vpop.f32.mrf.mxu0
        %v2231 = vadd.f32 0.0, %v2230
        %v2232 = vpop.f32.mrf.mxu0
        %v2233 = vpop.f32.mrf.mxu0
        %v2234 = vadd.f32 0.0, %v2233
        %v2235 = vpop.f32.mrf.mxu0
        %2236 = vmatprep.mubr.bf16.mxu0 0
        %2237 = vmatmul.mubr.bf16.gmra.mxu0 %v2115
        %v2238 = vpop.f32.mrf.mxu0
        %v2239 = vadd.f32 0.0, %v2238
        %v2240 = vpop.f32.mrf.mxu0
        %v2241 = vpop.f32.mrf.mxu0
        %v2242 = vadd.f32 0.0, %v2241
        %v2243 = vpop.f32.mrf.mxu0
        %2244 = vmatprep.mubr.bf16.mxu0 0
        %2245 = vmatmul.mubr.bf16.gmra.mxu0 %v2117
        %v2246 = vpop.f32.mrf.mxu0
        %v2247 = vadd.f32 0.0, %v2246
        %v2248 = vpop.f32.mrf.mxu0
        %v2249 = vpop.f32.mrf.mxu0
        %v2250 = vadd.f32 0.0, %v2249
        %v2251 = vpop.f32.mrf.mxu0
        %2252 = vmatprep.mubr.bf16.mxu0 0
        %2253 = vmatmul.mubr.bf16.gmra.mxu0 %v2119
        %v2254 = vpop.f32.mrf.mxu0
        %v2255 = vadd.f32 0.0, %v2254
        %v2256 = vpop.f32.mrf.mxu0
        %v2257 = vpop.f32.mrf.mxu0
        %v2258 = vadd.f32 0.0, %v2257
        %v2259 = vpop.f32.mrf.mxu0
        %2260 = vmatprep.mubr.bf16.mxu0 0
        %2261 = vmatmul.mubr.bf16.gmra.mxu0 %v2121
        %v2262 = vpop.f32.mrf.mxu0
        %v2263 = vadd.f32 0.0, %v2262
        %v2264 = vpop.f32.mrf.mxu0
        %v2265 = vpop.f32.mrf.mxu0
        %v2266 = vadd.f32 0.0, %v2265
        %v2267 = vpop.f32.mrf.mxu0
        %2268 = vmatprep.mubr.bf16.mxu0 0
        %2269 = vmatmul.mubr.bf16.gmra.mxu0 %v2123
        %v2270 = vpop.f32.mrf.mxu0
        %v2271 = vadd.f32 0.0, %v2270
        %v2272 = vpop.f32.mrf.mxu0
        %v2273 = vpop.f32.mrf.mxu0
        %v2274 = vadd.f32 0.0, %v2273
        %v2275 = vpop.f32.mrf.mxu0
        %2276 = vmatprep.mubr.bf16.mxu0 0
        %2277 = vmatmul.mubr.bf16.gmra.mxu0 %v2125
        %v2278 = vpop.f32.mrf.mxu0
        %v2279 = vadd.f32 0.0, %v2278
        %v2280 = vpop.f32.mrf.mxu0
        %v2281 = vpop.f32.mrf.mxu0
        %v2282 = vadd.f32 0.0, %v2281
        %v2283 = vpop.f32.mrf.mxu0
        %2284 = vmatprep.mubr.bf16.mxu0 0
        %2285 = vmatmul.mubr.bf16.gmra.mxu0 %v2127
        %v2286 = vpop.f32.mrf.mxu0
        %v2287 = vadd.f32 0.0, %v2286
        %v2288 = vpop.f32.mrf.mxu0
        %v2289 = vpop.f32.mrf.mxu0
        %v2290 = vadd.f32 0.0, %v2289
        %v2291 = vpop.f32.mrf.mxu0
        %2292 = vmatprep.mubr.bf16.mxu0 0
        %2293 = vmatmul.mubr.bf16.gmra.mxu0 %v2129
        %v2294 = vpop.f32.mrf.mxu0
        %v2295 = vadd.f32 0.0, %v2294
        %v2296 = vpop.f32.mrf.mxu0
        %v2297 = vpop.f32.mrf.mxu0
        %v2298 = vadd.f32 0.0, %v2297
        %v2299 = vpop.f32.mrf.mxu0
        %2300 = vmatprep.mubr.bf16.mxu0 0
        %2301 = vmatmul.mubr.bf16.gmra.mxu0 %v2131
        %v2302 = vpop.f32.mrf.mxu0
        %v2303 = vadd.f32 0.0, %v2302
        %v2304 = vpop.f32.mrf.mxu0
        %v2305 = vpop.f32.mrf.mxu0
        %v2306 = vadd.f32 0.0, %v2305
        %v2307 = vpop.f32.mrf.mxu0
        %2308 = vmatprep.mubr.bf16.mxu0 0
        %2309 = vmatmul.mubr.bf16.gmra.mxu0 %v2133
        %v2310 = vpop.f32.mrf.mxu0
        %v2311 = vadd.f32 0.0, %v2310
        %v2312 = vpop.f32.mrf.mxu0
        %v2313 = vpop.f32.mrf.mxu0
        %v2314 = vadd.f32 0.0, %v2313
        %v2315 = vpop.f32.mrf.mxu0
        %2316 = vmatprep.mubr.bf16.mxu0 0
        %2317 = vmatmul.mubr.bf16.gmra.mxu0 %v2135
        %v2318 = vpop.f32.mrf.mxu0
        %v2319 = vadd.f32 0.0, %v2318
        %v2320 = vpop.f32.mrf.mxu0
        %v2321 = vpop.f32.mrf.mxu0
        %v2322 = vadd.f32 0.0, %v2321
        %v2323 = vpop.f32.mrf.mxu0
        %2324 = vdwg.mxu0
        %v2325 = vld [vmem:[#allocation2] sm:$0xff]
        %v2326 = vld [vmem:[#allocation2 + $0x8] sm:$0xff]
        %v2327 = vld [vmem:[#allocation2 + $0x10] sm:$0xff]
        %v2328 = vld [vmem:[#allocation2 + $0x18] sm:$0xff]
        %v2329 = vld [vmem:[#allocation2 + $0x20] sm:$0xff]
        %v2330 = vld [vmem:[#allocation2 + $0x28] sm:$0xff]
        %v2331 = vld [vmem:[#allocation2 + $0x30] sm:$0xff]
        %v2332 = vld [vmem:[#allocation2 + $0x38] sm:$0xff]
        %v2333 = vld [vmem:[#allocation2 + $0x40] sm:$0xff]
        %v2334 = vld [vmem:[#allocation2 + $0x48] sm:$0xff]
        %v2335 = vld [vmem:[#allocation2 + $0x50] sm:$0xff]
        %v2336 = vld [vmem:[#allocation2 + $0x58] sm:$0xff]
        %v2337 = vld [vmem:[#allocation2 + $0x60] sm:$0xff]
        %v2338 = vld [vmem:[#allocation2 + $0x68] sm:$0xff]
        %v2339 = vld [vmem:[#allocation2 + $0x70] sm:$0xff]
        %v2340 = vld [vmem:[#allocation2 + $0x78] sm:$0xff]
        %v2341 = vld [vmem:[#allocation2 + $0x80] sm:$0xff]
        %v2342 = vld [vmem:[#allocation2 + $0x88] sm:$0xff]
        %v2343 = vld [vmem:[#allocation2 + $0x90] sm:$0xff]
        %v2344 = vld [vmem:[#allocation2 + $0x98] sm:$0xff]
        %v2345 = vld [vmem:[#allocation2 + $0xa0] sm:$0xff]
        %v2346 = vld [vmem:[#allocation2 + $0xa8] sm:$0xff]
        %v2347 = vld [vmem:[#allocation2 + $0xb0] sm:$0xff]
        %v2348 = vld [vmem:[#allocation2 + $0xb8] sm:$0xff]
        %v2349 = vadd.f32 %v2325, %v2231
        %v2350 = vadd.f32 %v2326, %v2234
        %v2351 = vadd.f32 %v2327, %v2239
        %v2352 = vadd.f32 %v2328, %v2242
        %v2353 = vadd.f32 %v2329, %v2247
        %v2354 = vadd.f32 %v2330, %v2250
        %v2355 = vadd.f32 %v2331, %v2255
        %v2356 = vadd.f32 %v2332, %v2258
        %v2357 = vadd.f32 %v2333, %v2263
        %v2358 = vadd.f32 %v2334, %v2266
        %v2359 = vadd.f32 %v2335, %v2271
        %v2360 = vadd.f32 %v2336, %v2274
        %v2361 = vadd.f32 %v2337, %v2279
        %v2362 = vadd.f32 %v2338, %v2282
        %v2363 = vadd.f32 %v2339, %v2287
        %v2364 = vadd.f32 %v2340, %v2290
        %v2365 = vadd.f32 %v2341, %v2295
        %v2366 = vadd.f32 %v2342, %v2298
        %v2367 = vadd.f32 %v2343, %v2303
        %v2368 = vadd.f32 %v2344, %v2306
        %v2369 = vadd.f32 %v2345, %v2311
        %v2370 = vadd.f32 %v2346, %v2314
        %v2371 = vadd.f32 %v2347, %v2319
        %v2372 = vadd.f32 %v2348, %v2322
        %2373 = vst [vmem:[#allocation2] sm:$0xff] %v2349
        %2374 = vst [vmem:[#allocation2 + $0x8] sm:$0xff] %v2350
        %2375 = vst [vmem:[#allocation2 + $0x10] sm:$0xff] %v2351
        %2376 = vst [vmem:[#allocation2 + $0x18] sm:$0xff] %v2352
        %2377 = vst [vmem:[#allocation2 + $0x20] sm:$0xff] %v2353
        %2378 = vst [vmem:[#allocation2 + $0x28] sm:$0xff] %v2354
        %2379 = vst [vmem:[#allocation2 + $0x30] sm:$0xff] %v2355
        %2380 = vst [vmem:[#allocation2 + $0x38] sm:$0xff] %v2356
        %2381 = vst [vmem:[#allocation2 + $0x40] sm:$0xff] %v2357
        %2382 = vst [vmem:[#allocation2 + $0x48] sm:$0xff] %v2358
        %2383 = vst [vmem:[#allocation2 + $0x50] sm:$0xff] %v2359
        %2384 = vst [vmem:[#allocation2 + $0x58] sm:$0xff] %v2360
        %2385 = vst [vmem:[#allocation2 + $0x60] sm:$0xff] %v2361
        %2386 = vst [vmem:[#allocation2 + $0x68] sm:$0xff] %v2362
        %2387 = vst [vmem:[#allocation2 + $0x70] sm:$0xff] %v2363
        %2388 = vst [vmem:[#allocation2 + $0x78] sm:$0xff] %v2364
        %2389 = vst [vmem:[#allocation2 + $0x80] sm:$0xff] %v2365
        %2390 = vst [vmem:[#allocation2 + $0x88] sm:$0xff] %v2366
        %2391 = vst [vmem:[#allocation2 + $0x90] sm:$0xff] %v2367
        %2392 = vst [vmem:[#allocation2 + $0x98] sm:$0xff] %v2368
        %2393 = vst [vmem:[#allocation2 + $0xa0] sm:$0xff] %v2369
        %2394 = vst [vmem:[#allocation2 + $0xa8] sm:$0xff] %v2370
        %2395 = vst [vmem:[#allocation2 + $0xb0] sm:$0xff] %v2371
        %2396 = vst [vmem:[#allocation2 + $0xb8] sm:$0xff] %v2372
        %s2397 = scalar_lea.vmem [#allocation8], 256
        %v2398 = vld [vmem:[%s2397] sm:$0xf]
        %v2399 = vld [vmem:[%s2397 + $0x4] sm:$0xf]
        %v2400 = vld [vmem:[%s2397 + $0x8] sm:$0xf]
        %v2401 = vld [vmem:[%s2397 + $0xc] sm:$0xf]
        %v2402 = vld [vmem:[%s2397 + $0x10] sm:$0xf]
        %v2403 = vld [vmem:[%s2397 + $0x14] sm:$0xf]
        %v2404 = vld [vmem:[%s2397 + $0x18] sm:$0xf]
        %v2405 = vld [vmem:[%s2397 + $0x1c] sm:$0xf]
        %v2406 = vld [vmem:[%s2397 + $0x20] sm:$0xf]
        %v2407 = vld [vmem:[%s2397 + $0x24] sm:$0xf]
        %v2408 = vld [vmem:[%s2397 + $0x28] sm:$0xf]
        %v2409 = vld [vmem:[%s2397 + $0x2c] sm:$0xf]
        %v2410 = vld [vmem:[%s2397 + $0x30] sm:$0xf]
        %v2411 = vld [vmem:[%s2397 + $0x34] sm:$0xf]
        %v2412 = vld [vmem:[%s2397 + $0x38] sm:$0xf]
        %v2413 = vld [vmem:[%s2397 + $0x3c] sm:$0xf]
        %vm2414 = vsmask.f32 3328
        %v2415 = vrot.slane %v1416, 4
        %v2416 = vrot.slane %v1418, 5
        %v2417 = vor.u32 %v2415, %v2416
        %v2418 = vrot.slane %v1427, 4
        %v2419 = vrot.slane %v1423, 5
        %v2420 = vor.u32 %v2418, %v2419
        %v2421 = vsel %vm2414, %v2417, %v2420
        %v2422 = vrot.slane %v1435, 4
        %v2423 = vrot.slane %v1431, 5
        %v2424 = vor.u32 %v2422, %v2423
        %v2425 = vsel %vm2414, %v2420, %v2424
        %v2426 = vrot.slane %v1443, 4
        %v2427 = vrot.slane %v1439, 5
        %v2428 = vor.u32 %v2426, %v2427
        %v2429 = vsel %vm2414, %v2424, %v2428
        %v2430 = vrot.slane %v1451, 4
        %v2431 = vrot.slane %v1447, 5
        %v2432 = vor.u32 %v2430, %v2431
        %v2433 = vsel %vm2414, %v2428, %v2432
        %v2434 = vrot.slane %v1459, 4
        %v2435 = vrot.slane %v1455, 5
        %v2436 = vor.u32 %v2434, %v2435
        %v2437 = vsel %vm2414, %v2432, %v2436
        %v2438 = vrot.slane %v1467, 4
        %v2439 = vrot.slane %v1463, 5
        %v2440 = vor.u32 %v2438, %v2439
        %v2441 = vsel %vm2414, %v2436, %v2440
        %v2442 = vrot.slane %v1475, 4
        %v2443 = vrot.slane %v1471, 5
        %v2444 = vor.u32 %v2442, %v2443
        %v2445 = vsel %vm2414, %v2440, %v2444
        %v2446 = vrot.slane %v1483, 4
        %v2447 = vrot.slane %v1479, 5
        %v2448 = vor.u32 %v2446, %v2447
        %v2449 = vsel %vm2414, %v2444, %v2448
        %v2450 = vrot.slane %v1491, 4
        %v2451 = vrot.slane %v1487, 5
        %v2452 = vor.u32 %v2450, %v2451
        %v2453 = vsel %vm2414, %v2448, %v2452
        %v2454 = vrot.slane %v1499, 4
        %v2455 = vrot.slane %v1495, 5
        %v2456 = vor.u32 %v2454, %v2455
        %v2457 = vsel %vm2414, %v2452, %v2456
        %v2458 = vrot.slane %v1507, 4
        %v2459 = vrot.slane %v1503, 5
        %v2460 = vor.u32 %v2458, %v2459
        %v2461 = vsel %vm2414, %v2456, %v2460
        %v2462 = vshrl.u32 %v1172, 16
        %v2464 = vrot.slane %v2462, 4
        %v2465 = vrot.slane %v1511, 5
        %v2466 = vor.u32 %v2464, %v2465
        %v2467 = vsel %vm2414, %v2460, %v2466
        %v2496 = vunpack.c.l.b16 %v2398
        %v2497 = vunpack.c.l.b16 %v2399
        %v2498 = vunpack.c.l.b16 %v2400
        %v2499 = vunpack.c.l.b16 %v2401
        %v2500 = vunpack.c.l.b16 %v2402
        %v2501 = vunpack.c.l.b16 %v2403
        %v2502 = vunpack.c.l.b16 %v2404
        %v2503 = vunpack.c.l.b16 %v2405
        %v2504 = vunpack.c.l.b16 %v2406
        %v2505 = vunpack.c.l.b16 %v2407
        %v2506 = vunpack.c.l.b16 %v2408
        %v2507 = vunpack.c.l.b16 %v2409
        %v2508 = vunpack.c.l.b16 %v2410
        %v2509 = vunpack.c.l.b16 %v2411
        %v2510 = vunpack.c.l.b16 %v2412
        %v2511 = vunpack.c.l.b16 %v2413
        %v2512 = vpack.c.b16 %v2497, %v2496
        %v2513 = vpack.c.b16 %v2499, %v2498
        %v2514 = vpack.c.b16 %v2501, %v2500
        %v2515 = vpack.c.b16 %v2503, %v2502
        %v2516 = vpack.c.b16 %v2505, %v2504
        %v2517 = vpack.c.b16 %v2507, %v2506
        %v2518 = vpack.c.b16 %v2509, %v2508
        %v2519 = vpack.c.b16 %v2511, %v2510
        %2528 = vmatprep.subr.bf16.mxu0 0
        %2529 = vmatpush1.bf16.msra.mxu0 %v2519
        %2530 = vmatprep.subr.bf16.mxu0 0
        %2531 = vmatpush1.bf16.msra.mxu0 %v2518
        %2532 = vmatprep.subr.bf16.mxu0 0
        %2533 = vmatpush1.bf16.msra.mxu0 %v2517
        %2534 = vmatprep.subr.bf16.mxu0 0
        %2535 = vmatpush1.bf16.msra.mxu0 %v2516
        %2536 = vmatprep.subr.bf16.mxu0 0
        %2537 = vmatpush1.bf16.msra.mxu0 %v2515
        %2538 = vmatprep.subr.bf16.mxu0 0
        %2539 = vmatpush1.bf16.msra.mxu0 %v2514
        %2540 = vmatprep.subr.bf16.mxu0 0
        %2541 = vmatpush1.bf16.msra.mxu0 %v2513
        %2542 = vmatprep.subr.bf16.mxu0 0
        %2543 = vmatpush1.bf16.msra.mxu0 %v2512
        %2544 = vmatprep.subr.bf16.mxu0 0
        %2545 = vmatpush2.bf16.msra.mxu0 0
        %2546 = vmatprep.subr.bf16.mxu0 0
        %2547 = vmatpush2.bf16.msra.mxu0 0
        %2548 = vmatprep.subr.bf16.mxu0 0
        %2549 = vmatpush2.bf16.msra.mxu0 0
        %2550 = vmatprep.subr.bf16.mxu0 0
        %2551 = vmatpush2.bf16.msra.mxu0 0
        %2552 = vmatprep.subr.bf16.mxu0 0
        %2553 = vmatpush2.bf16.msra.mxu0 0
        %2554 = vmatprep.subr.bf16.mxu0 0
        %2555 = vmatpush2.bf16.msra.mxu0 0
        %2556 = vmatprep.subr.bf16.mxu0 0
        %2557 = vmatpush2.bf16.msra.mxu0 0
        %2558 = vmatprep.subr.bf16.mxu0 0
        %2559 = vmatpush2.bf16.msra.mxu0 0
        %2560 = vmatprep.mubr.bf16.mxu0 0
        %2561 = vmatmul.mubr.bf16.gmra.mxu0 %v2421
        %v2562 = vpop.f32.mrf.mxu0
        %v2563 = vadd.f32 0.0, %v2562
        %v2564 = vpop.f32.mrf.mxu0
        %v2565 = vpop.f32.mrf.mxu0
        %v2566 = vadd.f32 0.0, %v2565
        %v2567 = vpop.f32.mrf.mxu0
        %2568 = vmatprep.mubr.bf16.mxu0 0
        %2569 = vmatmul.mubr.bf16.gmra.mxu0 %v2425
        %v2570 = vpop.f32.mrf.mxu0
        %v2571 = vadd.f32 0.0, %v2570
        %v2572 = vpop.f32.mrf.mxu0
        %v2573 = vpop.f32.mrf.mxu0
        %v2574 = vadd.f32 0.0, %v2573
        %v2575 = vpop.f32.mrf.mxu0
        %2576 = vmatprep.mubr.bf16.mxu0 0
        %2577 = vmatmul.mubr.bf16.gmra.mxu0 %v2429
        %v2578 = vpop.f32.mrf.mxu0
        %v2579 = vadd.f32 0.0, %v2578
        %v2580 = vpop.f32.mrf.mxu0
        %v2581 = vpop.f32.mrf.mxu0
        %v2582 = vadd.f32 0.0, %v2581
        %v2583 = vpop.f32.mrf.mxu0
        %2584 = vmatprep.mubr.bf16.mxu0 0
        %2585 = vmatmul.mubr.bf16.gmra.mxu0 %v2433
        %v2586 = vpop.f32.mrf.mxu0
        %v2587 = vadd.f32 0.0, %v2586
        %v2588 = vpop.f32.mrf.mxu0
        %v2589 = vpop.f32.mrf.mxu0
        %v2590 = vadd.f32 0.0, %v2589
        %v2591 = vpop.f32.mrf.mxu0
        %2592 = vmatprep.mubr.bf16.mxu0 0
        %2593 = vmatmul.mubr.bf16.gmra.mxu0 %v2437
        %v2594 = vpop.f32.mrf.mxu0
        %v2595 = vadd.f32 0.0, %v2594
        %v2596 = vpop.f32.mrf.mxu0
        %v2597 = vpop.f32.mrf.mxu0
        %v2598 = vadd.f32 0.0, %v2597
        %v2599 = vpop.f32.mrf.mxu0
        %2600 = vmatprep.mubr.bf16.mxu0 0
        %2601 = vmatmul.mubr.bf16.gmra.mxu0 %v2441
        %v2602 = vpop.f32.mrf.mxu0
        %v2603 = vadd.f32 0.0, %v2602
        %v2604 = vpop.f32.mrf.mxu0
        %v2605 = vpop.f32.mrf.mxu0
        %v2606 = vadd.f32 0.0, %v2605
        %v2607 = vpop.f32.mrf.mxu0
        %2608 = vmatprep.mubr.bf16.mxu0 0
        %2609 = vmatmul.mubr.bf16.gmra.mxu0 %v2445
        %v2610 = vpop.f32.mrf.mxu0
        %v2611 = vadd.f32 0.0, %v2610
        %v2612 = vpop.f32.mrf.mxu0
        %v2613 = vpop.f32.mrf.mxu0
        %v2614 = vadd.f32 0.0, %v2613
        %v2615 = vpop.f32.mrf.mxu0
        %2616 = vmatprep.mubr.bf16.mxu0 0
        %2617 = vmatmul.mubr.bf16.gmra.mxu0 %v2449
        %v2618 = vpop.f32.mrf.mxu0
        %v2619 = vadd.f32 0.0, %v2618
        %v2620 = vpop.f32.mrf.mxu0
        %v2621 = vpop.f32.mrf.mxu0
        %v2622 = vadd.f32 0.0, %v2621
        %v2623 = vpop.f32.mrf.mxu0
        %2624 = vmatprep.mubr.bf16.mxu0 0
        %2625 = vmatmul.mubr.bf16.gmra.mxu0 %v2453
        %v2626 = vpop.f32.mrf.mxu0
        %v2627 = vadd.f32 0.0, %v2626
        %v2628 = vpop.f32.mrf.mxu0
        %v2629 = vpop.f32.mrf.mxu0
        %v2630 = vadd.f32 0.0, %v2629
        %v2631 = vpop.f32.mrf.mxu0
        %2632 = vmatprep.mubr.bf16.mxu0 0
        %2633 = vmatmul.mubr.bf16.gmra.mxu0 %v2457
        %v2634 = vpop.f32.mrf.mxu0
        %v2635 = vadd.f32 0.0, %v2634
        %v2636 = vpop.f32.mrf.mxu0
        %v2637 = vpop.f32.mrf.mxu0
        %v2638 = vadd.f32 0.0, %v2637
        %v2639 = vpop.f32.mrf.mxu0
        %2640 = vmatprep.mubr.bf16.mxu0 0
        %2641 = vmatmul.mubr.bf16.gmra.mxu0 %v2461
        %v2642 = vpop.f32.mrf.mxu0
        %v2643 = vadd.f32 0.0, %v2642
        %v2644 = vpop.f32.mrf.mxu0
        %v2645 = vpop.f32.mrf.mxu0
        %v2646 = vadd.f32 0.0, %v2645
        %v2647 = vpop.f32.mrf.mxu0
        %2648 = vmatprep.mubr.bf16.mxu0 0
        %2649 = vmatmul.mubr.bf16.gmra.mxu0 %v2467
        %v2650 = vpop.f32.mrf.mxu0
        %v2651 = vadd.f32 0.0, %v2650
        %v2652 = vpop.f32.mrf.mxu0
        %v2653 = vpop.f32.mrf.mxu0
        %v2654 = vadd.f32 0.0, %v2653
        %v2655 = vpop.f32.mrf.mxu0
        %2656 = vdwg.mxu0
        %v2657 = vld [vmem:[#allocation2] sm:$0xff]
        %v2658 = vld [vmem:[#allocation2 + $0x8] sm:$0xff]
        %v2659 = vld [vmem:[#allocation2 + $0x10] sm:$0xff]
        %v2660 = vld [vmem:[#allocation2 + $0x18] sm:$0xff]
        %v2661 = vld [vmem:[#allocation2 + $0x20] sm:$0xff]
        %v2662 = vld [vmem:[#allocation2 + $0x28] sm:$0xff]
        %v2663 = vld [vmem:[#allocation2 + $0x30] sm:$0xff]
        %v2664 = vld [vmem:[#allocation2 + $0x38] sm:$0xff]
        %v2665 = vld [vmem:[#allocation2 + $0x40] sm:$0xff]
        %v2666 = vld [vmem:[#allocation2 + $0x48] sm:$0xff]
        %v2667 = vld [vmem:[#allocation2 + $0x50] sm:$0xff]
        %v2668 = vld [vmem:[#allocation2 + $0x58] sm:$0xff]
        %v2669 = vld [vmem:[#allocation2 + $0x60] sm:$0xff]
        %v2670 = vld [vmem:[#allocation2 + $0x68] sm:$0xff]
        %v2671 = vld [vmem:[#allocation2 + $0x70] sm:$0xff]
        %v2672 = vld [vmem:[#allocation2 + $0x78] sm:$0xff]
        %v2673 = vld [vmem:[#allocation2 + $0x80] sm:$0xff]
        %v2674 = vld [vmem:[#allocation2 + $0x88] sm:$0xff]
        %v2675 = vld [vmem:[#allocation2 + $0x90] sm:$0xff]
        %v2676 = vld [vmem:[#allocation2 + $0x98] sm:$0xff]
        %v2677 = vld [vmem:[#allocation2 + $0xa0] sm:$0xff]
        %v2678 = vld [vmem:[#allocation2 + $0xa8] sm:$0xff]
        %v2679 = vld [vmem:[#allocation2 + $0xb0] sm:$0xff]
        %v2680 = vld [vmem:[#allocation2 + $0xb8] sm:$0xff]
        %v2681 = vadd.f32 %v2657, %v2563
        %v2682 = vadd.f32 %v2658, %v2566
        %v2683 = vadd.f32 %v2659, %v2571
        %v2684 = vadd.f32 %v2660, %v2574
        %v2685 = vadd.f32 %v2661, %v2579
        %v2686 = vadd.f32 %v2662, %v2582
        %v2687 = vadd.f32 %v2663, %v2587
        %v2688 = vadd.f32 %v2664, %v2590
        %v2689 = vadd.f32 %v2665, %v2595
        %v2690 = vadd.f32 %v2666, %v2598
        %v2691 = vadd.f32 %v2667, %v2603
        %v2692 = vadd.f32 %v2668, %v2606
        %v2693 = vadd.f32 %v2669, %v2611
        %v2694 = vadd.f32 %v2670, %v2614
        %v2695 = vadd.f32 %v2671, %v2619
        %v2696 = vadd.f32 %v2672, %v2622
        %v2697 = vadd.f32 %v2673, %v2627
        %v2698 = vadd.f32 %v2674, %v2630
        %v2699 = vadd.f32 %v2675, %v2635
        %v2700 = vadd.f32 %v2676, %v2638
        %v2701 = vadd.f32 %v2677, %v2643
        %v2702 = vadd.f32 %v2678, %v2646
        %v2703 = vadd.f32 %v2679, %v2651
        %v2704 = vadd.f32 %v2680, %v2654
        %2705 = vst [vmem:[#allocation2] sm:$0xff] %v2681
        %2706 = vst [vmem:[#allocation2 + $0x8] sm:$0xff] %v2682
        %2707 = vst [vmem:[#allocation2 + $0x10] sm:$0xff] %v2683
        %2708 = vst [vmem:[#allocation2 + $0x18] sm:$0xff] %v2684
        %2709 = vst [vmem:[#allocation2 + $0x20] sm:$0xff] %v2685
        %2710 = vst [vmem:[#allocation2 + $0x28] sm:$0xff] %v2686
        %2711 = vst [vmem:[#allocation2 + $0x30] sm:$0xff] %v2687
        %2712 = vst [vmem:[#allocation2 + $0x38] sm:$0xff] %v2688
        %2713 = vst [vmem:[#allocation2 + $0x40] sm:$0xff] %v2689
        %2714 = vst [vmem:[#allocation2 + $0x48] sm:$0xff] %v2690
        %2715 = vst [vmem:[#allocation2 + $0x50] sm:$0xff] %v2691
        %2716 = vst [vmem:[#allocation2 + $0x58] sm:$0xff] %v2692
        %2717 = vst [vmem:[#allocation2 + $0x60] sm:$0xff] %v2693
        %2718 = vst [vmem:[#allocation2 + $0x68] sm:$0xff] %v2694
        %2719 = vst [vmem:[#allocation2 + $0x70] sm:$0xff] %v2695
        %2720 = vst [vmem:[#allocation2 + $0x78] sm:$0xff] %v2696
        %2721 = vst [vmem:[#allocation2 + $0x80] sm:$0xff] %v2697
        %2722 = vst [vmem:[#allocation2 + $0x88] sm:$0xff] %v2698
        %2723 = vst [vmem:[#allocation2 + $0x90] sm:$0xff] %v2699
        %2724 = vst [vmem:[#allocation2 + $0x98] sm:$0xff] %v2700
        %2725 = vst [vmem:[#allocation2 + $0xa0] sm:$0xff] %v2701
        %2726 = vst [vmem:[#allocation2 + $0xa8] sm:$0xff] %v2702
        %2727 = vst [vmem:[#allocation2 + $0xb0] sm:$0xff] %v2703
        %2728 = vst [vmem:[#allocation2 + $0xb8] sm:$0xff] %v2704
        %s2729 = scalar_lea.vmem [#allocation8], 320
        %v2730 = vld [vmem:[%s2729] sm:$0xf]
        %v2731 = vld [vmem:[%s2729 + $0x4] sm:$0xf]
        %v2732 = vld [vmem:[%s2729 + $0x8] sm:$0xf]
        %v2733 = vld [vmem:[%s2729 + $0xc] sm:$0xf]
        %v2734 = vld [vmem:[%s2729 + $0x10] sm:$0xf]
        %v2735 = vld [vmem:[%s2729 + $0x14] sm:$0xf]
        %v2736 = vld [vmem:[%s2729 + $0x18] sm:$0xf]
        %v2737 = vld [vmem:[%s2729 + $0x1c] sm:$0xf]
        %v2738 = vld [vmem:[%s2729 + $0x20] sm:$0xf]
        %v2739 = vld [vmem:[%s2729 + $0x24] sm:$0xf]
        %v2740 = vld [vmem:[%s2729 + $0x28] sm:$0xf]
        %v2741 = vld [vmem:[%s2729 + $0x2c] sm:$0xf]
        %v2742 = vld [vmem:[%s2729 + $0x30] sm:$0xf]
        %v2743 = vld [vmem:[%s2729 + $0x34] sm:$0xf]
        %v2744 = vld [vmem:[%s2729 + $0x38] sm:$0xf]
        %v2745 = vld [vmem:[%s2729 + $0x3c] sm:$0xf]
        %vm2746 = vcmask 1042432
        %v2747 = vrot.slane %v1160, 5
        %v2748 = vrot.slane %v1161, 5
        %v2749 = vsel %vm2746, %v2747, %v2748
        %v2750 = vrot.slane %v1162, 5
        %v2751 = vsel %vm2746, %v2748, %v2750
        %v2752 = vrot.slane %v1163, 5
        %v2753 = vsel %vm2746, %v2750, %v2752
        %v2754 = vrot.slane %v1164, 5
        %v2755 = vsel %vm2746, %v2752, %v2754
        %v2756 = vrot.slane %v1165, 5
        %v2757 = vsel %vm2746, %v2754, %v2756
        %v2758 = vrot.slane %v1166, 5
        %v2759 = vsel %vm2746, %v2756, %v2758
        %v2760 = vrot.slane %v1167, 5
        %v2761 = vsel %vm2746, %v2758, %v2760
        %v2762 = vrot.slane %v1168, 5
        %v2763 = vsel %vm2746, %v2760, %v2762
        %v2764 = vrot.slane %v1169, 5
        %v2765 = vsel %vm2746, %v2762, %v2764
        %v2766 = vrot.slane %v1170, 5
        %v2767 = vsel %vm2746, %v2764, %v2766
        %v2768 = vrot.slane %v1171, 5
        %v2769 = vsel %vm2746, %v2766, %v2768
        %v2770 = vrot.slane %v1172, 5
        %v2771 = vsel %vm2746, %v2768, %v2770
        %v2800 = vunpack.c.l.b16 %v2730
        %v2801 = vunpack.c.l.b16 %v2731
        %v2802 = vunpack.c.l.b16 %v2732
        %v2803 = vunpack.c.l.b16 %v2733
        %v2804 = vunpack.c.l.b16 %v2734
        %v2805 = vunpack.c.l.b16 %v2735
        %v2806 = vunpack.c.l.b16 %v2736
        %v2807 = vunpack.c.l.b16 %v2737
        %v2808 = vunpack.c.l.b16 %v2738
        %v2809 = vunpack.c.l.b16 %v2739
        %v2810 = vunpack.c.l.b16 %v2740
        %v2811 = vunpack.c.l.b16 %v2741
        %v2812 = vunpack.c.l.b16 %v2742
        %v2813 = vunpack.c.l.b16 %v2743
        %v2814 = vunpack.c.l.b16 %v2744
        %v2815 = vunpack.c.l.b16 %v2745
        %v2816 = vpack.c.b16 %v2801, %v2800
        %v2817 = vpack.c.b16 %v2803, %v2802
        %v2818 = vpack.c.b16 %v2805, %v2804
        %v2819 = vpack.c.b16 %v2807, %v2806
        %v2820 = vpack.c.b16 %v2809, %v2808
        %v2821 = vpack.c.b16 %v2811, %v2810
        %v2822 = vpack.c.b16 %v2813, %v2812
        %v2823 = vpack.c.b16 %v2815, %v2814
        %2832 = vmatprep.subr.bf16.mxu0 0
        %2833 = vmatpush1.bf16.msra.mxu0 %v2823
        %2834 = vmatprep.subr.bf16.mxu0 0
        %2835 = vmatpush1.bf16.msra.mxu0 %v2822
        %2836 = vmatprep.subr.bf16.mxu0 0
        %2837 = vmatpush1.bf16.msra.mxu0 %v2821
        %2838 = vmatprep.subr.bf16.mxu0 0
        %2839 = vmatpush1.bf16.msra.mxu0 %v2820
        %2840 = vmatprep.subr.bf16.mxu0 0
        %2841 = vmatpush1.bf16.msra.mxu0 %v2819
        %2842 = vmatprep.subr.bf16.mxu0 0
        %2843 = vmatpush1.bf16.msra.mxu0 %v2818
        %2844 = vmatprep.subr.bf16.mxu0 0
        %2845 = vmatpush1.bf16.msra.mxu0 %v2817
        %2846 = vmatprep.subr.bf16.mxu0 0
        %2847 = vmatpush1.bf16.msra.mxu0 %v2816
        %2848 = vmatprep.subr.bf16.mxu0 0
        %2849 = vmatpush2.bf16.msra.mxu0 0
        %2850 = vmatprep.subr.bf16.mxu0 0
        %2851 = vmatpush2.bf16.msra.mxu0 0
        %2852 = vmatprep.subr.bf16.mxu0 0
        %2853 = vmatpush2.bf16.msra.mxu0 0
        %2854 = vmatprep.subr.bf16.mxu0 0
        %2855 = vmatpush2.bf16.msra.mxu0 0
        %2856 = vmatprep.subr.bf16.mxu0 0
        %2857 = vmatpush2.bf16.msra.mxu0 0
        %2858 = vmatprep.subr.bf16.mxu0 0
        %2859 = vmatpush2.bf16.msra.mxu0 0
        %2860 = vmatprep.subr.bf16.mxu0 0
        %2861 = vmatpush2.bf16.msra.mxu0 0
        %2862 = vmatprep.subr.bf16.mxu0 0
        %2863 = vmatpush2.bf16.msra.mxu0 0
        %2864 = vmatprep.mubr.bf16.mxu0 0
        %2865 = vmatmul.mubr.bf16.gmra.mxu0 %v2749
        %v2866 = vpop.f32.mrf.mxu0
        %v2867 = vadd.f32 0.0, %v2866
        %v2868 = vpop.f32.mrf.mxu0
        %v2869 = vpop.f32.mrf.mxu0
        %v2870 = vadd.f32 0.0, %v2869
        %v2871 = vpop.f32.mrf.mxu0
        %2872 = vmatprep.mubr.bf16.mxu0 0
        %2873 = vmatmul.mubr.bf16.gmra.mxu0 %v2751
        %v2874 = vpop.f32.mrf.mxu0
        %v2875 = vadd.f32 0.0, %v2874
        %v2876 = vpop.f32.mrf.mxu0
        %v2877 = vpop.f32.mrf.mxu0
        %v2878 = vadd.f32 0.0, %v2877
        %v2879 = vpop.f32.mrf.mxu0
        %2880 = vmatprep.mubr.bf16.mxu0 0
        %2881 = vmatmul.mubr.bf16.gmra.mxu0 %v2753
        %v2882 = vpop.f32.mrf.mxu0
        %v2883 = vadd.f32 0.0, %v2882
        %v2884 = vpop.f32.mrf.mxu0
        %v2885 = vpop.f32.mrf.mxu0
        %v2886 = vadd.f32 0.0, %v2885
        %v2887 = vpop.f32.mrf.mxu0
        %2888 = vmatprep.mubr.bf16.mxu0 0
        %2889 = vmatmul.mubr.bf16.gmra.mxu0 %v2755
        %v2890 = vpop.f32.mrf.mxu0
        %v2891 = vadd.f32 0.0, %v2890
        %v2892 = vpop.f32.mrf.mxu0
        %v2893 = vpop.f32.mrf.mxu0
        %v2894 = vadd.f32 0.0, %v2893
        %v2895 = vpop.f32.mrf.mxu0
        %2896 = vmatprep.mubr.bf16.mxu0 0
        %2897 = vmatmul.mubr.bf16.gmra.mxu0 %v2757
        %v2898 = vpop.f32.mrf.mxu0
        %v2899 = vadd.f32 0.0, %v2898
        %v2900 = vpop.f32.mrf.mxu0
        %v2901 = vpop.f32.mrf.mxu0
        %v2902 = vadd.f32 0.0, %v2901
        %v2903 = vpop.f32.mrf.mxu0
        %2904 = vmatprep.mubr.bf16.mxu0 0
        %2905 = vmatmul.mubr.bf16.gmra.mxu0 %v2759
        %v2906 = vpop.f32.mrf.mxu0
        %v2907 = vadd.f32 0.0, %v2906
        %v2908 = vpop.f32.mrf.mxu0
        %v2909 = vpop.f32.mrf.mxu0
        %v2910 = vadd.f32 0.0, %v2909
        %v2911 = vpop.f32.mrf.mxu0
        %2912 = vmatprep.mubr.bf16.mxu0 0
        %2913 = vmatmul.mubr.bf16.gmra.mxu0 %v2761
        %v2914 = vpop.f32.mrf.mxu0
        %v2915 = vadd.f32 0.0, %v2914
        %v2916 = vpop.f32.mrf.mxu0
        %v2917 = vpop.f32.mrf.mxu0
        %v2918 = vadd.f32 0.0, %v2917
        %v2919 = vpop.f32.mrf.mxu0
        %2920 = vmatprep.mubr.bf16.mxu0 0
        %2921 = vmatmul.mubr.bf16.gmra.mxu0 %v2763
        %v2922 = vpop.f32.mrf.mxu0
        %v2923 = vadd.f32 0.0, %v2922
        %v2924 = vpop.f32.mrf.mxu0
        %v2925 = vpop.f32.mrf.mxu0
        %v2926 = vadd.f32 0.0, %v2925
        %v2927 = vpop.f32.mrf.mxu0
        %2928 = vmatprep.mubr.bf16.mxu0 0
        %2929 = vmatmul.mubr.bf16.gmra.mxu0 %v2765
        %v2930 = vpop.f32.mrf.mxu0
        %v2931 = vadd.f32 0.0, %v2930
        %v2932 = vpop.f32.mrf.mxu0
        %v2933 = vpop.f32.mrf.mxu0
        %v2934 = vadd.f32 0.0, %v2933
        %v2935 = vpop.f32.mrf.mxu0
        %2936 = vmatprep.mubr.bf16.mxu0 0
        %2937 = vmatmul.mubr.bf16.gmra.mxu0 %v2767
        %v2938 = vpop.f32.mrf.mxu0
        %v2939 = vadd.f32 0.0, %v2938
        %v2940 = vpop.f32.mrf.mxu0
        %v2941 = vpop.f32.mrf.mxu0
        %v2942 = vadd.f32 0.0, %v2941
        %v2943 = vpop.f32.mrf.mxu0
        %2944 = vmatprep.mubr.bf16.mxu0 0
        %2945 = vmatmul.mubr.bf16.gmra.mxu0 %v2769
        %v2946 = vpop.f32.mrf.mxu0
        %v2947 = vadd.f32 0.0, %v2946
        %v2948 = vpop.f32.mrf.mxu0
        %v2949 = vpop.f32.mrf.mxu0
        %v2950 = vadd.f32 0.0, %v2949
        %v2951 = vpop.f32.mrf.mxu0
        %2952 = vmatprep.mubr.bf16.mxu0 0
        %2953 = vmatmul.mubr.bf16.gmra.mxu0 %v2771
        %v2954 = vpop.f32.mrf.mxu0
        %v2955 = vadd.f32 0.0, %v2954
        %v2956 = vpop.f32.mrf.mxu0
        %v2957 = vpop.f32.mrf.mxu0
        %v2958 = vadd.f32 0.0, %v2957
        %v2959 = vpop.f32.mrf.mxu0
        %2960 = vdwg.mxu0
        %v2961 = vld [vmem:[#allocation2] sm:$0xff]
        %v2962 = vld [vmem:[#allocation2 + $0x8] sm:$0xff]
        %v2963 = vld [vmem:[#allocation2 + $0x10] sm:$0xff]
        %v2964 = vld [vmem:[#allocation2 + $0x18] sm:$0xff]
        %v2965 = vld [vmem:[#allocation2 + $0x20] sm:$0xff]
        %v2966 = vld [vmem:[#allocation2 + $0x28] sm:$0xff]
        %v2967 = vld [vmem:[#allocation2 + $0x30] sm:$0xff]
        %v2968 = vld [vmem:[#allocation2 + $0x38] sm:$0xff]
        %v2969 = vld [vmem:[#allocation2 + $0x40] sm:$0xff]
        %v2970 = vld [vmem:[#allocation2 + $0x48] sm:$0xff]
        %v2971 = vld [vmem:[#allocation2 + $0x50] sm:$0xff]
        %v2972 = vld [vmem:[#allocation2 + $0x58] sm:$0xff]
        %v2973 = vld [vmem:[#allocation2 + $0x60] sm:$0xff]
        %v2974 = vld [vmem:[#allocation2 + $0x68] sm:$0xff]
        %v2975 = vld [vmem:[#allocation2 + $0x70] sm:$0xff]
        %v2976 = vld [vmem:[#allocation2 + $0x78] sm:$0xff]
        %v2977 = vld [vmem:[#allocation2 + $0x80] sm:$0xff]
        %v2978 = vld [vmem:[#allocation2 + $0x88] sm:$0xff]
        %v2979 = vld [vmem:[#allocation2 + $0x90] sm:$0xff]
        %v2980 = vld [vmem:[#allocation2 + $0x98] sm:$0xff]
        %v2981 = vld [vmem:[#allocation2 + $0xa0] sm:$0xff]
        %v2982 = vld [vmem:[#allocation2 + $0xa8] sm:$0xff]
        %v2983 = vld [vmem:[#allocation2 + $0xb0] sm:$0xff]
        %v2984 = vld [vmem:[#allocation2 + $0xb8] sm:$0xff]
        %v2985 = vadd.f32 %v2961, %v2867
        %v2986 = vadd.f32 %v2962, %v2870
        %v2987 = vadd.f32 %v2963, %v2875
        %v2988 = vadd.f32 %v2964, %v2878
        %v2989 = vadd.f32 %v2965, %v2883
        %v2990 = vadd.f32 %v2966, %v2886
        %v2991 = vadd.f32 %v2967, %v2891
        %v2992 = vadd.f32 %v2968, %v2894
        %v2993 = vadd.f32 %v2969, %v2899
        %v2994 = vadd.f32 %v2970, %v2902
        %v2995 = vadd.f32 %v2971, %v2907
        %v2996 = vadd.f32 %v2972, %v2910
        %v2997 = vadd.f32 %v2973, %v2915
        %v2998 = vadd.f32 %v2974, %v2918
        %v2999 = vadd.f32 %v2975, %v2923
        %v3000 = vadd.f32 %v2976, %v2926
        %v3001 = vadd.f32 %v2977, %v2931
        %v3002 = vadd.f32 %v2978, %v2934
        %v3003 = vadd.f32 %v2979, %v2939
        %v3004 = vadd.f32 %v2980, %v2942
        %v3005 = vadd.f32 %v2981, %v2947
        %v3006 = vadd.f32 %v2982, %v2950
        %v3007 = vadd.f32 %v2983, %v2955
        %v3008 = vadd.f32 %v2984, %v2958
        %3009 = vst [vmem:[#allocation2] sm:$0xff] %v2985
        %3010 = vst [vmem:[#allocation2 + $0x8] sm:$0xff] %v2986
        %3011 = vst [vmem:[#allocation2 + $0x10] sm:$0xff] %v2987
        %3012 = vst [vmem:[#allocation2 + $0x18] sm:$0xff] %v2988
        %3013 = vst [vmem:[#allocation2 + $0x20] sm:$0xff] %v2989
        %3014 = vst [vmem:[#allocation2 + $0x28] sm:$0xff] %v2990
        %3015 = vst [vmem:[#allocation2 + $0x30] sm:$0xff] %v2991
        %3016 = vst [vmem:[#allocation2 + $0x38] sm:$0xff] %v2992
        %3017 = vst [vmem:[#allocation2 + $0x40] sm:$0xff] %v2993
        %3018 = vst [vmem:[#allocation2 + $0x48] sm:$0xff] %v2994
        %3019 = vst [vmem:[#allocation2 + $0x50] sm:$0xff] %v2995
        %3020 = vst [vmem:[#allocation2 + $0x58] sm:$0xff] %v2996
        %3021 = vst [vmem:[#allocation2 + $0x60] sm:$0xff] %v2997
        %3022 = vst [vmem:[#allocation2 + $0x68] sm:$0xff] %v2998
        %3023 = vst [vmem:[#allocation2 + $0x70] sm:$0xff] %v2999
        %3024 = vst [vmem:[#allocation2 + $0x78] sm:$0xff] %v3000
        %3025 = vst [vmem:[#allocation2 + $0x80] sm:$0xff] %v3001
        %3026 = vst [vmem:[#allocation2 + $0x88] sm:$0xff] %v3002
        %3027 = vst [vmem:[#allocation2 + $0x90] sm:$0xff] %v3003
        %3028 = vst [vmem:[#allocation2 + $0x98] sm:$0xff] %v3004
        %3029 = vst [vmem:[#allocation2 + $0xa0] sm:$0xff] %v3005
        %3030 = vst [vmem:[#allocation2 + $0xa8] sm:$0xff] %v3006
        %3031 = vst [vmem:[#allocation2 + $0xb0] sm:$0xff] %v3007
        %3032 = vst [vmem:[#allocation2 + $0xb8] sm:$0xff] %v3008
        %s3033 = scalar_lea.vmem [#allocation8], 384
        %v3034 = vld [vmem:[%s3033] sm:$0xf]
        %v3035 = vld [vmem:[%s3033 + $0x4] sm:$0xf]
        %v3036 = vld [vmem:[%s3033 + $0x8] sm:$0xf]
        %v3037 = vld [vmem:[%s3033 + $0xc] sm:$0xf]
        %v3038 = vld [vmem:[%s3033 + $0x10] sm:$0xf]
        %v3039 = vld [vmem:[%s3033 + $0x14] sm:$0xf]
        %v3040 = vld [vmem:[%s3033 + $0x18] sm:$0xf]
        %v3041 = vld [vmem:[%s3033 + $0x1c] sm:$0xf]
        %v3042 = vld [vmem:[%s3033 + $0x20] sm:$0xf]
        %v3043 = vld [vmem:[%s3033 + $0x24] sm:$0xf]
        %v3044 = vld [vmem:[%s3033 + $0x28] sm:$0xf]
        %v3045 = vld [vmem:[%s3033 + $0x2c] sm:$0xf]
        %v3046 = vld [vmem:[%s3033 + $0x30] sm:$0xf]
        %v3047 = vld [vmem:[%s3033 + $0x34] sm:$0xf]
        %v3048 = vld [vmem:[%s3033 + $0x38] sm:$0xf]
        %v3049 = vld [vmem:[%s3033 + $0x3c] sm:$0xf]
        %v3066 = vunpack.c.l.b16 %v3034
        %v3067 = vunpack.c.l.b16 %v3035
        %v3068 = vunpack.c.l.b16 %v3036
        %v3069 = vunpack.c.l.b16 %v3037
        %v3070 = vunpack.c.l.b16 %v3038
        %v3071 = vunpack.c.l.b16 %v3039
        %v3072 = vunpack.c.l.b16 %v3040
        %v3073 = vunpack.c.l.b16 %v3041
        %v3074 = vunpack.c.l.b16 %v3042
        %v3075 = vunpack.c.l.b16 %v3043
        %v3076 = vunpack.c.l.b16 %v3044
        %v3077 = vunpack.c.l.b16 %v3045
        %v3078 = vunpack.c.l.b16 %v3046
        %v3079 = vunpack.c.l.b16 %v3047
        %v3080 = vunpack.c.l.b16 %v3048
        %v3081 = vunpack.c.l.b16 %v3049
        %v3082 = vpack.c.b16 %v3067, %v3066
        %v3083 = vpack.c.b16 %v3069, %v3068
        %v3084 = vpack.c.b16 %v3071, %v3070
        %v3085 = vpack.c.b16 %v3073, %v3072
        %v3086 = vpack.c.b16 %v3075, %v3074
        %v3087 = vpack.c.b16 %v3077, %v3076
        %v3088 = vpack.c.b16 %v3079, %v3078
        %v3089 = vpack.c.b16 %v3081, %v3080
        %3098 = vmatprep.subr.bf16.mxu0 0
        %3099 = vmatpush1.bf16.msra.mxu0 %v3089
        %3100 = vmatprep.subr.bf16.mxu0 0
        %3101 = vmatpush1.bf16.msra.mxu0 %v3088
        %3102 = vmatprep.subr.bf16.mxu0 0
        %3103 = vmatpush1.bf16.msra.mxu0 %v3087
        %3104 = vmatprep.subr.bf16.mxu0 0
        %3105 = vmatpush1.bf16.msra.mxu0 %v3086
        %3106 = vmatprep.subr.bf16.mxu0 0
        %3107 = vmatpush1.bf16.msra.mxu0 %v3085
        %3108 = vmatprep.subr.bf16.mxu0 0
        %3109 = vmatpush1.bf16.msra.mxu0 %v3084
        %3110 = vmatprep.subr.bf16.mxu0 0
        %3111 = vmatpush1.bf16.msra.mxu0 %v3083
        %3112 = vmatprep.subr.bf16.mxu0 0
        %3113 = vmatpush1.bf16.msra.mxu0 %v3082
        %3114 = vmatprep.subr.bf16.mxu0 0
        %3115 = vmatpush2.bf16.msra.mxu0 0
        %3116 = vmatprep.subr.bf16.mxu0 0
        %3117 = vmatpush2.bf16.msra.mxu0 0
        %3118 = vmatprep.subr.bf16.mxu0 0
        %3119 = vmatpush2.bf16.msra.mxu0 0
        %3120 = vmatprep.subr.bf16.mxu0 0
        %3121 = vmatpush2.bf16.msra.mxu0 0
        %3122 = vmatprep.subr.bf16.mxu0 0
        %3123 = vmatpush2.bf16.msra.mxu0 0
        %3124 = vmatprep.subr.bf16.mxu0 0
        %3125 = vmatpush2.bf16.msra.mxu0 0
        %3126 = vmatprep.subr.bf16.mxu0 0
        %3127 = vmatpush2.bf16.msra.mxu0 0
        %3128 = vmatprep.subr.bf16.mxu0 0
        %3129 = vmatpush2.bf16.msra.mxu0 0
        %3130 = vmatprep.mubr.bf16.mxu0 0
        %3131 = vmatmul.mubr.bf16.gmra.mxu0 %v1161
        %v3132 = vpop.f32.mrf.mxu0
        %v3133 = vadd.f32 0.0, %v3132
        %v3134 = vpop.f32.mrf.mxu0
        %v3135 = vpop.f32.mrf.mxu0
        %v3136 = vadd.f32 0.0, %v3135
        %v3137 = vpop.f32.mrf.mxu0
        %3138 = vmatprep.mubr.bf16.mxu0 0
        %3139 = vmatmul.mubr.bf16.gmra.mxu0 %v1162
        %v3140 = vpop.f32.mrf.mxu0
        %v3141 = vadd.f32 0.0, %v3140
        %v3142 = vpop.f32.mrf.mxu0
        %v3143 = vpop.f32.mrf.mxu0
        %v3144 = vadd.f32 0.0, %v3143
        %v3145 = vpop.f32.mrf.mxu0
        %3146 = vmatprep.mubr.bf16.mxu0 0
        %3147 = vmatmul.mubr.bf16.gmra.mxu0 %v1163
        %v3148 = vpop.f32.mrf.mxu0
        %v3149 = vadd.f32 0.0, %v3148
        %v3150 = vpop.f32.mrf.mxu0
        %v3151 = vpop.f32.mrf.mxu0
        %v3152 = vadd.f32 0.0, %v3151
        %v3153 = vpop.f32.mrf.mxu0
        %3154 = vmatprep.mubr.bf16.mxu0 0
        %3155 = vmatmul.mubr.bf16.gmra.mxu0 %v1164
        %v3156 = vpop.f32.mrf.mxu0
        %v3157 = vadd.f32 0.0, %v3156
        %v3158 = vpop.f32.mrf.mxu0
        %v3159 = vpop.f32.mrf.mxu0
        %v3160 = vadd.f32 0.0, %v3159
        %v3161 = vpop.f32.mrf.mxu0
        %3162 = vmatprep.mubr.bf16.mxu0 0
        %3163 = vmatmul.mubr.bf16.gmra.mxu0 %v1165
        %v3164 = vpop.f32.mrf.mxu0
        %v3165 = vadd.f32 0.0, %v3164
        %v3166 = vpop.f32.mrf.mxu0
        %v3167 = vpop.f32.mrf.mxu0
        %v3168 = vadd.f32 0.0, %v3167
        %v3169 = vpop.f32.mrf.mxu0
        %3170 = vmatprep.mubr.bf16.mxu0 0
        %3171 = vmatmul.mubr.bf16.gmra.mxu0 %v1166
        %v3172 = vpop.f32.mrf.mxu0
        %v3173 = vadd.f32 0.0, %v3172
        %v3174 = vpop.f32.mrf.mxu0
        %v3175 = vpop.f32.mrf.mxu0
        %v3176 = vadd.f32 0.0, %v3175
        %v3177 = vpop.f32.mrf.mxu0
        %3178 = vmatprep.mubr.bf16.mxu0 0
        %3179 = vmatmul.mubr.bf16.gmra.mxu0 %v1167
        %v3180 = vpop.f32.mrf.mxu0
        %v3181 = vadd.f32 0.0, %v3180
        %v3182 = vpop.f32.mrf.mxu0
        %v3183 = vpop.f32.mrf.mxu0
        %v3184 = vadd.f32 0.0, %v3183
        %v3185 = vpop.f32.mrf.mxu0
        %3186 = vmatprep.mubr.bf16.mxu0 0
        %3187 = vmatmul.mubr.bf16.gmra.mxu0 %v1168
        %v3188 = vpop.f32.mrf.mxu0
        %v3189 = vadd.f32 0.0, %v3188
        %v3190 = vpop.f32.mrf.mxu0
        %v3191 = vpop.f32.mrf.mxu0
        %v3192 = vadd.f32 0.0, %v3191
        %v3193 = vpop.f32.mrf.mxu0
        %3194 = vmatprep.mubr.bf16.mxu0 0
        %3195 = vmatmul.mubr.bf16.gmra.mxu0 %v1169
        %v3196 = vpop.f32.mrf.mxu0
        %v3197 = vadd.f32 0.0, %v3196
        %v3198 = vpop.f32.mrf.mxu0
        %v3199 = vpop.f32.mrf.mxu0
        %v3200 = vadd.f32 0.0, %v3199
        %v3201 = vpop.f32.mrf.mxu0
        %3202 = vmatprep.mubr.bf16.mxu0 0
        %3203 = vmatmul.mubr.bf16.gmra.mxu0 %v1170
        %v3204 = vpop.f32.mrf.mxu0
        %v3205 = vadd.f32 0.0, %v3204
        %v3206 = vpop.f32.mrf.mxu0
        %v3207 = vpop.f32.mrf.mxu0
        %v3208 = vadd.f32 0.0, %v3207
        %v3209 = vpop.f32.mrf.mxu0
        %3210 = vmatprep.mubr.bf16.mxu0 0
        %3211 = vmatmul.mubr.bf16.gmra.mxu0 %v1171
        %v3212 = vpop.f32.mrf.mxu0
        %v3213 = vadd.f32 0.0, %v3212
        %v3214 = vpop.f32.mrf.mxu0
        %v3215 = vpop.f32.mrf.mxu0
        %v3216 = vadd.f32 0.0, %v3215
        %v3217 = vpop.f32.mrf.mxu0
        %3218 = vmatprep.mubr.bf16.mxu0 0
        %3219 = vmatmul.mubr.bf16.gmra.mxu0 %v1172
        %v3220 = vpop.f32.mrf.mxu0
        %v3221 = vadd.f32 0.0, %v3220
        %v3222 = vpop.f32.mrf.mxu0
        %v3223 = vpop.f32.mrf.mxu0
        %v3224 = vadd.f32 0.0, %v3223
        %v3225 = vpop.f32.mrf.mxu0
        %3226 = vdwg.mxu0
        %v3227 = vld [vmem:[#allocation2] sm:$0xff]
        %v3228 = vld [vmem:[#allocation2 + $0x8] sm:$0xff]
        %v3229 = vld [vmem:[#allocation2 + $0x10] sm:$0xff]
        %v3230 = vld [vmem:[#allocation2 + $0x18] sm:$0xff]
        %v3231 = vld [vmem:[#allocation2 + $0x20] sm:$0xff]
        %v3232 = vld [vmem:[#allocation2 + $0x28] sm:$0xff]
        %v3233 = vld [vmem:[#allocation2 + $0x30] sm:$0xff]
        %v3234 = vld [vmem:[#allocation2 + $0x38] sm:$0xff]
        %v3235 = vld [vmem:[#allocation2 + $0x40] sm:$0xff]
        %v3236 = vld [vmem:[#allocation2 + $0x48] sm:$0xff]
        %v3237 = vld [vmem:[#allocation2 + $0x50] sm:$0xff]
        %v3238 = vld [vmem:[#allocation2 + $0x58] sm:$0xff]
        %v3239 = vld [vmem:[#allocation2 + $0x60] sm:$0xff]
        %v3240 = vld [vmem:[#allocation2 + $0x68] sm:$0xff]
        %v3241 = vld [vmem:[#allocation2 + $0x70] sm:$0xff]
        %v3242 = vld [vmem:[#allocation2 + $0x78] sm:$0xff]
        %v3243 = vld [vmem:[#allocation2 + $0x80] sm:$0xff]
        %v3244 = vld [vmem:[#allocation2 + $0x88] sm:$0xff]
        %v3245 = vld [vmem:[#allocation2 + $0x90] sm:$0xff]
        %v3246 = vld [vmem:[#allocation2 + $0x98] sm:$0xff]
        %v3247 = vld [vmem:[#allocation2 + $0xa0] sm:$0xff]
        %v3248 = vld [vmem:[#allocation2 + $0xa8] sm:$0xff]
        %v3249 = vld [vmem:[#allocation2 + $0xb0] sm:$0xff]
        %v3250 = vld [vmem:[#allocation2 + $0xb8] sm:$0xff]
        %v3251 = vadd.f32 %v3227, %v3133
        %v3252 = vadd.f32 %v3228, %v3136
        %v3253 = vadd.f32 %v3229, %v3141
        %v3254 = vadd.f32 %v3230, %v3144
        %v3255 = vadd.f32 %v3231, %v3149
        %v3256 = vadd.f32 %v3232, %v3152
        %v3257 = vadd.f32 %v3233, %v3157
        %v3258 = vadd.f32 %v3234, %v3160
        %v3259 = vadd.f32 %v3235, %v3165
        %v3260 = vadd.f32 %v3236, %v3168
        %v3261 = vadd.f32 %v3237, %v3173
        %v3262 = vadd.f32 %v3238, %v3176
        %v3263 = vadd.f32 %v3239, %v3181
        %v3264 = vadd.f32 %v3240, %v3184
        %v3265 = vadd.f32 %v3241, %v3189
        %v3266 = vadd.f32 %v3242, %v3192
        %v3267 = vadd.f32 %v3243, %v3197
        %v3268 = vadd.f32 %v3244, %v3200
        %v3269 = vadd.f32 %v3245, %v3205
        %v3270 = vadd.f32 %v3246, %v3208
        %v3271 = vadd.f32 %v3247, %v3213
        %v3272 = vadd.f32 %v3248, %v3216
        %v3273 = vadd.f32 %v3249, %v3221
        %v3274 = vadd.f32 %v3250, %v3224
        %3275 = vst [vmem:[#allocation2] sm:$0xff] %v3251
        %3276 = vst [vmem:[#allocation2 + $0x8] sm:$0xff] %v3252
        %3277 = vst [vmem:[#allocation2 + $0x10] sm:$0xff] %v3253
        %3278 = vst [vmem:[#allocation2 + $0x18] sm:$0xff] %v3254
        %3279 = vst [vmem:[#allocation2 + $0x20] sm:$0xff] %v3255
        %3280 = vst [vmem:[#allocation2 + $0x28] sm:$0xff] %v3256
        %3281 = vst [vmem:[#allocation2 + $0x30] sm:$0xff] %v3257
        %3282 = vst [vmem:[#allocation2 + $0x38] sm:$0xff] %v3258
        %3283 = vst [vmem:[#allocation2 + $0x40] sm:$0xff] %v3259
        %3284 = vst [vmem:[#allocation2 + $0x48] sm:$0xff] %v3260
        %3285 = vst [vmem:[#allocation2 + $0x50] sm:$0xff] %v3261
        %3286 = vst [vmem:[#allocation2 + $0x58] sm:$0xff] %v3262
        %3287 = vst [vmem:[#allocation2 + $0x60] sm:$0xff] %v3263
        %3288 = vst [vmem:[#allocation2 + $0x68] sm:$0xff] %v3264
        %3289 = vst [vmem:[#allocation2 + $0x70] sm:$0xff] %v3265
        %3290 = vst [vmem:[#allocation2 + $0x78] sm:$0xff] %v3266
        %3291 = vst [vmem:[#allocation2 + $0x80] sm:$0xff] %v3267
        %3292 = vst [vmem:[#allocation2 + $0x88] sm:$0xff] %v3268
        %3293 = vst [vmem:[#allocation2 + $0x90] sm:$0xff] %v3269
        %3294 = vst [vmem:[#allocation2 + $0x98] sm:$0xff] %v3270
        %3295 = vst [vmem:[#allocation2 + $0xa0] sm:$0xff] %v3271
        %3296 = vst [vmem:[#allocation2 + $0xa8] sm:$0xff] %v3272
        %3297 = vst [vmem:[#allocation2 + $0xb0] sm:$0xff] %v3273
        %3298 = vst [vmem:[#allocation2 + $0xb8] sm:$0xff] %v3274
        %s3299 = scalar_lea.vmem [#allocation8], 448
        %v3300 = vld [vmem:[%s3299] sm:$0xf]
        %v3301 = vld [vmem:[%s3299 + $0x4] sm:$0xf]
        %v3302 = vld [vmem:[%s3299 + $0x8] sm:$0xf]
        %v3303 = vld [vmem:[%s3299 + $0xc] sm:$0xf]
        %v3304 = vld [vmem:[%s3299 + $0x10] sm:$0xf]
        %v3305 = vld [vmem:[%s3299 + $0x14] sm:$0xf]
        %v3306 = vld [vmem:[%s3299 + $0x18] sm:$0xf]
        %v3307 = vld [vmem:[%s3299 + $0x1c] sm:$0xf]
        %v3308 = vld [vmem:[%s3299 + $0x20] sm:$0xf]
        %v3309 = vld [vmem:[%s3299 + $0x24] sm:$0xf]
        %v3310 = vld [vmem:[%s3299 + $0x28] sm:$0xf]
        %v3311 = vld [vmem:[%s3299 + $0x2c] sm:$0xf]
        %v3312 = vld [vmem:[%s3299 + $0x30] sm:$0xf]
        %v3313 = vld [vmem:[%s3299 + $0x34] sm:$0xf]
        %v3314 = vld [vmem:[%s3299 + $0x38] sm:$0xf]
        %v3315 = vld [vmem:[%s3299 + $0x3c] sm:$0xf]
        %v3316 = vor.u32 %v2462, %v1513
        %v3318 = vshll.u32 %v1173, 16
        %v3320 = vrot.slane %v3318, 1
        %v3321 = vsel %vm1414, %v3316, %v3320
        %v3339 = vunpack.c.l.b16 %v3300
        %v3340 = vunpack.c.l.b16 %v3301
        %v3341 = vunpack.c.l.b16 %v3302
        %v3342 = vunpack.c.l.b16 %v3303
        %v3343 = vunpack.c.l.b16 %v3304
        %v3344 = vunpack.c.l.b16 %v3305
        %v3345 = vunpack.c.l.b16 %v3306
        %v3346 = vunpack.c.l.b16 %v3307
        %v3347 = vunpack.c.l.b16 %v3308
        %v3348 = vunpack.c.l.b16 %v3309
        %v3349 = vunpack.c.l.b16 %v3310
        %v3350 = vunpack.c.l.b16 %v3311
        %v3351 = vunpack.c.l.b16 %v3312
        %v3352 = vunpack.c.l.b16 %v3313
        %v3353 = vunpack.c.l.b16 %v3314
        %v3354 = vunpack.c.l.b16 %v3315
        %v3355 = vpack.c.b16 %v3340, %v3339
        %v3356 = vpack.c.b16 %v3342, %v3341
        %v3357 = vpack.c.b16 %v3344, %v3343
        %v3358 = vpack.c.b16 %v3346, %v3345
        %v3359 = vpack.c.b16 %v3348, %v3347
        %v3360 = vpack.c.b16 %v3350, %v3349
        %v3361 = vpack.c.b16 %v3352, %v3351
        %v3362 = vpack.c.b16 %v3354, %v3353
        %3371 = vmatprep.subr.bf16.mxu0 0
        %3372 = vmatpush1.bf16.msra.mxu0 %v3362
        %3373 = vmatprep.subr.bf16.mxu0 0
        %3374 = vmatpush1.bf16.msra.mxu0 %v3361
        %3375 = vmatprep.subr.bf16.mxu0 0
        %3376 = vmatpush1.bf16.msra.mxu0 %v3360
        %3377 = vmatprep.subr.bf16.mxu0 0
        %3378 = vmatpush1.bf16.msra.mxu0 %v3359
        %3379 = vmatprep.subr.bf16.mxu0 0
        %3380 = vmatpush1.bf16.msra.mxu0 %v3358
        %3381 = vmatprep.subr.bf16.mxu0 0
        %3382 = vmatpush1.bf16.msra.mxu0 %v3357
        %3383 = vmatprep.subr.bf16.mxu0 0
        %3384 = vmatpush1.bf16.msra.mxu0 %v3356
        %3385 = vmatprep.subr.bf16.mxu0 0
        %3386 = vmatpush1.bf16.msra.mxu0 %v3355
        %3387 = vmatprep.subr.bf16.mxu0 0
        %3388 = vmatpush2.bf16.msra.mxu0 0
        %3389 = vmatprep.subr.bf16.mxu0 0
        %3390 = vmatpush2.bf16.msra.mxu0 0
        %3391 = vmatprep.subr.bf16.mxu0 0
        %3392 = vmatpush2.bf16.msra.mxu0 0
        %3393 = vmatprep.subr.bf16.mxu0 0
        %3394 = vmatpush2.bf16.msra.mxu0 0
        %3395 = vmatprep.subr.bf16.mxu0 0
        %3396 = vmatpush2.bf16.msra.mxu0 0
        %3397 = vmatprep.subr.bf16.mxu0 0
        %3398 = vmatpush2.bf16.msra.mxu0 0
        %3399 = vmatprep.subr.bf16.mxu0 0
        %3400 = vmatpush2.bf16.msra.mxu0 0
        %3401 = vmatprep.subr.bf16.mxu0 0
        %3402 = vmatpush2.bf16.msra.mxu0 0
        %3403 = vmatprep.mubr.bf16.mxu0 0
        %3404 = vmatmul.mubr.bf16.gmra.mxu0 %v1434
        %v3405 = vpop.f32.mrf.mxu0
        %v3406 = vadd.f32 0.0, %v3405
        %v3407 = vpop.f32.mrf.mxu0
        %v3408 = vpop.f32.mrf.mxu0
        %v3409 = vadd.f32 0.0, %v3408
        %v3410 = vpop.f32.mrf.mxu0
        %3411 = vmatprep.mubr.bf16.mxu0 0
        %3412 = vmatmul.mubr.bf16.gmra.mxu0 %v1442
        %v3413 = vpop.f32.mrf.mxu0
        %v3414 = vadd.f32 0.0, %v3413
        %v3415 = vpop.f32.mrf.mxu0
        %v3416 = vpop.f32.mrf.mxu0
        %v3417 = vadd.f32 0.0, %v3416
        %v3418 = vpop.f32.mrf.mxu0
        %3419 = vmatprep.mubr.bf16.mxu0 0
        %3420 = vmatmul.mubr.bf16.gmra.mxu0 %v1450
        %v3421 = vpop.f32.mrf.mxu0
        %v3422 = vadd.f32 0.0, %v3421
        %v3423 = vpop.f32.mrf.mxu0
        %v3424 = vpop.f32.mrf.mxu0
        %v3425 = vadd.f32 0.0, %v3424
        %v3426 = vpop.f32.mrf.mxu0
        %3427 = vmatprep.mubr.bf16.mxu0 0
        %3428 = vmatmul.mubr.bf16.gmra.mxu0 %v1458
        %v3429 = vpop.f32.mrf.mxu0
        %v3430 = vadd.f32 0.0, %v3429
        %v3431 = vpop.f32.mrf.mxu0
        %v3432 = vpop.f32.mrf.mxu0
        %v3433 = vadd.f32 0.0, %v3432
        %v3434 = vpop.f32.mrf.mxu0
        %3435 = vmatprep.mubr.bf16.mxu0 0
        %3436 = vmatmul.mubr.bf16.gmra.mxu0 %v1466
        %v3437 = vpop.f32.mrf.mxu0
        %v3438 = vadd.f32 0.0, %v3437
        %v3439 = vpop.f32.mrf.mxu0
        %v3440 = vpop.f32.mrf.mxu0
        %v3441 = vadd.f32 0.0, %v3440
        %v3442 = vpop.f32.mrf.mxu0
        %3443 = vmatprep.mubr.bf16.mxu0 0
        %3444 = vmatmul.mubr.bf16.gmra.mxu0 %v1474
        %v3445 = vpop.f32.mrf.mxu0
        %v3446 = vadd.f32 0.0, %v3445
        %v3447 = vpop.f32.mrf.mxu0
        %v3448 = vpop.f32.mrf.mxu0
        %v3449 = vadd.f32 0.0, %v3448
        %v3450 = vpop.f32.mrf.mxu0
        %3451 = vmatprep.mubr.bf16.mxu0 0
        %3452 = vmatmul.mubr.bf16.gmra.mxu0 %v1482
        %v3453 = vpop.f32.mrf.mxu0
        %v3454 = vadd.f32 0.0, %v3453
        %v3455 = vpop.f32.mrf.mxu0
        %v3456 = vpop.f32.mrf.mxu0
        %v3457 = vadd.f32 0.0, %v3456
        %v3458 = vpop.f32.mrf.mxu0
        %3459 = vmatprep.mubr.bf16.mxu0 0
        %3460 = vmatmul.mubr.bf16.gmra.mxu0 %v1490
        %v3461 = vpop.f32.mrf.mxu0
        %v3462 = vadd.f32 0.0, %v3461
        %v3463 = vpop.f32.mrf.mxu0
        %v3464 = vpop.f32.mrf.mxu0
        %v3465 = vadd.f32 0.0, %v3464
        %v3466 = vpop.f32.mrf.mxu0
        %3467 = vmatprep.mubr.bf16.mxu0 0
        %3468 = vmatmul.mubr.bf16.gmra.mxu0 %v1498
        %v3469 = vpop.f32.mrf.mxu0
        %v3470 = vadd.f32 0.0, %v3469
        %v3471 = vpop.f32.mrf.mxu0
        %v3472 = vpop.f32.mrf.mxu0
        %v3473 = vadd.f32 0.0, %v3472
        %v3474 = vpop.f32.mrf.mxu0
        %3475 = vmatprep.mubr.bf16.mxu0 0
        %3476 = vmatmul.mubr.bf16.gmra.mxu0 %v1506
        %v3477 = vpop.f32.mrf.mxu0
        %v3478 = vadd.f32 0.0, %v3477
        %v3479 = vpop.f32.mrf.mxu0
        %v3480 = vpop.f32.mrf.mxu0
        %v3481 = vadd.f32 0.0, %v3480
        %v3482 = vpop.f32.mrf.mxu0
        %3483 = vmatprep.mubr.bf16.mxu0 0
        %3484 = vmatmul.mubr.bf16.gmra.mxu0 %v1514
        %v3485 = vpop.f32.mrf.mxu0
        %v3486 = vadd.f32 0.0, %v3485
        %v3487 = vpop.f32.mrf.mxu0
        %v3488 = vpop.f32.mrf.mxu0
        %v3489 = vadd.f32 0.0, %v3488
        %v3490 = vpop.f32.mrf.mxu0
        %3491 = vmatprep.mubr.bf16.mxu0 0
        %3492 = vmatmul.mubr.bf16.gmra.mxu0 %v3321
        %v3493 = vpop.f32.mrf.mxu0
        %v3494 = vadd.f32 0.0, %v3493
        %v3495 = vpop.f32.mrf.mxu0
        %v3496 = vpop.f32.mrf.mxu0
        %v3497 = vadd.f32 0.0, %v3496
        %v3498 = vpop.f32.mrf.mxu0
        %3499 = vdwg.mxu0
        %v3500 = vld [vmem:[#allocation2] sm:$0xff]
        %v3501 = vld [vmem:[#allocation2 + $0x8] sm:$0xff]
        %v3502 = vld [vmem:[#allocation2 + $0x10] sm:$0xff]
        %v3503 = vld [vmem:[#allocation2 + $0x18] sm:$0xff]
        %v3504 = vld [vmem:[#allocation2 + $0x20] sm:$0xff]
        %v3505 = vld [vmem:[#allocation2 + $0x28] sm:$0xff]
        %v3506 = vld [vmem:[#allocation2 + $0x30] sm:$0xff]
        %v3507 = vld [vmem:[#allocation2 + $0x38] sm:$0xff]
        %v3508 = vld [vmem:[#allocation2 + $0x40] sm:$0xff]
        %v3509 = vld [vmem:[#allocation2 + $0x48] sm:$0xff]
        %v3510 = vld [vmem:[#allocation2 + $0x50] sm:$0xff]
        %v3511 = vld [vmem:[#allocation2 + $0x58] sm:$0xff]
        %v3512 = vld [vmem:[#allocation2 + $0x60] sm:$0xff]
        %v3513 = vld [vmem:[#allocation2 + $0x68] sm:$0xff]
        %v3514 = vld [vmem:[#allocation2 + $0x70] sm:$0xff]
        %v3515 = vld [vmem:[#allocation2 + $0x78] sm:$0xff]
        %v3516 = vld [vmem:[#allocation2 + $0x80] sm:$0xff]
        %v3517 = vld [vmem:[#allocation2 + $0x88] sm:$0xff]
        %v3518 = vld [vmem:[#allocation2 + $0x90] sm:$0xff]
        %v3519 = vld [vmem:[#allocation2 + $0x98] sm:$0xff]
        %v3520 = vld [vmem:[#allocation2 + $0xa0] sm:$0xff]
        %v3521 = vld [vmem:[#allocation2 + $0xa8] sm:$0xff]
        %v3522 = vld [vmem:[#allocation2 + $0xb0] sm:$0xff]
        %v3523 = vld [vmem:[#allocation2 + $0xb8] sm:$0xff]
        %v3524 = vadd.f32 %v3500, %v3406
        %v3525 = vadd.f32 %v3501, %v3409
        %v3526 = vadd.f32 %v3502, %v3414
        %v3527 = vadd.f32 %v3503, %v3417
        %v3528 = vadd.f32 %v3504, %v3422
        %v3529 = vadd.f32 %v3505, %v3425
        %v3530 = vadd.f32 %v3506, %v3430
        %v3531 = vadd.f32 %v3507, %v3433
        %v3532 = vadd.f32 %v3508, %v3438
        %v3533 = vadd.f32 %v3509, %v3441
        %v3534 = vadd.f32 %v3510, %v3446
        %v3535 = vadd.f32 %v3511, %v3449
        %v3536 = vadd.f32 %v3512, %v3454
        %v3537 = vadd.f32 %v3513, %v3457
        %v3538 = vadd.f32 %v3514, %v3462
        %v3539 = vadd.f32 %v3515, %v3465
        %v3540 = vadd.f32 %v3516, %v3470
        %v3541 = vadd.f32 %v3517, %v3473
        %v3542 = vadd.f32 %v3518, %v3478
        %v3543 = vadd.f32 %v3519, %v3481
        %v3544 = vadd.f32 %v3520, %v3486
        %v3545 = vadd.f32 %v3521, %v3489
        %v3546 = vadd.f32 %v3522, %v3494
        %v3547 = vadd.f32 %v3523, %v3497
        %3548 = vst [vmem:[#allocation2] sm:$0xff] %v3524
        %3549 = vst [vmem:[#allocation2 + $0x8] sm:$0xff] %v3525
        %3550 = vst [vmem:[#allocation2 + $0x10] sm:$0xff] %v3526
        %3551 = vst [vmem:[#allocation2 + $0x18] sm:$0xff] %v3527
        %3552 = vst [vmem:[#allocation2 + $0x20] sm:$0xff] %v3528
        %3553 = vst [vmem:[#allocation2 + $0x28] sm:$0xff] %v3529
        %3554 = vst [vmem:[#allocation2 + $0x30] sm:$0xff] %v3530
        %3555 = vst [vmem:[#allocation2 + $0x38] sm:$0xff] %v3531
        %3556 = vst [vmem:[#allocation2 + $0x40] sm:$0xff] %v3532
        %3557 = vst [vmem:[#allocation2 + $0x48] sm:$0xff] %v3533
        %3558 = vst [vmem:[#allocation2 + $0x50] sm:$0xff] %v3534
        %3559 = vst [vmem:[#allocation2 + $0x58] sm:$0xff] %v3535
        %3560 = vst [vmem:[#allocation2 + $0x60] sm:$0xff] %v3536
        %3561 = vst [vmem:[#allocation2 + $0x68] sm:$0xff] %v3537
        %3562 = vst [vmem:[#allocation2 + $0x70] sm:$0xff] %v3538
        %3563 = vst [vmem:[#allocation2 + $0x78] sm:$0xff] %v3539
        %3564 = vst [vmem:[#allocation2 + $0x80] sm:$0xff] %v3540
        %3565 = vst [vmem:[#allocation2 + $0x88] sm:$0xff] %v3541
        %3566 = vst [vmem:[#allocation2 + $0x90] sm:$0xff] %v3542
        %3567 = vst [vmem:[#allocation2 + $0x98] sm:$0xff] %v3543
        %3568 = vst [vmem:[#allocation2 + $0xa0] sm:$0xff] %v3544
        %3569 = vst [vmem:[#allocation2 + $0xa8] sm:$0xff] %v3545
        %3570 = vst [vmem:[#allocation2 + $0xb0] sm:$0xff] %v3546
        %3571 = vst [vmem:[#allocation2 + $0xb8] sm:$0xff] %v3547
        %s3572 = scalar_lea.vmem [#allocation8], 512
        %v3573 = vld [vmem:[%s3572] sm:$0xf]
        %v3574 = vld [vmem:[%s3572 + $0x4] sm:$0xf]
        %v3575 = vld [vmem:[%s3572 + $0x8] sm:$0xf]
        %v3576 = vld [vmem:[%s3572 + $0xc] sm:$0xf]
        %v3577 = vld [vmem:[%s3572 + $0x10] sm:$0xf]
        %v3578 = vld [vmem:[%s3572 + $0x14] sm:$0xf]
        %v3579 = vld [vmem:[%s3572 + $0x18] sm:$0xf]
        %v3580 = vld [vmem:[%s3572 + $0x1c] sm:$0xf]
        %v3581 = vld [vmem:[%s3572 + $0x20] sm:$0xf]
        %v3582 = vld [vmem:[%s3572 + $0x24] sm:$0xf]
        %v3583 = vld [vmem:[%s3572 + $0x28] sm:$0xf]
        %v3584 = vld [vmem:[%s3572 + $0x2c] sm:$0xf]
        %v3585 = vld [vmem:[%s3572 + $0x30] sm:$0xf]
        %v3586 = vld [vmem:[%s3572 + $0x34] sm:$0xf]
        %v3587 = vld [vmem:[%s3572 + $0x38] sm:$0xf]
        %v3588 = vld [vmem:[%s3572 + $0x3c] sm:$0xf]
        %v3590 = vrot.slane %v1173, 1
        %v3591 = vsel %vm1806, %v1830, %v3590
        %v3609 = vunpack.c.l.b16 %v3573
        %v3610 = vunpack.c.l.b16 %v3574
        %v3611 = vunpack.c.l.b16 %v3575
        %v3612 = vunpack.c.l.b16 %v3576
        %v3613 = vunpack.c.l.b16 %v3577
        %v3614 = vunpack.c.l.b16 %v3578
        %v3615 = vunpack.c.l.b16 %v3579
        %v3616 = vunpack.c.l.b16 %v3580
        %v3617 = vunpack.c.l.b16 %v3581
        %v3618 = vunpack.c.l.b16 %v3582
        %v3619 = vunpack.c.l.b16 %v3583
        %v3620 = vunpack.c.l.b16 %v3584
        %v3621 = vunpack.c.l.b16 %v3585
        %v3622 = vunpack.c.l.b16 %v3586
        %v3623 = vunpack.c.l.b16 %v3587
        %v3624 = vunpack.c.l.b16 %v3588
        %v3625 = vpack.c.b16 %v3610, %v3609
        %v3626 = vpack.c.b16 %v3612, %v3611
        %v3627 = vpack.c.b16 %v3614, %v3613
        %v3628 = vpack.c.b16 %v3616, %v3615
        %v3629 = vpack.c.b16 %v3618, %v3617
        %v3630 = vpack.c.b16 %v3620, %v3619
        %v3631 = vpack.c.b16 %v3622, %v3621
        %v3632 = vpack.c.b16 %v3624, %v3623
        %3641 = vmatprep.subr.bf16.mxu0 0
        %3642 = vmatpush1.bf16.msra.mxu0 %v3632
        %3643 = vmatprep.subr.bf16.mxu0 0
        %3644 = vmatpush1.bf16.msra.mxu0 %v3631
        %3645 = vmatprep.subr.bf16.mxu0 0
        %3646 = vmatpush1.bf16.msra.mxu0 %v3630
        %3647 = vmatprep.subr.bf16.mxu0 0
        %3648 = vmatpush1.bf16.msra.mxu0 %v3629
        %3649 = vmatprep.subr.bf16.mxu0 0
        %3650 = vmatpush1.bf16.msra.mxu0 %v3628
        %3651 = vmatprep.subr.bf16.mxu0 0
        %3652 = vmatpush1.bf16.msra.mxu0 %v3627
        %3653 = vmatprep.subr.bf16.mxu0 0
        %3654 = vmatpush1.bf16.msra.mxu0 %v3626
        %3655 = vmatprep.subr.bf16.mxu0 0
        %3656 = vmatpush1.bf16.msra.mxu0 %v3625
        %3657 = vmatprep.subr.bf16.mxu0 0
        %3658 = vmatpush2.bf16.msra.mxu0 0
        %3659 = vmatprep.subr.bf16.mxu0 0
        %3660 = vmatpush2.bf16.msra.mxu0 0
        %3661 = vmatprep.subr.bf16.mxu0 0
        %3662 = vmatpush2.bf16.msra.mxu0 0
        %3663 = vmatprep.subr.bf16.mxu0 0
        %3664 = vmatpush2.bf16.msra.mxu0 0
        %3665 = vmatprep.subr.bf16.mxu0 0
        %3666 = vmatpush2.bf16.msra.mxu0 0
        %3667 = vmatprep.subr.bf16.mxu0 0
        %3668 = vmatpush2.bf16.msra.mxu0 0
        %3669 = vmatprep.subr.bf16.mxu0 0
        %3670 = vmatpush2.bf16.msra.mxu0 0
        %3671 = vmatprep.subr.bf16.mxu0 0
        %3672 = vmatpush2.bf16.msra.mxu0 0
        %3673 = vmatprep.mubr.bf16.mxu0 0
        %3674 = vmatmul.mubr.bf16.gmra.mxu0 %v1811
        %v3675 = vpop.f32.mrf.mxu0
        %v3676 = vadd.f32 0.0, %v3675
        %v3677 = vpop.f32.mrf.mxu0
        %v3678 = vpop.f32.mrf.mxu0
        %v3679 = vadd.f32 0.0, %v3678
        %v3680 = vpop.f32.mrf.mxu0
        %3681 = vmatprep.mubr.bf16.mxu0 0
        %3682 = vmatmul.mubr.bf16.gmra.mxu0 %v1813
        %v3683 = vpop.f32.mrf.mxu0
        %v3684 = vadd.f32 0.0, %v3683
        %v3685 = vpop.f32.mrf.mxu0
        %v3686 = vpop.f32.mrf.mxu0
        %v3687 = vadd.f32 0.0, %v3686
        %v3688 = vpop.f32.mrf.mxu0
        %3689 = vmatprep.mubr.bf16.mxu0 0
        %3690 = vmatmul.mubr.bf16.gmra.mxu0 %v1815
        %v3691 = vpop.f32.mrf.mxu0
        %v3692 = vadd.f32 0.0, %v3691
        %v3693 = vpop.f32.mrf.mxu0
        %v3694 = vpop.f32.mrf.mxu0
        %v3695 = vadd.f32 0.0, %v3694
        %v3696 = vpop.f32.mrf.mxu0
        %3697 = vmatprep.mubr.bf16.mxu0 0
        %3698 = vmatmul.mubr.bf16.gmra.mxu0 %v1817
        %v3699 = vpop.f32.mrf.mxu0
        %v3700 = vadd.f32 0.0, %v3699
        %v3701 = vpop.f32.mrf.mxu0
        %v3702 = vpop.f32.mrf.mxu0
        %v3703 = vadd.f32 0.0, %v3702
        %v3704 = vpop.f32.mrf.mxu0
        %3705 = vmatprep.mubr.bf16.mxu0 0
        %3706 = vmatmul.mubr.bf16.gmra.mxu0 %v1819
        %v3707 = vpop.f32.mrf.mxu0
        %v3708 = vadd.f32 0.0, %v3707
        %v3709 = vpop.f32.mrf.mxu0
        %v3710 = vpop.f32.mrf.mxu0
        %v3711 = vadd.f32 0.0, %v3710
        %v3712 = vpop.f32.mrf.mxu0
        %3713 = vmatprep.mubr.bf16.mxu0 0
        %3714 = vmatmul.mubr.bf16.gmra.mxu0 %v1821
        %v3715 = vpop.f32.mrf.mxu0
        %v3716 = vadd.f32 0.0, %v3715
        %v3717 = vpop.f32.mrf.mxu0
        %v3718 = vpop.f32.mrf.mxu0
        %v3719 = vadd.f32 0.0, %v3718
        %v3720 = vpop.f32.mrf.mxu0
        %3721 = vmatprep.mubr.bf16.mxu0 0
        %3722 = vmatmul.mubr.bf16.gmra.mxu0 %v1823
        %v3723 = vpop.f32.mrf.mxu0
        %v3724 = vadd.f32 0.0, %v3723
        %v3725 = vpop.f32.mrf.mxu0
        %v3726 = vpop.f32.mrf.mxu0
        %v3727 = vadd.f32 0.0, %v3726
        %v3728 = vpop.f32.mrf.mxu0
        %3729 = vmatprep.mubr.bf16.mxu0 0
        %3730 = vmatmul.mubr.bf16.gmra.mxu0 %v1825
        %v3731 = vpop.f32.mrf.mxu0
        %v3732 = vadd.f32 0.0, %v3731
        %v3733 = vpop.f32.mrf.mxu0
        %v3734 = vpop.f32.mrf.mxu0
        %v3735 = vadd.f32 0.0, %v3734
        %v3736 = vpop.f32.mrf.mxu0
        %3737 = vmatprep.mubr.bf16.mxu0 0
        %3738 = vmatmul.mubr.bf16.gmra.mxu0 %v1827
        %v3739 = vpop.f32.mrf.mxu0
        %v3740 = vadd.f32 0.0, %v3739
        %v3741 = vpop.f32.mrf.mxu0
        %v3742 = vpop.f32.mrf.mxu0
        %v3743 = vadd.f32 0.0, %v3742
        %v3744 = vpop.f32.mrf.mxu0
        %3745 = vmatprep.mubr.bf16.mxu0 0
        %3746 = vmatmul.mubr.bf16.gmra.mxu0 %v1829
        %v3747 = vpop.f32.mrf.mxu0
        %v3748 = vadd.f32 0.0, %v3747
        %v3749 = vpop.f32.mrf.mxu0
        %v3750 = vpop.f32.mrf.mxu0
        %v3751 = vadd.f32 0.0, %v3750
        %v3752 = vpop.f32.mrf.mxu0
        %3753 = vmatprep.mubr.bf16.mxu0 0
        %3754 = vmatmul.mubr.bf16.gmra.mxu0 %v1831
        %v3755 = vpop.f32.mrf.mxu0
        %v3756 = vadd.f32 0.0, %v3755
        %v3757 = vpop.f32.mrf.mxu0
        %v3758 = vpop.f32.mrf.mxu0
        %v3759 = vadd.f32 0.0, %v3758
        %v3760 = vpop.f32.mrf.mxu0
        %3761 = vmatprep.mubr.bf16.mxu0 0
        %3762 = vmatmul.mubr.bf16.gmra.mxu0 %v3591
        %v3763 = vpop.f32.mrf.mxu0
        %v3764 = vadd.f32 0.0, %v3763
        %v3765 = vpop.f32.mrf.mxu0
        %v3766 = vpop.f32.mrf.mxu0
        %v3767 = vadd.f32 0.0, %v3766
        %v3768 = vpop.f32.mrf.mxu0
        %3769 = vdwg.mxu0
        %v3770 = vld [vmem:[#allocation2] sm:$0xff]
        %v3771 = vld [vmem:[#allocation2 + $0x8] sm:$0xff]
        %v3772 = vld [vmem:[#allocation2 + $0x10] sm:$0xff]
        %v3773 = vld [vmem:[#allocation2 + $0x18] sm:$0xff]
        %v3774 = vld [vmem:[#allocation2 + $0x20] sm:$0xff]
        %v3775 = vld [vmem:[#allocation2 + $0x28] sm:$0xff]
        %v3776 = vld [vmem:[#allocation2 + $0x30] sm:$0xff]
        %v3777 = vld [vmem:[#allocation2 + $0x38] sm:$0xff]
        %v3778 = vld [vmem:[#allocation2 + $0x40] sm:$0xff]
        %v3779 = vld [vmem:[#allocation2 + $0x48] sm:$0xff]
        %v3780 = vld [vmem:[#allocation2 + $0x50] sm:$0xff]
        %v3781 = vld [vmem:[#allocation2 + $0x58] sm:$0xff]
        %v3782 = vld [vmem:[#allocation2 + $0x60] sm:$0xff]
        %v3783 = vld [vmem:[#allocation2 + $0x68] sm:$0xff]
        %v3784 = vld [vmem:[#allocation2 + $0x70] sm:$0xff]
        %v3785 = vld [vmem:[#allocation2 + $0x78] sm:$0xff]
        %v3786 = vld [vmem:[#allocation2 + $0x80] sm:$0xff]
        %v3787 = vld [vmem:[#allocation2 + $0x88] sm:$0xff]
        %v3788 = vld [vmem:[#allocation2 + $0x90] sm:$0xff]
        %v3789 = vld [vmem:[#allocation2 + $0x98] sm:$0xff]
        %v3790 = vld [vmem:[#allocation2 + $0xa0] sm:$0xff]
        %v3791 = vld [vmem:[#allocation2 + $0xa8] sm:$0xff]
        %v3792 = vld [vmem:[#allocation2 + $0xb0] sm:$0xff]
        %v3793 = vld [vmem:[#allocation2 + $0xb8] sm:$0xff]
        %v3794 = vadd.f32 %v3770, %v3676
        %v3795 = vadd.f32 %v3771, %v3679
        %v3796 = vadd.f32 %v3772, %v3684
        %v3797 = vadd.f32 %v3773, %v3687
        %v3798 = vadd.f32 %v3774, %v3692
        %v3799 = vadd.f32 %v3775, %v3695
        %v3800 = vadd.f32 %v3776, %v3700
        %v3801 = vadd.f32 %v3777, %v3703
        %v3802 = vadd.f32 %v3778, %v3708
        %v3803 = vadd.f32 %v3779, %v3711
        %v3804 = vadd.f32 %v3780, %v3716
        %v3805 = vadd.f32 %v3781, %v3719
        %v3806 = vadd.f32 %v3782, %v3724
        %v3807 = vadd.f32 %v3783, %v3727
        %v3808 = vadd.f32 %v3784, %v3732
        %v3809 = vadd.f32 %v3785, %v3735
        %v3810 = vadd.f32 %v3786, %v3740
        %v3811 = vadd.f32 %v3787, %v3743
        %v3812 = vadd.f32 %v3788, %v3748
        %v3813 = vadd.f32 %v3789, %v3751
        %v3814 = vadd.f32 %v3790, %v3756
        %v3815 = vadd.f32 %v3791, %v3759
        %v3816 = vadd.f32 %v3792, %v3764
        %v3817 = vadd.f32 %v3793, %v3767
        %3818 = vst [vmem:[#allocation2] sm:$0xff] %v3794
        %3819 = vst [vmem:[#allocation2 + $0x8] sm:$0xff] %v3795
        %3820 = vst [vmem:[#allocation2 + $0x10] sm:$0xff] %v3796
        %3821 = vst [vmem:[#allocation2 + $0x18] sm:$0xff] %v3797
        %3822 = vst [vmem:[#allocation2 + $0x20] sm:$0xff] %v3798
        %3823 = vst [vmem:[#allocation2 + $0x28] sm:$0xff] %v3799
        %3824 = vst [vmem:[#allocation2 + $0x30] sm:$0xff] %v3800
        %3825 = vst [vmem:[#allocation2 + $0x38] sm:$0xff] %v3801
        %3826 = vst [vmem:[#allocation2 + $0x40] sm:$0xff] %v3802
        %3827 = vst [vmem:[#allocation2 + $0x48] sm:$0xff] %v3803
        %3828 = vst [vmem:[#allocation2 + $0x50] sm:$0xff] %v3804
        %3829 = vst [vmem:[#allocation2 + $0x58] sm:$0xff] %v3805
        %3830 = vst [vmem:[#allocation2 + $0x60] sm:$0xff] %v3806
        %3831 = vst [vmem:[#allocation2 + $0x68] sm:$0xff] %v3807
        %3832 = vst [vmem:[#allocation2 + $0x70] sm:$0xff] %v3808
        %3833 = vst [vmem:[#allocation2 + $0x78] sm:$0xff] %v3809
        %3834 = vst [vmem:[#allocation2 + $0x80] sm:$0xff] %v3810
        %3835 = vst [vmem:[#allocation2 + $0x88] sm:$0xff] %v3811
        %3836 = vst [vmem:[#allocation2 + $0x90] sm:$0xff] %v3812
        %3837 = vst [vmem:[#allocation2 + $0x98] sm:$0xff] %v3813
        %3838 = vst [vmem:[#allocation2 + $0xa0] sm:$0xff] %v3814
        %3839 = vst [vmem:[#allocation2 + $0xa8] sm:$0xff] %v3815
        %3840 = vst [vmem:[#allocation2 + $0xb0] sm:$0xff] %v3816
        %3841 = vst [vmem:[#allocation2 + $0xb8] sm:$0xff] %v3817
        %s3842 = scalar_lea.vmem [#allocation8], 576
        %v3843 = vld [vmem:[%s3842] sm:$0xf]
        %v3844 = vld [vmem:[%s3842 + $0x4] sm:$0xf]
        %v3845 = vld [vmem:[%s3842 + $0x8] sm:$0xf]
        %v3846 = vld [vmem:[%s3842 + $0xc] sm:$0xf]
        %v3847 = vld [vmem:[%s3842 + $0x10] sm:$0xf]
        %v3848 = vld [vmem:[%s3842 + $0x14] sm:$0xf]
        %v3849 = vld [vmem:[%s3842 + $0x18] sm:$0xf]
        %v3850 = vld [vmem:[%s3842 + $0x1c] sm:$0xf]
        %v3851 = vld [vmem:[%s3842 + $0x20] sm:$0xf]
        %v3852 = vld [vmem:[%s3842 + $0x24] sm:$0xf]
        %v3853 = vld [vmem:[%s3842 + $0x28] sm:$0xf]
        %v3854 = vld [vmem:[%s3842 + $0x2c] sm:$0xf]
        %v3855 = vld [vmem:[%s3842 + $0x30] sm:$0xf]
        %v3856 = vld [vmem:[%s3842 + $0x34] sm:$0xf]
        %v3857 = vld [vmem:[%s3842 + $0x38] sm:$0xf]
        %v3858 = vld [vmem:[%s3842 + $0x3c] sm:$0xf]
        %v3875 = vunpack.c.l.b16 %v3843
        %v3876 = vunpack.c.l.b16 %v3844
        %v3877 = vunpack.c.l.b16 %v3845
        %v3878 = vunpack.c.l.b16 %v3846
        %v3879 = vunpack.c.l.b16 %v3847
        %v3880 = vunpack.c.l.b16 %v3848
        %v3881 = vunpack.c.l.b16 %v3849
        %v3882 = vunpack.c.l.b16 %v3850
        %v3883 = vunpack.c.l.b16 %v3851
        %v3884 = vunpack.c.l.b16 %v3852
        %v3885 = vunpack.c.l.b16 %v3853
        %v3886 = vunpack.c.l.b16 %v3854
        %v3887 = vunpack.c.l.b16 %v3855
        %v3888 = vunpack.c.l.b16 %v3856
        %v3889 = vunpack.c.l.b16 %v3857
        %v3890 = vunpack.c.l.b16 %v3858
        %v3891 = vpack.c.b16 %v3876, %v3875
        %v3892 = vpack.c.b16 %v3878, %v3877
        %v3893 = vpack.c.b16 %v3880, %v3879
        %v3894 = vpack.c.b16 %v3882, %v3881
        %v3895 = vpack.c.b16 %v3884, %v3883
        %v3896 = vpack.c.b16 %v3886, %v3885
        %v3897 = vpack.c.b16 %v3888, %v3887
        %v3898 = vpack.c.b16 %v3890, %v3889
        %3907 = vmatprep.subr.bf16.mxu0 0
        %3908 = vmatpush1.bf16.msra.mxu0 %v3898
        %3909 = vmatprep.subr.bf16.mxu0 0
        %3910 = vmatpush1.bf16.msra.mxu0 %v3897
        %3911 = vmatprep.subr.bf16.mxu0 0
        %3912 = vmatpush1.bf16.msra.mxu0 %v3896
        %3913 = vmatprep.subr.bf16.mxu0 0
        %3914 = vmatpush1.bf16.msra.mxu0 %v3895
        %3915 = vmatprep.subr.bf16.mxu0 0
        %3916 = vmatpush1.bf16.msra.mxu0 %v3894
        %3917 = vmatprep.subr.bf16.mxu0 0
        %3918 = vmatpush1.bf16.msra.mxu0 %v3893
        %3919 = vmatprep.subr.bf16.mxu0 0
        %3920 = vmatpush1.bf16.msra.mxu0 %v3892
        %3921 = vmatprep.subr.bf16.mxu0 0
        %3922 = vmatpush1.bf16.msra.mxu0 %v3891
        %3923 = vmatprep.subr.bf16.mxu0 0
        %3924 = vmatpush2.bf16.msra.mxu0 0
        %3925 = vmatprep.subr.bf16.mxu0 0
        %3926 = vmatpush2.bf16.msra.mxu0 0
        %3927 = vmatprep.subr.bf16.mxu0 0
        %3928 = vmatpush2.bf16.msra.mxu0 0
        %3929 = vmatprep.subr.bf16.mxu0 0
        %3930 = vmatpush2.bf16.msra.mxu0 0
        %3931 = vmatprep.subr.bf16.mxu0 0
        %3932 = vmatpush2.bf16.msra.mxu0 0
        %3933 = vmatprep.subr.bf16.mxu0 0
        %3934 = vmatpush2.bf16.msra.mxu0 0
        %3935 = vmatprep.subr.bf16.mxu0 0
        %3936 = vmatpush2.bf16.msra.mxu0 0
        %3937 = vmatprep.subr.bf16.mxu0 0
        %3938 = vmatpush2.bf16.msra.mxu0 0
        %3939 = vmatprep.mubr.bf16.mxu0 0
        %3940 = vmatmul.mubr.bf16.gmra.mxu0 %v1163
        %v3941 = vpop.f32.mrf.mxu0
        %v3942 = vadd.f32 0.0, %v3941
        %v3943 = vpop.f32.mrf.mxu0
        %v3944 = vpop.f32.mrf.mxu0
        %v3945 = vadd.f32 0.0, %v3944
        %v3946 = vpop.f32.mrf.mxu0
        %3947 = vmatprep.mubr.bf16.mxu0 0
        %3948 = vmatmul.mubr.bf16.gmra.mxu0 %v1164
        %v3949 = vpop.f32.mrf.mxu0
        %v3950 = vadd.f32 0.0, %v3949
        %v3951 = vpop.f32.mrf.mxu0
        %v3952 = vpop.f32.mrf.mxu0
        %v3953 = vadd.f32 0.0, %v3952
        %v3954 = vpop.f32.mrf.mxu0
        %3955 = vmatprep.mubr.bf16.mxu0 0
        %3956 = vmatmul.mubr.bf16.gmra.mxu0 %v1165
        %v3957 = vpop.f32.mrf.mxu0
        %v3958 = vadd.f32 0.0, %v3957
        %v3959 = vpop.f32.mrf.mxu0
        %v3960 = vpop.f32.mrf.mxu0
        %v3961 = vadd.f32 0.0, %v3960
        %v3962 = vpop.f32.mrf.mxu0
        %3963 = vmatprep.mubr.bf16.mxu0 0
        %3964 = vmatmul.mubr.bf16.gmra.mxu0 %v1166
        %v3965 = vpop.f32.mrf.mxu0
        %v3966 = vadd.f32 0.0, %v3965
        %v3967 = vpop.f32.mrf.mxu0
        %v3968 = vpop.f32.mrf.mxu0
        %v3969 = vadd.f32 0.0, %v3968
        %v3970 = vpop.f32.mrf.mxu0
        %3971 = vmatprep.mubr.bf16.mxu0 0
        %3972 = vmatmul.mubr.bf16.gmra.mxu0 %v1167
        %v3973 = vpop.f32.mrf.mxu0
        %v3974 = vadd.f32 0.0, %v3973
        %v3975 = vpop.f32.mrf.mxu0
        %v3976 = vpop.f32.mrf.mxu0
        %v3977 = vadd.f32 0.0, %v3976
        %v3978 = vpop.f32.mrf.mxu0
        %3979 = vmatprep.mubr.bf16.mxu0 0
        %3980 = vmatmul.mubr.bf16.gmra.mxu0 %v1168
        %v3981 = vpop.f32.mrf.mxu0
        %v3982 = vadd.f32 0.0, %v3981
        %v3983 = vpop.f32.mrf.mxu0
        %v3984 = vpop.f32.mrf.mxu0
        %v3985 = vadd.f32 0.0, %v3984
        %v3986 = vpop.f32.mrf.mxu0
        %3987 = vmatprep.mubr.bf16.mxu0 0
        %3988 = vmatmul.mubr.bf16.gmra.mxu0 %v1169
        %v3989 = vpop.f32.mrf.mxu0
        %v3990 = vadd.f32 0.0, %v3989
        %v3991 = vpop.f32.mrf.mxu0
        %v3992 = vpop.f32.mrf.mxu0
        %v3993 = vadd.f32 0.0, %v3992
        %v3994 = vpop.f32.mrf.mxu0
        %3995 = vmatprep.mubr.bf16.mxu0 0
        %3996 = vmatmul.mubr.bf16.gmra.mxu0 %v1170
        %v3997 = vpop.f32.mrf.mxu0
        %v3998 = vadd.f32 0.0, %v3997
        %v3999 = vpop.f32.mrf.mxu0
        %v4000 = vpop.f32.mrf.mxu0
        %v4001 = vadd.f32 0.0, %v4000
        %v4002 = vpop.f32.mrf.mxu0
        %4003 = vmatprep.mubr.bf16.mxu0 0
        %4004 = vmatmul.mubr.bf16.gmra.mxu0 %v1171
        %v4005 = vpop.f32.mrf.mxu0
        %v4006 = vadd.f32 0.0, %v4005
        %v4007 = vpop.f32.mrf.mxu0
        %v4008 = vpop.f32.mrf.mxu0
        %v4009 = vadd.f32 0.0, %v4008
        %v4010 = vpop.f32.mrf.mxu0
        %4011 = vmatprep.mubr.bf16.mxu0 0
        %4012 = vmatmul.mubr.bf16.gmra.mxu0 %v1172
        %v4013 = vpop.f32.mrf.mxu0
        %v4014 = vadd.f32 0.0, %v4013
        %v4015 = vpop.f32.mrf.mxu0
        %v4016 = vpop.f32.mrf.mxu0
        %v4017 = vadd.f32 0.0, %v4016
        %v4018 = vpop.f32.mrf.mxu0
        %4019 = vmatprep.mubr.bf16.mxu0 0
        %4020 = vmatmul.mubr.bf16.gmra.mxu0 %v1173
        %v4021 = vpop.f32.mrf.mxu0
        %v4022 = vadd.f32 0.0, %v4021
        %v4023 = vpop.f32.mrf.mxu0
        %v4024 = vpop.f32.mrf.mxu0
        %v4025 = vadd.f32 0.0, %v4024
        %v4026 = vpop.f32.mrf.mxu0
        %4027 = vmatprep.mubr.bf16.mxu0 0
        %4028 = vmatmul.mubr.bf16.gmra.mxu0 %v1174
        %v4029 = vpop.f32.mrf.mxu0
        %v4030 = vadd.f32 0.0, %v4029
        %v4031 = vpop.f32.mrf.mxu0
        %v4032 = vpop.f32.mrf.mxu0
        %v4033 = vadd.f32 0.0, %v4032
        %v4034 = vpop.f32.mrf.mxu0
        %4035 = vdwg.mxu0
        %v4036 = vld [vmem:[#allocation2] sm:$0xff]
        %v4037 = vld [vmem:[#allocation2 + $0x8] sm:$0xff]
        %v4038 = vld [vmem:[#allocation2 + $0x10] sm:$0xff]
        %v4039 = vld [vmem:[#allocation2 + $0x18] sm:$0xff]
        %v4040 = vld [vmem:[#allocation2 + $0x20] sm:$0xff]
        %v4041 = vld [vmem:[#allocation2 + $0x28] sm:$0xff]
        %v4042 = vld [vmem:[#allocation2 + $0x30] sm:$0xff]
        %v4043 = vld [vmem:[#allocation2 + $0x38] sm:$0xff]
        %v4044 = vld [vmem:[#allocation2 + $0x40] sm:$0xff]
        %v4045 = vld [vmem:[#allocation2 + $0x48] sm:$0xff]
        %v4046 = vld [vmem:[#allocation2 + $0x50] sm:$0xff]
        %v4047 = vld [vmem:[#allocation2 + $0x58] sm:$0xff]
        %v4048 = vld [vmem:[#allocation2 + $0x60] sm:$0xff]
        %v4049 = vld [vmem:[#allocation2 + $0x68] sm:$0xff]
        %v4050 = vld [vmem:[#allocation2 + $0x70] sm:$0xff]
        %v4051 = vld [vmem:[#allocation2 + $0x78] sm:$0xff]
        %v4052 = vld [vmem:[#allocation2 + $0x80] sm:$0xff]
        %v4053 = vld [vmem:[#allocation2 + $0x88] sm:$0xff]
        %v4054 = vld [vmem:[#allocation2 + $0x90] sm:$0xff]
        %v4055 = vld [vmem:[#allocation2 + $0x98] sm:$0xff]
        %v4056 = vld [vmem:[#allocation2 + $0xa0] sm:$0xff]
        %v4057 = vld [vmem:[#allocation2 + $0xa8] sm:$0xff]
        %v4058 = vld [vmem:[#allocation2 + $0xb0] sm:$0xff]
        %v4059 = vld [vmem:[#allocation2 + $0xb8] sm:$0xff]
        %v4060 = vadd.f32 %v4036, %v3942
        %v4061 = vadd.f32 %v4037, %v3945
        %v4062 = vadd.f32 %v4038, %v3950
        %v4063 = vadd.f32 %v4039, %v3953
        %v4064 = vadd.f32 %v4040, %v3958
        %v4065 = vadd.f32 %v4041, %v3961
        %v4066 = vadd.f32 %v4042, %v3966
        %v4067 = vadd.f32 %v4043, %v3969
        %v4068 = vadd.f32 %v4044, %v3974
        %v4069 = vadd.f32 %v4045, %v3977
        %v4070 = vadd.f32 %v4046, %v3982
        %v4071 = vadd.f32 %v4047, %v3985
        %v4072 = vadd.f32 %v4048, %v3990
        %v4073 = vadd.f32 %v4049, %v3993
        %v4074 = vadd.f32 %v4050, %v3998
        %v4075 = vadd.f32 %v4051, %v4001
        %v4076 = vadd.f32 %v4052, %v4006
        %v4077 = vadd.f32 %v4053, %v4009
        %v4078 = vadd.f32 %v4054, %v4014
        %v4079 = vadd.f32 %v4055, %v4017
        %v4080 = vadd.f32 %v4056, %v4022
        %v4081 = vadd.f32 %v4057, %v4025
        %v4082 = vadd.f32 %v4058, %v4030
        %v4083 = vadd.f32 %v4059, %v4033
        %4084 = vst [vmem:[#allocation2] sm:$0xff] %v4060
        %4085 = vst [vmem:[#allocation2 + $0x8] sm:$0xff] %v4061
        %4086 = vst [vmem:[#allocation2 + $0x10] sm:$0xff] %v4062
        %4087 = vst [vmem:[#allocation2 + $0x18] sm:$0xff] %v4063
        %4088 = vst [vmem:[#allocation2 + $0x20] sm:$0xff] %v4064
        %4089 = vst [vmem:[#allocation2 + $0x28] sm:$0xff] %v4065
        %4090 = vst [vmem:[#allocation2 + $0x30] sm:$0xff] %v4066
        %4091 = vst [vmem:[#allocation2 + $0x38] sm:$0xff] %v4067
        %4092 = vst [vmem:[#allocation2 + $0x40] sm:$0xff] %v4068
        %4093 = vst [vmem:[#allocation2 + $0x48] sm:$0xff] %v4069
        %4094 = vst [vmem:[#allocation2 + $0x50] sm:$0xff] %v4070
        %4095 = vst [vmem:[#allocation2 + $0x58] sm:$0xff] %v4071
        %4096 = vst [vmem:[#allocation2 + $0x60] sm:$0xff] %v4072
        %4097 = vst [vmem:[#allocation2 + $0x68] sm:$0xff] %v4073
        %4098 = vst [vmem:[#allocation2 + $0x70] sm:$0xff] %v4074
        %4099 = vst [vmem:[#allocation2 + $0x78] sm:$0xff] %v4075
        %4100 = vst [vmem:[#allocation2 + $0x80] sm:$0xff] %v4076
        %4101 = vst [vmem:[#allocation2 + $0x88] sm:$0xff] %v4077
        %4102 = vst [vmem:[#allocation2 + $0x90] sm:$0xff] %v4078
        %4103 = vst [vmem:[#allocation2 + $0x98] sm:$0xff] %v4079
        %4104 = vst [vmem:[#allocation2 + $0xa0] sm:$0xff] %v4080
        %4105 = vst [vmem:[#allocation2 + $0xa8] sm:$0xff] %v4081
        %4106 = vst [vmem:[#allocation2 + $0xb0] sm:$0xff] %v4082
        %4107 = vst [vmem:[#allocation2 + $0xb8] sm:$0xff] %v4083
        %s4108 = scalar_lea.vmem [#allocation8], 640
        %v4109 = vld [vmem:[%s4108] sm:$0xf]
        %v4110 = vld [vmem:[%s4108 + $0x4] sm:$0xf]
        %v4111 = vld [vmem:[%s4108 + $0x8] sm:$0xf]
        %v4112 = vld [vmem:[%s4108 + $0xc] sm:$0xf]
        %v4113 = vld [vmem:[%s4108 + $0x10] sm:$0xf]
        %v4114 = vld [vmem:[%s4108 + $0x14] sm:$0xf]
        %v4115 = vld [vmem:[%s4108 + $0x18] sm:$0xf]
        %v4116 = vld [vmem:[%s4108 + $0x1c] sm:$0xf]
        %v4117 = vld [vmem:[%s4108 + $0x20] sm:$0xf]
        %v4118 = vld [vmem:[%s4108 + $0x24] sm:$0xf]
        %v4119 = vld [vmem:[%s4108 + $0x28] sm:$0xf]
        %v4120 = vld [vmem:[%s4108 + $0x2c] sm:$0xf]
        %v4121 = vld [vmem:[%s4108 + $0x30] sm:$0xf]
        %v4122 = vld [vmem:[%s4108 + $0x34] sm:$0xf]
        %v4123 = vld [vmem:[%s4108 + $0x38] sm:$0xf]
        %v4124 = vld [vmem:[%s4108 + $0x3c] sm:$0xf]
        %v4125 = vshrl.u32 %v1173, 16
        %v4127 = vor.u32 %v4125, %v3320
        %v4129 = vshll.u32 %v1174, 16
        %v4131 = vrot.slane %v4129, 1
        %v4132 = vsel %vm1414, %v4127, %v4131
        %v4133 = vshrl.u32 %v1174, 16
        %v4135 = vor.u32 %v4133, %v4131
        %v4137 = vshll.u32 %v1175, 16
        %v4139 = vrot.slane %v4137, 1
        %v4140 = vsel %vm1414, %v4135, %v4139
        %v4159 = vunpack.c.l.b16 %v4109
        %v4160 = vunpack.c.l.b16 %v4110
        %v4161 = vunpack.c.l.b16 %v4111
        %v4162 = vunpack.c.l.b16 %v4112
        %v4163 = vunpack.c.l.b16 %v4113
        %v4164 = vunpack.c.l.b16 %v4114
        %v4165 = vunpack.c.l.b16 %v4115
        %v4166 = vunpack.c.l.b16 %v4116
        %v4167 = vunpack.c.l.b16 %v4117
        %v4168 = vunpack.c.l.b16 %v4118
        %v4169 = vunpack.c.l.b16 %v4119
        %v4170 = vunpack.c.l.b16 %v4120
        %v4171 = vunpack.c.l.b16 %v4121
        %v4172 = vunpack.c.l.b16 %v4122
        %v4173 = vunpack.c.l.b16 %v4123
        %v4174 = vunpack.c.l.b16 %v4124
        %v4175 = vpack.c.b16 %v4160, %v4159
        %v4176 = vpack.c.b16 %v4162, %v4161
        %v4177 = vpack.c.b16 %v4164, %v4163
        %v4178 = vpack.c.b16 %v4166, %v4165
        %v4179 = vpack.c.b16 %v4168, %v4167
        %v4180 = vpack.c.b16 %v4170, %v4169
        %v4181 = vpack.c.b16 %v4172, %v4171
        %v4182 = vpack.c.b16 %v4174, %v4173
        %4191 = vmatprep.subr.bf16.mxu0 0
        %4192 = vmatpush1.bf16.msra.mxu0 %v4182
        %4193 = vmatprep.subr.bf16.mxu0 0
        %4194 = vmatpush1.bf16.msra.mxu0 %v4181
        %4195 = vmatprep.subr.bf16.mxu0 0
        %4196 = vmatpush1.bf16.msra.mxu0 %v4180
        %4197 = vmatprep.subr.bf16.mxu0 0
        %4198 = vmatpush1.bf16.msra.mxu0 %v4179
        %4199 = vmatprep.subr.bf16.mxu0 0
        %4200 = vmatpush1.bf16.msra.mxu0 %v4178
        %4201 = vmatprep.subr.bf16.mxu0 0
        %4202 = vmatpush1.bf16.msra.mxu0 %v4177
        %4203 = vmatprep.subr.bf16.mxu0 0
        %4204 = vmatpush1.bf16.msra.mxu0 %v4176
        %4205 = vmatprep.subr.bf16.mxu0 0
        %4206 = vmatpush1.bf16.msra.mxu0 %v4175
        %4207 = vmatprep.subr.bf16.mxu0 0
        %4208 = vmatpush2.bf16.msra.mxu0 0
        %4209 = vmatprep.subr.bf16.mxu0 0
        %4210 = vmatpush2.bf16.msra.mxu0 0
        %4211 = vmatprep.subr.bf16.mxu0 0
        %4212 = vmatpush2.bf16.msra.mxu0 0
        %4213 = vmatprep.subr.bf16.mxu0 0
        %4214 = vmatpush2.bf16.msra.mxu0 0
        %4215 = vmatprep.subr.bf16.mxu0 0
        %4216 = vmatpush2.bf16.msra.mxu0 0
        %4217 = vmatprep.subr.bf16.mxu0 0
        %4218 = vmatpush2.bf16.msra.mxu0 0
        %4219 = vmatprep.subr.bf16.mxu0 0
        %4220 = vmatpush2.bf16.msra.mxu0 0
        %4221 = vmatprep.subr.bf16.mxu0 0
        %4222 = vmatpush2.bf16.msra.mxu0 0
        %4223 = vmatprep.mubr.bf16.mxu0 0
        %4224 = vmatmul.mubr.bf16.gmra.mxu0 %v1450
        %v4225 = vpop.f32.mrf.mxu0
        %v4226 = vadd.f32 0.0, %v4225
        %v4227 = vpop.f32.mrf.mxu0
        %v4228 = vpop.f32.mrf.mxu0
        %v4229 = vadd.f32 0.0, %v4228
        %v4230 = vpop.f32.mrf.mxu0
        %4231 = vmatprep.mubr.bf16.mxu0 0
        %4232 = vmatmul.mubr.bf16.gmra.mxu0 %v1458
        %v4233 = vpop.f32.mrf.mxu0
        %v4234 = vadd.f32 0.0, %v4233
        %v4235 = vpop.f32.mrf.mxu0
        %v4236 = vpop.f32.mrf.mxu0
        %v4237 = vadd.f32 0.0, %v4236
        %v4238 = vpop.f32.mrf.mxu0
        %4239 = vmatprep.mubr.bf16.mxu0 0
        %4240 = vmatmul.mubr.bf16.gmra.mxu0 %v1466
        %v4241 = vpop.f32.mrf.mxu0
        %v4242 = vadd.f32 0.0, %v4241
        %v4243 = vpop.f32.mrf.mxu0
        %v4244 = vpop.f32.mrf.mxu0
        %v4245 = vadd.f32 0.0, %v4244
        %v4246 = vpop.f32.mrf.mxu0
        %4247 = vmatprep.mubr.bf16.mxu0 0
        %4248 = vmatmul.mubr.bf16.gmra.mxu0 %v1474
        %v4249 = vpop.f32.mrf.mxu0
        %v4250 = vadd.f32 0.0, %v4249
        %v4251 = vpop.f32.mrf.mxu0
        %v4252 = vpop.f32.mrf.mxu0
        %v4253 = vadd.f32 0.0, %v4252
        %v4254 = vpop.f32.mrf.mxu0
        %4255 = vmatprep.mubr.bf16.mxu0 0
        %4256 = vmatmul.mubr.bf16.gmra.mxu0 %v1482
        %v4257 = vpop.f32.mrf.mxu0
        %v4258 = vadd.f32 0.0, %v4257
        %v4259 = vpop.f32.mrf.mxu0
        %v4260 = vpop.f32.mrf.mxu0
        %v4261 = vadd.f32 0.0, %v4260
        %v4262 = vpop.f32.mrf.mxu0
        %4263 = vmatprep.mubr.bf16.mxu0 0
        %4264 = vmatmul.mubr.bf16.gmra.mxu0 %v1490
        %v4265 = vpop.f32.mrf.mxu0
        %v4266 = vadd.f32 0.0, %v4265
        %v4267 = vpop.f32.mrf.mxu0
        %v4268 = vpop.f32.mrf.mxu0
        %v4269 = vadd.f32 0.0, %v4268
        %v4270 = vpop.f32.mrf.mxu0
        %4271 = vmatprep.mubr.bf16.mxu0 0
        %4272 = vmatmul.mubr.bf16.gmra.mxu0 %v1498
        %v4273 = vpop.f32.mrf.mxu0
        %v4274 = vadd.f32 0.0, %v4273
        %v4275 = vpop.f32.mrf.mxu0
        %v4276 = vpop.f32.mrf.mxu0
        %v4277 = vadd.f32 0.0, %v4276
        %v4278 = vpop.f32.mrf.mxu0
        %4279 = vmatprep.mubr.bf16.mxu0 0
        %4280 = vmatmul.mubr.bf16.gmra.mxu0 %v1506
        %v4281 = vpop.f32.mrf.mxu0
        %v4282 = vadd.f32 0.0, %v4281
        %v4283 = vpop.f32.mrf.mxu0
        %v4284 = vpop.f32.mrf.mxu0
        %v4285 = vadd.f32 0.0, %v4284
        %v4286 = vpop.f32.mrf.mxu0
        %4287 = vmatprep.mubr.bf16.mxu0 0
        %4288 = vmatmul.mubr.bf16.gmra.mxu0 %v1514
        %v4289 = vpop.f32.mrf.mxu0
        %v4290 = vadd.f32 0.0, %v4289
        %v4291 = vpop.f32.mrf.mxu0
        %v4292 = vpop.f32.mrf.mxu0
        %v4293 = vadd.f32 0.0, %v4292
        %v4294 = vpop.f32.mrf.mxu0
        %4295 = vmatprep.mubr.bf16.mxu0 0
        %4296 = vmatmul.mubr.bf16.gmra.mxu0 %v3321
        %v4297 = vpop.f32.mrf.mxu0
        %v4298 = vadd.f32 0.0, %v4297
        %v4299 = vpop.f32.mrf.mxu0
        %v4300 = vpop.f32.mrf.mxu0
        %v4301 = vadd.f32 0.0, %v4300
        %v4302 = vpop.f32.mrf.mxu0
        %4303 = vmatprep.mubr.bf16.mxu0 0
        %4304 = vmatmul.mubr.bf16.gmra.mxu0 %v4132
        %v4305 = vpop.f32.mrf.mxu0
        %v4306 = vadd.f32 0.0, %v4305
        %v4307 = vpop.f32.mrf.mxu0
        %v4308 = vpop.f32.mrf.mxu0
        %v4309 = vadd.f32 0.0, %v4308
        %v4310 = vpop.f32.mrf.mxu0
        %4311 = vmatprep.mubr.bf16.mxu0 0
        %4312 = vmatmul.mubr.bf16.gmra.mxu0 %v4140
        %v4313 = vpop.f32.mrf.mxu0
        %v4314 = vadd.f32 0.0, %v4313
        %v4315 = vpop.f32.mrf.mxu0
        %v4316 = vpop.f32.mrf.mxu0
        %v4317 = vadd.f32 0.0, %v4316
        %v4318 = vpop.f32.mrf.mxu0
        %4319 = vdwg.mxu0
        %v4320 = vld [vmem:[#allocation2] sm:$0xff]
        %v4321 = vld [vmem:[#allocation2 + $0x8] sm:$0xff]
        %v4322 = vld [vmem:[#allocation2 + $0x10] sm:$0xff]
        %v4323 = vld [vmem:[#allocation2 + $0x18] sm:$0xff]
        %v4324 = vld [vmem:[#allocation2 + $0x20] sm:$0xff]
        %v4325 = vld [vmem:[#allocation2 + $0x28] sm:$0xff]
        %v4326 = vld [vmem:[#allocation2 + $0x30] sm:$0xff]
        %v4327 = vld [vmem:[#allocation2 + $0x38] sm:$0xff]
        %v4328 = vld [vmem:[#allocation2 + $0x40] sm:$0xff]
        %v4329 = vld [vmem:[#allocation2 + $0x48] sm:$0xff]
        %v4330 = vld [vmem:[#allocation2 + $0x50] sm:$0xff]
        %v4331 = vld [vmem:[#allocation2 + $0x58] sm:$0xff]
        %v4332 = vld [vmem:[#allocation2 + $0x60] sm:$0xff]
        %v4333 = vld [vmem:[#allocation2 + $0x68] sm:$0xff]
        %v4334 = vld [vmem:[#allocation2 + $0x70] sm:$0xff]
        %v4335 = vld [vmem:[#allocation2 + $0x78] sm:$0xff]
        %v4336 = vld [vmem:[#allocation2 + $0x80] sm:$0xff]
        %v4337 = vld [vmem:[#allocation2 + $0x88] sm:$0xff]
        %v4338 = vld [vmem:[#allocation2 + $0x90] sm:$0xff]
        %v4339 = vld [vmem:[#allocation2 + $0x98] sm:$0xff]
        %v4340 = vld [vmem:[#allocation2 + $0xa0] sm:$0xff]
        %v4341 = vld [vmem:[#allocation2 + $0xa8] sm:$0xff]
        %v4342 = vld [vmem:[#allocation2 + $0xb0] sm:$0xff]
        %v4343 = vld [vmem:[#allocation2 + $0xb8] sm:$0xff]
        %v4344 = vadd.f32 %v4320, %v4226
        %v4345 = vadd.f32 %v4321, %v4229
        %v4346 = vadd.f32 %v4322, %v4234
        %v4347 = vadd.f32 %v4323, %v4237
        %v4348 = vadd.f32 %v4324, %v4242
        %v4349 = vadd.f32 %v4325, %v4245
        %v4350 = vadd.f32 %v4326, %v4250
        %v4351 = vadd.f32 %v4327, %v4253
        %v4352 = vadd.f32 %v4328, %v4258
        %v4353 = vadd.f32 %v4329, %v4261
        %v4354 = vadd.f32 %v4330, %v4266
        %v4355 = vadd.f32 %v4331, %v4269
        %v4356 = vadd.f32 %v4332, %v4274
        %v4357 = vadd.f32 %v4333, %v4277
        %v4358 = vadd.f32 %v4334, %v4282
        %v4359 = vadd.f32 %v4335, %v4285
        %v4360 = vadd.f32 %v4336, %v4290
        %v4361 = vadd.f32 %v4337, %v4293
        %v4362 = vadd.f32 %v4338, %v4298
        %v4363 = vadd.f32 %v4339, %v4301
        %v4364 = vadd.f32 %v4340, %v4306
        %v4365 = vadd.f32 %v4341, %v4309
        %v4366 = vadd.f32 %v4342, %v4314
        %v4367 = vadd.f32 %v4343, %v4317
        %4368 = vst [vmem:[#allocation2] sm:$0xff] %v4344
        %4369 = vst [vmem:[#allocation2 + $0x8] sm:$0xff] %v4345
        %4370 = vst [vmem:[#allocation2 + $0x10] sm:$0xff] %v4346
        %4371 = vst [vmem:[#allocation2 + $0x18] sm:$0xff] %v4347
        %4372 = vst [vmem:[#allocation2 + $0x20] sm:$0xff] %v4348
        %4373 = vst [vmem:[#allocation2 + $0x28] sm:$0xff] %v4349
        %4374 = vst [vmem:[#allocation2 + $0x30] sm:$0xff] %v4350
        %4375 = vst [vmem:[#allocation2 + $0x38] sm:$0xff] %v4351
        %4376 = vst [vmem:[#allocation2 + $0x40] sm:$0xff] %v4352
        %4377 = vst [vmem:[#allocation2 + $0x48] sm:$0xff] %v4353
        %4378 = vst [vmem:[#allocation2 + $0x50] sm:$0xff] %v4354
        %4379 = vst [vmem:[#allocation2 + $0x58] sm:$0xff] %v4355
        %4380 = vst [vmem:[#allocation2 + $0x60] sm:$0xff] %v4356
        %4381 = vst [vmem:[#allocation2 + $0x68] sm:$0xff] %v4357
        %4382 = vst [vmem:[#allocation2 + $0x70] sm:$0xff] %v4358
        %4383 = vst [vmem:[#allocation2 + $0x78] sm:$0xff] %v4359
        %4384 = vst [vmem:[#allocation2 + $0x80] sm:$0xff] %v4360
        %4385 = vst [vmem:[#allocation2 + $0x88] sm:$0xff] %v4361
        %4386 = vst [vmem:[#allocation2 + $0x90] sm:$0xff] %v4362
        %4387 = vst [vmem:[#allocation2 + $0x98] sm:$0xff] %v4363
        %4388 = vst [vmem:[#allocation2 + $0xa0] sm:$0xff] %v4364
        %4389 = vst [vmem:[#allocation2 + $0xa8] sm:$0xff] %v4365
        %4390 = vst [vmem:[#allocation2 + $0xb0] sm:$0xff] %v4366
        %4391 = vst [vmem:[#allocation2 + $0xb8] sm:$0xff] %v4367
        %s4392 = scalar_lea.vmem [#allocation8], 704
        %v4393 = vld [vmem:[%s4392] sm:$0xf]
        %v4394 = vld [vmem:[%s4392 + $0x4] sm:$0xf]
        %v4395 = vld [vmem:[%s4392 + $0x8] sm:$0xf]
        %v4396 = vld [vmem:[%s4392 + $0xc] sm:$0xf]
        %v4397 = vld [vmem:[%s4392 + $0x10] sm:$0xf]
        %v4398 = vld [vmem:[%s4392 + $0x14] sm:$0xf]
        %v4399 = vld [vmem:[%s4392 + $0x18] sm:$0xf]
        %v4400 = vld [vmem:[%s4392 + $0x1c] sm:$0xf]
        %v4401 = vld [vmem:[%s4392 + $0x20] sm:$0xf]
        %v4402 = vld [vmem:[%s4392 + $0x24] sm:$0xf]
        %v4403 = vld [vmem:[%s4392 + $0x28] sm:$0xf]
        %v4404 = vld [vmem:[%s4392 + $0x2c] sm:$0xf]
        %v4405 = vld [vmem:[%s4392 + $0x30] sm:$0xf]
        %v4406 = vld [vmem:[%s4392 + $0x34] sm:$0xf]
        %v4407 = vld [vmem:[%s4392 + $0x38] sm:$0xf]
        %v4408 = vld [vmem:[%s4392 + $0x3c] sm:$0xf]
        %v4411 = vrot.slane %v1174, 1
        %v4412 = vsel %vm1806, %v3590, %v4411
        %v4413 = vrot.slane %v1175, 1
        %v4414 = vsel %vm1806, %v4411, %v4413
        %v4433 = vunpack.c.l.b16 %v4393
        %v4434 = vunpack.c.l.b16 %v4394
        %v4435 = vunpack.c.l.b16 %v4395
        %v4436 = vunpack.c.l.b16 %v4396
        %v4437 = vunpack.c.l.b16 %v4397
        %v4438 = vunpack.c.l.b16 %v4398
        %v4439 = vunpack.c.l.b16 %v4399
        %v4440 = vunpack.c.l.b16 %v4400
        %v4441 = vunpack.c.l.b16 %v4401
        %v4442 = vunpack.c.l.b16 %v4402
        %v4443 = vunpack.c.l.b16 %v4403
        %v4444 = vunpack.c.l.b16 %v4404
        %v4445 = vunpack.c.l.b16 %v4405
        %v4446 = vunpack.c.l.b16 %v4406
        %v4447 = vunpack.c.l.b16 %v4407
        %v4448 = vunpack.c.l.b16 %v4408
        %v4449 = vpack.c.b16 %v4434, %v4433
        %v4450 = vpack.c.b16 %v4436, %v4435
        %v4451 = vpack.c.b16 %v4438, %v4437
        %v4452 = vpack.c.b16 %v4440, %v4439
        %v4453 = vpack.c.b16 %v4442, %v4441
        %v4454 = vpack.c.b16 %v4444, %v4443
        %v4455 = vpack.c.b16 %v4446, %v4445
        %v4456 = vpack.c.b16 %v4448, %v4447
        %4465 = vmatprep.subr.bf16.mxu0 0
        %4466 = vmatpush1.bf16.msra.mxu0 %v4456
        %4467 = vmatprep.subr.bf16.mxu0 0
        %4468 = vmatpush1.bf16.msra.mxu0 %v4455
        %4469 = vmatprep.subr.bf16.mxu0 0
        %4470 = vmatpush1.bf16.msra.mxu0 %v4454
        %4471 = vmatprep.subr.bf16.mxu0 0
        %4472 = vmatpush1.bf16.msra.mxu0 %v4453
        %4473 = vmatprep.subr.bf16.mxu0 0
        %4474 = vmatpush1.bf16.msra.mxu0 %v4452
        %4475 = vmatprep.subr.bf16.mxu0 0
        %4476 = vmatpush1.bf16.msra.mxu0 %v4451
        %4477 = vmatprep.subr.bf16.mxu0 0
        %4478 = vmatpush1.bf16.msra.mxu0 %v4450
        %4479 = vmatprep.subr.bf16.mxu0 0
        %4480 = vmatpush1.bf16.msra.mxu0 %v4449
        %4481 = vmatprep.subr.bf16.mxu0 0
        %4482 = vmatpush2.bf16.msra.mxu0 0
        %4483 = vmatprep.subr.bf16.mxu0 0
        %4484 = vmatpush2.bf16.msra.mxu0 0
        %4485 = vmatprep.subr.bf16.mxu0 0
        %4486 = vmatpush2.bf16.msra.mxu0 0
        %4487 = vmatprep.subr.bf16.mxu0 0
        %4488 = vmatpush2.bf16.msra.mxu0 0
        %4489 = vmatprep.subr.bf16.mxu0 0
        %4490 = vmatpush2.bf16.msra.mxu0 0
        %4491 = vmatprep.subr.bf16.mxu0 0
        %4492 = vmatpush2.bf16.msra.mxu0 0
        %4493 = vmatprep.subr.bf16.mxu0 0
        %4494 = vmatpush2.bf16.msra.mxu0 0
        %4495 = vmatprep.subr.bf16.mxu0 0
        %4496 = vmatpush2.bf16.msra.mxu0 0
        %4497 = vmatprep.mubr.bf16.mxu0 0
        %4498 = vmatmul.mubr.bf16.gmra.mxu0 %v1815
        %v4499 = vpop.f32.mrf.mxu0
        %v4500 = vadd.f32 0.0, %v4499
        %v4501 = vpop.f32.mrf.mxu0
        %v4502 = vpop.f32.mrf.mxu0
        %v4503 = vadd.f32 0.0, %v4502
        %v4504 = vpop.f32.mrf.mxu0
        %4505 = vmatprep.mubr.bf16.mxu0 0
        %4506 = vmatmul.mubr.bf16.gmra.mxu0 %v1817
        %v4507 = vpop.f32.mrf.mxu0
        %v4508 = vadd.f32 0.0, %v4507
        %v4509 = vpop.f32.mrf.mxu0
        %v4510 = vpop.f32.mrf.mxu0
        %v4511 = vadd.f32 0.0, %v4510
        %v4512 = vpop.f32.mrf.mxu0
        %4513 = vmatprep.mubr.bf16.mxu0 0
        %4514 = vmatmul.mubr.bf16.gmra.mxu0 %v1819
        %v4515 = vpop.f32.mrf.mxu0
        %v4516 = vadd.f32 0.0, %v4515
        %v4517 = vpop.f32.mrf.mxu0
        %v4518 = vpop.f32.mrf.mxu0
        %v4519 = vadd.f32 0.0, %v4518
        %v4520 = vpop.f32.mrf.mxu0
        %4521 = vmatprep.mubr.bf16.mxu0 0
        %4522 = vmatmul.mubr.bf16.gmra.mxu0 %v1821
        %v4523 = vpop.f32.mrf.mxu0
        %v4524 = vadd.f32 0.0, %v4523
        %v4525 = vpop.f32.mrf.mxu0
        %v4526 = vpop.f32.mrf.mxu0
        %v4527 = vadd.f32 0.0, %v4526
        %v4528 = vpop.f32.mrf.mxu0
        %4529 = vmatprep.mubr.bf16.mxu0 0
        %4530 = vmatmul.mubr.bf16.gmra.mxu0 %v1823
        %v4531 = vpop.f32.mrf.mxu0
        %v4532 = vadd.f32 0.0, %v4531
        %v4533 = vpop.f32.mrf.mxu0
        %v4534 = vpop.f32.mrf.mxu0
        %v4535 = vadd.f32 0.0, %v4534
        %v4536 = vpop.f32.mrf.mxu0
        %4537 = vmatprep.mubr.bf16.mxu0 0
        %4538 = vmatmul.mubr.bf16.gmra.mxu0 %v1825
        %v4539 = vpop.f32.mrf.mxu0
        %v4540 = vadd.f32 0.0, %v4539
        %v4541 = vpop.f32.mrf.mxu0
        %v4542 = vpop.f32.mrf.mxu0
        %v4543 = vadd.f32 0.0, %v4542
        %v4544 = vpop.f32.mrf.mxu0
        %4545 = vmatprep.mubr.bf16.mxu0 0
        %4546 = vmatmul.mubr.bf16.gmra.mxu0 %v1827
        %v4547 = vpop.f32.mrf.mxu0
        %v4548 = vadd.f32 0.0, %v4547
        %v4549 = vpop.f32.mrf.mxu0
        %v4550 = vpop.f32.mrf.mxu0
        %v4551 = vadd.f32 0.0, %v4550
        %v4552 = vpop.f32.mrf.mxu0
        %4553 = vmatprep.mubr.bf16.mxu0 0
        %4554 = vmatmul.mubr.bf16.gmra.mxu0 %v1829
        %v4555 = vpop.f32.mrf.mxu0
        %v4556 = vadd.f32 0.0, %v4555
        %v4557 = vpop.f32.mrf.mxu0
        %v4558 = vpop.f32.mrf.mxu0
        %v4559 = vadd.f32 0.0, %v4558
        %v4560 = vpop.f32.mrf.mxu0
        %4561 = vmatprep.mubr.bf16.mxu0 0
        %4562 = vmatmul.mubr.bf16.gmra.mxu0 %v1831
        %v4563 = vpop.f32.mrf.mxu0
        %v4564 = vadd.f32 0.0, %v4563
        %v4565 = vpop.f32.mrf.mxu0
        %v4566 = vpop.f32.mrf.mxu0
        %v4567 = vadd.f32 0.0, %v4566
        %v4568 = vpop.f32.mrf.mxu0
        %4569 = vmatprep.mubr.bf16.mxu0 0
        %4570 = vmatmul.mubr.bf16.gmra.mxu0 %v3591
        %v4571 = vpop.f32.mrf.mxu0
        %v4572 = vadd.f32 0.0, %v4571
        %v4573 = vpop.f32.mrf.mxu0
        %v4574 = vpop.f32.mrf.mxu0
        %v4575 = vadd.f32 0.0, %v4574
        %v4576 = vpop.f32.mrf.mxu0
        %4577 = vmatprep.mubr.bf16.mxu0 0
        %4578 = vmatmul.mubr.bf16.gmra.mxu0 %v4412
        %v4579 = vpop.f32.mrf.mxu0
        %v4580 = vadd.f32 0.0, %v4579
        %v4581 = vpop.f32.mrf.mxu0
        %v4582 = vpop.f32.mrf.mxu0
        %v4583 = vadd.f32 0.0, %v4582
        %v4584 = vpop.f32.mrf.mxu0
        %4585 = vmatprep.mubr.bf16.mxu0 0
        %4586 = vmatmul.mubr.bf16.gmra.mxu0 %v4414
        %v4587 = vpop.f32.mrf.mxu0
        %v4588 = vadd.f32 0.0, %v4587
        %v4589 = vpop.f32.mrf.mxu0
        %v4590 = vpop.f32.mrf.mxu0
        %v4591 = vadd.f32 0.0, %v4590
        %v4592 = vpop.f32.mrf.mxu0
        %4593 = vdwg.mxu0
        %v4594 = vld [vmem:[#allocation2] sm:$0xff]
        %v4595 = vld [vmem:[#allocation2 + $0x8] sm:$0xff]
        %v4596 = vld [vmem:[#allocation2 + $0x10] sm:$0xff]
        %v4597 = vld [vmem:[#allocation2 + $0x18] sm:$0xff]
        %v4598 = vld [vmem:[#allocation2 + $0x20] sm:$0xff]
        %v4599 = vld [vmem:[#allocation2 + $0x28] sm:$0xff]
        %v4600 = vld [vmem:[#allocation2 + $0x30] sm:$0xff]
        %v4601 = vld [vmem:[#allocation2 + $0x38] sm:$0xff]
        %v4602 = vld [vmem:[#allocation2 + $0x40] sm:$0xff]
        %v4603 = vld [vmem:[#allocation2 + $0x48] sm:$0xff]
        %v4604 = vld [vmem:[#allocation2 + $0x50] sm:$0xff]
        %v4605 = vld [vmem:[#allocation2 + $0x58] sm:$0xff]
        %v4606 = vld [vmem:[#allocation2 + $0x60] sm:$0xff]
        %v4607 = vld [vmem:[#allocation2 + $0x68] sm:$0xff]
        %v4608 = vld [vmem:[#allocation2 + $0x70] sm:$0xff]
        %v4609 = vld [vmem:[#allocation2 + $0x78] sm:$0xff]
        %v4610 = vld [vmem:[#allocation2 + $0x80] sm:$0xff]
        %v4611 = vld [vmem:[#allocation2 + $0x88] sm:$0xff]
        %v4612 = vld [vmem:[#allocation2 + $0x90] sm:$0xff]
        %v4613 = vld [vmem:[#allocation2 + $0x98] sm:$0xff]
        %v4614 = vld [vmem:[#allocation2 + $0xa0] sm:$0xff]
        %v4615 = vld [vmem:[#allocation2 + $0xa8] sm:$0xff]
        %v4616 = vld [vmem:[#allocation2 + $0xb0] sm:$0xff]
        %v4617 = vld [vmem:[#allocation2 + $0xb8] sm:$0xff]
        %v4618 = vadd.f32 %v4594, %v4500
        %v4619 = vadd.f32 %v4595, %v4503
        %v4620 = vadd.f32 %v4596, %v4508
        %v4621 = vadd.f32 %v4597, %v4511
        %v4622 = vadd.f32 %v4598, %v4516
        %v4623 = vadd.f32 %v4599, %v4519
        %v4624 = vadd.f32 %v4600, %v4524
        %v4625 = vadd.f32 %v4601, %v4527
        %v4626 = vadd.f32 %v4602, %v4532
        %v4627 = vadd.f32 %v4603, %v4535
        %v4628 = vadd.f32 %v4604, %v4540
        %v4629 = vadd.f32 %v4605, %v4543
        %v4630 = vadd.f32 %v4606, %v4548
        %v4631 = vadd.f32 %v4607, %v4551
        %v4632 = vadd.f32 %v4608, %v4556
        %v4633 = vadd.f32 %v4609, %v4559
        %v4634 = vadd.f32 %v4610, %v4564
        %v4635 = vadd.f32 %v4611, %v4567
        %v4636 = vadd.f32 %v4612, %v4572
        %v4637 = vadd.f32 %v4613, %v4575
        %v4638 = vadd.f32 %v4614, %v4580
        %v4639 = vadd.f32 %v4615, %v4583
        %v4640 = vadd.f32 %v4616, %v4588
        %v4641 = vadd.f32 %v4617, %v4591
        %4642 = vst [vmem:[#allocation2] sm:$0xff] %v4618
        %4643 = vst [vmem:[#allocation2 + $0x8] sm:$0xff] %v4619
        %4644 = vst [vmem:[#allocation2 + $0x10] sm:$0xff] %v4620
        %4645 = vst [vmem:[#allocation2 + $0x18] sm:$0xff] %v4621
        %4646 = vst [vmem:[#allocation2 + $0x20] sm:$0xff] %v4622
        %4647 = vst [vmem:[#allocation2 + $0x28] sm:$0xff] %v4623
        %4648 = vst [vmem:[#allocation2 + $0x30] sm:$0xff] %v4624
        %4649 = vst [vmem:[#allocation2 + $0x38] sm:$0xff] %v4625
        %4650 = vst [vmem:[#allocation2 + $0x40] sm:$0xff] %v4626
        %4651 = vst [vmem:[#allocation2 + $0x48] sm:$0xff] %v4627
        %4652 = vst [vmem:[#allocation2 + $0x50] sm:$0xff] %v4628
        %4653 = vst [vmem:[#allocation2 + $0x58] sm:$0xff] %v4629
        %4654 = vst [vmem:[#allocation2 + $0x60] sm:$0xff] %v4630
        %4655 = vst [vmem:[#allocation2 + $0x68] sm:$0xff] %v4631
        %4656 = vst [vmem:[#allocation2 + $0x70] sm:$0xff] %v4632
        %4657 = vst [vmem:[#allocation2 + $0x78] sm:$0xff] %v4633
        %4658 = vst [vmem:[#allocation2 + $0x80] sm:$0xff] %v4634
        %4659 = vst [vmem:[#allocation2 + $0x88] sm:$0xff] %v4635
        %4660 = vst [vmem:[#allocation2 + $0x90] sm:$0xff] %v4636
        %4661 = vst [vmem:[#allocation2 + $0x98] sm:$0xff] %v4637
        %4662 = vst [vmem:[#allocation2 + $0xa0] sm:$0xff] %v4638
        %4663 = vst [vmem:[#allocation2 + $0xa8] sm:$0xff] %v4639
        %4664 = vst [vmem:[#allocation2 + $0xb0] sm:$0xff] %v4640
        %4665 = vst [vmem:[#allocation2 + $0xb8] sm:$0xff] %v4641
        %s4666 = scalar_lea.vmem [#allocation8], 768
        %v4667 = vld [vmem:[%s4666] sm:$0xf]
        %v4668 = vld [vmem:[%s4666 + $0x4] sm:$0xf]
        %v4669 = vld [vmem:[%s4666 + $0x8] sm:$0xf]
        %v4670 = vld [vmem:[%s4666 + $0xc] sm:$0xf]
        %v4671 = vld [vmem:[%s4666 + $0x10] sm:$0xf]
        %v4672 = vld [vmem:[%s4666 + $0x14] sm:$0xf]
        %v4673 = vld [vmem:[%s4666 + $0x18] sm:$0xf]
        %v4674 = vld [vmem:[%s4666 + $0x1c] sm:$0xf]
        %v4675 = vld [vmem:[%s4666 + $0x20] sm:$0xf]
        %v4676 = vld [vmem:[%s4666 + $0x24] sm:$0xf]
        %v4677 = vld [vmem:[%s4666 + $0x28] sm:$0xf]
        %v4678 = vld [vmem:[%s4666 + $0x2c] sm:$0xf]
        %v4679 = vld [vmem:[%s4666 + $0x30] sm:$0xf]
        %v4680 = vld [vmem:[%s4666 + $0x34] sm:$0xf]
        %v4681 = vld [vmem:[%s4666 + $0x38] sm:$0xf]
        %v4682 = vld [vmem:[%s4666 + $0x3c] sm:$0xf]
        %v4683 = vrot.slane %v1173, 4
        %v4684 = vsel %vm2110, %v2134, %v4683
        %v4685 = vrot.slane %v1174, 4
        %v4686 = vsel %vm2110, %v4683, %v4685
        %v4687 = vrot.slane %v1175, 4
        %v4688 = vsel %vm2110, %v4685, %v4687
        %v4708 = vunpack.c.l.b16 %v4667
        %v4709 = vunpack.c.l.b16 %v4668
        %v4710 = vunpack.c.l.b16 %v4669
        %v4711 = vunpack.c.l.b16 %v4670
        %v4712 = vunpack.c.l.b16 %v4671
        %v4713 = vunpack.c.l.b16 %v4672
        %v4714 = vunpack.c.l.b16 %v4673
        %v4715 = vunpack.c.l.b16 %v4674
        %v4716 = vunpack.c.l.b16 %v4675
        %v4717 = vunpack.c.l.b16 %v4676
        %v4718 = vunpack.c.l.b16 %v4677
        %v4719 = vunpack.c.l.b16 %v4678
        %v4720 = vunpack.c.l.b16 %v4679
        %v4721 = vunpack.c.l.b16 %v4680
        %v4722 = vunpack.c.l.b16 %v4681
        %v4723 = vunpack.c.l.b16 %v4682
        %v4724 = vpack.c.b16 %v4709, %v4708
        %v4725 = vpack.c.b16 %v4711, %v4710
        %v4726 = vpack.c.b16 %v4713, %v4712
        %v4727 = vpack.c.b16 %v4715, %v4714
        %v4728 = vpack.c.b16 %v4717, %v4716
        %v4729 = vpack.c.b16 %v4719, %v4718
        %v4730 = vpack.c.b16 %v4721, %v4720
        %v4731 = vpack.c.b16 %v4723, %v4722
        %4740 = vmatprep.subr.bf16.mxu0 0
        %4741 = vmatpush1.bf16.msra.mxu0 %v4731
        %4742 = vmatprep.subr.bf16.mxu0 0
        %4743 = vmatpush1.bf16.msra.mxu0 %v4730
        %4744 = vmatprep.subr.bf16.mxu0 0
        %4745 = vmatpush1.bf16.msra.mxu0 %v4729
        %4746 = vmatprep.subr.bf16.mxu0 0
        %4747 = vmatpush1.bf16.msra.mxu0 %v4728
        %4748 = vmatprep.subr.bf16.mxu0 0
        %4749 = vmatpush1.bf16.msra.mxu0 %v4727
        %4750 = vmatprep.subr.bf16.mxu0 0
        %4751 = vmatpush1.bf16.msra.mxu0 %v4726
        %4752 = vmatprep.subr.bf16.mxu0 0
        %4753 = vmatpush1.bf16.msra.mxu0 %v4725
        %4754 = vmatprep.subr.bf16.mxu0 0
        %4755 = vmatpush1.bf16.msra.mxu0 %v4724
        %4756 = vmatprep.subr.bf16.mxu0 0
        %4757 = vmatpush2.bf16.msra.mxu0 0
        %4758 = vmatprep.subr.bf16.mxu0 0
        %4759 = vmatpush2.bf16.msra.mxu0 0
        %4760 = vmatprep.subr.bf16.mxu0 0
        %4761 = vmatpush2.bf16.msra.mxu0 0
        %4762 = vmatprep.subr.bf16.mxu0 0
        %4763 = vmatpush2.bf16.msra.mxu0 0
        %4764 = vmatprep.subr.bf16.mxu0 0
        %4765 = vmatpush2.bf16.msra.mxu0 0
        %4766 = vmatprep.subr.bf16.mxu0 0
        %4767 = vmatpush2.bf16.msra.mxu0 0
        %4768 = vmatprep.subr.bf16.mxu0 0
        %4769 = vmatpush2.bf16.msra.mxu0 0
        %4770 = vmatprep.subr.bf16.mxu0 0
        %4771 = vmatpush2.bf16.msra.mxu0 0
        %4772 = vmatprep.mubr.bf16.mxu0 0
        %4773 = vmatmul.mubr.bf16.gmra.mxu0 %v2119
        %v4774 = vpop.f32.mrf.mxu0
        %v4775 = vadd.f32 0.0, %v4774
        %v4776 = vpop.f32.mrf.mxu0
        %v4777 = vpop.f32.mrf.mxu0
        %v4778 = vadd.f32 0.0, %v4777
        %v4779 = vpop.f32.mrf.mxu0
        %4780 = vmatprep.mubr.bf16.mxu0 0
        %4781 = vmatmul.mubr.bf16.gmra.mxu0 %v2121
        %v4782 = vpop.f32.mrf.mxu0
        %v4783 = vadd.f32 0.0, %v4782
        %v4784 = vpop.f32.mrf.mxu0
        %v4785 = vpop.f32.mrf.mxu0
        %v4786 = vadd.f32 0.0, %v4785
        %v4787 = vpop.f32.mrf.mxu0
        %4788 = vmatprep.mubr.bf16.mxu0 0
        %4789 = vmatmul.mubr.bf16.gmra.mxu0 %v2123
        %v4790 = vpop.f32.mrf.mxu0
        %v4791 = vadd.f32 0.0, %v4790
        %v4792 = vpop.f32.mrf.mxu0
        %v4793 = vpop.f32.mrf.mxu0
        %v4794 = vadd.f32 0.0, %v4793
        %v4795 = vpop.f32.mrf.mxu0
        %4796 = vmatprep.mubr.bf16.mxu0 0
        %4797 = vmatmul.mubr.bf16.gmra.mxu0 %v2125
        %v4798 = vpop.f32.mrf.mxu0
        %v4799 = vadd.f32 0.0, %v4798
        %v4800 = vpop.f32.mrf.mxu0
        %v4801 = vpop.f32.mrf.mxu0
        %v4802 = vadd.f32 0.0, %v4801
        %v4803 = vpop.f32.mrf.mxu0
        %4804 = vmatprep.mubr.bf16.mxu0 0
        %4805 = vmatmul.mubr.bf16.gmra.mxu0 %v2127
        %v4806 = vpop.f32.mrf.mxu0
        %v4807 = vadd.f32 0.0, %v4806
        %v4808 = vpop.f32.mrf.mxu0
        %v4809 = vpop.f32.mrf.mxu0
        %v4810 = vadd.f32 0.0, %v4809
        %v4811 = vpop.f32.mrf.mxu0
        %4812 = vmatprep.mubr.bf16.mxu0 0
        %4813 = vmatmul.mubr.bf16.gmra.mxu0 %v2129
        %v4814 = vpop.f32.mrf.mxu0
        %v4815 = vadd.f32 0.0, %v4814
        %v4816 = vpop.f32.mrf.mxu0
        %v4817 = vpop.f32.mrf.mxu0
        %v4818 = vadd.f32 0.0, %v4817
        %v4819 = vpop.f32.mrf.mxu0
        %4820 = vmatprep.mubr.bf16.mxu0 0
        %4821 = vmatmul.mubr.bf16.gmra.mxu0 %v2131
        %v4822 = vpop.f32.mrf.mxu0
        %v4823 = vadd.f32 0.0, %v4822
        %v4824 = vpop.f32.mrf.mxu0
        %v4825 = vpop.f32.mrf.mxu0
        %v4826 = vadd.f32 0.0, %v4825
        %v4827 = vpop.f32.mrf.mxu0
        %4828 = vmatprep.mubr.bf16.mxu0 0
        %4829 = vmatmul.mubr.bf16.gmra.mxu0 %v2133
        %v4830 = vpop.f32.mrf.mxu0
        %v4831 = vadd.f32 0.0, %v4830
        %v4832 = vpop.f32.mrf.mxu0
        %v4833 = vpop.f32.mrf.mxu0
        %v4834 = vadd.f32 0.0, %v4833
        %v4835 = vpop.f32.mrf.mxu0
        %4836 = vmatprep.mubr.bf16.mxu0 0
        %4837 = vmatmul.mubr.bf16.gmra.mxu0 %v2135
        %v4838 = vpop.f32.mrf.mxu0
        %v4839 = vadd.f32 0.0, %v4838
        %v4840 = vpop.f32.mrf.mxu0
        %v4841 = vpop.f32.mrf.mxu0
        %v4842 = vadd.f32 0.0, %v4841
        %v4843 = vpop.f32.mrf.mxu0
        %4844 = vmatprep.mubr.bf16.mxu0 0
        %4845 = vmatmul.mubr.bf16.gmra.mxu0 %v4684
        %v4846 = vpop.f32.mrf.mxu0
        %v4847 = vadd.f32 0.0, %v4846
        %v4848 = vpop.f32.mrf.mxu0
        %v4849 = vpop.f32.mrf.mxu0
        %v4850 = vadd.f32 0.0, %v4849
        %v4851 = vpop.f32.mrf.mxu0
        %4852 = vmatprep.mubr.bf16.mxu0 0
        %4853 = vmatmul.mubr.bf16.gmra.mxu0 %v4686
        %v4854 = vpop.f32.mrf.mxu0
        %v4855 = vadd.f32 0.0, %v4854
        %v4856 = vpop.f32.mrf.mxu0
        %v4857 = vpop.f32.mrf.mxu0
        %v4858 = vadd.f32 0.0, %v4857
        %v4859 = vpop.f32.mrf.mxu0
        %4860 = vmatprep.mubr.bf16.mxu0 0
        %4861 = vmatmul.mubr.bf16.gmra.mxu0 %v4688
        %v4862 = vpop.f32.mrf.mxu0
        %v4863 = vadd.f32 0.0, %v4862
        %v4864 = vpop.f32.mrf.mxu0
        %v4865 = vpop.f32.mrf.mxu0
        %v4866 = vadd.f32 0.0, %v4865
        %v4867 = vpop.f32.mrf.mxu0
        %4868 = vdwg.mxu0
        %v4869 = vld [vmem:[#allocation2] sm:$0xff]
        %v4870 = vld [vmem:[#allocation2 + $0x8] sm:$0xff]
        %v4871 = vld [vmem:[#allocation2 + $0x10] sm:$0xff]
        %v4872 = vld [vmem:[#allocation2 + $0x18] sm:$0xff]
        %v4873 = vld [vmem:[#allocation2 + $0x20] sm:$0xff]
        %v4874 = vld [vmem:[#allocation2 + $0x28] sm:$0xff]
        %v4875 = vld [vmem:[#allocation2 + $0x30] sm:$0xff]
        %v4876 = vld [vmem:[#allocation2 + $0x38] sm:$0xff]
        %v4877 = vld [vmem:[#allocation2 + $0x40] sm:$0xff]
        %v4878 = vld [vmem:[#allocation2 + $0x48] sm:$0xff]
        %v4879 = vld [vmem:[#allocation2 + $0x50] sm:$0xff]
        %v4880 = vld [vmem:[#allocation2 + $0x58] sm:$0xff]
        %v4881 = vld [vmem:[#allocation2 + $0x60] sm:$0xff]
        %v4882 = vld [vmem:[#allocation2 + $0x68] sm:$0xff]
        %v4883 = vld [vmem:[#allocation2 + $0x70] sm:$0xff]
        %v4884 = vld [vmem:[#allocation2 + $0x78] sm:$0xff]
        %v4885 = vld [vmem:[#allocation2 + $0x80] sm:$0xff]
        %v4886 = vld [vmem:[#allocation2 + $0x88] sm:$0xff]
        %v4887 = vld [vmem:[#allocation2 + $0x90] sm:$0xff]
        %v4888 = vld [vmem:[#allocation2 + $0x98] sm:$0xff]
        %v4889 = vld [vmem:[#allocation2 + $0xa0] sm:$0xff]
        %v4890 = vld [vmem:[#allocation2 + $0xa8] sm:$0xff]
        %v4891 = vld [vmem:[#allocation2 + $0xb0] sm:$0xff]
        %v4892 = vld [vmem:[#allocation2 + $0xb8] sm:$0xff]
        %v4893 = vadd.f32 %v4869, %v4775
        %v4894 = vadd.f32 %v4870, %v4778
        %v4895 = vadd.f32 %v4871, %v4783
        %v4896 = vadd.f32 %v4872, %v4786
        %v4897 = vadd.f32 %v4873, %v4791
        %v4898 = vadd.f32 %v4874, %v4794
        %v4899 = vadd.f32 %v4875, %v4799
        %v4900 = vadd.f32 %v4876, %v4802
        %v4901 = vadd.f32 %v4877, %v4807
        %v4902 = vadd.f32 %v4878, %v4810
        %v4903 = vadd.f32 %v4879, %v4815
        %v4904 = vadd.f32 %v4880, %v4818
        %v4905 = vadd.f32 %v4881, %v4823
        %v4906 = vadd.f32 %v4882, %v4826
        %v4907 = vadd.f32 %v4883, %v4831
        %v4908 = vadd.f32 %v4884, %v4834
        %v4909 = vadd.f32 %v4885, %v4839
        %v4910 = vadd.f32 %v4886, %v4842
        %v4911 = vadd.f32 %v4887, %v4847
        %v4912 = vadd.f32 %v4888, %v4850
        %v4913 = vadd.f32 %v4889, %v4855
        %v4914 = vadd.f32 %v4890, %v4858
        %v4915 = vadd.f32 %v4891, %v4863
        %v4916 = vadd.f32 %v4892, %v4866
        %4917 = vst [vmem:[#allocation2] sm:$0xff] %v4893
        %4918 = vst [vmem:[#allocation2 + $0x8] sm:$0xff] %v4894
        %4919 = vst [vmem:[#allocation2 + $0x10] sm:$0xff] %v4895
        %4920 = vst [vmem:[#allocation2 + $0x18] sm:$0xff] %v4896
        %4921 = vst [vmem:[#allocation2 + $0x20] sm:$0xff] %v4897
        %4922 = vst [vmem:[#allocation2 + $0x28] sm:$0xff] %v4898
        %4923 = vst [vmem:[#allocation2 + $0x30] sm:$0xff] %v4899
        %4924 = vst [vmem:[#allocation2 + $0x38] sm:$0xff] %v4900
        %4925 = vst [vmem:[#allocation2 + $0x40] sm:$0xff] %v4901
        %4926 = vst [vmem:[#allocation2 + $0x48] sm:$0xff] %v4902
        %4927 = vst [vmem:[#allocation2 + $0x50] sm:$0xff] %v4903
        %4928 = vst [vmem:[#allocation2 + $0x58] sm:$0xff] %v4904
        %4929 = vst [vmem:[#allocation2 + $0x60] sm:$0xff] %v4905
        %4930 = vst [vmem:[#allocation2 + $0x68] sm:$0xff] %v4906
        %4931 = vst [vmem:[#allocation2 + $0x70] sm:$0xff] %v4907
        %4932 = vst [vmem:[#allocation2 + $0x78] sm:$0xff] %v4908
        %4933 = vst [vmem:[#allocation2 + $0x80] sm:$0xff] %v4909
        %4934 = vst [vmem:[#allocation2 + $0x88] sm:$0xff] %v4910
        %4935 = vst [vmem:[#allocation2 + $0x90] sm:$0xff] %v4911
        %4936 = vst [vmem:[#allocation2 + $0x98] sm:$0xff] %v4912
        %4937 = vst [vmem:[#allocation2 + $0xa0] sm:$0xff] %v4913
        %4938 = vst [vmem:[#allocation2 + $0xa8] sm:$0xff] %v4914
        %4939 = vst [vmem:[#allocation2 + $0xb0] sm:$0xff] %v4915
        %4940 = vst [vmem:[#allocation2 + $0xb8] sm:$0xff] %v4916
        %s4941 = scalar_lea.vmem [#allocation8], 832
        %v4942 = vld [vmem:[%s4941] sm:$0xf]
        %v4943 = vld [vmem:[%s4941 + $0x4] sm:$0xf]
        %v4944 = vld [vmem:[%s4941 + $0x8] sm:$0xf]
        %v4945 = vld [vmem:[%s4941 + $0xc] sm:$0xf]
        %v4946 = vld [vmem:[%s4941 + $0x10] sm:$0xf]
        %v4947 = vld [vmem:[%s4941 + $0x14] sm:$0xf]
        %v4948 = vld [vmem:[%s4941 + $0x18] sm:$0xf]
        %v4949 = vld [vmem:[%s4941 + $0x1c] sm:$0xf]
        %v4950 = vld [vmem:[%s4941 + $0x20] sm:$0xf]
        %v4951 = vld [vmem:[%s4941 + $0x24] sm:$0xf]
        %v4952 = vld [vmem:[%s4941 + $0x28] sm:$0xf]
        %v4953 = vld [vmem:[%s4941 + $0x2c] sm:$0xf]
        %v4954 = vld [vmem:[%s4941 + $0x30] sm:$0xf]
        %v4955 = vld [vmem:[%s4941 + $0x34] sm:$0xf]
        %v4956 = vld [vmem:[%s4941 + $0x38] sm:$0xf]
        %v4957 = vld [vmem:[%s4941 + $0x3c] sm:$0xf]
        %v4958 = vrot.slane %v4125, 4
        %v4959 = vrot.slane %v3318, 5
        %v4960 = vor.u32 %v4958, %v4959
        %v4961 = vsel %vm2414, %v2466, %v4960
        %v4962 = vrot.slane %v4133, 4
        %v4963 = vrot.slane %v4129, 5
        %v4964 = vor.u32 %v4962, %v4963
        %v4965 = vsel %vm2414, %v4960, %v4964
        %v4966 = vshrl.u32 %v1175, 16
        %v4968 = vrot.slane %v4966, 4
        %v4969 = vrot.slane %v4137, 5
        %v4970 = vor.u32 %v4968, %v4969
        %v4971 = vsel %vm2414, %v4964, %v4970
        %v4991 = vunpack.c.l.b16 %v4942
        %v4992 = vunpack.c.l.b16 %v4943
        %v4993 = vunpack.c.l.b16 %v4944
        %v4994 = vunpack.c.l.b16 %v4945
        %v4995 = vunpack.c.l.b16 %v4946
        %v4996 = vunpack.c.l.b16 %v4947
        %v4997 = vunpack.c.l.b16 %v4948
        %v4998 = vunpack.c.l.b16 %v4949
        %v4999 = vunpack.c.l.b16 %v4950
        %v5000 = vunpack.c.l.b16 %v4951
        %v5001 = vunpack.c.l.b16 %v4952
        %v5002 = vunpack.c.l.b16 %v4953
        %v5003 = vunpack.c.l.b16 %v4954
        %v5004 = vunpack.c.l.b16 %v4955
        %v5005 = vunpack.c.l.b16 %v4956
        %v5006 = vunpack.c.l.b16 %v4957
        %v5007 = vpack.c.b16 %v4992, %v4991
        %v5008 = vpack.c.b16 %v4994, %v4993
        %v5009 = vpack.c.b16 %v4996, %v4995
        %v5010 = vpack.c.b16 %v4998, %v4997
        %v5011 = vpack.c.b16 %v5000, %v4999
        %v5012 = vpack.c.b16 %v5002, %v5001
        %v5013 = vpack.c.b16 %v5004, %v5003
        %v5014 = vpack.c.b16 %v5006, %v5005
        %5023 = vmatprep.subr.bf16.mxu0 0
        %5024 = vmatpush1.bf16.msra.mxu0 %v5014
        %5025 = vmatprep.subr.bf16.mxu0 0
        %5026 = vmatpush1.bf16.msra.mxu0 %v5013
        %5027 = vmatprep.subr.bf16.mxu0 0
        %5028 = vmatpush1.bf16.msra.mxu0 %v5012
        %5029 = vmatprep.subr.bf16.mxu0 0
        %5030 = vmatpush1.bf16.msra.mxu0 %v5011
        %5031 = vmatprep.subr.bf16.mxu0 0
        %5032 = vmatpush1.bf16.msra.mxu0 %v5010
        %5033 = vmatprep.subr.bf16.mxu0 0
        %5034 = vmatpush1.bf16.msra.mxu0 %v5009
        %5035 = vmatprep.subr.bf16.mxu0 0
        %5036 = vmatpush1.bf16.msra.mxu0 %v5008
        %5037 = vmatprep.subr.bf16.mxu0 0
        %5038 = vmatpush1.bf16.msra.mxu0 %v5007
        %5039 = vmatprep.subr.bf16.mxu0 0
        %5040 = vmatpush2.bf16.msra.mxu0 0
        %5041 = vmatprep.subr.bf16.mxu0 0
        %5042 = vmatpush2.bf16.msra.mxu0 0
        %5043 = vmatprep.subr.bf16.mxu0 0
        %5044 = vmatpush2.bf16.msra.mxu0 0
        %5045 = vmatprep.subr.bf16.mxu0 0
        %5046 = vmatpush2.bf16.msra.mxu0 0
        %5047 = vmatprep.subr.bf16.mxu0 0
        %5048 = vmatpush2.bf16.msra.mxu0 0
        %5049 = vmatprep.subr.bf16.mxu0 0
        %5050 = vmatpush2.bf16.msra.mxu0 0
        %5051 = vmatprep.subr.bf16.mxu0 0
        %5052 = vmatpush2.bf16.msra.mxu0 0
        %5053 = vmatprep.subr.bf16.mxu0 0
        %5054 = vmatpush2.bf16.msra.mxu0 0
        %5055 = vmatprep.mubr.bf16.mxu0 0
        %5056 = vmatmul.mubr.bf16.gmra.mxu0 %v2433
        %v5057 = vpop.f32.mrf.mxu0
        %v5058 = vadd.f32 0.0, %v5057
        %v5059 = vpop.f32.mrf.mxu0
        %v5060 = vpop.f32.mrf.mxu0
        %v5061 = vadd.f32 0.0, %v5060
        %v5062 = vpop.f32.mrf.mxu0
        %5063 = vmatprep.mubr.bf16.mxu0 0
        %5064 = vmatmul.mubr.bf16.gmra.mxu0 %v2437
        %v5065 = vpop.f32.mrf.mxu0
        %v5066 = vadd.f32 0.0, %v5065
        %v5067 = vpop.f32.mrf.mxu0
        %v5068 = vpop.f32.mrf.mxu0
        %v5069 = vadd.f32 0.0, %v5068
        %v5070 = vpop.f32.mrf.mxu0
        %5071 = vmatprep.mubr.bf16.mxu0 0
        %5072 = vmatmul.mubr.bf16.gmra.mxu0 %v2441
        %v5073 = vpop.f32.mrf.mxu0
        %v5074 = vadd.f32 0.0, %v5073
        %v5075 = vpop.f32.mrf.mxu0
        %v5076 = vpop.f32.mrf.mxu0
        %v5077 = vadd.f32 0.0, %v5076
        %v5078 = vpop.f32.mrf.mxu0
        %5079 = vmatprep.mubr.bf16.mxu0 0
        %5080 = vmatmul.mubr.bf16.gmra.mxu0 %v2445
        %v5081 = vpop.f32.mrf.mxu0
        %v5082 = vadd.f32 0.0, %v5081
        %v5083 = vpop.f32.mrf.mxu0
        %v5084 = vpop.f32.mrf.mxu0
        %v5085 = vadd.f32 0.0, %v5084
        %v5086 = vpop.f32.mrf.mxu0
        %5087 = vmatprep.mubr.bf16.mxu0 0
        %5088 = vmatmul.mubr.bf16.gmra.mxu0 %v2449
        %v5089 = vpop.f32.mrf.mxu0
        %v5090 = vadd.f32 0.0, %v5089
        %v5091 = vpop.f32.mrf.mxu0
        %v5092 = vpop.f32.mrf.mxu0
        %v5093 = vadd.f32 0.0, %v5092
        %v5094 = vpop.f32.mrf.mxu0
        %5095 = vmatprep.mubr.bf16.mxu0 0
        %5096 = vmatmul.mubr.bf16.gmra.mxu0 %v2453
        %v5097 = vpop.f32.mrf.mxu0
        %v5098 = vadd.f32 0.0, %v5097
        %v5099 = vpop.f32.mrf.mxu0
        %v5100 = vpop.f32.mrf.mxu0
        %v5101 = vadd.f32 0.0, %v5100
        %v5102 = vpop.f32.mrf.mxu0
        %5103 = vmatprep.mubr.bf16.mxu0 0
        %5104 = vmatmul.mubr.bf16.gmra.mxu0 %v2457
        %v5105 = vpop.f32.mrf.mxu0
        %v5106 = vadd.f32 0.0, %v5105
        %v5107 = vpop.f32.mrf.mxu0
        %v5108 = vpop.f32.mrf.mxu0
        %v5109 = vadd.f32 0.0, %v5108
        %v5110 = vpop.f32.mrf.mxu0
        %5111 = vmatprep.mubr.bf16.mxu0 0
        %5112 = vmatmul.mubr.bf16.gmra.mxu0 %v2461
        %v5113 = vpop.f32.mrf.mxu0
        %v5114 = vadd.f32 0.0, %v5113
        %v5115 = vpop.f32.mrf.mxu0
        %v5116 = vpop.f32.mrf.mxu0
        %v5117 = vadd.f32 0.0, %v5116
        %v5118 = vpop.f32.mrf.mxu0
        %5119 = vmatprep.mubr.bf16.mxu0 0
        %5120 = vmatmul.mubr.bf16.gmra.mxu0 %v2467
        %v5121 = vpop.f32.mrf.mxu0
        %v5122 = vadd.f32 0.0, %v5121
        %v5123 = vpop.f32.mrf.mxu0
        %v5124 = vpop.f32.mrf.mxu0
        %v5125 = vadd.f32 0.0, %v5124
        %v5126 = vpop.f32.mrf.mxu0
        %5127 = vmatprep.mubr.bf16.mxu0 0
        %5128 = vmatmul.mubr.bf16.gmra.mxu0 %v4961
        %v5129 = vpop.f32.mrf.mxu0
        %v5130 = vadd.f32 0.0, %v5129
        %v5131 = vpop.f32.mrf.mxu0
        %v5132 = vpop.f32.mrf.mxu0
        %v5133 = vadd.f32 0.0, %v5132
        %v5134 = vpop.f32.mrf.mxu0
        %5135 = vmatprep.mubr.bf16.mxu0 0
        %5136 = vmatmul.mubr.bf16.gmra.mxu0 %v4965
        %v5137 = vpop.f32.mrf.mxu0
        %v5138 = vadd.f32 0.0, %v5137
        %v5139 = vpop.f32.mrf.mxu0
        %v5140 = vpop.f32.mrf.mxu0
        %v5141 = vadd.f32 0.0, %v5140
        %v5142 = vpop.f32.mrf.mxu0
        %5143 = vmatprep.mubr.bf16.mxu0 0
        %5144 = vmatmul.mubr.bf16.gmra.mxu0 %v4971
        %v5145 = vpop.f32.mrf.mxu0
        %v5146 = vadd.f32 0.0, %v5145
        %v5147 = vpop.f32.mrf.mxu0
        %v5148 = vpop.f32.mrf.mxu0
        %v5149 = vadd.f32 0.0, %v5148
        %v5150 = vpop.f32.mrf.mxu0
        %5151 = vdwg.mxu0
        %v5152 = vld [vmem:[#allocation2] sm:$0xff]
        %v5153 = vld [vmem:[#allocation2 + $0x8] sm:$0xff]
        %v5154 = vld [vmem:[#allocation2 + $0x10] sm:$0xff]
        %v5155 = vld [vmem:[#allocation2 + $0x18] sm:$0xff]
        %v5156 = vld [vmem:[#allocation2 + $0x20] sm:$0xff]
        %v5157 = vld [vmem:[#allocation2 + $0x28] sm:$0xff]
        %v5158 = vld [vmem:[#allocation2 + $0x30] sm:$0xff]
        %v5159 = vld [vmem:[#allocation2 + $0x38] sm:$0xff]
        %v5160 = vld [vmem:[#allocation2 + $0x40] sm:$0xff]
        %v5161 = vld [vmem:[#allocation2 + $0x48] sm:$0xff]
        %v5162 = vld [vmem:[#allocation2 + $0x50] sm:$0xff]
        %v5163 = vld [vmem:[#allocation2 + $0x58] sm:$0xff]
        %v5164 = vld [vmem:[#allocation2 + $0x60] sm:$0xff]
        %v5165 = vld [vmem:[#allocation2 + $0x68] sm:$0xff]
        %v5166 = vld [vmem:[#allocation2 + $0x70] sm:$0xff]
        %v5167 = vld [vmem:[#allocation2 + $0x78] sm:$0xff]
        %v5168 = vld [vmem:[#allocation2 + $0x80] sm:$0xff]
        %v5169 = vld [vmem:[#allocation2 + $0x88] sm:$0xff]
        %v5170 = vld [vmem:[#allocation2 + $0x90] sm:$0xff]
        %v5171 = vld [vmem:[#allocation2 + $0x98] sm:$0xff]
        %v5172 = vld [vmem:[#allocation2 + $0xa0] sm:$0xff]
        %v5173 = vld [vmem:[#allocation2 + $0xa8] sm:$0xff]
        %v5174 = vld [vmem:[#allocation2 + $0xb0] sm:$0xff]
        %v5175 = vld [vmem:[#allocation2 + $0xb8] sm:$0xff]
        %v5176 = vadd.f32 %v5152, %v5058
        %v5177 = vadd.f32 %v5153, %v5061
        %v5178 = vadd.f32 %v5154, %v5066
        %v5179 = vadd.f32 %v5155, %v5069
        %v5180 = vadd.f32 %v5156, %v5074
        %v5181 = vadd.f32 %v5157, %v5077
        %v5182 = vadd.f32 %v5158, %v5082
        %v5183 = vadd.f32 %v5159, %v5085
        %v5184 = vadd.f32 %v5160, %v5090
        %v5185 = vadd.f32 %v5161, %v5093
        %v5186 = vadd.f32 %v5162, %v5098
        %v5187 = vadd.f32 %v5163, %v5101
        %v5188 = vadd.f32 %v5164, %v5106
        %v5189 = vadd.f32 %v5165, %v5109
        %v5190 = vadd.f32 %v5166, %v5114
        %v5191 = vadd.f32 %v5167, %v5117
        %v5192 = vadd.f32 %v5168, %v5122
        %v5193 = vadd.f32 %v5169, %v5125
        %v5194 = vadd.f32 %v5170, %v5130
        %v5195 = vadd.f32 %v5171, %v5133
        %v5196 = vadd.f32 %v5172, %v5138
        %v5197 = vadd.f32 %v5173, %v5141
        %v5198 = vadd.f32 %v5174, %v5146
        %v5199 = vadd.f32 %v5175, %v5149
        %5200 = vst [vmem:[#allocation2] sm:$0xff] %v5176
        %5201 = vst [vmem:[#allocation2 + $0x8] sm:$0xff] %v5177
        %5202 = vst [vmem:[#allocation2 + $0x10] sm:$0xff] %v5178
        %5203 = vst [vmem:[#allocation2 + $0x18] sm:$0xff] %v5179
        %5204 = vst [vmem:[#allocation2 + $0x20] sm:$0xff] %v5180
        %5205 = vst [vmem:[#allocation2 + $0x28] sm:$0xff] %v5181
        %5206 = vst [vmem:[#allocation2 + $0x30] sm:$0xff] %v5182
        %5207 = vst [vmem:[#allocation2 + $0x38] sm:$0xff] %v5183
        %5208 = vst [vmem:[#allocation2 + $0x40] sm:$0xff] %v5184
        %5209 = vst [vmem:[#allocation2 + $0x48] sm:$0xff] %v5185
        %5210 = vst [vmem:[#allocation2 + $0x50] sm:$0xff] %v5186
        %5211 = vst [vmem:[#allocation2 + $0x58] sm:$0xff] %v5187
        %5212 = vst [vmem:[#allocation2 + $0x60] sm:$0xff] %v5188
        %5213 = vst [vmem:[#allocation2 + $0x68] sm:$0xff] %v5189
        %5214 = vst [vmem:[#allocation2 + $0x70] sm:$0xff] %v5190
        %5215 = vst [vmem:[#allocation2 + $0x78] sm:$0xff] %v5191
        %5216 = vst [vmem:[#allocation2 + $0x80] sm:$0xff] %v5192
        %5217 = vst [vmem:[#allocation2 + $0x88] sm:$0xff] %v5193
        %5218 = vst [vmem:[#allocation2 + $0x90] sm:$0xff] %v5194
        %5219 = vst [vmem:[#allocation2 + $0x98] sm:$0xff] %v5195
        %5220 = vst [vmem:[#allocation2 + $0xa0] sm:$0xff] %v5196
        %5221 = vst [vmem:[#allocation2 + $0xa8] sm:$0xff] %v5197
        %5222 = vst [vmem:[#allocation2 + $0xb0] sm:$0xff] %v5198
        %5223 = vst [vmem:[#allocation2 + $0xb8] sm:$0xff] %v5199
        %s5224 = scalar_lea.vmem [#allocation8], 896
        %v5225 = vld [vmem:[%s5224] sm:$0xf]
        %v5226 = vld [vmem:[%s5224 + $0x4] sm:$0xf]
        %v5227 = vld [vmem:[%s5224 + $0x8] sm:$0xf]
        %v5228 = vld [vmem:[%s5224 + $0xc] sm:$0xf]
        %v5229 = vld [vmem:[%s5224 + $0x10] sm:$0xf]
        %v5230 = vld [vmem:[%s5224 + $0x14] sm:$0xf]
        %v5231 = vld [vmem:[%s5224 + $0x18] sm:$0xf]
        %v5232 = vld [vmem:[%s5224 + $0x1c] sm:$0xf]
        %v5233 = vld [vmem:[%s5224 + $0x20] sm:$0xf]
        %v5234 = vld [vmem:[%s5224 + $0x24] sm:$0xf]
        %v5235 = vld [vmem:[%s5224 + $0x28] sm:$0xf]
        %v5236 = vld [vmem:[%s5224 + $0x2c] sm:$0xf]
        %v5237 = vld [vmem:[%s5224 + $0x30] sm:$0xf]
        %v5238 = vld [vmem:[%s5224 + $0x34] sm:$0xf]
        %v5239 = vld [vmem:[%s5224 + $0x38] sm:$0xf]
        %v5240 = vld [vmem:[%s5224 + $0x3c] sm:$0xf]
        %v5241 = vrot.slane %v1173, 5
        %v5242 = vsel %vm2746, %v2770, %v5241
        %v5243 = vrot.slane %v1174, 5
        %v5244 = vsel %vm2746, %v5241, %v5243
        %v5245 = vrot.slane %v1175, 5
        %v5246 = vsel %vm2746, %v5243, %v5245
        %v5266 = vunpack.c.l.b16 %v5225
        %v5267 = vunpack.c.l.b16 %v5226
        %v5268 = vunpack.c.l.b16 %v5227
        %v5269 = vunpack.c.l.b16 %v5228
        %v5270 = vunpack.c.l.b16 %v5229
        %v5271 = vunpack.c.l.b16 %v5230
        %v5272 = vunpack.c.l.b16 %v5231
        %v5273 = vunpack.c.l.b16 %v5232
        %v5274 = vunpack.c.l.b16 %v5233
        %v5275 = vunpack.c.l.b16 %v5234
        %v5276 = vunpack.c.l.b16 %v5235
        %v5277 = vunpack.c.l.b16 %v5236
        %v5278 = vunpack.c.l.b16 %v5237
        %v5279 = vunpack.c.l.b16 %v5238
        %v5280 = vunpack.c.l.b16 %v5239
        %v5281 = vunpack.c.l.b16 %v5240
        %v5282 = vpack.c.b16 %v5267, %v5266
        %v5283 = vpack.c.b16 %v5269, %v5268
        %v5284 = vpack.c.b16 %v5271, %v5270
        %v5285 = vpack.c.b16 %v5273, %v5272
        %v5286 = vpack.c.b16 %v5275, %v5274
        %v5287 = vpack.c.b16 %v5277, %v5276
        %v5288 = vpack.c.b16 %v5279, %v5278
        %v5289 = vpack.c.b16 %v5281, %v5280
        %5298 = vmatprep.subr.bf16.mxu0 0
        %5299 = vmatpush1.bf16.msra.mxu0 %v5289
        %5300 = vmatprep.subr.bf16.mxu0 0
        %5301 = vmatpush1.bf16.msra.mxu0 %v5288
        %5302 = vmatprep.subr.bf16.mxu0 0
        %5303 = vmatpush1.bf16.msra.mxu0 %v5287
        %5304 = vmatprep.subr.bf16.mxu0 0
        %5305 = vmatpush1.bf16.msra.mxu0 %v5286
        %5306 = vmatprep.subr.bf16.mxu0 0
        %5307 = vmatpush1.bf16.msra.mxu0 %v5285
        %5308 = vmatprep.subr.bf16.mxu0 0
        %5309 = vmatpush1.bf16.msra.mxu0 %v5284
        %5310 = vmatprep.subr.bf16.mxu0 0
        %5311 = vmatpush1.bf16.msra.mxu0 %v5283
        %5312 = vmatprep.subr.bf16.mxu0 0
        %5313 = vmatpush1.bf16.msra.mxu0 %v5282
        %5314 = vmatprep.subr.bf16.mxu0 0
        %5315 = vmatpush2.bf16.msra.mxu0 0
        %5316 = vmatprep.subr.bf16.mxu0 0
        %5317 = vmatpush2.bf16.msra.mxu0 0
        %5318 = vmatprep.subr.bf16.mxu0 0
        %5319 = vmatpush2.bf16.msra.mxu0 0
        %5320 = vmatprep.subr.bf16.mxu0 0
        %5321 = vmatpush2.bf16.msra.mxu0 0
        %5322 = vmatprep.subr.bf16.mxu0 0
        %5323 = vmatpush2.bf16.msra.mxu0 0
        %5324 = vmatprep.subr.bf16.mxu0 0
        %5325 = vmatpush2.bf16.msra.mxu0 0
        %5326 = vmatprep.subr.bf16.mxu0 0
        %5327 = vmatpush2.bf16.msra.mxu0 0
        %5328 = vmatprep.subr.bf16.mxu0 0
        %5329 = vmatpush2.bf16.msra.mxu0 0
        %5330 = vmatprep.mubr.bf16.mxu0 0
        %5331 = vmatmul.mubr.bf16.gmra.mxu0 %v2755
        %v5332 = vpop.f32.mrf.mxu0
        %v5333 = vadd.f32 0.0, %v5332
        %v5334 = vpop.f32.mrf.mxu0
        %v5335 = vpop.f32.mrf.mxu0
        %v5336 = vadd.f32 0.0, %v5335
        %v5337 = vpop.f32.mrf.mxu0
        %5338 = vmatprep.mubr.bf16.mxu0 0
        %5339 = vmatmul.mubr.bf16.gmra.mxu0 %v2757
        %v5340 = vpop.f32.mrf.mxu0
        %v5341 = vadd.f32 0.0, %v5340
        %v5342 = vpop.f32.mrf.mxu0
        %v5343 = vpop.f32.mrf.mxu0
        %v5344 = vadd.f32 0.0, %v5343
        %v5345 = vpop.f32.mrf.mxu0
        %5346 = vmatprep.mubr.bf16.mxu0 0
        %5347 = vmatmul.mubr.bf16.gmra.mxu0 %v2759
        %v5348 = vpop.f32.mrf.mxu0
        %v5349 = vadd.f32 0.0, %v5348
        %v5350 = vpop.f32.mrf.mxu0
        %v5351 = vpop.f32.mrf.mxu0
        %v5352 = vadd.f32 0.0, %v5351
        %v5353 = vpop.f32.mrf.mxu0
        %5354 = vmatprep.mubr.bf16.mxu0 0
        %5355 = vmatmul.mubr.bf16.gmra.mxu0 %v2761
        %v5356 = vpop.f32.mrf.mxu0
        %v5357 = vadd.f32 0.0, %v5356
        %v5358 = vpop.f32.mrf.mxu0
        %v5359 = vpop.f32.mrf.mxu0
        %v5360 = vadd.f32 0.0, %v5359
        %v5361 = vpop.f32.mrf.mxu0
        %5362 = vmatprep.mubr.bf16.mxu0 0
        %5363 = vmatmul.mubr.bf16.gmra.mxu0 %v2763
        %v5364 = vpop.f32.mrf.mxu0
        %v5365 = vadd.f32 0.0, %v5364
        %v5366 = vpop.f32.mrf.mxu0
        %v5367 = vpop.f32.mrf.mxu0
        %v5368 = vadd.f32 0.0, %v5367
        %v5369 = vpop.f32.mrf.mxu0
        %5370 = vmatprep.mubr.bf16.mxu0 0
        %5371 = vmatmul.mubr.bf16.gmra.mxu0 %v2765
        %v5372 = vpop.f32.mrf.mxu0
        %v5373 = vadd.f32 0.0, %v5372
        %v5374 = vpop.f32.mrf.mxu0
        %v5375 = vpop.f32.mrf.mxu0
        %v5376 = vadd.f32 0.0, %v5375
        %v5377 = vpop.f32.mrf.mxu0
        %5378 = vmatprep.mubr.bf16.mxu0 0
        %5379 = vmatmul.mubr.bf16.gmra.mxu0 %v2767
        %v5380 = vpop.f32.mrf.mxu0
        %v5381 = vadd.f32 0.0, %v5380
        %v5382 = vpop.f32.mrf.mxu0
        %v5383 = vpop.f32.mrf.mxu0
        %v5384 = vadd.f32 0.0, %v5383
        %v5385 = vpop.f32.mrf.mxu0
        %5386 = vmatprep.mubr.bf16.mxu0 0
        %5387 = vmatmul.mubr.bf16.gmra.mxu0 %v2769
        %v5388 = vpop.f32.mrf.mxu0
        %v5389 = vadd.f32 0.0, %v5388
        %v5390 = vpop.f32.mrf.mxu0
        %v5391 = vpop.f32.mrf.mxu0
        %v5392 = vadd.f32 0.0, %v5391
        %v5393 = vpop.f32.mrf.mxu0
        %5394 = vmatprep.mubr.bf16.mxu0 0
        %5395 = vmatmul.mubr.bf16.gmra.mxu0 %v2771
        %v5396 = vpop.f32.mrf.mxu0
        %v5397 = vadd.f32 0.0, %v5396
        %v5398 = vpop.f32.mrf.mxu0
        %v5399 = vpop.f32.mrf.mxu0
        %v5400 = vadd.f32 0.0, %v5399
        %v5401 = vpop.f32.mrf.mxu0
        %5402 = vmatprep.mubr.bf16.mxu0 0
        %5403 = vmatmul.mubr.bf16.gmra.mxu0 %v5242
        %v5404 = vpop.f32.mrf.mxu0
        %v5405 = vadd.f32 0.0, %v5404
        %v5406 = vpop.f32.mrf.mxu0
        %v5407 = vpop.f32.mrf.mxu0
        %v5408 = vadd.f32 0.0, %v5407
        %v5409 = vpop.f32.mrf.mxu0
        %5410 = vmatprep.mubr.bf16.mxu0 0
        %5411 = vmatmul.mubr.bf16.gmra.mxu0 %v5244
        %v5412 = vpop.f32.mrf.mxu0
        %v5413 = vadd.f32 0.0, %v5412
        %v5414 = vpop.f32.mrf.mxu0
        %v5415 = vpop.f32.mrf.mxu0
        %v5416 = vadd.f32 0.0, %v5415
        %v5417 = vpop.f32.mrf.mxu0
        %5418 = vmatprep.mubr.bf16.mxu0 0
        %5419 = vmatmul.mubr.bf16.gmra.mxu0 %v5246
        %v5420 = vpop.f32.mrf.mxu0
        %v5421 = vadd.f32 0.0, %v5420
        %v5422 = vpop.f32.mrf.mxu0
        %v5423 = vpop.f32.mrf.mxu0
        %v5424 = vadd.f32 0.0, %v5423
        %v5425 = vpop.f32.mrf.mxu0
        %5426 = vdwg.mxu0
        %v5427 = vld [vmem:[#allocation2] sm:$0xff]
        %v5428 = vld [vmem:[#allocation2 + $0x8] sm:$0xff]
        %v5429 = vld [vmem:[#allocation2 + $0x10] sm:$0xff]
        %v5430 = vld [vmem:[#allocation2 + $0x18] sm:$0xff]
        %v5431 = vld [vmem:[#allocation2 + $0x20] sm:$0xff]
        %v5432 = vld [vmem:[#allocation2 + $0x28] sm:$0xff]
        %v5433 = vld [vmem:[#allocation2 + $0x30] sm:$0xff]
        %v5434 = vld [vmem:[#allocation2 + $0x38] sm:$0xff]
        %v5435 = vld [vmem:[#allocation2 + $0x40] sm:$0xff]
        %v5436 = vld [vmem:[#allocation2 + $0x48] sm:$0xff]
        %v5437 = vld [vmem:[#allocation2 + $0x50] sm:$0xff]
        %v5438 = vld [vmem:[#allocation2 + $0x58] sm:$0xff]
        %v5439 = vld [vmem:[#allocation2 + $0x60] sm:$0xff]
        %v5440 = vld [vmem:[#allocation2 + $0x68] sm:$0xff]
        %v5441 = vld [vmem:[#allocation2 + $0x70] sm:$0xff]
        %v5442 = vld [vmem:[#allocation2 + $0x78] sm:$0xff]
        %v5443 = vld [vmem:[#allocation2 + $0x80] sm:$0xff]
        %v5444 = vld [vmem:[#allocation2 + $0x88] sm:$0xff]
        %v5445 = vld [vmem:[#allocation2 + $0x90] sm:$0xff]
        %v5446 = vld [vmem:[#allocation2 + $0x98] sm:$0xff]
        %v5447 = vld [vmem:[#allocation2 + $0xa0] sm:$0xff]
        %v5448 = vld [vmem:[#allocation2 + $0xa8] sm:$0xff]
        %v5449 = vld [vmem:[#allocation2 + $0xb0] sm:$0xff]
        %v5450 = vld [vmem:[#allocation2 + $0xb8] sm:$0xff]
        %v5451 = vadd.f32 %v5427, %v5333
        %v5452 = vadd.f32 %v5428, %v5336
        %v5453 = vadd.f32 %v5429, %v5341
        %v5454 = vadd.f32 %v5430, %v5344
        %v5455 = vadd.f32 %v5431, %v5349
        %v5456 = vadd.f32 %v5432, %v5352
        %v5457 = vadd.f32 %v5433, %v5357
        %v5458 = vadd.f32 %v5434, %v5360
        %v5459 = vadd.f32 %v5435, %v5365
        %v5460 = vadd.f32 %v5436, %v5368
        %v5461 = vadd.f32 %v5437, %v5373
        %v5462 = vadd.f32 %v5438, %v5376
        %v5463 = vadd.f32 %v5439, %v5381
        %v5464 = vadd.f32 %v5440, %v5384
        %v5465 = vadd.f32 %v5441, %v5389
        %v5466 = vadd.f32 %v5442, %v5392
        %v5467 = vadd.f32 %v5443, %v5397
        %v5468 = vadd.f32 %v5444, %v5400
        %v5469 = vadd.f32 %v5445, %v5405
        %v5470 = vadd.f32 %v5446, %v5408
        %v5471 = vadd.f32 %v5447, %v5413
        %v5472 = vadd.f32 %v5448, %v5416
        %v5473 = vadd.f32 %v5449, %v5421
        %v5474 = vadd.f32 %v5450, %v5424
        %5475 = vst [vmem:[#allocation2] sm:$0xff] %v5451
        %5476 = vst [vmem:[#allocation2 + $0x8] sm:$0xff] %v5452
        %5477 = vst [vmem:[#allocation2 + $0x10] sm:$0xff] %v5453
        %5478 = vst [vmem:[#allocation2 + $0x18] sm:$0xff] %v5454
        %5479 = vst [vmem:[#allocation2 + $0x20] sm:$0xff] %v5455
        %5480 = vst [vmem:[#allocation2 + $0x28] sm:$0xff] %v5456
        %5481 = vst [vmem:[#allocation2 + $0x30] sm:$0xff] %v5457
        %5482 = vst [vmem:[#allocation2 + $0x38] sm:$0xff] %v5458
        %5483 = vst [vmem:[#allocation2 + $0x40] sm:$0xff] %v5459
        %5484 = vst [vmem:[#allocation2 + $0x48] sm:$0xff] %v5460
        %5485 = vst [vmem:[#allocation2 + $0x50] sm:$0xff] %v5461
        %5486 = vst [vmem:[#allocation2 + $0x58] sm:$0xff] %v5462
        %5487 = vst [vmem:[#allocation2 + $0x60] sm:$0xff] %v5463
        %5488 = vst [vmem:[#allocation2 + $0x68] sm:$0xff] %v5464
        %5489 = vst [vmem:[#allocation2 + $0x70] sm:$0xff] %v5465
        %5490 = vst [vmem:[#allocation2 + $0x78] sm:$0xff] %v5466
        %5491 = vst [vmem:[#allocation2 + $0x80] sm:$0xff] %v5467
        %5492 = vst [vmem:[#allocation2 + $0x88] sm:$0xff] %v5468
        %5493 = vst [vmem:[#allocation2 + $0x90] sm:$0xff] %v5469
        %5494 = vst [vmem:[#allocation2 + $0x98] sm:$0xff] %v5470
        %5495 = vst [vmem:[#allocation2 + $0xa0] sm:$0xff] %v5471
        %5496 = vst [vmem:[#allocation2 + $0xa8] sm:$0xff] %v5472
        %5497 = vst [vmem:[#allocation2 + $0xb0] sm:$0xff] %v5473
        %5498 = vst [vmem:[#allocation2 + $0xb8] sm:$0xff] %v5474
        %s5499 = scalar_lea.vmem [#allocation8], 960
        %v5500 = vld [vmem:[%s5499] sm:$0xf]
        %v5501 = vld [vmem:[%s5499 + $0x4] sm:$0xf]
        %v5502 = vld [vmem:[%s5499 + $0x8] sm:$0xf]
        %v5503 = vld [vmem:[%s5499 + $0xc] sm:$0xf]
        %v5504 = vld [vmem:[%s5499 + $0x10] sm:$0xf]
        %v5505 = vld [vmem:[%s5499 + $0x14] sm:$0xf]
        %v5506 = vld [vmem:[%s5499 + $0x18] sm:$0xf]
        %v5507 = vld [vmem:[%s5499 + $0x1c] sm:$0xf]
        %v5508 = vld [vmem:[%s5499 + $0x20] sm:$0xf]
        %v5509 = vld [vmem:[%s5499 + $0x24] sm:$0xf]
        %v5510 = vld [vmem:[%s5499 + $0x28] sm:$0xf]
        %v5511 = vld [vmem:[%s5499 + $0x2c] sm:$0xf]
        %v5512 = vld [vmem:[%s5499 + $0x30] sm:$0xf]
        %v5513 = vld [vmem:[%s5499 + $0x34] sm:$0xf]
        %v5514 = vld [vmem:[%s5499 + $0x38] sm:$0xf]
        %v5515 = vld [vmem:[%s5499 + $0x3c] sm:$0xf]
        %v5532 = vunpack.c.l.b16 %v5500
        %v5533 = vunpack.c.l.b16 %v5501
        %v5534 = vunpack.c.l.b16 %v5502
        %v5535 = vunpack.c.l.b16 %v5503
        %v5536 = vunpack.c.l.b16 %v5504
        %v5537 = vunpack.c.l.b16 %v5505
        %v5538 = vunpack.c.l.b16 %v5506
        %v5539 = vunpack.c.l.b16 %v5507
        %v5540 = vunpack.c.l.b16 %v5508
        %v5541 = vunpack.c.l.b16 %v5509
        %v5542 = vunpack.c.l.b16 %v5510
        %v5543 = vunpack.c.l.b16 %v5511
        %v5544 = vunpack.c.l.b16 %v5512
        %v5545 = vunpack.c.l.b16 %v5513
        %v5546 = vunpack.c.l.b16 %v5514
        %v5547 = vunpack.c.l.b16 %v5515
        %v5548 = vpack.c.b16 %v5533, %v5532
        %v5549 = vpack.c.b16 %v5535, %v5534
        %v5550 = vpack.c.b16 %v5537, %v5536
        %v5551 = vpack.c.b16 %v5539, %v5538
        %v5552 = vpack.c.b16 %v5541, %v5540
        %v5553 = vpack.c.b16 %v5543, %v5542
        %v5554 = vpack.c.b16 %v5545, %v5544
        %v5555 = vpack.c.b16 %v5547, %v5546
        %5564 = vmatprep.subr.bf16.mxu0 0
        %5565 = vmatpush1.bf16.msra.mxu0 %v5555
        %5566 = vmatprep.subr.bf16.mxu0 0
        %5567 = vmatpush1.bf16.msra.mxu0 %v5554
        %5568 = vmatprep.subr.bf16.mxu0 0
        %5569 = vmatpush1.bf16.msra.mxu0 %v5553
        %5570 = vmatprep.subr.bf16.mxu0 0
        %5571 = vmatpush1.bf16.msra.mxu0 %v5552
        %5572 = vmatprep.subr.bf16.mxu0 0
        %5573 = vmatpush1.bf16.msra.mxu0 %v5551
        %5574 = vmatprep.subr.bf16.mxu0 0
        %5575 = vmatpush1.bf16.msra.mxu0 %v5550
        %5576 = vmatprep.subr.bf16.mxu0 0
        %5577 = vmatpush1.bf16.msra.mxu0 %v5549
        %5578 = vmatprep.subr.bf16.mxu0 0
        %5579 = vmatpush1.bf16.msra.mxu0 %v5548
        %5580 = vmatprep.subr.bf16.mxu0 0
        %5581 = vmatpush2.bf16.msra.mxu0 0
        %5582 = vmatprep.subr.bf16.mxu0 0
        %5583 = vmatpush2.bf16.msra.mxu0 0
        %5584 = vmatprep.subr.bf16.mxu0 0
        %5585 = vmatpush2.bf16.msra.mxu0 0
        %5586 = vmatprep.subr.bf16.mxu0 0
        %5587 = vmatpush2.bf16.msra.mxu0 0
        %5588 = vmatprep.subr.bf16.mxu0 0
        %5589 = vmatpush2.bf16.msra.mxu0 0
        %5590 = vmatprep.subr.bf16.mxu0 0
        %5591 = vmatpush2.bf16.msra.mxu0 0
        %5592 = vmatprep.subr.bf16.mxu0 0
        %5593 = vmatpush2.bf16.msra.mxu0 0
        %5594 = vmatprep.subr.bf16.mxu0 0
        %5595 = vmatpush2.bf16.msra.mxu0 0
        %5596 = vmatprep.mubr.bf16.mxu0 0
        %5597 = vmatmul.mubr.bf16.gmra.mxu0 %v1164
        %v5598 = vpop.f32.mrf.mxu0
        %v5599 = vadd.f32 0.0, %v5598
        %v5600 = vpop.f32.mrf.mxu0
        %v5601 = vpop.f32.mrf.mxu0
        %v5602 = vadd.f32 0.0, %v5601
        %v5603 = vpop.f32.mrf.mxu0
        %5604 = vmatprep.mubr.bf16.mxu0 0
        %5605 = vmatmul.mubr.bf16.gmra.mxu0 %v1165
        %v5606 = vpop.f32.mrf.mxu0
        %v5607 = vadd.f32 0.0, %v5606
        %v5608 = vpop.f32.mrf.mxu0
        %v5609 = vpop.f32.mrf.mxu0
        %v5610 = vadd.f32 0.0, %v5609
        %v5611 = vpop.f32.mrf.mxu0
        %5612 = vmatprep.mubr.bf16.mxu0 0
        %5613 = vmatmul.mubr.bf16.gmra.mxu0 %v1166
        %v5614 = vpop.f32.mrf.mxu0
        %v5615 = vadd.f32 0.0, %v5614
        %v5616 = vpop.f32.mrf.mxu0
        %v5617 = vpop.f32.mrf.mxu0
        %v5618 = vadd.f32 0.0, %v5617
        %v5619 = vpop.f32.mrf.mxu0
        %5620 = vmatprep.mubr.bf16.mxu0 0
        %5621 = vmatmul.mubr.bf16.gmra.mxu0 %v1167
        %v5622 = vpop.f32.mrf.mxu0
        %v5623 = vadd.f32 0.0, %v5622
        %v5624 = vpop.f32.mrf.mxu0
        %v5625 = vpop.f32.mrf.mxu0
        %v5626 = vadd.f32 0.0, %v5625
        %v5627 = vpop.f32.mrf.mxu0
        %5628 = vmatprep.mubr.bf16.mxu0 0
        %5629 = vmatmul.mubr.bf16.gmra.mxu0 %v1168
        %v5630 = vpop.f32.mrf.mxu0
        %v5631 = vadd.f32 0.0, %v5630
        %v5632 = vpop.f32.mrf.mxu0
        %v5633 = vpop.f32.mrf.mxu0
        %v5634 = vadd.f32 0.0, %v5633
        %v5635 = vpop.f32.mrf.mxu0
        %5636 = vmatprep.mubr.bf16.mxu0 0
        %5637 = vmatmul.mubr.bf16.gmra.mxu0 %v1169
        %v5638 = vpop.f32.mrf.mxu0
        %v5639 = vadd.f32 0.0, %v5638
        %v5640 = vpop.f32.mrf.mxu0
        %v5641 = vpop.f32.mrf.mxu0
        %v5642 = vadd.f32 0.0, %v5641
        %v5643 = vpop.f32.mrf.mxu0
        %5644 = vmatprep.mubr.bf16.mxu0 0
        %5645 = vmatmul.mubr.bf16.gmra.mxu0 %v1170
        %v5646 = vpop.f32.mrf.mxu0
        %v5647 = vadd.f32 0.0, %v5646
        %v5648 = vpop.f32.mrf.mxu0
        %v5649 = vpop.f32.mrf.mxu0
        %v5650 = vadd.f32 0.0, %v5649
        %v5651 = vpop.f32.mrf.mxu0
        %5652 = vmatprep.mubr.bf16.mxu0 0
        %5653 = vmatmul.mubr.bf16.gmra.mxu0 %v1171
        %v5654 = vpop.f32.mrf.mxu0
        %v5655 = vadd.f32 0.0, %v5654
        %v5656 = vpop.f32.mrf.mxu0
        %v5657 = vpop.f32.mrf.mxu0
        %v5658 = vadd.f32 0.0, %v5657
        %v5659 = vpop.f32.mrf.mxu0
        %5660 = vmatprep.mubr.bf16.mxu0 0
        %5661 = vmatmul.mubr.bf16.gmra.mxu0 %v1172
        %v5662 = vpop.f32.mrf.mxu0
        %v5663 = vadd.f32 0.0, %v5662
        %v5664 = vpop.f32.mrf.mxu0
        %v5665 = vpop.f32.mrf.mxu0
        %v5666 = vadd.f32 0.0, %v5665
        %v5667 = vpop.f32.mrf.mxu0
        %5668 = vmatprep.mubr.bf16.mxu0 0
        %5669 = vmatmul.mubr.bf16.gmra.mxu0 %v1173
        %v5670 = vpop.f32.mrf.mxu0
        %v5671 = vadd.f32 0.0, %v5670
        %v5672 = vpop.f32.mrf.mxu0
        %v5673 = vpop.f32.mrf.mxu0
        %v5674 = vadd.f32 0.0, %v5673
        %v5675 = vpop.f32.mrf.mxu0
        %5676 = vmatprep.mubr.bf16.mxu0 0
        %5677 = vmatmul.mubr.bf16.gmra.mxu0 %v1174
        %v5678 = vpop.f32.mrf.mxu0
        %v5679 = vadd.f32 0.0, %v5678
        %v5680 = vpop.f32.mrf.mxu0
        %v5681 = vpop.f32.mrf.mxu0
        %v5682 = vadd.f32 0.0, %v5681
        %v5683 = vpop.f32.mrf.mxu0
        %5684 = vmatprep.mubr.bf16.mxu0 0
        %5685 = vmatmul.mubr.bf16.gmra.mxu0 %v1175
        %v5686 = vpop.f32.mrf.mxu0
        %v5687 = vadd.f32 0.0, %v5686
        %v5688 = vpop.f32.mrf.mxu0
        %v5689 = vpop.f32.mrf.mxu0
        %v5690 = vadd.f32 0.0, %v5689
        %v5691 = vpop.f32.mrf.mxu0
        %5692 = vdwg.mxu0
        %v5693 = vld [vmem:[#allocation2] sm:$0xff]
        %v5694 = vld [vmem:[#allocation2 + $0x8] sm:$0xff]
        %v5695 = vld [vmem:[#allocation2 + $0x10] sm:$0xff]
        %v5696 = vld [vmem:[#allocation2 + $0x18] sm:$0xff]
        %v5697 = vld [vmem:[#allocation2 + $0x20] sm:$0xff]
        %v5698 = vld [vmem:[#allocation2 + $0x28] sm:$0xff]
        %v5699 = vld [vmem:[#allocation2 + $0x30] sm:$0xff]
        %v5700 = vld [vmem:[#allocation2 + $0x38] sm:$0xff]
        %v5701 = vld [vmem:[#allocation2 + $0x40] sm:$0xff]
        %v5702 = vld [vmem:[#allocation2 + $0x48] sm:$0xff]
        %v5703 = vld [vmem:[#allocation2 + $0x50] sm:$0xff]
        %v5704 = vld [vmem:[#allocation2 + $0x58] sm:$0xff]
        %v5705 = vld [vmem:[#allocation2 + $0x60] sm:$0xff]
        %v5706 = vld [vmem:[#allocation2 + $0x68] sm:$0xff]
        %v5707 = vld [vmem:[#allocation2 + $0x70] sm:$0xff]
        %v5708 = vld [vmem:[#allocation2 + $0x78] sm:$0xff]
        %v5709 = vld [vmem:[#allocation2 + $0x80] sm:$0xff]
        %v5710 = vld [vmem:[#allocation2 + $0x88] sm:$0xff]
        %v5711 = vld [vmem:[#allocation2 + $0x90] sm:$0xff]
        %v5712 = vld [vmem:[#allocation2 + $0x98] sm:$0xff]
        %v5713 = vld [vmem:[#allocation2 + $0xa0] sm:$0xff]
        %v5714 = vld [vmem:[#allocation2 + $0xa8] sm:$0xff]
        %v5715 = vld [vmem:[#allocation2 + $0xb0] sm:$0xff]
        %v5716 = vld [vmem:[#allocation2 + $0xb8] sm:$0xff]
        %v5717 = vadd.f32 %v5693, %v5599
        %v5718 = vadd.f32 %v5694, %v5602
        %v5719 = vadd.f32 %v5695, %v5607
        %v5720 = vadd.f32 %v5696, %v5610
        %v5721 = vadd.f32 %v5697, %v5615
        %v5722 = vadd.f32 %v5698, %v5618
        %v5723 = vadd.f32 %v5699, %v5623
        %v5724 = vadd.f32 %v5700, %v5626
        %v5725 = vadd.f32 %v5701, %v5631
        %v5726 = vadd.f32 %v5702, %v5634
        %v5727 = vadd.f32 %v5703, %v5639
        %v5728 = vadd.f32 %v5704, %v5642
        %v5729 = vadd.f32 %v5705, %v5647
        %v5730 = vadd.f32 %v5706, %v5650
        %v5731 = vadd.f32 %v5707, %v5655
        %v5732 = vadd.f32 %v5708, %v5658
        %v5733 = vadd.f32 %v5709, %v5663
        %v5734 = vadd.f32 %v5710, %v5666
        %v5735 = vadd.f32 %v5711, %v5671
        %v5736 = vadd.f32 %v5712, %v5674
        %v5737 = vadd.f32 %v5713, %v5679
        %v5738 = vadd.f32 %v5714, %v5682
        %v5739 = vadd.f32 %v5715, %v5687
        %v5740 = vadd.f32 %v5716, %v5690
        %5741 = vst [vmem:[#allocation2] sm:$0xff] %v5717
        %5742 = vst [vmem:[#allocation2 + $0x8] sm:$0xff] %v5718
        %5743 = vst [vmem:[#allocation2 + $0x10] sm:$0xff] %v5719
        %5744 = vst [vmem:[#allocation2 + $0x18] sm:$0xff] %v5720
        %5745 = vst [vmem:[#allocation2 + $0x20] sm:$0xff] %v5721
        %5746 = vst [vmem:[#allocation2 + $0x28] sm:$0xff] %v5722
        %5747 = vst [vmem:[#allocation2 + $0x30] sm:$0xff] %v5723
        %5748 = vst [vmem:[#allocation2 + $0x38] sm:$0xff] %v5724
        %5749 = vst [vmem:[#allocation2 + $0x40] sm:$0xff] %v5725
        %5750 = vst [vmem:[#allocation2 + $0x48] sm:$0xff] %v5726
        %5751 = vst [vmem:[#allocation2 + $0x50] sm:$0xff] %v5727
        %5752 = vst [vmem:[#allocation2 + $0x58] sm:$0xff] %v5728
        %5753 = vst [vmem:[#allocation2 + $0x60] sm:$0xff] %v5729
        %5754 = vst [vmem:[#allocation2 + $0x68] sm:$0xff] %v5730
        %5755 = vst [vmem:[#allocation2 + $0x70] sm:$0xff] %v5731
        %5756 = vst [vmem:[#allocation2 + $0x78] sm:$0xff] %v5732
        %5757 = vst [vmem:[#allocation2 + $0x80] sm:$0xff] %v5733
        %5758 = vst [vmem:[#allocation2 + $0x88] sm:$0xff] %v5734
        %5759 = vst [vmem:[#allocation2 + $0x90] sm:$0xff] %v5735
        %5760 = vst [vmem:[#allocation2 + $0x98] sm:$0xff] %v5736
        %5761 = vst [vmem:[#allocation2 + $0xa0] sm:$0xff] %v5737
        %5762 = vst [vmem:[#allocation2 + $0xa8] sm:$0xff] %v5738
        %5763 = vst [vmem:[#allocation2 + $0xb0] sm:$0xff] %v5739
        %5764 = vst [vmem:[#allocation2 + $0xb8] sm:$0xff] %v5740
        %s5765 = scalar_lea.vmem [#allocation8], 1024
        %v5766 = vld [vmem:[%s5765] sm:$0xf]
        %v5767 = vld [vmem:[%s5765 + $0x4] sm:$0xf]
        %v5768 = vld [vmem:[%s5765 + $0x8] sm:$0xf]
        %v5769 = vld [vmem:[%s5765 + $0xc] sm:$0xf]
        %v5770 = vld [vmem:[%s5765 + $0x10] sm:$0xf]
        %v5771 = vld [vmem:[%s5765 + $0x14] sm:$0xf]
        %v5772 = vld [vmem:[%s5765 + $0x18] sm:$0xf]
        %v5773 = vld [vmem:[%s5765 + $0x1c] sm:$0xf]
        %v5774 = vld [vmem:[%s5765 + $0x20] sm:$0xf]
        %v5775 = vld [vmem:[%s5765 + $0x24] sm:$0xf]
        %v5776 = vld [vmem:[%s5765 + $0x28] sm:$0xf]
        %v5777 = vld [vmem:[%s5765 + $0x2c] sm:$0xf]
        %v5778 = vld [vmem:[%s5765 + $0x30] sm:$0xf]
        %v5779 = vld [vmem:[%s5765 + $0x34] sm:$0xf]
        %v5780 = vld [vmem:[%s5765 + $0x38] sm:$0xf]
        %v5781 = vld [vmem:[%s5765 + $0x3c] sm:$0xf]
        %v5782 = vor.u32 %v4966, %v4139
        %v5784 = vshll.u32 %v1176, 16
        %v5786 = vrot.slane %v5784, 1
        %v5787 = vsel %vm1414, %v5782, %v5786
        %v5805 = vunpack.c.l.b16 %v5766
        %v5806 = vunpack.c.l.b16 %v5767
        %v5807 = vunpack.c.l.b16 %v5768
        %v5808 = vunpack.c.l.b16 %v5769
        %v5809 = vunpack.c.l.b16 %v5770
        %v5810 = vunpack.c.l.b16 %v5771
        %v5811 = vunpack.c.l.b16 %v5772
        %v5812 = vunpack.c.l.b16 %v5773
        %v5813 = vunpack.c.l.b16 %v5774
        %v5814 = vunpack.c.l.b16 %v5775
        %v5815 = vunpack.c.l.b16 %v5776
        %v5816 = vunpack.c.l.b16 %v5777
        %v5817 = vunpack.c.l.b16 %v5778
        %v5818 = vunpack.c.l.b16 %v5779
        %v5819 = vunpack.c.l.b16 %v5780
        %v5820 = vunpack.c.l.b16 %v5781
        %v5821 = vpack.c.b16 %v5806, %v5805
        %v5822 = vpack.c.b16 %v5808, %v5807
        %v5823 = vpack.c.b16 %v5810, %v5809
        %v5824 = vpack.c.b16 %v5812, %v5811
        %v5825 = vpack.c.b16 %v5814, %v5813
        %v5826 = vpack.c.b16 %v5816, %v5815
        %v5827 = vpack.c.b16 %v5818, %v5817
        %v5828 = vpack.c.b16 %v5820, %v5819
        %5837 = vmatprep.subr.bf16.mxu0 0
        %5838 = vmatpush1.bf16.msra.mxu0 %v5828
        %5839 = vmatprep.subr.bf16.mxu0 0
        %5840 = vmatpush1.bf16.msra.mxu0 %v5827
        %5841 = vmatprep.subr.bf16.mxu0 0
        %5842 = vmatpush1.bf16.msra.mxu0 %v5826
        %5843 = vmatprep.subr.bf16.mxu0 0
        %5844 = vmatpush1.bf16.msra.mxu0 %v5825
        %5845 = vmatprep.subr.bf16.mxu0 0
        %5846 = vmatpush1.bf16.msra.mxu0 %v5824
        %5847 = vmatprep.subr.bf16.mxu0 0
        %5848 = vmatpush1.bf16.msra.mxu0 %v5823
        %5849 = vmatprep.subr.bf16.mxu0 0
        %5850 = vmatpush1.bf16.msra.mxu0 %v5822
        %5851 = vmatprep.subr.bf16.mxu0 0
        %5852 = vmatpush1.bf16.msra.mxu0 %v5821
        %5853 = vmatprep.subr.bf16.mxu0 0
        %5854 = vmatpush2.bf16.msra.mxu0 0
        %5855 = vmatprep.subr.bf16.mxu0 0
        %5856 = vmatpush2.bf16.msra.mxu0 0
        %5857 = vmatprep.subr.bf16.mxu0 0
        %5858 = vmatpush2.bf16.msra.mxu0 0
        %5859 = vmatprep.subr.bf16.mxu0 0
        %5860 = vmatpush2.bf16.msra.mxu0 0
        %5861 = vmatprep.subr.bf16.mxu0 0
        %5862 = vmatpush2.bf16.msra.mxu0 0
        %5863 = vmatprep.subr.bf16.mxu0 0
        %5864 = vmatpush2.bf16.msra.mxu0 0
        %5865 = vmatprep.subr.bf16.mxu0 0
        %5866 = vmatpush2.bf16.msra.mxu0 0
        %5867 = vmatprep.subr.bf16.mxu0 0
        %5868 = vmatpush2.bf16.msra.mxu0 0
        %5869 = vmatprep.mubr.bf16.mxu0 0
        %5870 = vmatmul.mubr.bf16.gmra.mxu0 %v1458
        %v5871 = vpop.f32.mrf.mxu0
        %v5872 = vadd.f32 0.0, %v5871
        %v5873 = vpop.f32.mrf.mxu0
        %v5874 = vpop.f32.mrf.mxu0
        %v5875 = vadd.f32 0.0, %v5874
        %v5876 = vpop.f32.mrf.mxu0
        %5877 = vmatprep.mubr.bf16.mxu0 0
        %5878 = vmatmul.mubr.bf16.gmra.mxu0 %v1466
        %v5879 = vpop.f32.mrf.mxu0
        %v5880 = vadd.f32 0.0, %v5879
        %v5881 = vpop.f32.mrf.mxu0
        %v5882 = vpop.f32.mrf.mxu0
        %v5883 = vadd.f32 0.0, %v5882
        %v5884 = vpop.f32.mrf.mxu0
        %5885 = vmatprep.mubr.bf16.mxu0 0
        %5886 = vmatmul.mubr.bf16.gmra.mxu0 %v1474
        %v5887 = vpop.f32.mrf.mxu0
        %v5888 = vadd.f32 0.0, %v5887
        %v5889 = vpop.f32.mrf.mxu0
        %v5890 = vpop.f32.mrf.mxu0
        %v5891 = vadd.f32 0.0, %v5890
        %v5892 = vpop.f32.mrf.mxu0
        %5893 = vmatprep.mubr.bf16.mxu0 0
        %5894 = vmatmul.mubr.bf16.gmra.mxu0 %v1482
        %v5895 = vpop.f32.mrf.mxu0
        %v5896 = vadd.f32 0.0, %v5895
        %v5897 = vpop.f32.mrf.mxu0
        %v5898 = vpop.f32.mrf.mxu0
        %v5899 = vadd.f32 0.0, %v5898
        %v5900 = vpop.f32.mrf.mxu0
        %5901 = vmatprep.mubr.bf16.mxu0 0
        %5902 = vmatmul.mubr.bf16.gmra.mxu0 %v1490
        %v5903 = vpop.f32.mrf.mxu0
        %v5904 = vadd.f32 0.0, %v5903
        %v5905 = vpop.f32.mrf.mxu0
        %v5906 = vpop.f32.mrf.mxu0
        %v5907 = vadd.f32 0.0, %v5906
        %v5908 = vpop.f32.mrf.mxu0
        %5909 = vmatprep.mubr.bf16.mxu0 0
        %5910 = vmatmul.mubr.bf16.gmra.mxu0 %v1498
        %v5911 = vpop.f32.mrf.mxu0
        %v5912 = vadd.f32 0.0, %v5911
        %v5913 = vpop.f32.mrf.mxu0
        %v5914 = vpop.f32.mrf.mxu0
        %v5915 = vadd.f32 0.0, %v5914
        %v5916 = vpop.f32.mrf.mxu0
        %5917 = vmatprep.mubr.bf16.mxu0 0
        %5918 = vmatmul.mubr.bf16.gmra.mxu0 %v1506
        %v5919 = vpop.f32.mrf.mxu0
        %v5920 = vadd.f32 0.0, %v5919
        %v5921 = vpop.f32.mrf.mxu0
        %v5922 = vpop.f32.mrf.mxu0
        %v5923 = vadd.f32 0.0, %v5922
        %v5924 = vpop.f32.mrf.mxu0
        %5925 = vmatprep.mubr.bf16.mxu0 0
        %5926 = vmatmul.mubr.bf16.gmra.mxu0 %v1514
        %v5927 = vpop.f32.mrf.mxu0
        %v5928 = vadd.f32 0.0, %v5927
        %v5929 = vpop.f32.mrf.mxu0
        %v5930 = vpop.f32.mrf.mxu0
        %v5931 = vadd.f32 0.0, %v5930
        %v5932 = vpop.f32.mrf.mxu0
        %5933 = vmatprep.mubr.bf16.mxu0 0
        %5934 = vmatmul.mubr.bf16.gmra.mxu0 %v3321
        %v5935 = vpop.f32.mrf.mxu0
        %v5936 = vadd.f32 0.0, %v5935
        %v5937 = vpop.f32.mrf.mxu0
        %v5938 = vpop.f32.mrf.mxu0
        %v5939 = vadd.f32 0.0, %v5938
        %v5940 = vpop.f32.mrf.mxu0
        %5941 = vmatprep.mubr.bf16.mxu0 0
        %5942 = vmatmul.mubr.bf16.gmra.mxu0 %v4132
        %v5943 = vpop.f32.mrf.mxu0
        %v5944 = vadd.f32 0.0, %v5943
        %v5945 = vpop.f32.mrf.mxu0
        %v5946 = vpop.f32.mrf.mxu0
        %v5947 = vadd.f32 0.0, %v5946
        %v5948 = vpop.f32.mrf.mxu0
        %5949 = vmatprep.mubr.bf16.mxu0 0
        %5950 = vmatmul.mubr.bf16.gmra.mxu0 %v4140
        %v5951 = vpop.f32.mrf.mxu0
        %v5952 = vadd.f32 0.0, %v5951
        %v5953 = vpop.f32.mrf.mxu0
        %v5954 = vpop.f32.mrf.mxu0
        %v5955 = vadd.f32 0.0, %v5954
        %v5956 = vpop.f32.mrf.mxu0
        %5957 = vmatprep.mubr.bf16.mxu0 0
        %5958 = vmatmul.mubr.bf16.gmra.mxu0 %v5787
        %v5959 = vpop.f32.mrf.mxu0
        %v5960 = vadd.f32 0.0, %v5959
        %v5961 = vpop.f32.mrf.mxu0
        %v5962 = vpop.f32.mrf.mxu0
        %v5963 = vadd.f32 0.0, %v5962
        %v5964 = vpop.f32.mrf.mxu0
        %5965 = vdwg.mxu0
        %v5966 = vld [vmem:[#allocation2] sm:$0xff]
        %v5967 = vld [vmem:[#allocation2 + $0x8] sm:$0xff]
        %v5968 = vld [vmem:[#allocation2 + $0x10] sm:$0xff]
        %v5969 = vld [vmem:[#allocation2 + $0x18] sm:$0xff]
        %v5970 = vld [vmem:[#allocation2 + $0x20] sm:$0xff]
        %v5971 = vld [vmem:[#allocation2 + $0x28] sm:$0xff]
        %v5972 = vld [vmem:[#allocation2 + $0x30] sm:$0xff]
        %v5973 = vld [vmem:[#allocation2 + $0x38] sm:$0xff]
        %v5974 = vld [vmem:[#allocation2 + $0x40] sm:$0xff]
        %v5975 = vld [vmem:[#allocation2 + $0x48] sm:$0xff]
        %v5976 = vld [vmem:[#allocation2 + $0x50] sm:$0xff]
        %v5977 = vld [vmem:[#allocation2 + $0x58] sm:$0xff]
        %v5978 = vld [vmem:[#allocation2 + $0x60] sm:$0xff]
        %v5979 = vld [vmem:[#allocation2 + $0x68] sm:$0xff]
        %v5980 = vld [vmem:[#allocation2 + $0x70] sm:$0xff]
        %v5981 = vld [vmem:[#allocation2 + $0x78] sm:$0xff]
        %v5982 = vld [vmem:[#allocation2 + $0x80] sm:$0xff]
        %v5983 = vld [vmem:[#allocation2 + $0x88] sm:$0xff]
        %v5984 = vld [vmem:[#allocation2 + $0x90] sm:$0xff]
        %v5985 = vld [vmem:[#allocation2 + $0x98] sm:$0xff]
        %v5986 = vld [vmem:[#allocation2 + $0xa0] sm:$0xff]
        %v5987 = vld [vmem:[#allocation2 + $0xa8] sm:$0xff]
        %v5988 = vld [vmem:[#allocation2 + $0xb0] sm:$0xff]
        %v5989 = vld [vmem:[#allocation2 + $0xb8] sm:$0xff]
        %v5990 = vadd.f32 %v5966, %v5872
        %v5991 = vadd.f32 %v5967, %v5875
        %v5992 = vadd.f32 %v5968, %v5880
        %v5993 = vadd.f32 %v5969, %v5883
        %v5994 = vadd.f32 %v5970, %v5888
        %v5995 = vadd.f32 %v5971, %v5891
        %v5996 = vadd.f32 %v5972, %v5896
        %v5997 = vadd.f32 %v5973, %v5899
        %v5998 = vadd.f32 %v5974, %v5904
        %v5999 = vadd.f32 %v5975, %v5907
        %v6000 = vadd.f32 %v5976, %v5912
        %v6001 = vadd.f32 %v5977, %v5915
        %v6002 = vadd.f32 %v5978, %v5920
        %v6003 = vadd.f32 %v5979, %v5923
        %v6004 = vadd.f32 %v5980, %v5928
        %v6005 = vadd.f32 %v5981, %v5931
        %v6006 = vadd.f32 %v5982, %v5936
        %v6007 = vadd.f32 %v5983, %v5939
        %v6008 = vadd.f32 %v5984, %v5944
        %v6009 = vadd.f32 %v5985, %v5947
        %v6010 = vadd.f32 %v5986, %v5952
        %v6011 = vadd.f32 %v5987, %v5955
        %v6012 = vadd.f32 %v5988, %v5960
        %v6013 = vadd.f32 %v5989, %v5963
        %6014 = vst [vmem:[#allocation2] sm:$0xff] %v5990
        %6015 = vst [vmem:[#allocation2 + $0x8] sm:$0xff] %v5991
        %6016 = vst [vmem:[#allocation2 + $0x10] sm:$0xff] %v5992
        %6017 = vst [vmem:[#allocation2 + $0x18] sm:$0xff] %v5993
        %6018 = vst [vmem:[#allocation2 + $0x20] sm:$0xff] %v5994
        %6019 = vst [vmem:[#allocation2 + $0x28] sm:$0xff] %v5995
        %6020 = vst [vmem:[#allocation2 + $0x30] sm:$0xff] %v5996
        %6021 = vst [vmem:[#allocation2 + $0x38] sm:$0xff] %v5997
        %6022 = vst [vmem:[#allocation2 + $0x40] sm:$0xff] %v5998
        %6023 = vst [vmem:[#allocation2 + $0x48] sm:$0xff] %v5999
        %6024 = vst [vmem:[#allocation2 + $0x50] sm:$0xff] %v6000
        %6025 = vst [vmem:[#allocation2 + $0x58] sm:$0xff] %v6001
        %6026 = vst [vmem:[#allocation2 + $0x60] sm:$0xff] %v6002
        %6027 = vst [vmem:[#allocation2 + $0x68] sm:$0xff] %v6003
        %6028 = vst [vmem:[#allocation2 + $0x70] sm:$0xff] %v6004
        %6029 = vst [vmem:[#allocation2 + $0x78] sm:$0xff] %v6005
        %6030 = vst [vmem:[#allocation2 + $0x80] sm:$0xff] %v6006
        %6031 = vst [vmem:[#allocation2 + $0x88] sm:$0xff] %v6007
        %6032 = vst [vmem:[#allocation2 + $0x90] sm:$0xff] %v6008
        %6033 = vst [vmem:[#allocation2 + $0x98] sm:$0xff] %v6009
        %6034 = vst [vmem:[#allocation2 + $0xa0] sm:$0xff] %v6010
        %6035 = vst [vmem:[#allocation2 + $0xa8] sm:$0xff] %v6011
        %6036 = vst [vmem:[#allocation2 + $0xb0] sm:$0xff] %v6012
        %6037 = vst [vmem:[#allocation2 + $0xb8] sm:$0xff] %v6013
        %s6038 = scalar_lea.vmem [#allocation8], 1088
        %v6039 = vld [vmem:[%s6038] sm:$0xf]
        %v6040 = vld [vmem:[%s6038 + $0x4] sm:$0xf]
        %v6041 = vld [vmem:[%s6038 + $0x8] sm:$0xf]
        %v6042 = vld [vmem:[%s6038 + $0xc] sm:$0xf]
        %v6043 = vld [vmem:[%s6038 + $0x10] sm:$0xf]
        %v6044 = vld [vmem:[%s6038 + $0x14] sm:$0xf]
        %v6045 = vld [vmem:[%s6038 + $0x18] sm:$0xf]
        %v6046 = vld [vmem:[%s6038 + $0x1c] sm:$0xf]
        %v6047 = vld [vmem:[%s6038 + $0x20] sm:$0xf]
        %v6048 = vld [vmem:[%s6038 + $0x24] sm:$0xf]
        %v6049 = vld [vmem:[%s6038 + $0x28] sm:$0xf]
        %v6050 = vld [vmem:[%s6038 + $0x2c] sm:$0xf]
        %v6051 = vld [vmem:[%s6038 + $0x30] sm:$0xf]
        %v6052 = vld [vmem:[%s6038 + $0x34] sm:$0xf]
        %v6053 = vld [vmem:[%s6038 + $0x38] sm:$0xf]
        %v6054 = vld [vmem:[%s6038 + $0x3c] sm:$0xf]
        %v6056 = vrot.slane %v1176, 1
        %v6057 = vsel %vm1806, %v4413, %v6056
        %v6075 = vunpack.c.l.b16 %v6039
        %v6076 = vunpack.c.l.b16 %v6040
        %v6077 = vunpack.c.l.b16 %v6041
        %v6078 = vunpack.c.l.b16 %v6042
        %v6079 = vunpack.c.l.b16 %v6043
        %v6080 = vunpack.c.l.b16 %v6044
        %v6081 = vunpack.c.l.b16 %v6045
        %v6082 = vunpack.c.l.b16 %v6046
        %v6083 = vunpack.c.l.b16 %v6047
        %v6084 = vunpack.c.l.b16 %v6048
        %v6085 = vunpack.c.l.b16 %v6049
        %v6086 = vunpack.c.l.b16 %v6050
        %v6087 = vunpack.c.l.b16 %v6051
        %v6088 = vunpack.c.l.b16 %v6052
        %v6089 = vunpack.c.l.b16 %v6053
        %v6090 = vunpack.c.l.b16 %v6054
        %v6091 = vpack.c.b16 %v6076, %v6075
        %v6092 = vpack.c.b16 %v6078, %v6077
        %v6093 = vpack.c.b16 %v6080, %v6079
        %v6094 = vpack.c.b16 %v6082, %v6081
        %v6095 = vpack.c.b16 %v6084, %v6083
        %v6096 = vpack.c.b16 %v6086, %v6085
        %v6097 = vpack.c.b16 %v6088, %v6087
        %v6098 = vpack.c.b16 %v6090, %v6089
        %6107 = vmatprep.subr.bf16.mxu0 0
        %6108 = vmatpush1.bf16.msra.mxu0 %v6098
        %6109 = vmatprep.subr.bf16.mxu0 0
        %6110 = vmatpush1.bf16.msra.mxu0 %v6097
        %6111 = vmatprep.subr.bf16.mxu0 0
        %6112 = vmatpush1.bf16.msra.mxu0 %v6096
        %6113 = vmatprep.subr.bf16.mxu0 0
        %6114 = vmatpush1.bf16.msra.mxu0 %v6095
        %6115 = vmatprep.subr.bf16.mxu0 0
        %6116 = vmatpush1.bf16.msra.mxu0 %v6094
        %6117 = vmatprep.subr.bf16.mxu0 0
        %6118 = vmatpush1.bf16.msra.mxu0 %v6093
        %6119 = vmatprep.subr.bf16.mxu0 0
        %6120 = vmatpush1.bf16.msra.mxu0 %v6092
        %6121 = vmatprep.subr.bf16.mxu0 0
        %6122 = vmatpush1.bf16.msra.mxu0 %v6091
        %6123 = vmatprep.subr.bf16.mxu0 0
        %6124 = vmatpush2.bf16.msra.mxu0 0
        %6125 = vmatprep.subr.bf16.mxu0 0
        %6126 = vmatpush2.bf16.msra.mxu0 0
        %6127 = vmatprep.subr.bf16.mxu0 0
        %6128 = vmatpush2.bf16.msra.mxu0 0
        %6129 = vmatprep.subr.bf16.mxu0 0
        %6130 = vmatpush2.bf16.msra.mxu0 0
        %6131 = vmatprep.subr.bf16.mxu0 0
        %6132 = vmatpush2.bf16.msra.mxu0 0
        %6133 = vmatprep.subr.bf16.mxu0 0
        %6134 = vmatpush2.bf16.msra.mxu0 0
        %6135 = vmatprep.subr.bf16.mxu0 0
        %6136 = vmatpush2.bf16.msra.mxu0 0
        %6137 = vmatprep.subr.bf16.mxu0 0
        %6138 = vmatpush2.bf16.msra.mxu0 0
        %6139 = vmatprep.mubr.bf16.mxu0 0
        %6140 = vmatmul.mubr.bf16.gmra.mxu0 %v1817
        %v6141 = vpop.f32.mrf.mxu0
        %v6142 = vadd.f32 0.0, %v6141
        %v6143 = vpop.f32.mrf.mxu0
        %v6144 = vpop.f32.mrf.mxu0
        %v6145 = vadd.f32 0.0, %v6144
        %v6146 = vpop.f32.mrf.mxu0
        %6147 = vmatprep.mubr.bf16.mxu0 0
        %6148 = vmatmul.mubr.bf16.gmra.mxu0 %v1819
        %v6149 = vpop.f32.mrf.mxu0
        %v6150 = vadd.f32 0.0, %v6149
        %v6151 = vpop.f32.mrf.mxu0
        %v6152 = vpop.f32.mrf.mxu0
        %v6153 = vadd.f32 0.0, %v6152
        %v6154 = vpop.f32.mrf.mxu0
        %6155 = vmatprep.mubr.bf16.mxu0 0
        %6156 = vmatmul.mubr.bf16.gmra.mxu0 %v1821
        %v6157 = vpop.f32.mrf.mxu0
        %v6158 = vadd.f32 0.0, %v6157
        %v6159 = vpop.f32.mrf.mxu0
        %v6160 = vpop.f32.mrf.mxu0
        %v6161 = vadd.f32 0.0, %v6160
        %v6162 = vpop.f32.mrf.mxu0
        %6163 = vmatprep.mubr.bf16.mxu0 0
        %6164 = vmatmul.mubr.bf16.gmra.mxu0 %v1823
        %v6165 = vpop.f32.mrf.mxu0
        %v6166 = vadd.f32 0.0, %v6165
        %v6167 = vpop.f32.mrf.mxu0
        %v6168 = vpop.f32.mrf.mxu0
        %v6169 = vadd.f32 0.0, %v6168
        %v6170 = vpop.f32.mrf.mxu0
        %6171 = vmatprep.mubr.bf16.mxu0 0
        %6172 = vmatmul.mubr.bf16.gmra.mxu0 %v1825
        %v6173 = vpop.f32.mrf.mxu0
        %v6174 = vadd.f32 0.0, %v6173
        %v6175 = vpop.f32.mrf.mxu0
        %v6176 = vpop.f32.mrf.mxu0
        %v6177 = vadd.f32 0.0, %v6176
        %v6178 = vpop.f32.mrf.mxu0
        %6179 = vmatprep.mubr.bf16.mxu0 0
        %6180 = vmatmul.mubr.bf16.gmra.mxu0 %v1827
        %v6181 = vpop.f32.mrf.mxu0
        %v6182 = vadd.f32 0.0, %v6181
        %v6183 = vpop.f32.mrf.mxu0
        %v6184 = vpop.f32.mrf.mxu0
        %v6185 = vadd.f32 0.0, %v6184
        %v6186 = vpop.f32.mrf.mxu0
        %6187 = vmatprep.mubr.bf16.mxu0 0
        %6188 = vmatmul.mubr.bf16.gmra.mxu0 %v1829
        %v6189 = vpop.f32.mrf.mxu0
        %v6190 = vadd.f32 0.0, %v6189
        %v6191 = vpop.f32.mrf.mxu0
        %v6192 = vpop.f32.mrf.mxu0
        %v6193 = vadd.f32 0.0, %v6192
        %v6194 = vpop.f32.mrf.mxu0
        %6195 = vmatprep.mubr.bf16.mxu0 0
        %6196 = vmatmul.mubr.bf16.gmra.mxu0 %v1831
        %v6197 = vpop.f32.mrf.mxu0
        %v6198 = vadd.f32 0.0, %v6197
        %v6199 = vpop.f32.mrf.mxu0
        %v6200 = vpop.f32.mrf.mxu0
        %v6201 = vadd.f32 0.0, %v6200
        %v6202 = vpop.f32.mrf.mxu0
        %6203 = vmatprep.mubr.bf16.mxu0 0
        %6204 = vmatmul.mubr.bf16.gmra.mxu0 %v3591
        %v6205 = vpop.f32.mrf.mxu0
        %v6206 = vadd.f32 0.0, %v6205
        %v6207 = vpop.f32.mrf.mxu0
        %v6208 = vpop.f32.mrf.mxu0
        %v6209 = vadd.f32 0.0, %v6208
        %v6210 = vpop.f32.mrf.mxu0
        %6211 = vmatprep.mubr.bf16.mxu0 0
        %6212 = vmatmul.mubr.bf16.gmra.mxu0 %v4412
        %v6213 = vpop.f32.mrf.mxu0
        %v6214 = vadd.f32 0.0, %v6213
        %v6215 = vpop.f32.mrf.mxu0
        %v6216 = vpop.f32.mrf.mxu0
        %v6217 = vadd.f32 0.0, %v6216
        %v6218 = vpop.f32.mrf.mxu0
        %6219 = vmatprep.mubr.bf16.mxu0 0
        %6220 = vmatmul.mubr.bf16.gmra.mxu0 %v4414
        %v6221 = vpop.f32.mrf.mxu0
        %v6222 = vadd.f32 0.0, %v6221
        %v6223 = vpop.f32.mrf.mxu0
        %v6224 = vpop.f32.mrf.mxu0
        %v6225 = vadd.f32 0.0, %v6224
        %v6226 = vpop.f32.mrf.mxu0
        %6227 = vmatprep.mubr.bf16.mxu0 0
        %6228 = vmatmul.mubr.bf16.gmra.mxu0 %v6057
        %v6229 = vpop.f32.mrf.mxu0
        %v6230 = vadd.f32 0.0, %v6229
        %v6231 = vpop.f32.mrf.mxu0
        %v6232 = vpop.f32.mrf.mxu0
        %v6233 = vadd.f32 0.0, %v6232
        %v6234 = vpop.f32.mrf.mxu0
        %6235 = vdwg.mxu0
        %v6236 = vld [vmem:[#allocation2] sm:$0xff]
        %v6237 = vld [vmem:[#allocation2 + $0x8] sm:$0xff]
        %v6238 = vld [vmem:[#allocation2 + $0x10] sm:$0xff]
        %v6239 = vld [vmem:[#allocation2 + $0x18] sm:$0xff]
        %v6240 = vld [vmem:[#allocation2 + $0x20] sm:$0xff]
        %v6241 = vld [vmem:[#allocation2 + $0x28] sm:$0xff]
        %v6242 = vld [vmem:[#allocation2 + $0x30] sm:$0xff]
        %v6243 = vld [vmem:[#allocation2 + $0x38] sm:$0xff]
        %v6244 = vld [vmem:[#allocation2 + $0x40] sm:$0xff]
        %v6245 = vld [vmem:[#allocation2 + $0x48] sm:$0xff]
        %v6246 = vld [vmem:[#allocation2 + $0x50] sm:$0xff]
        %v6247 = vld [vmem:[#allocation2 + $0x58] sm:$0xff]
        %v6248 = vld [vmem:[#allocation2 + $0x60] sm:$0xff]
        %v6249 = vld [vmem:[#allocation2 + $0x68] sm:$0xff]
        %v6250 = vld [vmem:[#allocation2 + $0x70] sm:$0xff]
        %v6251 = vld [vmem:[#allocation2 + $0x78] sm:$0xff]
        %v6252 = vld [vmem:[#allocation2 + $0x80] sm:$0xff]
        %v6253 = vld [vmem:[#allocation2 + $0x88] sm:$0xff]
        %v6254 = vld [vmem:[#allocation2 + $0x90] sm:$0xff]
        %v6255 = vld [vmem:[#allocation2 + $0x98] sm:$0xff]
        %v6256 = vld [vmem:[#allocation2 + $0xa0] sm:$0xff]
        %v6257 = vld [vmem:[#allocation2 + $0xa8] sm:$0xff]
        %v6258 = vld [vmem:[#allocation2 + $0xb0] sm:$0xff]
        %v6259 = vld [vmem:[#allocation2 + $0xb8] sm:$0xff]
        %v6260 = vadd.f32 %v6236, %v6142
        %v6261 = vadd.f32 %v6237, %v6145
        %v6262 = vadd.f32 %v6238, %v6150
        %v6263 = vadd.f32 %v6239, %v6153
        %v6264 = vadd.f32 %v6240, %v6158
        %v6265 = vadd.f32 %v6241, %v6161
        %v6266 = vadd.f32 %v6242, %v6166
        %v6267 = vadd.f32 %v6243, %v6169
        %v6268 = vadd.f32 %v6244, %v6174
        %v6269 = vadd.f32 %v6245, %v6177
        %v6270 = vadd.f32 %v6246, %v6182
        %v6271 = vadd.f32 %v6247, %v6185
        %v6272 = vadd.f32 %v6248, %v6190
        %v6273 = vadd.f32 %v6249, %v6193
        %v6274 = vadd.f32 %v6250, %v6198
        %v6275 = vadd.f32 %v6251, %v6201
        %v6276 = vadd.f32 %v6252, %v6206
        %v6277 = vadd.f32 %v6253, %v6209
        %v6278 = vadd.f32 %v6254, %v6214
        %v6279 = vadd.f32 %v6255, %v6217
        %v6280 = vadd.f32 %v6256, %v6222
        %v6281 = vadd.f32 %v6257, %v6225
        %v6282 = vadd.f32 %v6258, %v6230
        %v6283 = vadd.f32 %v6259, %v6233
        %6284 = vst [vmem:[#allocation2] sm:$0xff] %v6260
        %6285 = vst [vmem:[#allocation2 + $0x8] sm:$0xff] %v6261
        %6286 = vst [vmem:[#allocation2 + $0x10] sm:$0xff] %v6262
        %6287 = vst [vmem:[#allocation2 + $0x18] sm:$0xff] %v6263
        %6288 = vst [vmem:[#allocation2 + $0x20] sm:$0xff] %v6264
        %6289 = vst [vmem:[#allocation2 + $0x28] sm:$0xff] %v6265
        %6290 = vst [vmem:[#allocation2 + $0x30] sm:$0xff] %v6266
        %6291 = vst [vmem:[#allocation2 + $0x38] sm:$0xff] %v6267
        %6292 = vst [vmem:[#allocation2 + $0x40] sm:$0xff] %v6268
        %6293 = vst [vmem:[#allocation2 + $0x48] sm:$0xff] %v6269
        %6294 = vst [vmem:[#allocation2 + $0x50] sm:$0xff] %v6270
        %6295 = vst [vmem:[#allocation2 + $0x58] sm:$0xff] %v6271
        %6296 = vst [vmem:[#allocation2 + $0x60] sm:$0xff] %v6272
        %6297 = vst [vmem:[#allocation2 + $0x68] sm:$0xff] %v6273
        %6298 = vst [vmem:[#allocation2 + $0x70] sm:$0xff] %v6274
        %6299 = vst [vmem:[#allocation2 + $0x78] sm:$0xff] %v6275
        %6300 = vst [vmem:[#allocation2 + $0x80] sm:$0xff] %v6276
        %6301 = vst [vmem:[#allocation2 + $0x88] sm:$0xff] %v6277
        %6302 = vst [vmem:[#allocation2 + $0x90] sm:$0xff] %v6278
        %6303 = vst [vmem:[#allocation2 + $0x98] sm:$0xff] %v6279
        %6304 = vst [vmem:[#allocation2 + $0xa0] sm:$0xff] %v6280
        %6305 = vst [vmem:[#allocation2 + $0xa8] sm:$0xff] %v6281
        %6306 = vst [vmem:[#allocation2 + $0xb0] sm:$0xff] %v6282
        %6307 = vst [vmem:[#allocation2 + $0xb8] sm:$0xff] %v6283
        %s6308 = scalar_lea.vmem [#allocation8], 1152
        %v6309 = vld [vmem:[%s6308] sm:$0xf]
        %v6310 = vld [vmem:[%s6308 + $0x4] sm:$0xf]
        %v6311 = vld [vmem:[%s6308 + $0x8] sm:$0xf]
        %v6312 = vld [vmem:[%s6308 + $0xc] sm:$0xf]
        %v6313 = vld [vmem:[%s6308 + $0x10] sm:$0xf]
        %v6314 = vld [vmem:[%s6308 + $0x14] sm:$0xf]
        %v6315 = vld [vmem:[%s6308 + $0x18] sm:$0xf]
        %v6316 = vld [vmem:[%s6308 + $0x1c] sm:$0xf]
        %v6317 = vld [vmem:[%s6308 + $0x20] sm:$0xf]
        %v6318 = vld [vmem:[%s6308 + $0x24] sm:$0xf]
        %v6319 = vld [vmem:[%s6308 + $0x28] sm:$0xf]
        %v6320 = vld [vmem:[%s6308 + $0x2c] sm:$0xf]
        %v6321 = vld [vmem:[%s6308 + $0x30] sm:$0xf]
        %v6322 = vld [vmem:[%s6308 + $0x34] sm:$0xf]
        %v6323 = vld [vmem:[%s6308 + $0x38] sm:$0xf]
        %v6324 = vld [vmem:[%s6308 + $0x3c] sm:$0xf]
        %v6341 = vunpack.c.l.b16 %v6309
        %v6342 = vunpack.c.l.b16 %v6310
        %v6343 = vunpack.c.l.b16 %v6311
        %v6344 = vunpack.c.l.b16 %v6312
        %v6345 = vunpack.c.l.b16 %v6313
        %v6346 = vunpack.c.l.b16 %v6314
        %v6347 = vunpack.c.l.b16 %v6315
        %v6348 = vunpack.c.l.b16 %v6316
        %v6349 = vunpack.c.l.b16 %v6317
        %v6350 = vunpack.c.l.b16 %v6318
        %v6351 = vunpack.c.l.b16 %v6319
        %v6352 = vunpack.c.l.b16 %v6320
        %v6353 = vunpack.c.l.b16 %v6321
        %v6354 = vunpack.c.l.b16 %v6322
        %v6355 = vunpack.c.l.b16 %v6323
        %v6356 = vunpack.c.l.b16 %v6324
        %v6357 = vpack.c.b16 %v6342, %v6341
        %v6358 = vpack.c.b16 %v6344, %v6343
        %v6359 = vpack.c.b16 %v6346, %v6345
        %v6360 = vpack.c.b16 %v6348, %v6347
        %v6361 = vpack.c.b16 %v6350, %v6349
        %v6362 = vpack.c.b16 %v6352, %v6351
        %v6363 = vpack.c.b16 %v6354, %v6353
        %v6364 = vpack.c.b16 %v6356, %v6355
        %6373 = vmatprep.subr.bf16.mxu0 0
        %6374 = vmatpush1.bf16.msra.mxu0 %v6364
        %6375 = vmatprep.subr.bf16.mxu0 0
        %6376 = vmatpush1.bf16.msra.mxu0 %v6363
        %6377 = vmatprep.subr.bf16.mxu0 0
        %6378 = vmatpush1.bf16.msra.mxu0 %v6362
        %6379 = vmatprep.subr.bf16.mxu0 0
        %6380 = vmatpush1.bf16.msra.mxu0 %v6361
        %6381 = vmatprep.subr.bf16.mxu0 0
        %6382 = vmatpush1.bf16.msra.mxu0 %v6360
        %6383 = vmatprep.subr.bf16.mxu0 0
        %6384 = vmatpush1.bf16.msra.mxu0 %v6359
        %6385 = vmatprep.subr.bf16.mxu0 0
        %6386 = vmatpush1.bf16.msra.mxu0 %v6358
        %6387 = vmatprep.subr.bf16.mxu0 0
        %6388 = vmatpush1.bf16.msra.mxu0 %v6357
        %6389 = vmatprep.subr.bf16.mxu0 0
        %6390 = vmatpush2.bf16.msra.mxu0 0
        %6391 = vmatprep.subr.bf16.mxu0 0
        %6392 = vmatpush2.bf16.msra.mxu0 0
        %6393 = vmatprep.subr.bf16.mxu0 0
        %6394 = vmatpush2.bf16.msra.mxu0 0
        %6395 = vmatprep.subr.bf16.mxu0 0
        %6396 = vmatpush2.bf16.msra.mxu0 0
        %6397 = vmatprep.subr.bf16.mxu0 0
        %6398 = vmatpush2.bf16.msra.mxu0 0
        %6399 = vmatprep.subr.bf16.mxu0 0
        %6400 = vmatpush2.bf16.msra.mxu0 0
        %6401 = vmatprep.subr.bf16.mxu0 0
        %6402 = vmatpush2.bf16.msra.mxu0 0
        %6403 = vmatprep.subr.bf16.mxu0 0
        %6404 = vmatpush2.bf16.msra.mxu0 0
        %6405 = vmatprep.mubr.bf16.mxu0 0
        %6406 = vmatmul.mubr.bf16.gmra.mxu0 %v1166
        %v6407 = vpop.f32.mrf.mxu0
        %v6408 = vadd.f32 0.0, %v6407
        %v6409 = vpop.f32.mrf.mxu0
        %v6410 = vpop.f32.mrf.mxu0
        %v6411 = vadd.f32 0.0, %v6410
        %v6412 = vpop.f32.mrf.mxu0
        %6413 = vmatprep.mubr.bf16.mxu0 0
        %6414 = vmatmul.mubr.bf16.gmra.mxu0 %v1167
        %v6415 = vpop.f32.mrf.mxu0
        %v6416 = vadd.f32 0.0, %v6415
        %v6417 = vpop.f32.mrf.mxu0
        %v6418 = vpop.f32.mrf.mxu0
        %v6419 = vadd.f32 0.0, %v6418
        %v6420 = vpop.f32.mrf.mxu0
        %6421 = vmatprep.mubr.bf16.mxu0 0
        %6422 = vmatmul.mubr.bf16.gmra.mxu0 %v1168
        %v6423 = vpop.f32.mrf.mxu0
        %v6424 = vadd.f32 0.0, %v6423
        %v6425 = vpop.f32.mrf.mxu0
        %v6426 = vpop.f32.mrf.mxu0
        %v6427 = vadd.f32 0.0, %v6426
        %v6428 = vpop.f32.mrf.mxu0
        %6429 = vmatprep.mubr.bf16.mxu0 0
        %6430 = vmatmul.mubr.bf16.gmra.mxu0 %v1169
        %v6431 = vpop.f32.mrf.mxu0
        %v6432 = vadd.f32 0.0, %v6431
        %v6433 = vpop.f32.mrf.mxu0
        %v6434 = vpop.f32.mrf.mxu0
        %v6435 = vadd.f32 0.0, %v6434
        %v6436 = vpop.f32.mrf.mxu0
        %6437 = vmatprep.mubr.bf16.mxu0 0
        %6438 = vmatmul.mubr.bf16.gmra.mxu0 %v1170
        %v6439 = vpop.f32.mrf.mxu0
        %v6440 = vadd.f32 0.0, %v6439
        %v6441 = vpop.f32.mrf.mxu0
        %v6442 = vpop.f32.mrf.mxu0
        %v6443 = vadd.f32 0.0, %v6442
        %v6444 = vpop.f32.mrf.mxu0
        %6445 = vmatprep.mubr.bf16.mxu0 0
        %6446 = vmatmul.mubr.bf16.gmra.mxu0 %v1171
        %v6447 = vpop.f32.mrf.mxu0
        %v6448 = vadd.f32 0.0, %v6447
        %v6449 = vpop.f32.mrf.mxu0
        %v6450 = vpop.f32.mrf.mxu0
        %v6451 = vadd.f32 0.0, %v6450
        %v6452 = vpop.f32.mrf.mxu0
        %6453 = vmatprep.mubr.bf16.mxu0 0
        %6454 = vmatmul.mubr.bf16.gmra.mxu0 %v1172
        %v6455 = vpop.f32.mrf.mxu0
        %v6456 = vadd.f32 0.0, %v6455
        %v6457 = vpop.f32.mrf.mxu0
        %v6458 = vpop.f32.mrf.mxu0
        %v6459 = vadd.f32 0.0, %v6458
        %v6460 = vpop.f32.mrf.mxu0
        %6461 = vmatprep.mubr.bf16.mxu0 0
        %6462 = vmatmul.mubr.bf16.gmra.mxu0 %v1173
        %v6463 = vpop.f32.mrf.mxu0
        %v6464 = vadd.f32 0.0, %v6463
        %v6465 = vpop.f32.mrf.mxu0
        %v6466 = vpop.f32.mrf.mxu0
        %v6467 = vadd.f32 0.0, %v6466
        %v6468 = vpop.f32.mrf.mxu0
        %6469 = vmatprep.mubr.bf16.mxu0 0
        %6470 = vmatmul.mubr.bf16.gmra.mxu0 %v1174
        %v6471 = vpop.f32.mrf.mxu0
        %v6472 = vadd.f32 0.0, %v6471
        %v6473 = vpop.f32.mrf.mxu0
        %v6474 = vpop.f32.mrf.mxu0
        %v6475 = vadd.f32 0.0, %v6474
        %v6476 = vpop.f32.mrf.mxu0
        %6477 = vmatprep.mubr.bf16.mxu0 0
        %6478 = vmatmul.mubr.bf16.gmra.mxu0 %v1175
        %v6479 = vpop.f32.mrf.mxu0
        %v6480 = vadd.f32 0.0, %v6479
        %v6481 = vpop.f32.mrf.mxu0
        %v6482 = vpop.f32.mrf.mxu0
        %v6483 = vadd.f32 0.0, %v6482
        %v6484 = vpop.f32.mrf.mxu0
        %6485 = vmatprep.mubr.bf16.mxu0 0
        %6486 = vmatmul.mubr.bf16.gmra.mxu0 %v1176
        %v6487 = vpop.f32.mrf.mxu0
        %v6488 = vadd.f32 0.0, %v6487
        %v6489 = vpop.f32.mrf.mxu0
        %v6490 = vpop.f32.mrf.mxu0
        %v6491 = vadd.f32 0.0, %v6490
        %v6492 = vpop.f32.mrf.mxu0
        %6493 = vmatprep.mubr.bf16.mxu0 0
        %6494 = vmatmul.mubr.bf16.gmra.mxu0 %v1177
        %v6495 = vpop.f32.mrf.mxu0
        %v6496 = vadd.f32 0.0, %v6495
        %v6497 = vpop.f32.mrf.mxu0
        %v6498 = vpop.f32.mrf.mxu0
        %v6499 = vadd.f32 0.0, %v6498
        %v6500 = vpop.f32.mrf.mxu0
        %6501 = vdwg.mxu0
        %v6502 = vld [vmem:[#allocation2] sm:$0xff]
        %v6503 = vld [vmem:[#allocation2 + $0x8] sm:$0xff]
        %v6504 = vld [vmem:[#allocation2 + $0x10] sm:$0xff]
        %v6505 = vld [vmem:[#allocation2 + $0x18] sm:$0xff]
        %v6506 = vld [vmem:[#allocation2 + $0x20] sm:$0xff]
        %v6507 = vld [vmem:[#allocation2 + $0x28] sm:$0xff]
        %v6508 = vld [vmem:[#allocation2 + $0x30] sm:$0xff]
        %v6509 = vld [vmem:[#allocation2 + $0x38] sm:$0xff]
        %v6510 = vld [vmem:[#allocation2 + $0x40] sm:$0xff]
        %v6511 = vld [vmem:[#allocation2 + $0x48] sm:$0xff]
        %v6512 = vld [vmem:[#allocation2 + $0x50] sm:$0xff]
        %v6513 = vld [vmem:[#allocation2 + $0x58] sm:$0xff]
        %v6514 = vld [vmem:[#allocation2 + $0x60] sm:$0xff]
        %v6515 = vld [vmem:[#allocation2 + $0x68] sm:$0xff]
        %v6516 = vld [vmem:[#allocation2 + $0x70] sm:$0xff]
        %v6517 = vld [vmem:[#allocation2 + $0x78] sm:$0xff]
        %v6518 = vld [vmem:[#allocation2 + $0x80] sm:$0xff]
        %v6519 = vld [vmem:[#allocation2 + $0x88] sm:$0xff]
        %v6520 = vld [vmem:[#allocation2 + $0x90] sm:$0xff]
        %v6521 = vld [vmem:[#allocation2 + $0x98] sm:$0xff]
        %v6522 = vld [vmem:[#allocation2 + $0xa0] sm:$0xff]
        %v6523 = vld [vmem:[#allocation2 + $0xa8] sm:$0xff]
        %v6524 = vld [vmem:[#allocation2 + $0xb0] sm:$0xff]
        %v6525 = vld [vmem:[#allocation2 + $0xb8] sm:$0xff]
        %v6526 = vadd.f32 %v6502, %v6408
        %v6527 = vadd.f32 %v6503, %v6411
        %v6528 = vadd.f32 %v6504, %v6416
        %v6529 = vadd.f32 %v6505, %v6419
        %v6530 = vadd.f32 %v6506, %v6424
        %v6531 = vadd.f32 %v6507, %v6427
        %v6532 = vadd.f32 %v6508, %v6432
        %v6533 = vadd.f32 %v6509, %v6435
        %v6534 = vadd.f32 %v6510, %v6440
        %v6535 = vadd.f32 %v6511, %v6443
        %v6536 = vadd.f32 %v6512, %v6448
        %v6537 = vadd.f32 %v6513, %v6451
        %v6538 = vadd.f32 %v6514, %v6456
        %v6539 = vadd.f32 %v6515, %v6459
        %v6540 = vadd.f32 %v6516, %v6464
        %v6541 = vadd.f32 %v6517, %v6467
        %v6542 = vadd.f32 %v6518, %v6472
        %v6543 = vadd.f32 %v6519, %v6475
        %v6544 = vadd.f32 %v6520, %v6480
        %v6545 = vadd.f32 %v6521, %v6483
        %v6546 = vadd.f32 %v6522, %v6488
        %v6547 = vadd.f32 %v6523, %v6491
        %v6548 = vadd.f32 %v6524, %v6496
        %v6549 = vadd.f32 %v6525, %v6499
        %6550 = vst [vmem:[#allocation2] sm:$0xff] %v6526
        %6551 = vst [vmem:[#allocation2 + $0x8] sm:$0xff] %v6527
        %6552 = vst [vmem:[#allocation2 + $0x10] sm:$0xff] %v6528
        %6553 = vst [vmem:[#allocation2 + $0x18] sm:$0xff] %v6529
        %6554 = vst [vmem:[#allocation2 + $0x20] sm:$0xff] %v6530
        %6555 = vst [vmem:[#allocation2 + $0x28] sm:$0xff] %v6531
        %6556 = vst [vmem:[#allocation2 + $0x30] sm:$0xff] %v6532
        %6557 = vst [vmem:[#allocation2 + $0x38] sm:$0xff] %v6533
        %6558 = vst [vmem:[#allocation2 + $0x40] sm:$0xff] %v6534
        %6559 = vst [vmem:[#allocation2 + $0x48] sm:$0xff] %v6535
        %6560 = vst [vmem:[#allocation2 + $0x50] sm:$0xff] %v6536
        %6561 = vst [vmem:[#allocation2 + $0x58] sm:$0xff] %v6537
        %6562 = vst [vmem:[#allocation2 + $0x60] sm:$0xff] %v6538
        %6563 = vst [vmem:[#allocation2 + $0x68] sm:$0xff] %v6539
        %6564 = vst [vmem:[#allocation2 + $0x70] sm:$0xff] %v6540
        %6565 = vst [vmem:[#allocation2 + $0x78] sm:$0xff] %v6541
        %6566 = vst [vmem:[#allocation2 + $0x80] sm:$0xff] %v6542
        %6567 = vst [vmem:[#allocation2 + $0x88] sm:$0xff] %v6543
        %6568 = vst [vmem:[#allocation2 + $0x90] sm:$0xff] %v6544
        %6569 = vst [vmem:[#allocation2 + $0x98] sm:$0xff] %v6545
        %6570 = vst [vmem:[#allocation2 + $0xa0] sm:$0xff] %v6546
        %6571 = vst [vmem:[#allocation2 + $0xa8] sm:$0xff] %v6547
        %6572 = vst [vmem:[#allocation2 + $0xb0] sm:$0xff] %v6548
        %6573 = vst [vmem:[#allocation2 + $0xb8] sm:$0xff] %v6549
        %s6574 = scalar_lea.vmem [#allocation8], 1216
        %v6575 = vld [vmem:[%s6574] sm:$0xf]
        %v6576 = vld [vmem:[%s6574 + $0x4] sm:$0xf]
        %v6577 = vld [vmem:[%s6574 + $0x8] sm:$0xf]
        %v6578 = vld [vmem:[%s6574 + $0xc] sm:$0xf]
        %v6579 = vld [vmem:[%s6574 + $0x10] sm:$0xf]
        %v6580 = vld [vmem:[%s6574 + $0x14] sm:$0xf]
        %v6581 = vld [vmem:[%s6574 + $0x18] sm:$0xf]
        %v6582 = vld [vmem:[%s6574 + $0x1c] sm:$0xf]
        %v6583 = vld [vmem:[%s6574 + $0x20] sm:$0xf]
        %v6584 = vld [vmem:[%s6574 + $0x24] sm:$0xf]
        %v6585 = vld [vmem:[%s6574 + $0x28] sm:$0xf]
        %v6586 = vld [vmem:[%s6574 + $0x2c] sm:$0xf]
        %v6587 = vld [vmem:[%s6574 + $0x30] sm:$0xf]
        %v6588 = vld [vmem:[%s6574 + $0x34] sm:$0xf]
        %v6589 = vld [vmem:[%s6574 + $0x38] sm:$0xf]
        %v6590 = vld [vmem:[%s6574 + $0x3c] sm:$0xf]
        %v6591 = vshrl.u32 %v1176, 16
        %v6593 = vor.u32 %v6591, %v5786
        %v6595 = vshll.u32 %v1177, 16
        %v6597 = vrot.slane %v6595, 1
        %v6598 = vsel %vm1414, %v6593, %v6597
        %v6599 = vshrl.u32 %v1177, 16
        %v6601 = vor.u32 %v6599, %v6597
        %v6603 = vshll.u32 %v1178, 16
        %v6605 = vrot.slane %v6603, 1
        %v6606 = vsel %vm1414, %v6601, %v6605
        %v6625 = vunpack.c.l.b16 %v6575
        %v6626 = vunpack.c.l.b16 %v6576
        %v6627 = vunpack.c.l.b16 %v6577
        %v6628 = vunpack.c.l.b16 %v6578
        %v6629 = vunpack.c.l.b16 %v6579
        %v6630 = vunpack.c.l.b16 %v6580
        %v6631 = vunpack.c.l.b16 %v6581
        %v6632 = vunpack.c.l.b16 %v6582
        %v6633 = vunpack.c.l.b16 %v6583
        %v6634 = vunpack.c.l.b16 %v6584
        %v6635 = vunpack.c.l.b16 %v6585
        %v6636 = vunpack.c.l.b16 %v6586
        %v6637 = vunpack.c.l.b16 %v6587
        %v6638 = vunpack.c.l.b16 %v6588
        %v6639 = vunpack.c.l.b16 %v6589
        %v6640 = vunpack.c.l.b16 %v6590
        %v6641 = vpack.c.b16 %v6626, %v6625
        %v6642 = vpack.c.b16 %v6628, %v6627
        %v6643 = vpack.c.b16 %v6630, %v6629
        %v6644 = vpack.c.b16 %v6632, %v6631
        %v6645 = vpack.c.b16 %v6634, %v6633
        %v6646 = vpack.c.b16 %v6636, %v6635
        %v6647 = vpack.c.b16 %v6638, %v6637
        %v6648 = vpack.c.b16 %v6640, %v6639
        %6657 = vmatprep.subr.bf16.mxu0 0
        %6658 = vmatpush1.bf16.msra.mxu0 %v6648
        %6659 = vmatprep.subr.bf16.mxu0 0
        %6660 = vmatpush1.bf16.msra.mxu0 %v6647
        %6661 = vmatprep.subr.bf16.mxu0 0
        %6662 = vmatpush1.bf16.msra.mxu0 %v6646
        %6663 = vmatprep.subr.bf16.mxu0 0
        %6664 = vmatpush1.bf16.msra.mxu0 %v6645
        %6665 = vmatprep.subr.bf16.mxu0 0
        %6666 = vmatpush1.bf16.msra.mxu0 %v6644
        %6667 = vmatprep.subr.bf16.mxu0 0
        %6668 = vmatpush1.bf16.msra.mxu0 %v6643
        %6669 = vmatprep.subr.bf16.mxu0 0
        %6670 = vmatpush1.bf16.msra.mxu0 %v6642
        %6671 = vmatprep.subr.bf16.mxu0 0
        %6672 = vmatpush1.bf16.msra.mxu0 %v6641
        %6673 = vmatprep.subr.bf16.mxu0 0
        %6674 = vmatpush2.bf16.msra.mxu0 0
        %6675 = vmatprep.subr.bf16.mxu0 0
        %6676 = vmatpush2.bf16.msra.mxu0 0
        %6677 = vmatprep.subr.bf16.mxu0 0
        %6678 = vmatpush2.bf16.msra.mxu0 0
        %6679 = vmatprep.subr.bf16.mxu0 0
        %6680 = vmatpush2.bf16.msra.mxu0 0
        %6681 = vmatprep.subr.bf16.mxu0 0
        %6682 = vmatpush2.bf16.msra.mxu0 0
        %6683 = vmatprep.subr.bf16.mxu0 0
        %6684 = vmatpush2.bf16.msra.mxu0 0
        %6685 = vmatprep.subr.bf16.mxu0 0
        %6686 = vmatpush2.bf16.msra.mxu0 0
        %6687 = vmatprep.subr.bf16.mxu0 0
        %6688 = vmatpush2.bf16.msra.mxu0 0
        %6689 = vmatprep.mubr.bf16.mxu0 0
        %6690 = vmatmul.mubr.bf16.gmra.mxu0 %v1474
        %v6691 = vpop.f32.mrf.mxu0
        %v6692 = vadd.f32 0.0, %v6691
        %v6693 = vpop.f32.mrf.mxu0
        %v6694 = vpop.f32.mrf.mxu0
        %v6695 = vadd.f32 0.0, %v6694
        %v6696 = vpop.f32.mrf.mxu0
        %6697 = vmatprep.mubr.bf16.mxu0 0
        %6698 = vmatmul.mubr.bf16.gmra.mxu0 %v1482
        %v6699 = vpop.f32.mrf.mxu0
        %v6700 = vadd.f32 0.0, %v6699
        %v6701 = vpop.f32.mrf.mxu0
        %v6702 = vpop.f32.mrf.mxu0
        %v6703 = vadd.f32 0.0, %v6702
        %v6704 = vpop.f32.mrf.mxu0
        %6705 = vmatprep.mubr.bf16.mxu0 0
        %6706 = vmatmul.mubr.bf16.gmra.mxu0 %v1490
        %v6707 = vpop.f32.mrf.mxu0
        %v6708 = vadd.f32 0.0, %v6707
        %v6709 = vpop.f32.mrf.mxu0
        %v6710 = vpop.f32.mrf.mxu0
        %v6711 = vadd.f32 0.0, %v6710
        %v6712 = vpop.f32.mrf.mxu0
        %6713 = vmatprep.mubr.bf16.mxu0 0
        %6714 = vmatmul.mubr.bf16.gmra.mxu0 %v1498
        %v6715 = vpop.f32.mrf.mxu0
        %v6716 = vadd.f32 0.0, %v6715
        %v6717 = vpop.f32.mrf.mxu0
        %v6718 = vpop.f32.mrf.mxu0
        %v6719 = vadd.f32 0.0, %v6718
        %v6720 = vpop.f32.mrf.mxu0
        %6721 = vmatprep.mubr.bf16.mxu0 0
        %6722 = vmatmul.mubr.bf16.gmra.mxu0 %v1506
        %v6723 = vpop.f32.mrf.mxu0
        %v6724 = vadd.f32 0.0, %v6723
        %v6725 = vpop.f32.mrf.mxu0
        %v6726 = vpop.f32.mrf.mxu0
        %v6727 = vadd.f32 0.0, %v6726
        %v6728 = vpop.f32.mrf.mxu0
        %6729 = vmatprep.mubr.bf16.mxu0 0
        %6730 = vmatmul.mubr.bf16.gmra.mxu0 %v1514
        %v6731 = vpop.f32.mrf.mxu0
        %v6732 = vadd.f32 0.0, %v6731
        %v6733 = vpop.f32.mrf.mxu0
        %v6734 = vpop.f32.mrf.mxu0
        %v6735 = vadd.f32 0.0, %v6734
        %v6736 = vpop.f32.mrf.mxu0
        %6737 = vmatprep.mubr.bf16.mxu0 0
        %6738 = vmatmul.mubr.bf16.gmra.mxu0 %v3321
        %v6739 = vpop.f32.mrf.mxu0
        %v6740 = vadd.f32 0.0, %v6739
        %v6741 = vpop.f32.mrf.mxu0
        %v6742 = vpop.f32.mrf.mxu0
        %v6743 = vadd.f32 0.0, %v6742
        %v6744 = vpop.f32.mrf.mxu0
        %6745 = vmatprep.mubr.bf16.mxu0 0
        %6746 = vmatmul.mubr.bf16.gmra.mxu0 %v4132
        %v6747 = vpop.f32.mrf.mxu0
        %v6748 = vadd.f32 0.0, %v6747
        %v6749 = vpop.f32.mrf.mxu0
        %v6750 = vpop.f32.mrf.mxu0
        %v6751 = vadd.f32 0.0, %v6750
        %v6752 = vpop.f32.mrf.mxu0
        %6753 = vmatprep.mubr.bf16.mxu0 0
        %6754 = vmatmul.mubr.bf16.gmra.mxu0 %v4140
        %v6755 = vpop.f32.mrf.mxu0
        %v6756 = vadd.f32 0.0, %v6755
        %v6757 = vpop.f32.mrf.mxu0
        %v6758 = vpop.f32.mrf.mxu0
        %v6759 = vadd.f32 0.0, %v6758
        %v6760 = vpop.f32.mrf.mxu0
        %6761 = vmatprep.mubr.bf16.mxu0 0
        %6762 = vmatmul.mubr.bf16.gmra.mxu0 %v5787
        %v6763 = vpop.f32.mrf.mxu0
        %v6764 = vadd.f32 0.0, %v6763
        %v6765 = vpop.f32.mrf.mxu0
        %v6766 = vpop.f32.mrf.mxu0
        %v6767 = vadd.f32 0.0, %v6766
        %v6768 = vpop.f32.mrf.mxu0
        %6769 = vmatprep.mubr.bf16.mxu0 0
        %6770 = vmatmul.mubr.bf16.gmra.mxu0 %v6598
        %v6771 = vpop.f32.mrf.mxu0
        %v6772 = vadd.f32 0.0, %v6771
        %v6773 = vpop.f32.mrf.mxu0
        %v6774 = vpop.f32.mrf.mxu0
        %v6775 = vadd.f32 0.0, %v6774
        %v6776 = vpop.f32.mrf.mxu0
        %6777 = vmatprep.mubr.bf16.mxu0 0
        %6778 = vmatmul.mubr.bf16.gmra.mxu0 %v6606
        %v6779 = vpop.f32.mrf.mxu0
        %v6780 = vadd.f32 0.0, %v6779
        %v6781 = vpop.f32.mrf.mxu0
        %v6782 = vpop.f32.mrf.mxu0
        %v6783 = vadd.f32 0.0, %v6782
        %v6784 = vpop.f32.mrf.mxu0
        %6785 = vdwg.mxu0
        %v6786 = vld [vmem:[#allocation2] sm:$0xff]
        %v6787 = vld [vmem:[#allocation2 + $0x8] sm:$0xff]
        %v6788 = vld [vmem:[#allocation2 + $0x10] sm:$0xff]
        %v6789 = vld [vmem:[#allocation2 + $0x18] sm:$0xff]
        %v6790 = vld [vmem:[#allocation2 + $0x20] sm:$0xff]
        %v6791 = vld [vmem:[#allocation2 + $0x28] sm:$0xff]
        %v6792 = vld [vmem:[#allocation2 + $0x30] sm:$0xff]
        %v6793 = vld [vmem:[#allocation2 + $0x38] sm:$0xff]
        %v6794 = vld [vmem:[#allocation2 + $0x40] sm:$0xff]
        %v6795 = vld [vmem:[#allocation2 + $0x48] sm:$0xff]
        %v6796 = vld [vmem:[#allocation2 + $0x50] sm:$0xff]
        %v6797 = vld [vmem:[#allocation2 + $0x58] sm:$0xff]
        %v6798 = vld [vmem:[#allocation2 + $0x60] sm:$0xff]
        %v6799 = vld [vmem:[#allocation2 + $0x68] sm:$0xff]
        %v6800 = vld [vmem:[#allocation2 + $0x70] sm:$0xff]
        %v6801 = vld [vmem:[#allocation2 + $0x78] sm:$0xff]
        %v6802 = vld [vmem:[#allocation2 + $0x80] sm:$0xff]
        %v6803 = vld [vmem:[#allocation2 + $0x88] sm:$0xff]
        %v6804 = vld [vmem:[#allocation2 + $0x90] sm:$0xff]
        %v6805 = vld [vmem:[#allocation2 + $0x98] sm:$0xff]
        %v6806 = vld [vmem:[#allocation2 + $0xa0] sm:$0xff]
        %v6807 = vld [vmem:[#allocation2 + $0xa8] sm:$0xff]
        %v6808 = vld [vmem:[#allocation2 + $0xb0] sm:$0xff]
        %v6809 = vld [vmem:[#allocation2 + $0xb8] sm:$0xff]
        %v6810 = vadd.f32 %v6786, %v6692
        %v6811 = vadd.f32 %v6787, %v6695
        %v6812 = vadd.f32 %v6788, %v6700
        %v6813 = vadd.f32 %v6789, %v6703
        %v6814 = vadd.f32 %v6790, %v6708
        %v6815 = vadd.f32 %v6791, %v6711
        %v6816 = vadd.f32 %v6792, %v6716
        %v6817 = vadd.f32 %v6793, %v6719
        %v6818 = vadd.f32 %v6794, %v6724
        %v6819 = vadd.f32 %v6795, %v6727
        %v6820 = vadd.f32 %v6796, %v6732
        %v6821 = vadd.f32 %v6797, %v6735
        %v6822 = vadd.f32 %v6798, %v6740
        %v6823 = vadd.f32 %v6799, %v6743
        %v6824 = vadd.f32 %v6800, %v6748
        %v6825 = vadd.f32 %v6801, %v6751
        %v6826 = vadd.f32 %v6802, %v6756
        %v6827 = vadd.f32 %v6803, %v6759
        %v6828 = vadd.f32 %v6804, %v6764
        %v6829 = vadd.f32 %v6805, %v6767
        %v6830 = vadd.f32 %v6806, %v6772
        %v6831 = vadd.f32 %v6807, %v6775
        %v6832 = vadd.f32 %v6808, %v6780
        %v6833 = vadd.f32 %v6809, %v6783
        %6834 = vst [vmem:[#allocation2] sm:$0xff] %v6810
        %6835 = vst [vmem:[#allocation2 + $0x8] sm:$0xff] %v6811
        %6836 = vst [vmem:[#allocation2 + $0x10] sm:$0xff] %v6812
        %6837 = vst [vmem:[#allocation2 + $0x18] sm:$0xff] %v6813
        %6838 = vst [vmem:[#allocation2 + $0x20] sm:$0xff] %v6814
        %6839 = vst [vmem:[#allocation2 + $0x28] sm:$0xff] %v6815
        %6840 = vst [vmem:[#allocation2 + $0x30] sm:$0xff] %v6816
        %6841 = vst [vmem:[#allocation2 + $0x38] sm:$0xff] %v6817
        %6842 = vst [vmem:[#allocation2 + $0x40] sm:$0xff] %v6818
        %6843 = vst [vmem:[#allocation2 + $0x48] sm:$0xff] %v6819
        %6844 = vst [vmem:[#allocation2 + $0x50] sm:$0xff] %v6820
        %6845 = vst [vmem:[#allocation2 + $0x58] sm:$0xff] %v6821
        %6846 = vst [vmem:[#allocation2 + $0x60] sm:$0xff] %v6822
        %6847 = vst [vmem:[#allocation2 + $0x68] sm:$0xff] %v6823
        %6848 = vst [vmem:[#allocation2 + $0x70] sm:$0xff] %v6824
        %6849 = vst [vmem:[#allocation2 + $0x78] sm:$0xff] %v6825
        %6850 = vst [vmem:[#allocation2 + $0x80] sm:$0xff] %v6826
        %6851 = vst [vmem:[#allocation2 + $0x88] sm:$0xff] %v6827
        %6852 = vst [vmem:[#allocation2 + $0x90] sm:$0xff] %v6828
        %6853 = vst [vmem:[#allocation2 + $0x98] sm:$0xff] %v6829
        %6854 = vst [vmem:[#allocation2 + $0xa0] sm:$0xff] %v6830
        %6855 = vst [vmem:[#allocation2 + $0xa8] sm:$0xff] %v6831
        %6856 = vst [vmem:[#allocation2 + $0xb0] sm:$0xff] %v6832
        %6857 = vst [vmem:[#allocation2 + $0xb8] sm:$0xff] %v6833
        %s6858 = scalar_lea.vmem [#allocation8], 1280
        %v6859 = vld [vmem:[%s6858] sm:$0xf]
        %v6860 = vld [vmem:[%s6858 + $0x4] sm:$0xf]
        %v6861 = vld [vmem:[%s6858 + $0x8] sm:$0xf]
        %v6862 = vld [vmem:[%s6858 + $0xc] sm:$0xf]
        %v6863 = vld [vmem:[%s6858 + $0x10] sm:$0xf]
        %v6864 = vld [vmem:[%s6858 + $0x14] sm:$0xf]
        %v6865 = vld [vmem:[%s6858 + $0x18] sm:$0xf]
        %v6866 = vld [vmem:[%s6858 + $0x1c] sm:$0xf]
        %v6867 = vld [vmem:[%s6858 + $0x20] sm:$0xf]
        %v6868 = vld [vmem:[%s6858 + $0x24] sm:$0xf]
        %v6869 = vld [vmem:[%s6858 + $0x28] sm:$0xf]
        %v6870 = vld [vmem:[%s6858 + $0x2c] sm:$0xf]
        %v6871 = vld [vmem:[%s6858 + $0x30] sm:$0xf]
        %v6872 = vld [vmem:[%s6858 + $0x34] sm:$0xf]
        %v6873 = vld [vmem:[%s6858 + $0x38] sm:$0xf]
        %v6874 = vld [vmem:[%s6858 + $0x3c] sm:$0xf]
        %v6877 = vrot.slane %v1177, 1
        %v6878 = vsel %vm1806, %v6056, %v6877
        %v6879 = vrot.slane %v1178, 1
        %v6880 = vsel %vm1806, %v6877, %v6879
        %v6899 = vunpack.c.l.b16 %v6859
        %v6900 = vunpack.c.l.b16 %v6860
        %v6901 = vunpack.c.l.b16 %v6861
        %v6902 = vunpack.c.l.b16 %v6862
        %v6903 = vunpack.c.l.b16 %v6863
        %v6904 = vunpack.c.l.b16 %v6864
        %v6905 = vunpack.c.l.b16 %v6865
        %v6906 = vunpack.c.l.b16 %v6866
        %v6907 = vunpack.c.l.b16 %v6867
        %v6908 = vunpack.c.l.b16 %v6868
        %v6909 = vunpack.c.l.b16 %v6869
        %v6910 = vunpack.c.l.b16 %v6870
        %v6911 = vunpack.c.l.b16 %v6871
        %v6912 = vunpack.c.l.b16 %v6872
        %v6913 = vunpack.c.l.b16 %v6873
        %v6914 = vunpack.c.l.b16 %v6874
        %v6915 = vpack.c.b16 %v6900, %v6899
        %v6916 = vpack.c.b16 %v6902, %v6901
        %v6917 = vpack.c.b16 %v6904, %v6903
        %v6918 = vpack.c.b16 %v6906, %v6905
        %v6919 = vpack.c.b16 %v6908, %v6907
        %v6920 = vpack.c.b16 %v6910, %v6909
        %v6921 = vpack.c.b16 %v6912, %v6911
        %v6922 = vpack.c.b16 %v6914, %v6913
        %6931 = vmatprep.subr.bf16.mxu0 0
        %6932 = vmatpush1.bf16.msra.mxu0 %v6922
        %6933 = vmatprep.subr.bf16.mxu0 0
        %6934 = vmatpush1.bf16.msra.mxu0 %v6921
        %6935 = vmatprep.subr.bf16.mxu0 0
        %6936 = vmatpush1.bf16.msra.mxu0 %v6920
        %6937 = vmatprep.subr.bf16.mxu0 0
        %6938 = vmatpush1.bf16.msra.mxu0 %v6919
        %6939 = vmatprep.subr.bf16.mxu0 0
        %6940 = vmatpush1.bf16.msra.mxu0 %v6918
        %6941 = vmatprep.subr.bf16.mxu0 0
        %6942 = vmatpush1.bf16.msra.mxu0 %v6917
        %6943 = vmatprep.subr.bf16.mxu0 0
        %6944 = vmatpush1.bf16.msra.mxu0 %v6916
        %6945 = vmatprep.subr.bf16.mxu0 0
        %6946 = vmatpush1.bf16.msra.mxu0 %v6915
        %6947 = vmatprep.subr.bf16.mxu0 0
        %6948 = vmatpush2.bf16.msra.mxu0 0
        %6949 = vmatprep.subr.bf16.mxu0 0
        %6950 = vmatpush2.bf16.msra.mxu0 0
        %6951 = vmatprep.subr.bf16.mxu0 0
        %6952 = vmatpush2.bf16.msra.mxu0 0
        %6953 = vmatprep.subr.bf16.mxu0 0
        %6954 = vmatpush2.bf16.msra.mxu0 0
        %6955 = vmatprep.subr.bf16.mxu0 0
        %6956 = vmatpush2.bf16.msra.mxu0 0
        %6957 = vmatprep.subr.bf16.mxu0 0
        %6958 = vmatpush2.bf16.msra.mxu0 0
        %6959 = vmatprep.subr.bf16.mxu0 0
        %6960 = vmatpush2.bf16.msra.mxu0 0
        %6961 = vmatprep.subr.bf16.mxu0 0
        %6962 = vmatpush2.bf16.msra.mxu0 0
        %6963 = vmatprep.mubr.bf16.mxu0 0
        %6964 = vmatmul.mubr.bf16.gmra.mxu0 %v1821
        %v6965 = vpop.f32.mrf.mxu0
        %v6966 = vadd.f32 0.0, %v6965
        %v6967 = vpop.f32.mrf.mxu0
        %v6968 = vpop.f32.mrf.mxu0
        %v6969 = vadd.f32 0.0, %v6968
        %v6970 = vpop.f32.mrf.mxu0
        %6971 = vmatprep.mubr.bf16.mxu0 0
        %6972 = vmatmul.mubr.bf16.gmra.mxu0 %v1823
        %v6973 = vpop.f32.mrf.mxu0
        %v6974 = vadd.f32 0.0, %v6973
        %v6975 = vpop.f32.mrf.mxu0
        %v6976 = vpop.f32.mrf.mxu0
        %v6977 = vadd.f32 0.0, %v6976
        %v6978 = vpop.f32.mrf.mxu0
        %6979 = vmatprep.mubr.bf16.mxu0 0
        %6980 = vmatmul.mubr.bf16.gmra.mxu0 %v1825
        %v6981 = vpop.f32.mrf.mxu0
        %v6982 = vadd.f32 0.0, %v6981
        %v6983 = vpop.f32.mrf.mxu0
        %v6984 = vpop.f32.mrf.mxu0
        %v6985 = vadd.f32 0.0, %v6984
        %v6986 = vpop.f32.mrf.mxu0
        %6987 = vmatprep.mubr.bf16.mxu0 0
        %6988 = vmatmul.mubr.bf16.gmra.mxu0 %v1827
        %v6989 = vpop.f32.mrf.mxu0
        %v6990 = vadd.f32 0.0, %v6989
        %v6991 = vpop.f32.mrf.mxu0
        %v6992 = vpop.f32.mrf.mxu0
        %v6993 = vadd.f32 0.0, %v6992
        %v6994 = vpop.f32.mrf.mxu0
        %6995 = vmatprep.mubr.bf16.mxu0 0
        %6996 = vmatmul.mubr.bf16.gmra.mxu0 %v1829
        %v6997 = vpop.f32.mrf.mxu0
        %v6998 = vadd.f32 0.0, %v6997
        %v6999 = vpop.f32.mrf.mxu0
        %v7000 = vpop.f32.mrf.mxu0
        %v7001 = vadd.f32 0.0, %v7000
        %v7002 = vpop.f32.mrf.mxu0
        %7003 = vmatprep.mubr.bf16.mxu0 0
        %7004 = vmatmul.mubr.bf16.gmra.mxu0 %v1831
        %v7005 = vpop.f32.mrf.mxu0
        %v7006 = vadd.f32 0.0, %v7005
        %v7007 = vpop.f32.mrf.mxu0
        %v7008 = vpop.f32.mrf.mxu0
        %v7009 = vadd.f32 0.0, %v7008
        %v7010 = vpop.f32.mrf.mxu0
        %7011 = vmatprep.mubr.bf16.mxu0 0
        %7012 = vmatmul.mubr.bf16.gmra.mxu0 %v3591
        %v7013 = vpop.f32.mrf.mxu0
        %v7014 = vadd.f32 0.0, %v7013
        %v7015 = vpop.f32.mrf.mxu0
        %v7016 = vpop.f32.mrf.mxu0
        %v7017 = vadd.f32 0.0, %v7016
        %v7018 = vpop.f32.mrf.mxu0
        %7019 = vmatprep.mubr.bf16.mxu0 0
        %7020 = vmatmul.mubr.bf16.gmra.mxu0 %v4412
        %v7021 = vpop.f32.mrf.mxu0
        %v7022 = vadd.f32 0.0, %v7021
        %v7023 = vpop.f32.mrf.mxu0
        %v7024 = vpop.f32.mrf.mxu0
        %v7025 = vadd.f32 0.0, %v7024
        %v7026 = vpop.f32.mrf.mxu0
        %7027 = vmatprep.mubr.bf16.mxu0 0
        %7028 = vmatmul.mubr.bf16.gmra.mxu0 %v4414
        %v7029 = vpop.f32.mrf.mxu0
        %v7030 = vadd.f32 0.0, %v7029
        %v7031 = vpop.f32.mrf.mxu0
        %v7032 = vpop.f32.mrf.mxu0
        %v7033 = vadd.f32 0.0, %v7032
        %v7034 = vpop.f32.mrf.mxu0
        %7035 = vmatprep.mubr.bf16.mxu0 0
        %7036 = vmatmul.mubr.bf16.gmra.mxu0 %v6057
        %v7037 = vpop.f32.mrf.mxu0
        %v7038 = vadd.f32 0.0, %v7037
        %v7039 = vpop.f32.mrf.mxu0
        %v7040 = vpop.f32.mrf.mxu0
        %v7041 = vadd.f32 0.0, %v7040
        %v7042 = vpop.f32.mrf.mxu0
        %7043 = vmatprep.mubr.bf16.mxu0 0
        %7044 = vmatmul.mubr.bf16.gmra.mxu0 %v6878
        %v7045 = vpop.f32.mrf.mxu0
        %v7046 = vadd.f32 0.0, %v7045
        %v7047 = vpop.f32.mrf.mxu0
        %v7048 = vpop.f32.mrf.mxu0
        %v7049 = vadd.f32 0.0, %v7048
        %v7050 = vpop.f32.mrf.mxu0
        %7051 = vmatprep.mubr.bf16.mxu0 0
        %7052 = vmatmul.mubr.bf16.gmra.mxu0 %v6880
        %v7053 = vpop.f32.mrf.mxu0
        %v7054 = vadd.f32 0.0, %v7053
        %v7055 = vpop.f32.mrf.mxu0
        %v7056 = vpop.f32.mrf.mxu0
        %v7057 = vadd.f32 0.0, %v7056
        %v7058 = vpop.f32.mrf.mxu0
        %7059 = vdwg.mxu0
        %v7060 = vld [vmem:[#allocation2] sm:$0xff]
        %v7061 = vld [vmem:[#allocation2 + $0x8] sm:$0xff]
        %v7062 = vld [vmem:[#allocation2 + $0x10] sm:$0xff]
        %v7063 = vld [vmem:[#allocation2 + $0x18] sm:$0xff]
        %v7064 = vld [vmem:[#allocation2 + $0x20] sm:$0xff]
        %v7065 = vld [vmem:[#allocation2 + $0x28] sm:$0xff]
        %v7066 = vld [vmem:[#allocation2 + $0x30] sm:$0xff]
        %v7067 = vld [vmem:[#allocation2 + $0x38] sm:$0xff]
        %v7068 = vld [vmem:[#allocation2 + $0x40] sm:$0xff]
        %v7069 = vld [vmem:[#allocation2 + $0x48] sm:$0xff]
        %v7070 = vld [vmem:[#allocation2 + $0x50] sm:$0xff]
        %v7071 = vld [vmem:[#allocation2 + $0x58] sm:$0xff]
        %v7072 = vld [vmem:[#allocation2 + $0x60] sm:$0xff]
        %v7073 = vld [vmem:[#allocation2 + $0x68] sm:$0xff]
        %v7074 = vld [vmem:[#allocation2 + $0x70] sm:$0xff]
        %v7075 = vld [vmem:[#allocation2 + $0x78] sm:$0xff]
        %v7076 = vld [vmem:[#allocation2 + $0x80] sm:$0xff]
        %v7077 = vld [vmem:[#allocation2 + $0x88] sm:$0xff]
        %v7078 = vld [vmem:[#allocation2 + $0x90] sm:$0xff]
        %v7079 = vld [vmem:[#allocation2 + $0x98] sm:$0xff]
        %v7080 = vld [vmem:[#allocation2 + $0xa0] sm:$0xff]
        %v7081 = vld [vmem:[#allocation2 + $0xa8] sm:$0xff]
        %v7082 = vld [vmem:[#allocation2 + $0xb0] sm:$0xff]
        %v7083 = vld [vmem:[#allocation2 + $0xb8] sm:$0xff]
        %v7084 = vadd.f32 %v7060, %v6966
        %v7085 = vadd.f32 %v7061, %v6969
        %v7086 = vadd.f32 %v7062, %v6974
        %v7087 = vadd.f32 %v7063, %v6977
        %v7088 = vadd.f32 %v7064, %v6982
        %v7089 = vadd.f32 %v7065, %v6985
        %v7090 = vadd.f32 %v7066, %v6990
        %v7091 = vadd.f32 %v7067, %v6993
        %v7092 = vadd.f32 %v7068, %v6998
        %v7093 = vadd.f32 %v7069, %v7001
        %v7094 = vadd.f32 %v7070, %v7006
        %v7095 = vadd.f32 %v7071, %v7009
        %v7096 = vadd.f32 %v7072, %v7014
        %v7097 = vadd.f32 %v7073, %v7017
        %v7098 = vadd.f32 %v7074, %v7022
        %v7099 = vadd.f32 %v7075, %v7025
        %v7100 = vadd.f32 %v7076, %v7030
        %v7101 = vadd.f32 %v7077, %v7033
        %v7102 = vadd.f32 %v7078, %v7038
        %v7103 = vadd.f32 %v7079, %v7041
        %v7104 = vadd.f32 %v7080, %v7046
        %v7105 = vadd.f32 %v7081, %v7049
        %v7106 = vadd.f32 %v7082, %v7054
        %v7107 = vadd.f32 %v7083, %v7057
        %7108 = vst [vmem:[#allocation2] sm:$0xff] %v7084
        %7109 = vst [vmem:[#allocation2 + $0x8] sm:$0xff] %v7085
        %7110 = vst [vmem:[#allocation2 + $0x10] sm:$0xff] %v7086
        %7111 = vst [vmem:[#allocation2 + $0x18] sm:$0xff] %v7087
        %7112 = vst [vmem:[#allocation2 + $0x20] sm:$0xff] %v7088
        %7113 = vst [vmem:[#allocation2 + $0x28] sm:$0xff] %v7089
        %7114 = vst [vmem:[#allocation2 + $0x30] sm:$0xff] %v7090
        %7115 = vst [vmem:[#allocation2 + $0x38] sm:$0xff] %v7091
        %7116 = vst [vmem:[#allocation2 + $0x40] sm:$0xff] %v7092
        %7117 = vst [vmem:[#allocation2 + $0x48] sm:$0xff] %v7093
        %7118 = vst [vmem:[#allocation2 + $0x50] sm:$0xff] %v7094
        %7119 = vst [vmem:[#allocation2 + $0x58] sm:$0xff] %v7095
        %7120 = vst [vmem:[#allocation2 + $0x60] sm:$0xff] %v7096
        %7121 = vst [vmem:[#allocation2 + $0x68] sm:$0xff] %v7097
        %7122 = vst [vmem:[#allocation2 + $0x70] sm:$0xff] %v7098
        %7123 = vst [vmem:[#allocation2 + $0x78] sm:$0xff] %v7099
        %7124 = vst [vmem:[#allocation2 + $0x80] sm:$0xff] %v7100
        %7125 = vst [vmem:[#allocation2 + $0x88] sm:$0xff] %v7101
        %7126 = vst [vmem:[#allocation2 + $0x90] sm:$0xff] %v7102
        %7127 = vst [vmem:[#allocation2 + $0x98] sm:$0xff] %v7103
        %7128 = vst [vmem:[#allocation2 + $0xa0] sm:$0xff] %v7104
        %7129 = vst [vmem:[#allocation2 + $0xa8] sm:$0xff] %v7105
        %7130 = vst [vmem:[#allocation2 + $0xb0] sm:$0xff] %v7106
        %7131 = vst [vmem:[#allocation2 + $0xb8] sm:$0xff] %v7107
        %s7132 = scalar_lea.vmem [#allocation8], 1344
        %v7133 = vld [vmem:[%s7132] sm:$0xf]
        %v7134 = vld [vmem:[%s7132 + $0x4] sm:$0xf]
        %v7135 = vld [vmem:[%s7132 + $0x8] sm:$0xf]
        %v7136 = vld [vmem:[%s7132 + $0xc] sm:$0xf]
        %v7137 = vld [vmem:[%s7132 + $0x10] sm:$0xf]
        %v7138 = vld [vmem:[%s7132 + $0x14] sm:$0xf]
        %v7139 = vld [vmem:[%s7132 + $0x18] sm:$0xf]
        %v7140 = vld [vmem:[%s7132 + $0x1c] sm:$0xf]
        %v7141 = vld [vmem:[%s7132 + $0x20] sm:$0xf]
        %v7142 = vld [vmem:[%s7132 + $0x24] sm:$0xf]
        %v7143 = vld [vmem:[%s7132 + $0x28] sm:$0xf]
        %v7144 = vld [vmem:[%s7132 + $0x2c] sm:$0xf]
        %v7145 = vld [vmem:[%s7132 + $0x30] sm:$0xf]
        %v7146 = vld [vmem:[%s7132 + $0x34] sm:$0xf]
        %v7147 = vld [vmem:[%s7132 + $0x38] sm:$0xf]
        %v7148 = vld [vmem:[%s7132 + $0x3c] sm:$0xf]
        %v7149 = vrot.slane %v1176, 4
        %v7150 = vsel %vm2110, %v4687, %v7149
        %v7151 = vrot.slane %v1177, 4
        %v7152 = vsel %vm2110, %v7149, %v7151
        %v7153 = vrot.slane %v1178, 4
        %v7154 = vsel %vm2110, %v7151, %v7153
        %v7174 = vunpack.c.l.b16 %v7133
        %v7175 = vunpack.c.l.b16 %v7134
        %v7176 = vunpack.c.l.b16 %v7135
        %v7177 = vunpack.c.l.b16 %v7136
        %v7178 = vunpack.c.l.b16 %v7137
        %v7179 = vunpack.c.l.b16 %v7138
        %v7180 = vunpack.c.l.b16 %v7139
        %v7181 = vunpack.c.l.b16 %v7140
        %v7182 = vunpack.c.l.b16 %v7141
        %v7183 = vunpack.c.l.b16 %v7142
        %v7184 = vunpack.c.l.b16 %v7143
        %v7185 = vunpack.c.l.b16 %v7144
        %v7186 = vunpack.c.l.b16 %v7145
        %v7187 = vunpack.c.l.b16 %v7146
        %v7188 = vunpack.c.l.b16 %v7147
        %v7189 = vunpack.c.l.b16 %v7148
        %v7190 = vpack.c.b16 %v7175, %v7174
        %v7191 = vpack.c.b16 %v7177, %v7176
        %v7192 = vpack.c.b16 %v7179, %v7178
        %v7193 = vpack.c.b16 %v7181, %v7180
        %v7194 = vpack.c.b16 %v7183, %v7182
        %v7195 = vpack.c.b16 %v7185, %v7184
        %v7196 = vpack.c.b16 %v7187, %v7186
        %v7197 = vpack.c.b16 %v7189, %v7188
        %7206 = vmatprep.subr.bf16.mxu0 0
        %7207 = vmatpush1.bf16.msra.mxu0 %v7197
        %7208 = vmatprep.subr.bf16.mxu0 0
        %7209 = vmatpush1.bf16.msra.mxu0 %v7196
        %7210 = vmatprep.subr.bf16.mxu0 0
        %7211 = vmatpush1.bf16.msra.mxu0 %v7195
        %7212 = vmatprep.subr.bf16.mxu0 0
        %7213 = vmatpush1.bf16.msra.mxu0 %v7194
        %7214 = vmatprep.subr.bf16.mxu0 0
        %7215 = vmatpush1.bf16.msra.mxu0 %v7193
        %7216 = vmatprep.subr.bf16.mxu0 0
        %7217 = vmatpush1.bf16.msra.mxu0 %v7192
        %7218 = vmatprep.subr.bf16.mxu0 0
        %7219 = vmatpush1.bf16.msra.mxu0 %v7191
        %7220 = vmatprep.subr.bf16.mxu0 0
        %7221 = vmatpush1.bf16.msra.mxu0 %v7190
        %7222 = vmatprep.subr.bf16.mxu0 0
        %7223 = vmatpush2.bf16.msra.mxu0 0
        %7224 = vmatprep.subr.bf16.mxu0 0
        %7225 = vmatpush2.bf16.msra.mxu0 0
        %7226 = vmatprep.subr.bf16.mxu0 0
        %7227 = vmatpush2.bf16.msra.mxu0 0
        %7228 = vmatprep.subr.bf16.mxu0 0
        %7229 = vmatpush2.bf16.msra.mxu0 0
        %7230 = vmatprep.subr.bf16.mxu0 0
        %7231 = vmatpush2.bf16.msra.mxu0 0
        %7232 = vmatprep.subr.bf16.mxu0 0
        %7233 = vmatpush2.bf16.msra.mxu0 0
        %7234 = vmatprep.subr.bf16.mxu0 0
        %7235 = vmatpush2.bf16.msra.mxu0 0
        %7236 = vmatprep.subr.bf16.mxu0 0
        %7237 = vmatpush2.bf16.msra.mxu0 0
        %7238 = vmatprep.mubr.bf16.mxu0 0
        %7239 = vmatmul.mubr.bf16.gmra.mxu0 %v2125
        %v7240 = vpop.f32.mrf.mxu0
        %v7241 = vadd.f32 0.0, %v7240
        %v7242 = vpop.f32.mrf.mxu0
        %v7243 = vpop.f32.mrf.mxu0
        %v7244 = vadd.f32 0.0, %v7243
        %v7245 = vpop.f32.mrf.mxu0
        %7246 = vmatprep.mubr.bf16.mxu0 0
        %7247 = vmatmul.mubr.bf16.gmra.mxu0 %v2127
        %v7248 = vpop.f32.mrf.mxu0
        %v7249 = vadd.f32 0.0, %v7248
        %v7250 = vpop.f32.mrf.mxu0
        %v7251 = vpop.f32.mrf.mxu0
        %v7252 = vadd.f32 0.0, %v7251
        %v7253 = vpop.f32.mrf.mxu0
        %7254 = vmatprep.mubr.bf16.mxu0 0
        %7255 = vmatmul.mubr.bf16.gmra.mxu0 %v2129
        %v7256 = vpop.f32.mrf.mxu0
        %v7257 = vadd.f32 0.0, %v7256
        %v7258 = vpop.f32.mrf.mxu0
        %v7259 = vpop.f32.mrf.mxu0
        %v7260 = vadd.f32 0.0, %v7259
        %v7261 = vpop.f32.mrf.mxu0
        %7262 = vmatprep.mubr.bf16.mxu0 0
        %7263 = vmatmul.mubr.bf16.gmra.mxu0 %v2131
        %v7264 = vpop.f32.mrf.mxu0
        %v7265 = vadd.f32 0.0, %v7264
        %v7266 = vpop.f32.mrf.mxu0
        %v7267 = vpop.f32.mrf.mxu0
        %v7268 = vadd.f32 0.0, %v7267
        %v7269 = vpop.f32.mrf.mxu0
        %7270 = vmatprep.mubr.bf16.mxu0 0
        %7271 = vmatmul.mubr.bf16.gmra.mxu0 %v2133
        %v7272 = vpop.f32.mrf.mxu0
        %v7273 = vadd.f32 0.0, %v7272
        %v7274 = vpop.f32.mrf.mxu0
        %v7275 = vpop.f32.mrf.mxu0
        %v7276 = vadd.f32 0.0, %v7275
        %v7277 = vpop.f32.mrf.mxu0
        %7278 = vmatprep.mubr.bf16.mxu0 0
        %7279 = vmatmul.mubr.bf16.gmra.mxu0 %v2135
        %v7280 = vpop.f32.mrf.mxu0
        %v7281 = vadd.f32 0.0, %v7280
        %v7282 = vpop.f32.mrf.mxu0
        %v7283 = vpop.f32.mrf.mxu0
        %v7284 = vadd.f32 0.0, %v7283
        %v7285 = vpop.f32.mrf.mxu0
        %7286 = vmatprep.mubr.bf16.mxu0 0
        %7287 = vmatmul.mubr.bf16.gmra.mxu0 %v4684
        %v7288 = vpop.f32.mrf.mxu0
        %v7289 = vadd.f32 0.0, %v7288
        %v7290 = vpop.f32.mrf.mxu0
        %v7291 = vpop.f32.mrf.mxu0
        %v7292 = vadd.f32 0.0, %v7291
        %v7293 = vpop.f32.mrf.mxu0
        %7294 = vmatprep.mubr.bf16.mxu0 0
        %7295 = vmatmul.mubr.bf16.gmra.mxu0 %v4686
        %v7296 = vpop.f32.mrf.mxu0
        %v7297 = vadd.f32 0.0, %v7296
        %v7298 = vpop.f32.mrf.mxu0
        %v7299 = vpop.f32.mrf.mxu0
        %v7300 = vadd.f32 0.0, %v7299
        %v7301 = vpop.f32.mrf.mxu0
        %7302 = vmatprep.mubr.bf16.mxu0 0
        %7303 = vmatmul.mubr.bf16.gmra.mxu0 %v4688
        %v7304 = vpop.f32.mrf.mxu0
        %v7305 = vadd.f32 0.0, %v7304
        %v7306 = vpop.f32.mrf.mxu0
        %v7307 = vpop.f32.mrf.mxu0
        %v7308 = vadd.f32 0.0, %v7307
        %v7309 = vpop.f32.mrf.mxu0
        %7310 = vmatprep.mubr.bf16.mxu0 0
        %7311 = vmatmul.mubr.bf16.gmra.mxu0 %v7150
        %v7312 = vpop.f32.mrf.mxu0
        %v7313 = vadd.f32 0.0, %v7312
        %v7314 = vpop.f32.mrf.mxu0
        %v7315 = vpop.f32.mrf.mxu0
        %v7316 = vadd.f32 0.0, %v7315
        %v7317 = vpop.f32.mrf.mxu0
        %7318 = vmatprep.mubr.bf16.mxu0 0
        %7319 = vmatmul.mubr.bf16.gmra.mxu0 %v7152
        %v7320 = vpop.f32.mrf.mxu0
        %v7321 = vadd.f32 0.0, %v7320
        %v7322 = vpop.f32.mrf.mxu0
        %v7323 = vpop.f32.mrf.mxu0
        %v7324 = vadd.f32 0.0, %v7323
        %v7325 = vpop.f32.mrf.mxu0
        %7326 = vmatprep.mubr.bf16.mxu0 0
        %7327 = vmatmul.mubr.bf16.gmra.mxu0 %v7154
        %v7328 = vpop.f32.mrf.mxu0
        %v7329 = vadd.f32 0.0, %v7328
        %v7330 = vpop.f32.mrf.mxu0
        %v7331 = vpop.f32.mrf.mxu0
        %v7332 = vadd.f32 0.0, %v7331
        %v7333 = vpop.f32.mrf.mxu0
        %7334 = vdwg.mxu0
        %v7335 = vld [vmem:[#allocation2] sm:$0xff]
        %v7336 = vld [vmem:[#allocation2 + $0x8] sm:$0xff]
        %v7337 = vld [vmem:[#allocation2 + $0x10] sm:$0xff]
        %v7338 = vld [vmem:[#allocation2 + $0x18] sm:$0xff]
        %v7339 = vld [vmem:[#allocation2 + $0x20] sm:$0xff]
        %v7340 = vld [vmem:[#allocation2 + $0x28] sm:$0xff]
        %v7341 = vld [vmem:[#allocation2 + $0x30] sm:$0xff]
        %v7342 = vld [vmem:[#allocation2 + $0x38] sm:$0xff]
        %v7343 = vld [vmem:[#allocation2 + $0x40] sm:$0xff]
        %v7344 = vld [vmem:[#allocation2 + $0x48] sm:$0xff]
        %v7345 = vld [vmem:[#allocation2 + $0x50] sm:$0xff]
        %v7346 = vld [vmem:[#allocation2 + $0x58] sm:$0xff]
        %v7347 = vld [vmem:[#allocation2 + $0x60] sm:$0xff]
        %v7348 = vld [vmem:[#allocation2 + $0x68] sm:$0xff]
        %v7349 = vld [vmem:[#allocation2 + $0x70] sm:$0xff]
        %v7350 = vld [vmem:[#allocation2 + $0x78] sm:$0xff]
        %v7351 = vld [vmem:[#allocation2 + $0x80] sm:$0xff]
        %v7352 = vld [vmem:[#allocation2 + $0x88] sm:$0xff]
        %v7353 = vld [vmem:[#allocation2 + $0x90] sm:$0xff]
        %v7354 = vld [vmem:[#allocation2 + $0x98] sm:$0xff]
        %v7355 = vld [vmem:[#allocation2 + $0xa0] sm:$0xff]
        %v7356 = vld [vmem:[#allocation2 + $0xa8] sm:$0xff]
        %v7357 = vld [vmem:[#allocation2 + $0xb0] sm:$0xff]
        %v7358 = vld [vmem:[#allocation2 + $0xb8] sm:$0xff]
        %v7359 = vadd.f32 %v7335, %v7241
        %v7360 = vadd.f32 %v7336, %v7244
        %v7361 = vadd.f32 %v7337, %v7249
        %v7362 = vadd.f32 %v7338, %v7252
        %v7363 = vadd.f32 %v7339, %v7257
        %v7364 = vadd.f32 %v7340, %v7260
        %v7365 = vadd.f32 %v7341, %v7265
        %v7366 = vadd.f32 %v7342, %v7268
        %v7367 = vadd.f32 %v7343, %v7273
        %v7368 = vadd.f32 %v7344, %v7276
        %v7369 = vadd.f32 %v7345, %v7281
        %v7370 = vadd.f32 %v7346, %v7284
        %v7371 = vadd.f32 %v7347, %v7289
        %v7372 = vadd.f32 %v7348, %v7292
        %v7373 = vadd.f32 %v7349, %v7297
        %v7374 = vadd.f32 %v7350, %v7300
        %v7375 = vadd.f32 %v7351, %v7305
        %v7376 = vadd.f32 %v7352, %v7308
        %v7377 = vadd.f32 %v7353, %v7313
        %v7378 = vadd.f32 %v7354, %v7316
        %v7379 = vadd.f32 %v7355, %v7321
        %v7380 = vadd.f32 %v7356, %v7324
        %v7381 = vadd.f32 %v7357, %v7329
        %v7382 = vadd.f32 %v7358, %v7332
        %7383 = vst [vmem:[#allocation2] sm:$0xff] %v7359
        %7384 = vst [vmem:[#allocation2 + $0x8] sm:$0xff] %v7360
        %7385 = vst [vmem:[#allocation2 + $0x10] sm:$0xff] %v7361
        %7386 = vst [vmem:[#allocation2 + $0x18] sm:$0xff] %v7362
        %7387 = vst [vmem:[#allocation2 + $0x20] sm:$0xff] %v7363
        %7388 = vst [vmem:[#allocation2 + $0x28] sm:$0xff] %v7364
        %7389 = vst [vmem:[#allocation2 + $0x30] sm:$0xff] %v7365
        %7390 = vst [vmem:[#allocation2 + $0x38] sm:$0xff] %v7366
        %7391 = vst [vmem:[#allocation2 + $0x40] sm:$0xff] %v7367
        %7392 = vst [vmem:[#allocation2 + $0x48] sm:$0xff] %v7368
        %7393 = vst [vmem:[#allocation2 + $0x50] sm:$0xff] %v7369
        %7394 = vst [vmem:[#allocation2 + $0x58] sm:$0xff] %v7370
        %7395 = vst [vmem:[#allocation2 + $0x60] sm:$0xff] %v7371
        %7396 = vst [vmem:[#allocation2 + $0x68] sm:$0xff] %v7372
        %7397 = vst [vmem:[#allocation2 + $0x70] sm:$0xff] %v7373
        %7398 = vst [vmem:[#allocation2 + $0x78] sm:$0xff] %v7374
        %7399 = vst [vmem:[#allocation2 + $0x80] sm:$0xff] %v7375
        %7400 = vst [vmem:[#allocation2 + $0x88] sm:$0xff] %v7376
        %7401 = vst [vmem:[#allocation2 + $0x90] sm:$0xff] %v7377
        %7402 = vst [vmem:[#allocation2 + $0x98] sm:$0xff] %v7378
        %7403 = vst [vmem:[#allocation2 + $0xa0] sm:$0xff] %v7379
        %7404 = vst [vmem:[#allocation2 + $0xa8] sm:$0xff] %v7380
        %7405 = vst [vmem:[#allocation2 + $0xb0] sm:$0xff] %v7381
        %7406 = vst [vmem:[#allocation2 + $0xb8] sm:$0xff] %v7382
        %s7407 = scalar_lea.vmem [#allocation8], 1408
        %v7408 = vld [vmem:[%s7407] sm:$0xf]
        %v7409 = vld [vmem:[%s7407 + $0x4] sm:$0xf]
        %v7410 = vld [vmem:[%s7407 + $0x8] sm:$0xf]
        %v7411 = vld [vmem:[%s7407 + $0xc] sm:$0xf]
        %v7412 = vld [vmem:[%s7407 + $0x10] sm:$0xf]
        %v7413 = vld [vmem:[%s7407 + $0x14] sm:$0xf]
        %v7414 = vld [vmem:[%s7407 + $0x18] sm:$0xf]
        %v7415 = vld [vmem:[%s7407 + $0x1c] sm:$0xf]
        %v7416 = vld [vmem:[%s7407 + $0x20] sm:$0xf]
        %v7417 = vld [vmem:[%s7407 + $0x24] sm:$0xf]
        %v7418 = vld [vmem:[%s7407 + $0x28] sm:$0xf]
        %v7419 = vld [vmem:[%s7407 + $0x2c] sm:$0xf]
        %v7420 = vld [vmem:[%s7407 + $0x30] sm:$0xf]
        %v7421 = vld [vmem:[%s7407 + $0x34] sm:$0xf]
        %v7422 = vld [vmem:[%s7407 + $0x38] sm:$0xf]
        %v7423 = vld [vmem:[%s7407 + $0x3c] sm:$0xf]
        %v7424 = vrot.slane %v6591, 4
        %v7425 = vrot.slane %v5784, 5
        %v7426 = vor.u32 %v7424, %v7425
        %v7427 = vsel %vm2414, %v4970, %v7426
        %v7428 = vrot.slane %v6599, 4
        %v7429 = vrot.slane %v6595, 5
        %v7430 = vor.u32 %v7428, %v7429
        %v7431 = vsel %vm2414, %v7426, %v7430
        %v7432 = vshrl.u32 %v1178, 16
        %v7434 = vrot.slane %v7432, 4
        %v7435 = vrot.slane %v6603, 5
        %v7436 = vor.u32 %v7434, %v7435
        %v7437 = vsel %vm2414, %v7430, %v7436
        %v7457 = vunpack.c.l.b16 %v7408
        %v7458 = vunpack.c.l.b16 %v7409
        %v7459 = vunpack.c.l.b16 %v7410
        %v7460 = vunpack.c.l.b16 %v7411
        %v7461 = vunpack.c.l.b16 %v7412
        %v7462 = vunpack.c.l.b16 %v7413
        %v7463 = vunpack.c.l.b16 %v7414
        %v7464 = vunpack.c.l.b16 %v7415
        %v7465 = vunpack.c.l.b16 %v7416
        %v7466 = vunpack.c.l.b16 %v7417
        %v7467 = vunpack.c.l.b16 %v7418
        %v7468 = vunpack.c.l.b16 %v7419
        %v7469 = vunpack.c.l.b16 %v7420
        %v7470 = vunpack.c.l.b16 %v7421
        %v7471 = vunpack.c.l.b16 %v7422
        %v7472 = vunpack.c.l.b16 %v7423
        %v7473 = vpack.c.b16 %v7458, %v7457
        %v7474 = vpack.c.b16 %v7460, %v7459
        %v7475 = vpack.c.b16 %v7462, %v7461
        %v7476 = vpack.c.b16 %v7464, %v7463
        %v7477 = vpack.c.b16 %v7466, %v7465
        %v7478 = vpack.c.b16 %v7468, %v7467
        %v7479 = vpack.c.b16 %v7470, %v7469
        %v7480 = vpack.c.b16 %v7472, %v7471
        %7489 = vmatprep.subr.bf16.mxu0 0
        %7490 = vmatpush1.bf16.msra.mxu0 %v7480
        %7491 = vmatprep.subr.bf16.mxu0 0
        %7492 = vmatpush1.bf16.msra.mxu0 %v7479
        %7493 = vmatprep.subr.bf16.mxu0 0
        %7494 = vmatpush1.bf16.msra.mxu0 %v7478
        %7495 = vmatprep.subr.bf16.mxu0 0
        %7496 = vmatpush1.bf16.msra.mxu0 %v7477
        %7497 = vmatprep.subr.bf16.mxu0 0
        %7498 = vmatpush1.bf16.msra.mxu0 %v7476
        %7499 = vmatprep.subr.bf16.mxu0 0
        %7500 = vmatpush1.bf16.msra.mxu0 %v7475
        %7501 = vmatprep.subr.bf16.mxu0 0
        %7502 = vmatpush1.bf16.msra.mxu0 %v7474
        %7503 = vmatprep.subr.bf16.mxu0 0
        %7504 = vmatpush1.bf16.msra.mxu0 %v7473
        %7505 = vmatprep.subr.bf16.mxu0 0
        %7506 = vmatpush2.bf16.msra.mxu0 0
        %7507 = vmatprep.subr.bf16.mxu0 0
        %7508 = vmatpush2.bf16.msra.mxu0 0
        %7509 = vmatprep.subr.bf16.mxu0 0
        %7510 = vmatpush2.bf16.msra.mxu0 0
        %7511 = vmatprep.subr.bf16.mxu0 0
        %7512 = vmatpush2.bf16.msra.mxu0 0
        %7513 = vmatprep.subr.bf16.mxu0 0
        %7514 = vmatpush2.bf16.msra.mxu0 0
        %7515 = vmatprep.subr.bf16.mxu0 0
        %7516 = vmatpush2.bf16.msra.mxu0 0
        %7517 = vmatprep.subr.bf16.mxu0 0
        %7518 = vmatpush2.bf16.msra.mxu0 0
        %7519 = vmatprep.subr.bf16.mxu0 0
        %7520 = vmatpush2.bf16.msra.mxu0 0
        %7521 = vmatprep.mubr.bf16.mxu0 0
        %7522 = vmatmul.mubr.bf16.gmra.mxu0 %v2445
        %v7523 = vpop.f32.mrf.mxu0
        %v7524 = vadd.f32 0.0, %v7523
        %v7525 = vpop.f32.mrf.mxu0
        %v7526 = vpop.f32.mrf.mxu0
        %v7527 = vadd.f32 0.0, %v7526
        %v7528 = vpop.f32.mrf.mxu0
        %7529 = vmatprep.mubr.bf16.mxu0 0
        %7530 = vmatmul.mubr.bf16.gmra.mxu0 %v2449
        %v7531 = vpop.f32.mrf.mxu0
        %v7532 = vadd.f32 0.0, %v7531
        %v7533 = vpop.f32.mrf.mxu0
        %v7534 = vpop.f32.mrf.mxu0
        %v7535 = vadd.f32 0.0, %v7534
        %v7536 = vpop.f32.mrf.mxu0
        %7537 = vmatprep.mubr.bf16.mxu0 0
        %7538 = vmatmul.mubr.bf16.gmra.mxu0 %v2453
        %v7539 = vpop.f32.mrf.mxu0
        %v7540 = vadd.f32 0.0, %v7539
        %v7541 = vpop.f32.mrf.mxu0
        %v7542 = vpop.f32.mrf.mxu0
        %v7543 = vadd.f32 0.0, %v7542
        %v7544 = vpop.f32.mrf.mxu0
        %7545 = vmatprep.mubr.bf16.mxu0 0
        %7546 = vmatmul.mubr.bf16.gmra.mxu0 %v2457
        %v7547 = vpop.f32.mrf.mxu0
        %v7548 = vadd.f32 0.0, %v7547
        %v7549 = vpop.f32.mrf.mxu0
        %v7550 = vpop.f32.mrf.mxu0
        %v7551 = vadd.f32 0.0, %v7550
        %v7552 = vpop.f32.mrf.mxu0
        %7553 = vmatprep.mubr.bf16.mxu0 0
        %7554 = vmatmul.mubr.bf16.gmra.mxu0 %v2461
        %v7555 = vpop.f32.mrf.mxu0
        %v7556 = vadd.f32 0.0, %v7555
        %v7557 = vpop.f32.mrf.mxu0
        %v7558 = vpop.f32.mrf.mxu0
        %v7559 = vadd.f32 0.0, %v7558
        %v7560 = vpop.f32.mrf.mxu0
        %7561 = vmatprep.mubr.bf16.mxu0 0
        %7562 = vmatmul.mubr.bf16.gmra.mxu0 %v2467
        %v7563 = vpop.f32.mrf.mxu0
        %v7564 = vadd.f32 0.0, %v7563
        %v7565 = vpop.f32.mrf.mxu0
        %v7566 = vpop.f32.mrf.mxu0
        %v7567 = vadd.f32 0.0, %v7566
        %v7568 = vpop.f32.mrf.mxu0
        %7569 = vmatprep.mubr.bf16.mxu0 0
        %7570 = vmatmul.mubr.bf16.gmra.mxu0 %v4961
        %v7571 = vpop.f32.mrf.mxu0
        %v7572 = vadd.f32 0.0, %v7571
        %v7573 = vpop.f32.mrf.mxu0
        %v7574 = vpop.f32.mrf.mxu0
        %v7575 = vadd.f32 0.0, %v7574
        %v7576 = vpop.f32.mrf.mxu0
        %7577 = vmatprep.mubr.bf16.mxu0 0
        %7578 = vmatmul.mubr.bf16.gmra.mxu0 %v4965
        %v7579 = vpop.f32.mrf.mxu0
        %v7580 = vadd.f32 0.0, %v7579
        %v7581 = vpop.f32.mrf.mxu0
        %v7582 = vpop.f32.mrf.mxu0
        %v7583 = vadd.f32 0.0, %v7582
        %v7584 = vpop.f32.mrf.mxu0
        %7585 = vmatprep.mubr.bf16.mxu0 0
        %7586 = vmatmul.mubr.bf16.gmra.mxu0 %v4971
        %v7587 = vpop.f32.mrf.mxu0
        %v7588 = vadd.f32 0.0, %v7587
        %v7589 = vpop.f32.mrf.mxu0
        %v7590 = vpop.f32.mrf.mxu0
        %v7591 = vadd.f32 0.0, %v7590
        %v7592 = vpop.f32.mrf.mxu0
        %7593 = vmatprep.mubr.bf16.mxu0 0
        %7594 = vmatmul.mubr.bf16.gmra.mxu0 %v7427
        %v7595 = vpop.f32.mrf.mxu0
        %v7596 = vadd.f32 0.0, %v7595
        %v7597 = vpop.f32.mrf.mxu0
        %v7598 = vpop.f32.mrf.mxu0
        %v7599 = vadd.f32 0.0, %v7598
        %v7600 = vpop.f32.mrf.mxu0
        %7601 = vmatprep.mubr.bf16.mxu0 0
        %7602 = vmatmul.mubr.bf16.gmra.mxu0 %v7431
        %v7603 = vpop.f32.mrf.mxu0
        %v7604 = vadd.f32 0.0, %v7603
        %v7605 = vpop.f32.mrf.mxu0
        %v7606 = vpop.f32.mrf.mxu0
        %v7607 = vadd.f32 0.0, %v7606
        %v7608 = vpop.f32.mrf.mxu0
        %7609 = vmatprep.mubr.bf16.mxu0 0
        %7610 = vmatmul.mubr.bf16.gmra.mxu0 %v7437
        %v7611 = vpop.f32.mrf.mxu0
        %v7612 = vadd.f32 0.0, %v7611
        %v7613 = vpop.f32.mrf.mxu0
        %v7614 = vpop.f32.mrf.mxu0
        %v7615 = vadd.f32 0.0, %v7614
        %v7616 = vpop.f32.mrf.mxu0
        %7617 = vdwg.mxu0
        %v7618 = vld [vmem:[#allocation2] sm:$0xff]
        %v7619 = vld [vmem:[#allocation2 + $0x8] sm:$0xff]
        %v7620 = vld [vmem:[#allocation2 + $0x10] sm:$0xff]
        %v7621 = vld [vmem:[#allocation2 + $0x18] sm:$0xff]
        %v7622 = vld [vmem:[#allocation2 + $0x20] sm:$0xff]
        %v7623 = vld [vmem:[#allocation2 + $0x28] sm:$0xff]
        %v7624 = vld [vmem:[#allocation2 + $0x30] sm:$0xff]
        %v7625 = vld [vmem:[#allocation2 + $0x38] sm:$0xff]
        %v7626 = vld [vmem:[#allocation2 + $0x40] sm:$0xff]
        %v7627 = vld [vmem:[#allocation2 + $0x48] sm:$0xff]
        %v7628 = vld [vmem:[#allocation2 + $0x50] sm:$0xff]
        %v7629 = vld [vmem:[#allocation2 + $0x58] sm:$0xff]
        %v7630 = vld [vmem:[#allocation2 + $0x60] sm:$0xff]
        %v7631 = vld [vmem:[#allocation2 + $0x68] sm:$0xff]
        %v7632 = vld [vmem:[#allocation2 + $0x70] sm:$0xff]
        %v7633 = vld [vmem:[#allocation2 + $0x78] sm:$0xff]
        %v7634 = vld [vmem:[#allocation2 + $0x80] sm:$0xff]
        %v7635 = vld [vmem:[#allocation2 + $0x88] sm:$0xff]
        %v7636 = vld [vmem:[#allocation2 + $0x90] sm:$0xff]
        %v7637 = vld [vmem:[#allocation2 + $0x98] sm:$0xff]
        %v7638 = vld [vmem:[#allocation2 + $0xa0] sm:$0xff]
        %v7639 = vld [vmem:[#allocation2 + $0xa8] sm:$0xff]
        %v7640 = vld [vmem:[#allocation2 + $0xb0] sm:$0xff]
        %v7641 = vld [vmem:[#allocation2 + $0xb8] sm:$0xff]
        %v7642 = vadd.f32 %v7618, %v7524
        %v7643 = vadd.f32 %v7619, %v7527
        %v7644 = vadd.f32 %v7620, %v7532
        %v7645 = vadd.f32 %v7621, %v7535
        %v7646 = vadd.f32 %v7622, %v7540
        %v7647 = vadd.f32 %v7623, %v7543
        %v7648 = vadd.f32 %v7624, %v7548
        %v7649 = vadd.f32 %v7625, %v7551
        %v7650 = vadd.f32 %v7626, %v7556
        %v7651 = vadd.f32 %v7627, %v7559
        %v7652 = vadd.f32 %v7628, %v7564
        %v7653 = vadd.f32 %v7629, %v7567
        %v7654 = vadd.f32 %v7630, %v7572
        %v7655 = vadd.f32 %v7631, %v7575
        %v7656 = vadd.f32 %v7632, %v7580
        %v7657 = vadd.f32 %v7633, %v7583
        %v7658 = vadd.f32 %v7634, %v7588
        %v7659 = vadd.f32 %v7635, %v7591
        %v7660 = vadd.f32 %v7636, %v7596
        %v7661 = vadd.f32 %v7637, %v7599
        %v7662 = vadd.f32 %v7638, %v7604
        %v7663 = vadd.f32 %v7639, %v7607
        %v7664 = vadd.f32 %v7640, %v7612
        %v7665 = vadd.f32 %v7641, %v7615
        %7666 = vst [vmem:[#allocation2] sm:$0xff] %v7642
        %7667 = vst [vmem:[#allocation2 + $0x8] sm:$0xff] %v7643
        %7668 = vst [vmem:[#allocation2 + $0x10] sm:$0xff] %v7644
        %7669 = vst [vmem:[#allocation2 + $0x18] sm:$0xff] %v7645
        %7670 = vst [vmem:[#allocation2 + $0x20] sm:$0xff] %v7646
        %7671 = vst [vmem:[#allocation2 + $0x28] sm:$0xff] %v7647
        %7672 = vst [vmem:[#allocation2 + $0x30] sm:$0xff] %v7648
        %7673 = vst [vmem:[#allocation2 + $0x38] sm:$0xff] %v7649
        %7674 = vst [vmem:[#allocation2 + $0x40] sm:$0xff] %v7650
        %7675 = vst [vmem:[#allocation2 + $0x48] sm:$0xff] %v7651
        %7676 = vst [vmem:[#allocation2 + $0x50] sm:$0xff] %v7652
        %7677 = vst [vmem:[#allocation2 + $0x58] sm:$0xff] %v7653
        %7678 = vst [vmem:[#allocation2 + $0x60] sm:$0xff] %v7654
        %7679 = vst [vmem:[#allocation2 + $0x68] sm:$0xff] %v7655
        %7680 = vst [vmem:[#allocation2 + $0x70] sm:$0xff] %v7656
        %7681 = vst [vmem:[#allocation2 + $0x78] sm:$0xff] %v7657
        %7682 = vst [vmem:[#allocation2 + $0x80] sm:$0xff] %v7658
        %7683 = vst [vmem:[#allocation2 + $0x88] sm:$0xff] %v7659
        %7684 = vst [vmem:[#allocation2 + $0x90] sm:$0xff] %v7660
        %7685 = vst [vmem:[#allocation2 + $0x98] sm:$0xff] %v7661
        %7686 = vst [vmem:[#allocation2 + $0xa0] sm:$0xff] %v7662
        %7687 = vst [vmem:[#allocation2 + $0xa8] sm:$0xff] %v7663
        %7688 = vst [vmem:[#allocation2 + $0xb0] sm:$0xff] %v7664
        %7689 = vst [vmem:[#allocation2 + $0xb8] sm:$0xff] %v7665
        %s7690 = scalar_lea.vmem [#allocation8], 1472
        %v7691 = vld [vmem:[%s7690] sm:$0xf]
        %v7692 = vld [vmem:[%s7690 + $0x4] sm:$0xf]
        %v7693 = vld [vmem:[%s7690 + $0x8] sm:$0xf]
        %v7694 = vld [vmem:[%s7690 + $0xc] sm:$0xf]
        %v7695 = vld [vmem:[%s7690 + $0x10] sm:$0xf]
        %v7696 = vld [vmem:[%s7690 + $0x14] sm:$0xf]
        %v7697 = vld [vmem:[%s7690 + $0x18] sm:$0xf]
        %v7698 = vld [vmem:[%s7690 + $0x1c] sm:$0xf]
        %v7699 = vld [vmem:[%s7690 + $0x20] sm:$0xf]
        %v7700 = vld [vmem:[%s7690 + $0x24] sm:$0xf]
        %v7701 = vld [vmem:[%s7690 + $0x28] sm:$0xf]
        %v7702 = vld [vmem:[%s7690 + $0x2c] sm:$0xf]
        %v7703 = vld [vmem:[%s7690 + $0x30] sm:$0xf]
        %v7704 = vld [vmem:[%s7690 + $0x34] sm:$0xf]
        %v7705 = vld [vmem:[%s7690 + $0x38] sm:$0xf]
        %v7706 = vld [vmem:[%s7690 + $0x3c] sm:$0xf]
        %v7707 = vrot.slane %v1176, 5
        %v7708 = vsel %vm2746, %v5245, %v7707
        %v7709 = vrot.slane %v1177, 5
        %v7710 = vsel %vm2746, %v7707, %v7709
        %v7711 = vrot.slane %v1178, 5
        %v7712 = vsel %vm2746, %v7709, %v7711
        %v7732 = vunpack.c.l.b16 %v7691
        %v7733 = vunpack.c.l.b16 %v7692
        %v7734 = vunpack.c.l.b16 %v7693
        %v7735 = vunpack.c.l.b16 %v7694
        %v7736 = vunpack.c.l.b16 %v7695
        %v7737 = vunpack.c.l.b16 %v7696
        %v7738 = vunpack.c.l.b16 %v7697
        %v7739 = vunpack.c.l.b16 %v7698
        %v7740 = vunpack.c.l.b16 %v7699
        %v7741 = vunpack.c.l.b16 %v7700
        %v7742 = vunpack.c.l.b16 %v7701
        %v7743 = vunpack.c.l.b16 %v7702
        %v7744 = vunpack.c.l.b16 %v7703
        %v7745 = vunpack.c.l.b16 %v7704
        %v7746 = vunpack.c.l.b16 %v7705
        %v7747 = vunpack.c.l.b16 %v7706
        %v7748 = vpack.c.b16 %v7733, %v7732
        %v7749 = vpack.c.b16 %v7735, %v7734
        %v7750 = vpack.c.b16 %v7737, %v7736
        %v7751 = vpack.c.b16 %v7739, %v7738
        %v7752 = vpack.c.b16 %v7741, %v7740
        %v7753 = vpack.c.b16 %v7743, %v7742
        %v7754 = vpack.c.b16 %v7745, %v7744
        %v7755 = vpack.c.b16 %v7747, %v7746
        %7764 = vmatprep.subr.bf16.mxu0 0
        %7765 = vmatpush1.bf16.msra.mxu0 %v7755
        %7766 = vmatprep.subr.bf16.mxu0 0
        %7767 = vmatpush1.bf16.msra.mxu0 %v7754
        %7768 = vmatprep.subr.bf16.mxu0 0
        %7769 = vmatpush1.bf16.msra.mxu0 %v7753
        %7770 = vmatprep.subr.bf16.mxu0 0
        %7771 = vmatpush1.bf16.msra.mxu0 %v7752
        %7772 = vmatprep.subr.bf16.mxu0 0
        %7773 = vmatpush1.bf16.msra.mxu0 %v7751
        %7774 = vmatprep.subr.bf16.mxu0 0
        %7775 = vmatpush1.bf16.msra.mxu0 %v7750
        %7776 = vmatprep.subr.bf16.mxu0 0
        %7777 = vmatpush1.bf16.msra.mxu0 %v7749
        %7778 = vmatprep.subr.bf16.mxu0 0
        %7779 = vmatpush1.bf16.msra.mxu0 %v7748
        %7780 = vmatprep.subr.bf16.mxu0 0
        %7781 = vmatpush2.bf16.msra.mxu0 0
        %7782 = vmatprep.subr.bf16.mxu0 0
        %7783 = vmatpush2.bf16.msra.mxu0 0
        %7784 = vmatprep.subr.bf16.mxu0 0
        %7785 = vmatpush2.bf16.msra.mxu0 0
        %7786 = vmatprep.subr.bf16.mxu0 0
        %7787 = vmatpush2.bf16.msra.mxu0 0
        %7788 = vmatprep.subr.bf16.mxu0 0
        %7789 = vmatpush2.bf16.msra.mxu0 0
        %7790 = vmatprep.subr.bf16.mxu0 0
        %7791 = vmatpush2.bf16.msra.mxu0 0
        %7792 = vmatprep.subr.bf16.mxu0 0
        %7793 = vmatpush2.bf16.msra.mxu0 0
        %7794 = vmatprep.subr.bf16.mxu0 0
        %7795 = vmatpush2.bf16.msra.mxu0 0
        %7796 = vmatprep.mubr.bf16.mxu0 0
        %7797 = vmatmul.mubr.bf16.gmra.mxu0 %v2761
        %v7798 = vpop.f32.mrf.mxu0
        %v7799 = vadd.f32 0.0, %v7798
        %v7800 = vpop.f32.mrf.mxu0
        %v7801 = vpop.f32.mrf.mxu0
        %v7802 = vadd.f32 0.0, %v7801
        %v7803 = vpop.f32.mrf.mxu0
        %7804 = vmatprep.mubr.bf16.mxu0 0
        %7805 = vmatmul.mubr.bf16.gmra.mxu0 %v2763
        %v7806 = vpop.f32.mrf.mxu0
        %v7807 = vadd.f32 0.0, %v7806
        %v7808 = vpop.f32.mrf.mxu0
        %v7809 = vpop.f32.mrf.mxu0
        %v7810 = vadd.f32 0.0, %v7809
        %v7811 = vpop.f32.mrf.mxu0
        %7812 = vmatprep.mubr.bf16.mxu0 0
        %7813 = vmatmul.mubr.bf16.gmra.mxu0 %v2765
        %v7814 = vpop.f32.mrf.mxu0
        %v7815 = vadd.f32 0.0, %v7814
        %v7816 = vpop.f32.mrf.mxu0
        %v7817 = vpop.f32.mrf.mxu0
        %v7818 = vadd.f32 0.0, %v7817
        %v7819 = vpop.f32.mrf.mxu0
        %7820 = vmatprep.mubr.bf16.mxu0 0
        %7821 = vmatmul.mubr.bf16.gmra.mxu0 %v2767
        %v7822 = vpop.f32.mrf.mxu0
        %v7823 = vadd.f32 0.0, %v7822
        %v7824 = vpop.f32.mrf.mxu0
        %v7825 = vpop.f32.mrf.mxu0
        %v7826 = vadd.f32 0.0, %v7825
        %v7827 = vpop.f32.mrf.mxu0
        %7828 = vmatprep.mubr.bf16.mxu0 0
        %7829 = vmatmul.mubr.bf16.gmra.mxu0 %v2769
        %v7830 = vpop.f32.mrf.mxu0
        %v7831 = vadd.f32 0.0, %v7830
        %v7832 = vpop.f32.mrf.mxu0
        %v7833 = vpop.f32.mrf.mxu0
        %v7834 = vadd.f32 0.0, %v7833
        %v7835 = vpop.f32.mrf.mxu0
        %7836 = vmatprep.mubr.bf16.mxu0 0
        %7837 = vmatmul.mubr.bf16.gmra.mxu0 %v2771
        %v7838 = vpop.f32.mrf.mxu0
        %v7839 = vadd.f32 0.0, %v7838
        %v7840 = vpop.f32.mrf.mxu0
        %v7841 = vpop.f32.mrf.mxu0
        %v7842 = vadd.f32 0.0, %v7841
        %v7843 = vpop.f32.mrf.mxu0
        %7844 = vmatprep.mubr.bf16.mxu0 0
        %7845 = vmatmul.mubr.bf16.gmra.mxu0 %v5242
        %v7846 = vpop.f32.mrf.mxu0
        %v7847 = vadd.f32 0.0, %v7846
        %v7848 = vpop.f32.mrf.mxu0
        %v7849 = vpop.f32.mrf.mxu0
        %v7850 = vadd.f32 0.0, %v7849
        %v7851 = vpop.f32.mrf.mxu0
        %7852 = vmatprep.mubr.bf16.mxu0 0
        %7853 = vmatmul.mubr.bf16.gmra.mxu0 %v5244
        %v7854 = vpop.f32.mrf.mxu0
        %v7855 = vadd.f32 0.0, %v7854
        %v7856 = vpop.f32.mrf.mxu0
        %v7857 = vpop.f32.mrf.mxu0
        %v7858 = vadd.f32 0.0, %v7857
        %v7859 = vpop.f32.mrf.mxu0
        %7860 = vmatprep.mubr.bf16.mxu0 0
        %7861 = vmatmul.mubr.bf16.gmra.mxu0 %v5246
        %v7862 = vpop.f32.mrf.mxu0
        %v7863 = vadd.f32 0.0, %v7862
        %v7864 = vpop.f32.mrf.mxu0
        %v7865 = vpop.f32.mrf.mxu0
        %v7866 = vadd.f32 0.0, %v7865
        %v7867 = vpop.f32.mrf.mxu0
        %7868 = vmatprep.mubr.bf16.mxu0 0
        %7869 = vmatmul.mubr.bf16.gmra.mxu0 %v7708
        %v7870 = vpop.f32.mrf.mxu0
        %v7871 = vadd.f32 0.0, %v7870
        %v7872 = vpop.f32.mrf.mxu0
        %v7873 = vpop.f32.mrf.mxu0
        %v7874 = vadd.f32 0.0, %v7873
        %v7875 = vpop.f32.mrf.mxu0
        %7876 = vmatprep.mubr.bf16.mxu0 0
        %7877 = vmatmul.mubr.bf16.gmra.mxu0 %v7710
        %v7878 = vpop.f32.mrf.mxu0
        %v7879 = vadd.f32 0.0, %v7878
        %v7880 = vpop.f32.mrf.mxu0
        %v7881 = vpop.f32.mrf.mxu0
        %v7882 = vadd.f32 0.0, %v7881
        %v7883 = vpop.f32.mrf.mxu0
        %7884 = vmatprep.mubr.bf16.mxu0 0
        %7885 = vmatmul.mubr.bf16.gmra.mxu0 %v7712
        %v7886 = vpop.f32.mrf.mxu0
        %v7887 = vadd.f32 0.0, %v7886
        %v7888 = vpop.f32.mrf.mxu0
        %v7889 = vpop.f32.mrf.mxu0
        %v7890 = vadd.f32 0.0, %v7889
        %v7891 = vpop.f32.mrf.mxu0
        %7892 = vdwg.mxu0
        %v7893 = vld [vmem:[#allocation2] sm:$0xff]
        %v7894 = vld [vmem:[#allocation2 + $0x8] sm:$0xff]
        %v7895 = vld [vmem:[#allocation2 + $0x10] sm:$0xff]
        %v7896 = vld [vmem:[#allocation2 + $0x18] sm:$0xff]
        %v7897 = vld [vmem:[#allocation2 + $0x20] sm:$0xff]
        %v7898 = vld [vmem:[#allocation2 + $0x28] sm:$0xff]
        %v7899 = vld [vmem:[#allocation2 + $0x30] sm:$0xff]
        %v7900 = vld [vmem:[#allocation2 + $0x38] sm:$0xff]
        %v7901 = vld [vmem:[#allocation2 + $0x40] sm:$0xff]
        %v7902 = vld [vmem:[#allocation2 + $0x48] sm:$0xff]
        %v7903 = vld [vmem:[#allocation2 + $0x50] sm:$0xff]
        %v7904 = vld [vmem:[#allocation2 + $0x58] sm:$0xff]
        %v7905 = vld [vmem:[#allocation2 + $0x60] sm:$0xff]
        %v7906 = vld [vmem:[#allocation2 + $0x68] sm:$0xff]
        %v7907 = vld [vmem:[#allocation2 + $0x70] sm:$0xff]
        %v7908 = vld [vmem:[#allocation2 + $0x78] sm:$0xff]
        %v7909 = vld [vmem:[#allocation2 + $0x80] sm:$0xff]
        %v7910 = vld [vmem:[#allocation2 + $0x88] sm:$0xff]
        %v7911 = vld [vmem:[#allocation2 + $0x90] sm:$0xff]
        %v7912 = vld [vmem:[#allocation2 + $0x98] sm:$0xff]
        %v7913 = vld [vmem:[#allocation2 + $0xa0] sm:$0xff]
        %v7914 = vld [vmem:[#allocation2 + $0xa8] sm:$0xff]
        %v7915 = vld [vmem:[#allocation2 + $0xb0] sm:$0xff]
        %v7916 = vld [vmem:[#allocation2 + $0xb8] sm:$0xff]
        %v7917 = vadd.f32 %v7893, %v7799
        %v7918 = vadd.f32 %v7894, %v7802
        %v7919 = vadd.f32 %v7895, %v7807
        %v7920 = vadd.f32 %v7896, %v7810
        %v7921 = vadd.f32 %v7897, %v7815
        %v7922 = vadd.f32 %v7898, %v7818
        %v7923 = vadd.f32 %v7899, %v7823
        %v7924 = vadd.f32 %v7900, %v7826
        %v7925 = vadd.f32 %v7901, %v7831
        %v7926 = vadd.f32 %v7902, %v7834
        %v7927 = vadd.f32 %v7903, %v7839
        %v7928 = vadd.f32 %v7904, %v7842
        %v7929 = vadd.f32 %v7905, %v7847
        %v7930 = vadd.f32 %v7906, %v7850
        %v7931 = vadd.f32 %v7907, %v7855
        %v7932 = vadd.f32 %v7908, %v7858
        %v7933 = vadd.f32 %v7909, %v7863
        %v7934 = vadd.f32 %v7910, %v7866
        %v7935 = vadd.f32 %v7911, %v7871
        %v7936 = vadd.f32 %v7912, %v7874
        %v7937 = vadd.f32 %v7913, %v7879
        %v7938 = vadd.f32 %v7914, %v7882
        %v7939 = vadd.f32 %v7915, %v7887
        %v7940 = vadd.f32 %v7916, %v7890
        %7941 = vst [vmem:[#allocation2] sm:$0xff] %v7917
        %7942 = vst [vmem:[#allocation2 + $0x8] sm:$0xff] %v7918
        %7943 = vst [vmem:[#allocation2 + $0x10] sm:$0xff] %v7919
        %7944 = vst [vmem:[#allocation2 + $0x18] sm:$0xff] %v7920
        %7945 = vst [vmem:[#allocation2 + $0x20] sm:$0xff] %v7921
        %7946 = vst [vmem:[#allocation2 + $0x28] sm:$0xff] %v7922
        %7947 = vst [vmem:[#allocation2 + $0x30] sm:$0xff] %v7923
        %7948 = vst [vmem:[#allocation2 + $0x38] sm:$0xff] %v7924
        %7949 = vst [vmem:[#allocation2 + $0x40] sm:$0xff] %v7925
        %7950 = vst [vmem:[#allocation2 + $0x48] sm:$0xff] %v7926
        %7951 = vst [vmem:[#allocation2 + $0x50] sm:$0xff] %v7927
        %7952 = vst [vmem:[#allocation2 + $0x58] sm:$0xff] %v7928
        %7953 = vst [vmem:[#allocation2 + $0x60] sm:$0xff] %v7929
        %7954 = vst [vmem:[#allocation2 + $0x68] sm:$0xff] %v7930
        %7955 = vst [vmem:[#allocation2 + $0x70] sm:$0xff] %v7931
        %7956 = vst [vmem:[#allocation2 + $0x78] sm:$0xff] %v7932
        %7957 = vst [vmem:[#allocation2 + $0x80] sm:$0xff] %v7933
        %7958 = vst [vmem:[#allocation2 + $0x88] sm:$0xff] %v7934
        %7959 = vst [vmem:[#allocation2 + $0x90] sm:$0xff] %v7935
        %7960 = vst [vmem:[#allocation2 + $0x98] sm:$0xff] %v7936
        %7961 = vst [vmem:[#allocation2 + $0xa0] sm:$0xff] %v7937
        %7962 = vst [vmem:[#allocation2 + $0xa8] sm:$0xff] %v7938
        %7963 = vst [vmem:[#allocation2 + $0xb0] sm:$0xff] %v7939
        %7964 = vst [vmem:[#allocation2 + $0xb8] sm:$0xff] %v7940
        %s7965 = scalar_lea.vmem [#allocation8], 1536
        %v7966 = vld [vmem:[%s7965] sm:$0xf]
        %v7967 = vld [vmem:[%s7965 + $0x4] sm:$0xf]
        %v7968 = vld [vmem:[%s7965 + $0x8] sm:$0xf]
        %v7969 = vld [vmem:[%s7965 + $0xc] sm:$0xf]
        %v7970 = vld [vmem:[%s7965 + $0x10] sm:$0xf]
        %v7971 = vld [vmem:[%s7965 + $0x14] sm:$0xf]
        %v7972 = vld [vmem:[%s7965 + $0x18] sm:$0xf]
        %v7973 = vld [vmem:[%s7965 + $0x1c] sm:$0xf]
        %v7974 = vld [vmem:[%s7965 + $0x20] sm:$0xf]
        %v7975 = vld [vmem:[%s7965 + $0x24] sm:$0xf]
        %v7976 = vld [vmem:[%s7965 + $0x28] sm:$0xf]
        %v7977 = vld [vmem:[%s7965 + $0x2c] sm:$0xf]
        %v7978 = vld [vmem:[%s7965 + $0x30] sm:$0xf]
        %v7979 = vld [vmem:[%s7965 + $0x34] sm:$0xf]
        %v7980 = vld [vmem:[%s7965 + $0x38] sm:$0xf]
        %v7981 = vld [vmem:[%s7965 + $0x3c] sm:$0xf]
        %v7998 = vunpack.c.l.b16 %v7966
        %v7999 = vunpack.c.l.b16 %v7967
        %v8000 = vunpack.c.l.b16 %v7968
        %v8001 = vunpack.c.l.b16 %v7969
        %v8002 = vunpack.c.l.b16 %v7970
        %v8003 = vunpack.c.l.b16 %v7971
        %v8004 = vunpack.c.l.b16 %v7972
        %v8005 = vunpack.c.l.b16 %v7973
        %v8006 = vunpack.c.l.b16 %v7974
        %v8007 = vunpack.c.l.b16 %v7975
        %v8008 = vunpack.c.l.b16 %v7976
        %v8009 = vunpack.c.l.b16 %v7977
        %v8010 = vunpack.c.l.b16 %v7978
        %v8011 = vunpack.c.l.b16 %v7979
        %v8012 = vunpack.c.l.b16 %v7980
        %v8013 = vunpack.c.l.b16 %v7981
        %v8014 = vpack.c.b16 %v7999, %v7998
        %v8015 = vpack.c.b16 %v8001, %v8000
        %v8016 = vpack.c.b16 %v8003, %v8002
        %v8017 = vpack.c.b16 %v8005, %v8004
        %v8018 = vpack.c.b16 %v8007, %v8006
        %v8019 = vpack.c.b16 %v8009, %v8008
        %v8020 = vpack.c.b16 %v8011, %v8010
        %v8021 = vpack.c.b16 %v8013, %v8012
        %8030 = vmatprep.subr.bf16.mxu0 0
        %8031 = vmatpush1.bf16.msra.mxu0 %v8021
        %8032 = vmatprep.subr.bf16.mxu0 0
        %8033 = vmatpush1.bf16.msra.mxu0 %v8020
        %8034 = vmatprep.subr.bf16.mxu0 0
        %8035 = vmatpush1.bf16.msra.mxu0 %v8019
        %8036 = vmatprep.subr.bf16.mxu0 0
        %8037 = vmatpush1.bf16.msra.mxu0 %v8018
        %8038 = vmatprep.subr.bf16.mxu0 0
        %8039 = vmatpush1.bf16.msra.mxu0 %v8017
        %8040 = vmatprep.subr.bf16.mxu0 0
        %8041 = vmatpush1.bf16.msra.mxu0 %v8016
        %8042 = vmatprep.subr.bf16.mxu0 0
        %8043 = vmatpush1.bf16.msra.mxu0 %v8015
        %8044 = vmatprep.subr.bf16.mxu0 0
        %8045 = vmatpush1.bf16.msra.mxu0 %v8014
        %8046 = vmatprep.subr.bf16.mxu0 0
        %8047 = vmatpush2.bf16.msra.mxu0 0
        %8048 = vmatprep.subr.bf16.mxu0 0
        %8049 = vmatpush2.bf16.msra.mxu0 0
        %8050 = vmatprep.subr.bf16.mxu0 0
        %8051 = vmatpush2.bf16.msra.mxu0 0
        %8052 = vmatprep.subr.bf16.mxu0 0
        %8053 = vmatpush2.bf16.msra.mxu0 0
        %8054 = vmatprep.subr.bf16.mxu0 0
        %8055 = vmatpush2.bf16.msra.mxu0 0
        %8056 = vmatprep.subr.bf16.mxu0 0
        %8057 = vmatpush2.bf16.msra.mxu0 0
        %8058 = vmatprep.subr.bf16.mxu0 0
        %8059 = vmatpush2.bf16.msra.mxu0 0
        %8060 = vmatprep.subr.bf16.mxu0 0
        %8061 = vmatpush2.bf16.msra.mxu0 0
        %8062 = vmatprep.mubr.bf16.mxu0 0
        %8063 = vmatmul.mubr.bf16.gmra.mxu0 %v1167
        %v8064 = vpop.f32.mrf.mxu0
        %v8065 = vadd.f32 0.0, %v8064
        %v8066 = vpop.f32.mrf.mxu0
        %v8067 = vpop.f32.mrf.mxu0
        %v8068 = vadd.f32 0.0, %v8067
        %v8069 = vpop.f32.mrf.mxu0
        %8070 = vmatprep.mubr.bf16.mxu0 0
        %8071 = vmatmul.mubr.bf16.gmra.mxu0 %v1168
        %v8072 = vpop.f32.mrf.mxu0
        %v8073 = vadd.f32 0.0, %v8072
        %v8074 = vpop.f32.mrf.mxu0
        %v8075 = vpop.f32.mrf.mxu0
        %v8076 = vadd.f32 0.0, %v8075
        %v8077 = vpop.f32.mrf.mxu0
        %8078 = vmatprep.mubr.bf16.mxu0 0
        %8079 = vmatmul.mubr.bf16.gmra.mxu0 %v1169
        %v8080 = vpop.f32.mrf.mxu0
        %v8081 = vadd.f32 0.0, %v8080
        %v8082 = vpop.f32.mrf.mxu0
        %v8083 = vpop.f32.mrf.mxu0
        %v8084 = vadd.f32 0.0, %v8083
        %v8085 = vpop.f32.mrf.mxu0
        %8086 = vmatprep.mubr.bf16.mxu0 0
        %8087 = vmatmul.mubr.bf16.gmra.mxu0 %v1170
        %v8088 = vpop.f32.mrf.mxu0
        %v8089 = vadd.f32 0.0, %v8088
        %v8090 = vpop.f32.mrf.mxu0
        %v8091 = vpop.f32.mrf.mxu0
        %v8092 = vadd.f32 0.0, %v8091
        %v8093 = vpop.f32.mrf.mxu0
        %8094 = vmatprep.mubr.bf16.mxu0 0
        %8095 = vmatmul.mubr.bf16.gmra.mxu0 %v1171
        %v8096 = vpop.f32.mrf.mxu0
        %v8097 = vadd.f32 0.0, %v8096
        %v8098 = vpop.f32.mrf.mxu0
        %v8099 = vpop.f32.mrf.mxu0
        %v8100 = vadd.f32 0.0, %v8099
        %v8101 = vpop.f32.mrf.mxu0
        %8102 = vmatprep.mubr.bf16.mxu0 0
        %8103 = vmatmul.mubr.bf16.gmra.mxu0 %v1172
        %v8104 = vpop.f32.mrf.mxu0
        %v8105 = vadd.f32 0.0, %v8104
        %v8106 = vpop.f32.mrf.mxu0
        %v8107 = vpop.f32.mrf.mxu0
        %v8108 = vadd.f32 0.0, %v8107
        %v8109 = vpop.f32.mrf.mxu0
        %8110 = vmatprep.mubr.bf16.mxu0 0
        %8111 = vmatmul.mubr.bf16.gmra.mxu0 %v1173
        %v8112 = vpop.f32.mrf.mxu0
        %v8113 = vadd.f32 0.0, %v8112
        %v8114 = vpop.f32.mrf.mxu0
        %v8115 = vpop.f32.mrf.mxu0
        %v8116 = vadd.f32 0.0, %v8115
        %v8117 = vpop.f32.mrf.mxu0
        %8118 = vmatprep.mubr.bf16.mxu0 0
        %8119 = vmatmul.mubr.bf16.gmra.mxu0 %v1174
        %v8120 = vpop.f32.mrf.mxu0
        %v8121 = vadd.f32 0.0, %v8120
        %v8122 = vpop.f32.mrf.mxu0
        %v8123 = vpop.f32.mrf.mxu0
        %v8124 = vadd.f32 0.0, %v8123
        %v8125 = vpop.f32.mrf.mxu0
        %8126 = vmatprep.mubr.bf16.mxu0 0
        %8127 = vmatmul.mubr.bf16.gmra.mxu0 %v1175
        %v8128 = vpop.f32.mrf.mxu0
        %v8129 = vadd.f32 0.0, %v8128
        %v8130 = vpop.f32.mrf.mxu0
        %v8131 = vpop.f32.mrf.mxu0
        %v8132 = vadd.f32 0.0, %v8131
        %v8133 = vpop.f32.mrf.mxu0
        %8134 = vmatprep.mubr.bf16.mxu0 0
        %8135 = vmatmul.mubr.bf16.gmra.mxu0 %v1176
        %v8136 = vpop.f32.mrf.mxu0
        %v8137 = vadd.f32 0.0, %v8136
        %v8138 = vpop.f32.mrf.mxu0
        %v8139 = vpop.f32.mrf.mxu0
        %v8140 = vadd.f32 0.0, %v8139
        %v8141 = vpop.f32.mrf.mxu0
        %8142 = vmatprep.mubr.bf16.mxu0 0
        %8143 = vmatmul.mubr.bf16.gmra.mxu0 %v1177
        %v8144 = vpop.f32.mrf.mxu0
        %v8145 = vadd.f32 0.0, %v8144
        %v8146 = vpop.f32.mrf.mxu0
        %v8147 = vpop.f32.mrf.mxu0
        %v8148 = vadd.f32 0.0, %v8147
        %v8149 = vpop.f32.mrf.mxu0
        %8150 = vmatprep.mubr.bf16.mxu0 0
        %8151 = vmatmul.mubr.bf16.gmra.mxu0 %v1178
        %v8152 = vpop.f32.mrf.mxu0
        %v8153 = vadd.f32 0.0, %v8152
        %v8154 = vpop.f32.mrf.mxu0
        %v8155 = vpop.f32.mrf.mxu0
        %v8156 = vadd.f32 0.0, %v8155
        %v8157 = vpop.f32.mrf.mxu0
        %8158 = vdwg.mxu0
        %v8159 = vld [vmem:[#allocation2] sm:$0xff]
        %v8160 = vld [vmem:[#allocation2 + $0x8] sm:$0xff]
        %v8161 = vld [vmem:[#allocation2 + $0x10] sm:$0xff]
        %v8162 = vld [vmem:[#allocation2 + $0x18] sm:$0xff]
        %v8163 = vld [vmem:[#allocation2 + $0x20] sm:$0xff]
        %v8164 = vld [vmem:[#allocation2 + $0x28] sm:$0xff]
        %v8165 = vld [vmem:[#allocation2 + $0x30] sm:$0xff]
        %v8166 = vld [vmem:[#allocation2 + $0x38] sm:$0xff]
        %v8167 = vld [vmem:[#allocation2 + $0x40] sm:$0xff]
        %v8168 = vld [vmem:[#allocation2 + $0x48] sm:$0xff]
        %v8169 = vld [vmem:[#allocation2 + $0x50] sm:$0xff]
        %v8170 = vld [vmem:[#allocation2 + $0x58] sm:$0xff]
        %v8171 = vld [vmem:[#allocation2 + $0x60] sm:$0xff]
        %v8172 = vld [vmem:[#allocation2 + $0x68] sm:$0xff]
        %v8173 = vld [vmem:[#allocation2 + $0x70] sm:$0xff]
        %v8174 = vld [vmem:[#allocation2 + $0x78] sm:$0xff]
        %v8175 = vld [vmem:[#allocation2 + $0x80] sm:$0xff]
        %v8176 = vld [vmem:[#allocation2 + $0x88] sm:$0xff]
        %v8177 = vld [vmem:[#allocation2 + $0x90] sm:$0xff]
        %v8178 = vld [vmem:[#allocation2 + $0x98] sm:$0xff]
        %v8179 = vld [vmem:[#allocation2 + $0xa0] sm:$0xff]
        %v8180 = vld [vmem:[#allocation2 + $0xa8] sm:$0xff]
        %v8181 = vld [vmem:[#allocation2 + $0xb0] sm:$0xff]
        %v8182 = vld [vmem:[#allocation2 + $0xb8] sm:$0xff]
        %v8183 = vadd.f32 %v8159, %v8065
        %v8184 = vadd.f32 %v8160, %v8068
        %v8185 = vadd.f32 %v8161, %v8073
        %v8186 = vadd.f32 %v8162, %v8076
        %v8187 = vadd.f32 %v8163, %v8081
        %v8188 = vadd.f32 %v8164, %v8084
        %v8189 = vadd.f32 %v8165, %v8089
        %v8190 = vadd.f32 %v8166, %v8092
        %v8191 = vadd.f32 %v8167, %v8097
        %v8192 = vadd.f32 %v8168, %v8100
        %v8193 = vadd.f32 %v8169, %v8105
        %v8194 = vadd.f32 %v8170, %v8108
        %v8195 = vadd.f32 %v8171, %v8113
        %v8196 = vadd.f32 %v8172, %v8116
        %v8197 = vadd.f32 %v8173, %v8121
        %v8198 = vadd.f32 %v8174, %v8124
        %v8199 = vadd.f32 %v8175, %v8129
        %v8200 = vadd.f32 %v8176, %v8132
        %v8201 = vadd.f32 %v8177, %v8137
        %v8202 = vadd.f32 %v8178, %v8140
        %v8203 = vadd.f32 %v8179, %v8145
        %v8204 = vadd.f32 %v8180, %v8148
        %v8205 = vadd.f32 %v8181, %v8153
        %v8206 = vadd.f32 %v8182, %v8156
        %8207 = vst [vmem:[#allocation2] sm:$0xff] %v8183
        %8208 = vst [vmem:[#allocation2 + $0x8] sm:$0xff] %v8184
        %8209 = vst [vmem:[#allocation2 + $0x10] sm:$0xff] %v8185
        %8210 = vst [vmem:[#allocation2 + $0x18] sm:$0xff] %v8186
        %8211 = vst [vmem:[#allocation2 + $0x20] sm:$0xff] %v8187
        %8212 = vst [vmem:[#allocation2 + $0x28] sm:$0xff] %v8188
        %8213 = vst [vmem:[#allocation2 + $0x30] sm:$0xff] %v8189
        %8214 = vst [vmem:[#allocation2 + $0x38] sm:$0xff] %v8190
        %8215 = vst [vmem:[#allocation2 + $0x40] sm:$0xff] %v8191
        %8216 = vst [vmem:[#allocation2 + $0x48] sm:$0xff] %v8192
        %8217 = vst [vmem:[#allocation2 + $0x50] sm:$0xff] %v8193
        %8218 = vst [vmem:[#allocation2 + $0x58] sm:$0xff] %v8194
        %8219 = vst [vmem:[#allocation2 + $0x60] sm:$0xff] %v8195
        %8220 = vst [vmem:[#allocation2 + $0x68] sm:$0xff] %v8196
        %8221 = vst [vmem:[#allocation2 + $0x70] sm:$0xff] %v8197
        %8222 = vst [vmem:[#allocation2 + $0x78] sm:$0xff] %v8198
        %8223 = vst [vmem:[#allocation2 + $0x80] sm:$0xff] %v8199
        %8224 = vst [vmem:[#allocation2 + $0x88] sm:$0xff] %v8200
        %8225 = vst [vmem:[#allocation2 + $0x90] sm:$0xff] %v8201
        %8226 = vst [vmem:[#allocation2 + $0x98] sm:$0xff] %v8202
        %8227 = vst [vmem:[#allocation2 + $0xa0] sm:$0xff] %v8203
        %8228 = vst [vmem:[#allocation2 + $0xa8] sm:$0xff] %v8204
        %8229 = vst [vmem:[#allocation2 + $0xb0] sm:$0xff] %v8205
        %8230 = vst [vmem:[#allocation2 + $0xb8] sm:$0xff] %v8206
        %s8231 = scalar_lea.vmem [#allocation8], 1600
        %v8232 = vld [vmem:[%s8231] sm:$0xf]
        %v8233 = vld [vmem:[%s8231 + $0x4] sm:$0xf]
        %v8234 = vld [vmem:[%s8231 + $0x8] sm:$0xf]
        %v8235 = vld [vmem:[%s8231 + $0xc] sm:$0xf]
        %v8236 = vld [vmem:[%s8231 + $0x10] sm:$0xf]
        %v8237 = vld [vmem:[%s8231 + $0x14] sm:$0xf]
        %v8238 = vld [vmem:[%s8231 + $0x18] sm:$0xf]
        %v8239 = vld [vmem:[%s8231 + $0x1c] sm:$0xf]
        %v8240 = vld [vmem:[%s8231 + $0x20] sm:$0xf]
        %v8241 = vld [vmem:[%s8231 + $0x24] sm:$0xf]
        %v8242 = vld [vmem:[%s8231 + $0x28] sm:$0xf]
        %v8243 = vld [vmem:[%s8231 + $0x2c] sm:$0xf]
        %v8244 = vld [vmem:[%s8231 + $0x30] sm:$0xf]
        %v8245 = vld [vmem:[%s8231 + $0x34] sm:$0xf]
        %v8246 = vld [vmem:[%s8231 + $0x38] sm:$0xf]
        %v8247 = vld [vmem:[%s8231 + $0x3c] sm:$0xf]
        %v8248 = vor.u32 %v7432, %v6605
        %v8250 = vshll.u32 %v1179, 16
        %v8252 = vrot.slane %v8250, 1
        %v8253 = vsel %vm1414, %v8248, %v8252
        %v8271 = vunpack.c.l.b16 %v8232
        %v8272 = vunpack.c.l.b16 %v8233
        %v8273 = vunpack.c.l.b16 %v8234
        %v8274 = vunpack.c.l.b16 %v8235
        %v8275 = vunpack.c.l.b16 %v8236
        %v8276 = vunpack.c.l.b16 %v8237
        %v8277 = vunpack.c.l.b16 %v8238
        %v8278 = vunpack.c.l.b16 %v8239
        %v8279 = vunpack.c.l.b16 %v8240
        %v8280 = vunpack.c.l.b16 %v8241
        %v8281 = vunpack.c.l.b16 %v8242
        %v8282 = vunpack.c.l.b16 %v8243
        %v8283 = vunpack.c.l.b16 %v8244
        %v8284 = vunpack.c.l.b16 %v8245
        %v8285 = vunpack.c.l.b16 %v8246
        %v8286 = vunpack.c.l.b16 %v8247
        %v8287 = vpack.c.b16 %v8272, %v8271
        %v8288 = vpack.c.b16 %v8274, %v8273
        %v8289 = vpack.c.b16 %v8276, %v8275
        %v8290 = vpack.c.b16 %v8278, %v8277
        %v8291 = vpack.c.b16 %v8280, %v8279
        %v8292 = vpack.c.b16 %v8282, %v8281
        %v8293 = vpack.c.b16 %v8284, %v8283
        %v8294 = vpack.c.b16 %v8286, %v8285
        %8303 = vmatprep.subr.bf16.mxu0 0
        %8304 = vmatpush1.bf16.msra.mxu0 %v8294
        %8305 = vmatprep.subr.bf16.mxu0 0
        %8306 = vmatpush1.bf16.msra.mxu0 %v8293
        %8307 = vmatprep.subr.bf16.mxu0 0
        %8308 = vmatpush1.bf16.msra.mxu0 %v8292
        %8309 = vmatprep.subr.bf16.mxu0 0
        %8310 = vmatpush1.bf16.msra.mxu0 %v8291
        %8311 = vmatprep.subr.bf16.mxu0 0
        %8312 = vmatpush1.bf16.msra.mxu0 %v8290
        %8313 = vmatprep.subr.bf16.mxu0 0
        %8314 = vmatpush1.bf16.msra.mxu0 %v8289
        %8315 = vmatprep.subr.bf16.mxu0 0
        %8316 = vmatpush1.bf16.msra.mxu0 %v8288
        %8317 = vmatprep.subr.bf16.mxu0 0
        %8318 = vmatpush1.bf16.msra.mxu0 %v8287
        %8319 = vmatprep.subr.bf16.mxu0 0
        %8320 = vmatpush2.bf16.msra.mxu0 0
        %8321 = vmatprep.subr.bf16.mxu0 0
        %8322 = vmatpush2.bf16.msra.mxu0 0
        %8323 = vmatprep.subr.bf16.mxu0 0
        %8324 = vmatpush2.bf16.msra.mxu0 0
        %8325 = vmatprep.subr.bf16.mxu0 0
        %8326 = vmatpush2.bf16.msra.mxu0 0
        %8327 = vmatprep.subr.bf16.mxu0 0
        %8328 = vmatpush2.bf16.msra.mxu0 0
        %8329 = vmatprep.subr.bf16.mxu0 0
        %8330 = vmatpush2.bf16.msra.mxu0 0
        %8331 = vmatprep.subr.bf16.mxu0 0
        %8332 = vmatpush2.bf16.msra.mxu0 0
        %8333 = vmatprep.subr.bf16.mxu0 0
        %8334 = vmatpush2.bf16.msra.mxu0 0
        %8335 = vmatprep.mubr.bf16.mxu0 0
        %8336 = vmatmul.mubr.bf16.gmra.mxu0 %v1482
        %v8337 = vpop.f32.mrf.mxu0
        %v8338 = vadd.f32 0.0, %v8337
        %v8339 = vpop.f32.mrf.mxu0
        %v8340 = vpop.f32.mrf.mxu0
        %v8341 = vadd.f32 0.0, %v8340
        %v8342 = vpop.f32.mrf.mxu0
        %8343 = vmatprep.mubr.bf16.mxu0 0
        %8344 = vmatmul.mubr.bf16.gmra.mxu0 %v1490
        %v8345 = vpop.f32.mrf.mxu0
        %v8346 = vadd.f32 0.0, %v8345
        %v8347 = vpop.f32.mrf.mxu0
        %v8348 = vpop.f32.mrf.mxu0
        %v8349 = vadd.f32 0.0, %v8348
        %v8350 = vpop.f32.mrf.mxu0
        %8351 = vmatprep.mubr.bf16.mxu0 0
        %8352 = vmatmul.mubr.bf16.gmra.mxu0 %v1498
        %v8353 = vpop.f32.mrf.mxu0
        %v8354 = vadd.f32 0.0, %v8353
        %v8355 = vpop.f32.mrf.mxu0
        %v8356 = vpop.f32.mrf.mxu0
        %v8357 = vadd.f32 0.0, %v8356
        %v8358 = vpop.f32.mrf.mxu0
        %8359 = vmatprep.mubr.bf16.mxu0 0
        %8360 = vmatmul.mubr.bf16.gmra.mxu0 %v1506
        %v8361 = vpop.f32.mrf.mxu0
        %v8362 = vadd.f32 0.0, %v8361
        %v8363 = vpop.f32.mrf.mxu0
        %v8364 = vpop.f32.mrf.mxu0
        %v8365 = vadd.f32 0.0, %v8364
        %v8366 = vpop.f32.mrf.mxu0
        %8367 = vmatprep.mubr.bf16.mxu0 0
        %8368 = vmatmul.mubr.bf16.gmra.mxu0 %v1514
        %v8369 = vpop.f32.mrf.mxu0
        %v8370 = vadd.f32 0.0, %v8369
        %v8371 = vpop.f32.mrf.mxu0
        %v8372 = vpop.f32.mrf.mxu0
        %v8373 = vadd.f32 0.0, %v8372
        %v8374 = vpop.f32.mrf.mxu0
        %8375 = vmatprep.mubr.bf16.mxu0 0
        %8376 = vmatmul.mubr.bf16.gmra.mxu0 %v3321
        %v8377 = vpop.f32.mrf.mxu0
        %v8378 = vadd.f32 0.0, %v8377
        %v8379 = vpop.f32.mrf.mxu0
        %v8380 = vpop.f32.mrf.mxu0
        %v8381 = vadd.f32 0.0, %v8380
        %v8382 = vpop.f32.mrf.mxu0
        %8383 = vmatprep.mubr.bf16.mxu0 0
        %8384 = vmatmul.mubr.bf16.gmra.mxu0 %v4132
        %v8385 = vpop.f32.mrf.mxu0
        %v8386 = vadd.f32 0.0, %v8385
        %v8387 = vpop.f32.mrf.mxu0
        %v8388 = vpop.f32.mrf.mxu0
        %v8389 = vadd.f32 0.0, %v8388
        %v8390 = vpop.f32.mrf.mxu0
        %8391 = vmatprep.mubr.bf16.mxu0 0
        %8392 = vmatmul.mubr.bf16.gmra.mxu0 %v4140
        %v8393 = vpop.f32.mrf.mxu0
        %v8394 = vadd.f32 0.0, %v8393
        %v8395 = vpop.f32.mrf.mxu0
        %v8396 = vpop.f32.mrf.mxu0
        %v8397 = vadd.f32 0.0, %v8396
        %v8398 = vpop.f32.mrf.mxu0
        %8399 = vmatprep.mubr.bf16.mxu0 0
        %8400 = vmatmul.mubr.bf16.gmra.mxu0 %v5787
        %v8401 = vpop.f32.mrf.mxu0
        %v8402 = vadd.f32 0.0, %v8401
        %v8403 = vpop.f32.mrf.mxu0
        %v8404 = vpop.f32.mrf.mxu0
        %v8405 = vadd.f32 0.0, %v8404
        %v8406 = vpop.f32.mrf.mxu0
        %8407 = vmatprep.mubr.bf16.mxu0 0
        %8408 = vmatmul.mubr.bf16.gmra.mxu0 %v6598
        %v8409 = vpop.f32.mrf.mxu0
        %v8410 = vadd.f32 0.0, %v8409
        %v8411 = vpop.f32.mrf.mxu0
        %v8412 = vpop.f32.mrf.mxu0
        %v8413 = vadd.f32 0.0, %v8412
        %v8414 = vpop.f32.mrf.mxu0
        %8415 = vmatprep.mubr.bf16.mxu0 0
        %8416 = vmatmul.mubr.bf16.gmra.mxu0 %v6606
        %v8417 = vpop.f32.mrf.mxu0
        %v8418 = vadd.f32 0.0, %v8417
        %v8419 = vpop.f32.mrf.mxu0
        %v8420 = vpop.f32.mrf.mxu0
        %v8421 = vadd.f32 0.0, %v8420
        %v8422 = vpop.f32.mrf.mxu0
        %8423 = vmatprep.mubr.bf16.mxu0 0
        %8424 = vmatmul.mubr.bf16.gmra.mxu0 %v8253
        %v8425 = vpop.f32.mrf.mxu0
        %v8426 = vadd.f32 0.0, %v8425
        %v8427 = vpop.f32.mrf.mxu0
        %v8428 = vpop.f32.mrf.mxu0
        %v8429 = vadd.f32 0.0, %v8428
        %v8430 = vpop.f32.mrf.mxu0
        %8431 = vdwg.mxu0
        %v8432 = vld [vmem:[#allocation2] sm:$0xff]
        %v8433 = vld [vmem:[#allocation2 + $0x8] sm:$0xff]
        %v8434 = vld [vmem:[#allocation2 + $0x10] sm:$0xff]
        %v8435 = vld [vmem:[#allocation2 + $0x18] sm:$0xff]
        %v8436 = vld [vmem:[#allocation2 + $0x20] sm:$0xff]
        %v8437 = vld [vmem:[#allocation2 + $0x28] sm:$0xff]
        %v8438 = vld [vmem:[#allocation2 + $0x30] sm:$0xff]
        %v8439 = vld [vmem:[#allocation2 + $0x38] sm:$0xff]
        %v8440 = vld [vmem:[#allocation2 + $0x40] sm:$0xff]
        %v8441 = vld [vmem:[#allocation2 + $0x48] sm:$0xff]
        %v8442 = vld [vmem:[#allocation2 + $0x50] sm:$0xff]
        %v8443 = vld [vmem:[#allocation2 + $0x58] sm:$0xff]
        %v8444 = vld [vmem:[#allocation2 + $0x60] sm:$0xff]
        %v8445 = vld [vmem:[#allocation2 + $0x68] sm:$0xff]
        %v8446 = vld [vmem:[#allocation2 + $0x70] sm:$0xff]
        %v8447 = vld [vmem:[#allocation2 + $0x78] sm:$0xff]
        %v8448 = vld [vmem:[#allocation2 + $0x80] sm:$0xff]
        %v8449 = vld [vmem:[#allocation2 + $0x88] sm:$0xff]
        %v8450 = vld [vmem:[#allocation2 + $0x90] sm:$0xff]
        %v8451 = vld [vmem:[#allocation2 + $0x98] sm:$0xff]
        %v8452 = vld [vmem:[#allocation2 + $0xa0] sm:$0xff]
        %v8453 = vld [vmem:[#allocation2 + $0xa8] sm:$0xff]
        %v8454 = vld [vmem:[#allocation2 + $0xb0] sm:$0xff]
        %v8455 = vld [vmem:[#allocation2 + $0xb8] sm:$0xff]
        %v8456 = vadd.f32 %v8432, %v8338
        %v8457 = vadd.f32 %v8433, %v8341
        %v8458 = vadd.f32 %v8434, %v8346
        %v8459 = vadd.f32 %v8435, %v8349
        %v8460 = vadd.f32 %v8436, %v8354
        %v8461 = vadd.f32 %v8437, %v8357
        %v8462 = vadd.f32 %v8438, %v8362
        %v8463 = vadd.f32 %v8439, %v8365
        %v8464 = vadd.f32 %v8440, %v8370
        %v8465 = vadd.f32 %v8441, %v8373
        %v8466 = vadd.f32 %v8442, %v8378
        %v8467 = vadd.f32 %v8443, %v8381
        %v8468 = vadd.f32 %v8444, %v8386
        %v8469 = vadd.f32 %v8445, %v8389
        %v8470 = vadd.f32 %v8446, %v8394
        %v8471 = vadd.f32 %v8447, %v8397
        %v8472 = vadd.f32 %v8448, %v8402
        %v8473 = vadd.f32 %v8449, %v8405
        %v8474 = vadd.f32 %v8450, %v8410
        %v8475 = vadd.f32 %v8451, %v8413
        %v8476 = vadd.f32 %v8452, %v8418
        %v8477 = vadd.f32 %v8453, %v8421
        %v8478 = vadd.f32 %v8454, %v8426
        %v8479 = vadd.f32 %v8455, %v8429
        %8480 = vst [vmem:[#allocation2] sm:$0xff] %v8456
        %8481 = vst [vmem:[#allocation2 + $0x8] sm:$0xff] %v8457
        %8482 = vst [vmem:[#allocation2 + $0x10] sm:$0xff] %v8458
        %8483 = vst [vmem:[#allocation2 + $0x18] sm:$0xff] %v8459
        %8484 = vst [vmem:[#allocation2 + $0x20] sm:$0xff] %v8460
        %8485 = vst [vmem:[#allocation2 + $0x28] sm:$0xff] %v8461
        %8486 = vst [vmem:[#allocation2 + $0x30] sm:$0xff] %v8462
        %8487 = vst [vmem:[#allocation2 + $0x38] sm:$0xff] %v8463
        %8488 = vst [vmem:[#allocation2 + $0x40] sm:$0xff] %v8464
        %8489 = vst [vmem:[#allocation2 + $0x48] sm:$0xff] %v8465
        %8490 = vst [vmem:[#allocation2 + $0x50] sm:$0xff] %v8466
        %8491 = vst [vmem:[#allocation2 + $0x58] sm:$0xff] %v8467
        %8492 = vst [vmem:[#allocation2 + $0x60] sm:$0xff] %v8468
        %8493 = vst [vmem:[#allocation2 + $0x68] sm:$0xff] %v8469
        %8494 = vst [vmem:[#allocation2 + $0x70] sm:$0xff] %v8470
        %8495 = vst [vmem:[#allocation2 + $0x78] sm:$0xff] %v8471
        %8496 = vst [vmem:[#allocation2 + $0x80] sm:$0xff] %v8472
        %8497 = vst [vmem:[#allocation2 + $0x88] sm:$0xff] %v8473
        %8498 = vst [vmem:[#allocation2 + $0x90] sm:$0xff] %v8474
        %8499 = vst [vmem:[#allocation2 + $0x98] sm:$0xff] %v8475
        %8500 = vst [vmem:[#allocation2 + $0xa0] sm:$0xff] %v8476
        %8501 = vst [vmem:[#allocation2 + $0xa8] sm:$0xff] %v8477
        %8502 = vst [vmem:[#allocation2 + $0xb0] sm:$0xff] %v8478
        %8503 = vst [vmem:[#allocation2 + $0xb8] sm:$0xff] %v8479
        %s8504 = scalar_lea.vmem [#allocation8], 1664
        %v8505 = vld [vmem:[%s8504] sm:$0xf]
        %v8506 = vld [vmem:[%s8504 + $0x4] sm:$0xf]
        %v8507 = vld [vmem:[%s8504 + $0x8] sm:$0xf]
        %v8508 = vld [vmem:[%s8504 + $0xc] sm:$0xf]
        %v8509 = vld [vmem:[%s8504 + $0x10] sm:$0xf]
        %v8510 = vld [vmem:[%s8504 + $0x14] sm:$0xf]
        %v8511 = vld [vmem:[%s8504 + $0x18] sm:$0xf]
        %v8512 = vld [vmem:[%s8504 + $0x1c] sm:$0xf]
        %v8513 = vld [vmem:[%s8504 + $0x20] sm:$0xf]
        %v8514 = vld [vmem:[%s8504 + $0x24] sm:$0xf]
        %v8515 = vld [vmem:[%s8504 + $0x28] sm:$0xf]
        %v8516 = vld [vmem:[%s8504 + $0x2c] sm:$0xf]
        %v8517 = vld [vmem:[%s8504 + $0x30] sm:$0xf]
        %v8518 = vld [vmem:[%s8504 + $0x34] sm:$0xf]
        %v8519 = vld [vmem:[%s8504 + $0x38] sm:$0xf]
        %v8520 = vld [vmem:[%s8504 + $0x3c] sm:$0xf]
        %v8522 = vrot.slane %v1179, 1
        %v8523 = vsel %vm1806, %v6879, %v8522
        %v8541 = vunpack.c.l.b16 %v8505
        %v8542 = vunpack.c.l.b16 %v8506
        %v8543 = vunpack.c.l.b16 %v8507
        %v8544 = vunpack.c.l.b16 %v8508
        %v8545 = vunpack.c.l.b16 %v8509
        %v8546 = vunpack.c.l.b16 %v8510
        %v8547 = vunpack.c.l.b16 %v8511
        %v8548 = vunpack.c.l.b16 %v8512
        %v8549 = vunpack.c.l.b16 %v8513
        %v8550 = vunpack.c.l.b16 %v8514
        %v8551 = vunpack.c.l.b16 %v8515
        %v8552 = vunpack.c.l.b16 %v8516
        %v8553 = vunpack.c.l.b16 %v8517
        %v8554 = vunpack.c.l.b16 %v8518
        %v8555 = vunpack.c.l.b16 %v8519
        %v8556 = vunpack.c.l.b16 %v8520
        %v8557 = vpack.c.b16 %v8542, %v8541
        %v8558 = vpack.c.b16 %v8544, %v8543
        %v8559 = vpack.c.b16 %v8546, %v8545
        %v8560 = vpack.c.b16 %v8548, %v8547
        %v8561 = vpack.c.b16 %v8550, %v8549
        %v8562 = vpack.c.b16 %v8552, %v8551
        %v8563 = vpack.c.b16 %v8554, %v8553
        %v8564 = vpack.c.b16 %v8556, %v8555
        %8573 = vmatprep.subr.bf16.mxu0 0
        %8574 = vmatpush1.bf16.msra.mxu0 %v8564
        %8575 = vmatprep.subr.bf16.mxu0 0
        %8576 = vmatpush1.bf16.msra.mxu0 %v8563
        %8577 = vmatprep.subr.bf16.mxu0 0
        %8578 = vmatpush1.bf16.msra.mxu0 %v8562
        %8579 = vmatprep.subr.bf16.mxu0 0
        %8580 = vmatpush1.bf16.msra.mxu0 %v8561
        %8581 = vmatprep.subr.bf16.mxu0 0
        %8582 = vmatpush1.bf16.msra.mxu0 %v8560
        %8583 = vmatprep.subr.bf16.mxu0 0
        %8584 = vmatpush1.bf16.msra.mxu0 %v8559
        %8585 = vmatprep.subr.bf16.mxu0 0
        %8586 = vmatpush1.bf16.msra.mxu0 %v8558
        %8587 = vmatprep.subr.bf16.mxu0 0
        %8588 = vmatpush1.bf16.msra.mxu0 %v8557
        %8589 = vmatprep.subr.bf16.mxu0 0
        %8590 = vmatpush2.bf16.msra.mxu0 0
        %8591 = vmatprep.subr.bf16.mxu0 0
        %8592 = vmatpush2.bf16.msra.mxu0 0
        %8593 = vmatprep.subr.bf16.mxu0 0
        %8594 = vmatpush2.bf16.msra.mxu0 0
        %8595 = vmatprep.subr.bf16.mxu0 0
        %8596 = vmatpush2.bf16.msra.mxu0 0
        %8597 = vmatprep.subr.bf16.mxu0 0
        %8598 = vmatpush2.bf16.msra.mxu0 0
        %8599 = vmatprep.subr.bf16.mxu0 0
        %8600 = vmatpush2.bf16.msra.mxu0 0
        %8601 = vmatprep.subr.bf16.mxu0 0
        %8602 = vmatpush2.bf16.msra.mxu0 0
        %8603 = vmatprep.subr.bf16.mxu0 0
        %8604 = vmatpush2.bf16.msra.mxu0 0
        %8605 = vmatprep.mubr.bf16.mxu0 0
        %8606 = vmatmul.mubr.bf16.gmra.mxu0 %v1823
        %v8607 = vpop.f32.mrf.mxu0
        %v8608 = vadd.f32 0.0, %v8607
        %v8609 = vpop.f32.mrf.mxu0
        %v8610 = vpop.f32.mrf.mxu0
        %v8611 = vadd.f32 0.0, %v8610
        %v8612 = vpop.f32.mrf.mxu0
        %8613 = vmatprep.mubr.bf16.mxu0 0
        %8614 = vmatmul.mubr.bf16.gmra.mxu0 %v1825
        %v8615 = vpop.f32.mrf.mxu0
        %v8616 = vadd.f32 0.0, %v8615
        %v8617 = vpop.f32.mrf.mxu0
        %v8618 = vpop.f32.mrf.mxu0
        %v8619 = vadd.f32 0.0, %v8618
        %v8620 = vpop.f32.mrf.mxu0
        %8621 = vmatprep.mubr.bf16.mxu0 0
        %8622 = vmatmul.mubr.bf16.gmra.mxu0 %v1827
        %v8623 = vpop.f32.mrf.mxu0
        %v8624 = vadd.f32 0.0, %v8623
        %v8625 = vpop.f32.mrf.mxu0
        %v8626 = vpop.f32.mrf.mxu0
        %v8627 = vadd.f32 0.0, %v8626
        %v8628 = vpop.f32.mrf.mxu0
        %8629 = vmatprep.mubr.bf16.mxu0 0
        %8630 = vmatmul.mubr.bf16.gmra.mxu0 %v1829
        %v8631 = vpop.f32.mrf.mxu0
        %v8632 = vadd.f32 0.0, %v8631
        %v8633 = vpop.f32.mrf.mxu0
        %v8634 = vpop.f32.mrf.mxu0
        %v8635 = vadd.f32 0.0, %v8634
        %v8636 = vpop.f32.mrf.mxu0
        %8637 = vmatprep.mubr.bf16.mxu0 0
        %8638 = vmatmul.mubr.bf16.gmra.mxu0 %v1831
        %v8639 = vpop.f32.mrf.mxu0
        %v8640 = vadd.f32 0.0, %v8639
        %v8641 = vpop.f32.mrf.mxu0
        %v8642 = vpop.f32.mrf.mxu0
        %v8643 = vadd.f32 0.0, %v8642
        %v8644 = vpop.f32.mrf.mxu0
        %8645 = vmatprep.mubr.bf16.mxu0 0
        %8646 = vmatmul.mubr.bf16.gmra.mxu0 %v3591
        %v8647 = vpop.f32.mrf.mxu0
        %v8648 = vadd.f32 0.0, %v8647
        %v8649 = vpop.f32.mrf.mxu0
        %v8650 = vpop.f32.mrf.mxu0
        %v8651 = vadd.f32 0.0, %v8650
        %v8652 = vpop.f32.mrf.mxu0
        %8653 = vmatprep.mubr.bf16.mxu0 0
        %8654 = vmatmul.mubr.bf16.gmra.mxu0 %v4412
        %v8655 = vpop.f32.mrf.mxu0
        %v8656 = vadd.f32 0.0, %v8655
        %v8657 = vpop.f32.mrf.mxu0
        %v8658 = vpop.f32.mrf.mxu0
        %v8659 = vadd.f32 0.0, %v8658
        %v8660 = vpop.f32.mrf.mxu0
        %8661 = vmatprep.mubr.bf16.mxu0 0
        %8662 = vmatmul.mubr.bf16.gmra.mxu0 %v4414
        %v8663 = vpop.f32.mrf.mxu0
        %v8664 = vadd.f32 0.0, %v8663
        %v8665 = vpop.f32.mrf.mxu0
        %v8666 = vpop.f32.mrf.mxu0
        %v8667 = vadd.f32 0.0, %v8666
        %v8668 = vpop.f32.mrf.mxu0
        %8669 = vmatprep.mubr.bf16.mxu0 0
        %8670 = vmatmul.mubr.bf16.gmra.mxu0 %v6057
        %v8671 = vpop.f32.mrf.mxu0
        %v8672 = vadd.f32 0.0, %v8671
        %v8673 = vpop.f32.mrf.mxu0
        %v8674 = vpop.f32.mrf.mxu0
        %v8675 = vadd.f32 0.0, %v8674
        %v8676 = vpop.f32.mrf.mxu0
        %8677 = vmatprep.mubr.bf16.mxu0 0
        %8678 = vmatmul.mubr.bf16.gmra.mxu0 %v6878
        %v8679 = vpop.f32.mrf.mxu0
        %v8680 = vadd.f32 0.0, %v8679
        %v8681 = vpop.f32.mrf.mxu0
        %v8682 = vpop.f32.mrf.mxu0
        %v8683 = vadd.f32 0.0, %v8682
        %v8684 = vpop.f32.mrf.mxu0
        %8685 = vmatprep.mubr.bf16.mxu0 0
        %8686 = vmatmul.mubr.bf16.gmra.mxu0 %v6880
        %v8687 = vpop.f32.mrf.mxu0
        %v8688 = vadd.f32 0.0, %v8687
        %v8689 = vpop.f32.mrf.mxu0
        %v8690 = vpop.f32.mrf.mxu0
        %v8691 = vadd.f32 0.0, %v8690
        %v8692 = vpop.f32.mrf.mxu0
        %8693 = vmatprep.mubr.bf16.mxu0 0
        %8694 = vmatmul.mubr.bf16.gmra.mxu0 %v8523
        %v8695 = vpop.f32.mrf.mxu0
        %v8696 = vadd.f32 0.0, %v8695
        %v8697 = vpop.f32.mrf.mxu0
        %v8698 = vpop.f32.mrf.mxu0
        %v8699 = vadd.f32 0.0, %v8698
        %v8700 = vpop.f32.mrf.mxu0
        %8701 = vdwg.mxu0
        %v8702 = vld [vmem:[#allocation2] sm:$0xff]
        %v8703 = vld [vmem:[#allocation2 + $0x8] sm:$0xff]
        %v8704 = vld [vmem:[#allocation2 + $0x10] sm:$0xff]
        %v8705 = vld [vmem:[#allocation2 + $0x18] sm:$0xff]
        %v8706 = vld [vmem:[#allocation2 + $0x20] sm:$0xff]
        %v8707 = vld [vmem:[#allocation2 + $0x28] sm:$0xff]
        %v8708 = vld [vmem:[#allocation2 + $0x30] sm:$0xff]
        %v8709 = vld [vmem:[#allocation2 + $0x38] sm:$0xff]
        %v8710 = vld [vmem:[#allocation2 + $0x40] sm:$0xff]
        %v8711 = vld [vmem:[#allocation2 + $0x48] sm:$0xff]
        %v8712 = vld [vmem:[#allocation2 + $0x50] sm:$0xff]
        %v8713 = vld [vmem:[#allocation2 + $0x58] sm:$0xff]
        %v8714 = vld [vmem:[#allocation2 + $0x60] sm:$0xff]
        %v8715 = vld [vmem:[#allocation2 + $0x68] sm:$0xff]
        %v8716 = vld [vmem:[#allocation2 + $0x70] sm:$0xff]
        %v8717 = vld [vmem:[#allocation2 + $0x78] sm:$0xff]
        %v8718 = vld [vmem:[#allocation2 + $0x80] sm:$0xff]
        %v8719 = vld [vmem:[#allocation2 + $0x88] sm:$0xff]
        %v8720 = vld [vmem:[#allocation2 + $0x90] sm:$0xff]
        %v8721 = vld [vmem:[#allocation2 + $0x98] sm:$0xff]
        %v8722 = vld [vmem:[#allocation2 + $0xa0] sm:$0xff]
        %v8723 = vld [vmem:[#allocation2 + $0xa8] sm:$0xff]
        %v8724 = vld [vmem:[#allocation2 + $0xb0] sm:$0xff]
        %v8725 = vld [vmem:[#allocation2 + $0xb8] sm:$0xff]
        %v8726 = vadd.f32 %v8702, %v8608
        %v8727 = vadd.f32 %v8703, %v8611
        %v8728 = vadd.f32 %v8704, %v8616
        %v8729 = vadd.f32 %v8705, %v8619
        %v8730 = vadd.f32 %v8706, %v8624
        %v8731 = vadd.f32 %v8707, %v8627
        %v8732 = vadd.f32 %v8708, %v8632
        %v8733 = vadd.f32 %v8709, %v8635
        %v8734 = vadd.f32 %v8710, %v8640
        %v8735 = vadd.f32 %v8711, %v8643
        %v8736 = vadd.f32 %v8712, %v8648
        %v8737 = vadd.f32 %v8713, %v8651
        %v8738 = vadd.f32 %v8714, %v8656
        %v8739 = vadd.f32 %v8715, %v8659
        %v8740 = vadd.f32 %v8716, %v8664
        %v8741 = vadd.f32 %v8717, %v8667
        %v8742 = vadd.f32 %v8718, %v8672
        %v8743 = vadd.f32 %v8719, %v8675
        %v8744 = vadd.f32 %v8720, %v8680
        %v8745 = vadd.f32 %v8721, %v8683
        %v8746 = vadd.f32 %v8722, %v8688
        %v8747 = vadd.f32 %v8723, %v8691
        %v8748 = vadd.f32 %v8724, %v8696
        %v8749 = vadd.f32 %v8725, %v8699
        %8750 = vst [vmem:[#allocation2] sm:$0xff] %v8726
        %8751 = vst [vmem:[#allocation2 + $0x8] sm:$0xff] %v8727
        %8752 = vst [vmem:[#allocation2 + $0x10] sm:$0xff] %v8728
        %8753 = vst [vmem:[#allocation2 + $0x18] sm:$0xff] %v8729
        %8754 = vst [vmem:[#allocation2 + $0x20] sm:$0xff] %v8730
        %8755 = vst [vmem:[#allocation2 + $0x28] sm:$0xff] %v8731
        %8756 = vst [vmem:[#allocation2 + $0x30] sm:$0xff] %v8732
        %8757 = vst [vmem:[#allocation2 + $0x38] sm:$0xff] %v8733
        %8758 = vst [vmem:[#allocation2 + $0x40] sm:$0xff] %v8734
        %8759 = vst [vmem:[#allocation2 + $0x48] sm:$0xff] %v8735
        %8760 = vst [vmem:[#allocation2 + $0x50] sm:$0xff] %v8736
        %8761 = vst [vmem:[#allocation2 + $0x58] sm:$0xff] %v8737
        %8762 = vst [vmem:[#allocation2 + $0x60] sm:$0xff] %v8738
        %8763 = vst [vmem:[#allocation2 + $0x68] sm:$0xff] %v8739
        %8764 = vst [vmem:[#allocation2 + $0x70] sm:$0xff] %v8740
        %8765 = vst [vmem:[#allocation2 + $0x78] sm:$0xff] %v8741
        %8766 = vst [vmem:[#allocation2 + $0x80] sm:$0xff] %v8742
        %8767 = vst [vmem:[#allocation2 + $0x88] sm:$0xff] %v8743
        %8768 = vst [vmem:[#allocation2 + $0x90] sm:$0xff] %v8744
        %8769 = vst [vmem:[#allocation2 + $0x98] sm:$0xff] %v8745
        %8770 = vst [vmem:[#allocation2 + $0xa0] sm:$0xff] %v8746
        %8771 = vst [vmem:[#allocation2 + $0xa8] sm:$0xff] %v8747
        %8772 = vst [vmem:[#allocation2 + $0xb0] sm:$0xff] %v8748
        %8773 = vst [vmem:[#allocation2 + $0xb8] sm:$0xff] %v8749
        %v8774 = vld [vmem:[#allocation2] sm:$0xff]
        %v8775 = vld [vmem:[#allocation2 + $0x8] sm:$0xff]
        %v8776 = vld [vmem:[#allocation2 + $0x10] sm:$0xff]
        %v8777 = vld [vmem:[#allocation2 + $0x18] sm:$0xff]
        %v8778 = vld [vmem:[#allocation2 + $0x20] sm:$0xff]
        %v8779 = vld [vmem:[#allocation2 + $0x28] sm:$0xff]
        %v8780 = vld [vmem:[#allocation2 + $0x30] sm:$0xff]
        %v8781 = vld [vmem:[#allocation2 + $0x38] sm:$0xff]
        %v8782 = vld [vmem:[#allocation2 + $0x40] sm:$0xff]
        %v8783 = vld [vmem:[#allocation2 + $0x48] sm:$0xff]
        %v8784 = vld [vmem:[#allocation2 + $0x50] sm:$0xff]
        %v8785 = vld [vmem:[#allocation2 + $0x58] sm:$0xff]
        %v8786 = vld [vmem:[#allocation2 + $0x60] sm:$0xff]
        %v8787 = vld [vmem:[#allocation2 + $0x68] sm:$0xff]
        %v8788 = vld [vmem:[#allocation2 + $0x70] sm:$0xff]
        %v8789 = vld [vmem:[#allocation2 + $0x78] sm:$0xff]
        %v8790 = vld [vmem:[#allocation2 + $0x80] sm:$0xff]
        %v8791 = vld [vmem:[#allocation2 + $0x88] sm:$0xff]
        %v8792 = vld [vmem:[#allocation2 + $0x90] sm:$0xff]
        %v8793 = vld [vmem:[#allocation2 + $0x98] sm:$0xff]
        %v8794 = vld [vmem:[#allocation2 + $0xa0] sm:$0xff]
        %v8795 = vld [vmem:[#allocation2 + $0xa8] sm:$0xff]
        %v8796 = vld [vmem:[#allocation2 + $0xb0] sm:$0xff]
        %v8797 = vld [vmem:[#allocation2 + $0xb8] sm:$0xff]
        %v8798 = vld [vmem:[%s6] sm:$0x1]
        %v8800 = vlaneseq
        %v8801 = vshrl.u32 %v8800, 7
        %v8802 = vsub.s32 0, %v8801
        %v8803 = vrot.slane %v8798, %v8802
        %v8805 = vadd.f32 %v8774, %v8803
        %v8806 = vadd.f32 %v8775, %v8803
        %v8807 = vadd.f32 %v8776, %v8803
        %v8808 = vadd.f32 %v8777, %v8803
        %v8809 = vadd.f32 %v8778, %v8803
        %v8810 = vadd.f32 %v8779, %v8803
        %v8811 = vadd.f32 %v8780, %v8803
        %v8812 = vadd.f32 %v8781, %v8803
        %v8813 = vadd.f32 %v8782, %v8803
        %v8814 = vadd.f32 %v8783, %v8803
        %v8815 = vadd.f32 %v8784, %v8803
        %v8816 = vadd.f32 %v8785, %v8803
        %v8817 = vadd.f32 %v8786, %v8803
        %v8818 = vadd.f32 %v8787, %v8803
        %v8819 = vadd.f32 %v8788, %v8803
        %v8820 = vadd.f32 %v8789, %v8803
        %v8821 = vadd.f32 %v8790, %v8803
        %v8822 = vadd.f32 %v8791, %v8803
        %v8823 = vadd.f32 %v8792, %v8803
        %v8824 = vadd.f32 %v8793, %v8803
        %v8825 = vadd.f32 %v8794, %v8803
        %v8826 = vadd.f32 %v8795, %v8803
        %v8827 = vadd.f32 %v8796, %v8803
        %v8828 = vadd.f32 %v8797, %v8803
        %v8829 = vmax.f32 %v8805, 0.0
        %v8830 = vmax.f32 %v8806, 0.0
        %v8831 = vmax.f32 %v8807, 0.0
        %v8832 = vmax.f32 %v8808, 0.0
        %v8833 = vmax.f32 %v8809, 0.0
        %v8834 = vmax.f32 %v8810, 0.0
        %v8835 = vmax.f32 %v8811, 0.0
        %v8836 = vmax.f32 %v8812, 0.0
        %v8837 = vmax.f32 %v8813, 0.0
        %v8838 = vmax.f32 %v8814, 0.0
        %v8839 = vmax.f32 %v8815, 0.0
        %v8840 = vmax.f32 %v8816, 0.0
        %v8841 = vmax.f32 %v8817, 0.0
        %v8842 = vmax.f32 %v8818, 0.0
        %v8843 = vmax.f32 %v8819, 0.0
        %v8844 = vmax.f32 %v8820, 0.0
        %v8845 = vmax.f32 %v8821, 0.0
        %v8846 = vmax.f32 %v8822, 0.0
        %v8847 = vmax.f32 %v8823, 0.0
        %v8848 = vmax.f32 %v8824, 0.0
        %v8849 = vmax.f32 %v8825, 0.0
        %v8850 = vmax.f32 %v8826, 0.0
        %v8851 = vmax.f32 %v8827, 0.0
        %v8852 = vmax.f32 %v8828, 0.0
        %v8853 = vpack.c.bf16 %v8830, %v8829
        %v8854 = vpack.c.bf16 %v8832, %v8831
        %v8855 = vpack.c.bf16 %v8834, %v8833
        %v8856 = vpack.c.bf16 %v8836, %v8835
        %v8857 = vpack.c.bf16 %v8838, %v8837
        %v8858 = vpack.c.bf16 %v8840, %v8839
        %v8859 = vpack.c.bf16 %v8842, %v8841
        %v8860 = vpack.c.bf16 %v8844, %v8843
        %v8861 = vpack.c.bf16 %v8846, %v8845
        %v8862 = vpack.c.bf16 %v8848, %v8847
        %v8863 = vpack.c.bf16 %v8850, %v8849
        %v8864 = vpack.c.bf16 %v8852, %v8851
        %v8865 = vld [vmem:[#allocation9] sm:$0xf]
        %v8866 = vld [vmem:[#allocation9 + $0x4] sm:$0xf]
        %v8867 = vld [vmem:[#allocation9 + $0x8] sm:$0xf]
        %v8868 = vld [vmem:[#allocation9 + $0xc] sm:$0xf]
        %v8869 = vld [vmem:[#allocation9 + $0x10] sm:$0xf]
        %v8870 = vld [vmem:[#allocation9 + $0x14] sm:$0xf]
        %v8871 = vld [vmem:[#allocation9 + $0x18] sm:$0xf]
        %v8872 = vld [vmem:[#allocation9 + $0x1c] sm:$0xf]
        %v8873 = vld [vmem:[#allocation9 + $0x20] sm:$0xf]
        %v8874 = vld [vmem:[#allocation9 + $0x24] sm:$0xf]
        %v8875 = vld [vmem:[#allocation9 + $0x28] sm:$0xf]
        %v8876 = vld [vmem:[#allocation9 + $0x2c] sm:$0xf]
        %v8877 = vld [vmem:[#allocation9 + $0x30] sm:$0xf]
        %v8878 = vld [vmem:[#allocation9 + $0x34] sm:$0xf]
        %v8879 = vld [vmem:[#allocation9 + $0x38] sm:$0xf]
        %v8880 = vld [vmem:[#allocation9 + $0x3c] sm:$0xf]
        %v8881 = vld [vmem:[%s8] sm:$0x1]
        %v8883 = vlaneseq
        %v8884 = vshrl.u32 %v8883, 7
        %v8885 = vsub.s32 0, %v8884
        %v8886 = vrot.slane %v8881, %v8885
        %v8904 = vunpack.c.l.b16 %v8865
        %v8905 = vunpack.c.l.b16 %v8866
        %v8906 = vunpack.c.l.b16 %v8867
        %v8907 = vunpack.c.l.b16 %v8868
        %v8908 = vunpack.c.l.b16 %v8869
        %v8909 = vunpack.c.l.b16 %v8870
        %v8910 = vunpack.c.l.b16 %v8871
        %v8911 = vunpack.c.l.b16 %v8872
        %v8912 = vunpack.c.l.b16 %v8873
        %v8913 = vunpack.c.l.b16 %v8874
        %v8914 = vunpack.c.l.b16 %v8875
        %v8915 = vunpack.c.l.b16 %v8876
        %v8916 = vunpack.c.l.b16 %v8877
        %v8917 = vunpack.c.l.b16 %v8878
        %v8918 = vunpack.c.l.b16 %v8879
        %v8919 = vunpack.c.l.b16 %v8880
        %v8920 = vpack.c.b16 %v8905, %v8904
        %v8921 = vpack.c.b16 %v8907, %v8906
        %v8922 = vpack.c.b16 %v8909, %v8908
        %v8923 = vpack.c.b16 %v8911, %v8910
        %v8924 = vpack.c.b16 %v8913, %v8912
        %v8925 = vpack.c.b16 %v8915, %v8914
        %v8926 = vpack.c.b16 %v8917, %v8916
        %v8927 = vpack.c.b16 %v8919, %v8918
        %8936 = vmatprep.subr.bf16.mxu0 0
        %8937 = vmatpush1.bf16.msra.mxu0 %v8927
        %8938 = vmatprep.subr.bf16.mxu0 0
        %8939 = vmatpush1.bf16.msra.mxu0 %v8926
        %8940 = vmatprep.subr.bf16.mxu0 0
        %8941 = vmatpush1.bf16.msra.mxu0 %v8925
        %8942 = vmatprep.subr.bf16.mxu0 0
        %8943 = vmatpush1.bf16.msra.mxu0 %v8924
        %8944 = vmatprep.subr.bf16.mxu0 0
        %8945 = vmatpush1.bf16.msra.mxu0 %v8923
        %8946 = vmatprep.subr.bf16.mxu0 0
        %8947 = vmatpush1.bf16.msra.mxu0 %v8922
        %8948 = vmatprep.subr.bf16.mxu0 0
        %8949 = vmatpush1.bf16.msra.mxu0 %v8921
        %8950 = vmatprep.subr.bf16.mxu0 0
        %8951 = vmatpush1.bf16.msra.mxu0 %v8920
        %8952 = vmatprep.subr.bf16.mxu0 0
        %8953 = vmatpush2.bf16.msra.mxu0 0
        %8954 = vmatprep.subr.bf16.mxu0 0
        %8955 = vmatpush2.bf16.msra.mxu0 0
        %8956 = vmatprep.subr.bf16.mxu0 0
        %8957 = vmatpush2.bf16.msra.mxu0 0
        %8958 = vmatprep.subr.bf16.mxu0 0
        %8959 = vmatpush2.bf16.msra.mxu0 0
        %8960 = vmatprep.subr.bf16.mxu0 0
        %8961 = vmatpush2.bf16.msra.mxu0 0
        %8962 = vmatprep.subr.bf16.mxu0 0
        %8963 = vmatpush2.bf16.msra.mxu0 0
        %8964 = vmatprep.subr.bf16.mxu0 0
        %8965 = vmatpush2.bf16.msra.mxu0 0
        %8966 = vmatprep.subr.bf16.mxu0 0
        %8967 = vmatpush2.bf16.msra.mxu0 0
        %8968 = vmatprep.mubr.bf16.mxu0 0
        %8969 = vmatmul.mubr.bf16.gmra.mxu0 %v8853
        %v8970 = vpop.f32.mrf.mxu0
        %v8971 = vadd.f32 %v8886, %v8970
        %v8972 = vpop.f32.mrf.mxu0
        %v8973 = vpop.f32.mrf.mxu0
        %v8974 = vadd.f32 %v8886, %v8973
        %v8975 = vpop.f32.mrf.mxu0
        %8976 = vmatprep.mubr.bf16.mxu0 0
        %8977 = vmatmul.mubr.bf16.gmra.mxu0 %v8854
        %v8978 = vpop.f32.mrf.mxu0
        %v8979 = vadd.f32 %v8886, %v8978
        %v8980 = vpop.f32.mrf.mxu0
        %v8981 = vpop.f32.mrf.mxu0
        %v8982 = vadd.f32 %v8886, %v8981
        %v8983 = vpop.f32.mrf.mxu0
        %8984 = vmatprep.mubr.bf16.mxu0 0
        %8985 = vmatmul.mubr.bf16.gmra.mxu0 %v8855
        %v8986 = vpop.f32.mrf.mxu0
        %v8987 = vadd.f32 %v8886, %v8986
        %v8988 = vpop.f32.mrf.mxu0
        %v8989 = vpop.f32.mrf.mxu0
        %v8990 = vadd.f32 %v8886, %v8989
        %v8991 = vpop.f32.mrf.mxu0
        %8992 = vmatprep.mubr.bf16.mxu0 0
        %8993 = vmatmul.mubr.bf16.gmra.mxu0 %v8856
        %v8994 = vpop.f32.mrf.mxu0
        %v8995 = vadd.f32 %v8886, %v8994
        %v8996 = vpop.f32.mrf.mxu0
        %v8997 = vpop.f32.mrf.mxu0
        %v8998 = vadd.f32 %v8886, %v8997
        %v8999 = vpop.f32.mrf.mxu0
        %9000 = vmatprep.mubr.bf16.mxu0 0
        %9001 = vmatmul.mubr.bf16.gmra.mxu0 %v8857
        %v9002 = vpop.f32.mrf.mxu0
        %v9003 = vadd.f32 %v8886, %v9002
        %v9004 = vpop.f32.mrf.mxu0
        %v9005 = vpop.f32.mrf.mxu0
        %v9006 = vadd.f32 %v8886, %v9005
        %v9007 = vpop.f32.mrf.mxu0
        %9008 = vmatprep.mubr.bf16.mxu0 0
        %9009 = vmatmul.mubr.bf16.gmra.mxu0 %v8858
        %v9010 = vpop.f32.mrf.mxu0
        %v9011 = vadd.f32 %v8886, %v9010
        %v9012 = vpop.f32.mrf.mxu0
        %v9013 = vpop.f32.mrf.mxu0
        %v9014 = vadd.f32 %v8886, %v9013
        %v9015 = vpop.f32.mrf.mxu0
        %9016 = vmatprep.mubr.bf16.mxu0 0
        %9017 = vmatmul.mubr.bf16.gmra.mxu0 %v8859
        %v9018 = vpop.f32.mrf.mxu0
        %v9019 = vadd.f32 %v8886, %v9018
        %v9020 = vpop.f32.mrf.mxu0
        %v9021 = vpop.f32.mrf.mxu0
        %v9022 = vadd.f32 %v8886, %v9021
        %v9023 = vpop.f32.mrf.mxu0
        %9024 = vmatprep.mubr.bf16.mxu0 0
        %9025 = vmatmul.mubr.bf16.gmra.mxu0 %v8860
        %v9026 = vpop.f32.mrf.mxu0
        %v9027 = vadd.f32 %v8886, %v9026
        %v9028 = vpop.f32.mrf.mxu0
        %v9029 = vpop.f32.mrf.mxu0
        %v9030 = vadd.f32 %v8886, %v9029
        %v9031 = vpop.f32.mrf.mxu0
        %9032 = vmatprep.mubr.bf16.mxu0 0
        %9033 = vmatmul.mubr.bf16.gmra.mxu0 %v8861
        %v9034 = vpop.f32.mrf.mxu0
        %v9035 = vadd.f32 %v8886, %v9034
        %v9036 = vpop.f32.mrf.mxu0
        %v9037 = vpop.f32.mrf.mxu0
        %v9038 = vadd.f32 %v8886, %v9037
        %v9039 = vpop.f32.mrf.mxu0
        %9040 = vmatprep.mubr.bf16.mxu0 0
        %9041 = vmatmul.mubr.bf16.gmra.mxu0 %v8862
        %v9042 = vpop.f32.mrf.mxu0
        %v9043 = vadd.f32 %v8886, %v9042
        %v9044 = vpop.f32.mrf.mxu0
        %v9045 = vpop.f32.mrf.mxu0
        %v9046 = vadd.f32 %v8886, %v9045
        %v9047 = vpop.f32.mrf.mxu0
        %9048 = vmatprep.mubr.bf16.mxu0 0
        %9049 = vmatmul.mubr.bf16.gmra.mxu0 %v8863
        %v9050 = vpop.f32.mrf.mxu0
        %v9051 = vadd.f32 %v8886, %v9050
        %v9052 = vpop.f32.mrf.mxu0
        %v9053 = vpop.f32.mrf.mxu0
        %v9054 = vadd.f32 %v8886, %v9053
        %v9055 = vpop.f32.mrf.mxu0
        %9056 = vmatprep.mubr.bf16.mxu0 0
        %9057 = vmatmul.mubr.bf16.gmra.mxu0 %v8864
        %v9058 = vpop.f32.mrf.mxu0
        %v9059 = vadd.f32 %v8886, %v9058
        %v9060 = vpop.f32.mrf.mxu0
        %v9061 = vpop.f32.mrf.mxu0
        %v9062 = vadd.f32 %v8886, %v9061
        %v9063 = vpop.f32.mrf.mxu0
        %9064 = vdwg.mxu0
        %v9065 = vld [vmem:[%s358] sm:$0xff]
        %v9066 = vld [vmem:[%s358 + $0x8] sm:$0xff]
        %v9067 = vld [vmem:[%s358 + $0x10] sm:$0xff]
        %v9068 = vld [vmem:[%s358 + $0x18] sm:$0xff]
        %v9069 = vld [vmem:[%s358 + $0x20] sm:$0xff]
        %v9070 = vld [vmem:[%s358 + $0x28] sm:$0xff]
        %v9071 = vld [vmem:[%s358 + $0x30] sm:$0xff]
        %v9072 = vld [vmem:[%s358 + $0x38] sm:$0xff]
        %v9073 = vld [vmem:[%s358 + $0x40] sm:$0xff]
        %v9074 = vld [vmem:[%s358 + $0x48] sm:$0xff]
        %v9075 = vld [vmem:[%s358 + $0x50] sm:$0xff]
        %v9076 = vld [vmem:[%s358 + $0x58] sm:$0xff]
        %v9077 = vld [vmem:[%s358 + $0x60] sm:$0xff]
        %v9078 = vld [vmem:[%s358 + $0x68] sm:$0xff]
        %v9079 = vld [vmem:[%s358 + $0x70] sm:$0xff]
        %v9080 = vld [vmem:[%s358 + $0x78] sm:$0xff]
        %v9081 = vld [vmem:[%s358 + $0x80] sm:$0xff]
        %v9082 = vld [vmem:[%s358 + $0x88] sm:$0xff]
        %v9083 = vld [vmem:[%s358 + $0x90] sm:$0xff]
        %v9084 = vld [vmem:[%s358 + $0x98] sm:$0xff]
        %v9085 = vld [vmem:[%s358 + $0xa0] sm:$0xff]
        %v9086 = vld [vmem:[%s358 + $0xa8] sm:$0xff]
        %v9087 = vld [vmem:[%s358 + $0xb0] sm:$0xff]
        %v9088 = vld [vmem:[%s358 + $0xb8] sm:$0xff]
        %v9089 = vadd.f32 %v8971, %v9065
        %v9090 = vadd.f32 %v8974, %v9066
        %v9091 = vadd.f32 %v8979, %v9067
        %v9092 = vadd.f32 %v8982, %v9068
        %v9093 = vadd.f32 %v8987, %v9069
        %v9094 = vadd.f32 %v8990, %v9070
        %v9095 = vadd.f32 %v8995, %v9071
        %v9096 = vadd.f32 %v8998, %v9072
        %v9097 = vadd.f32 %v9003, %v9073
        %v9098 = vadd.f32 %v9006, %v9074
        %v9099 = vadd.f32 %v9011, %v9075
        %v9100 = vadd.f32 %v9014, %v9076
        %v9101 = vadd.f32 %v9019, %v9077
        %v9102 = vadd.f32 %v9022, %v9078
        %v9103 = vadd.f32 %v9027, %v9079
        %v9104 = vadd.f32 %v9030, %v9080
        %v9105 = vadd.f32 %v9035, %v9081
        %v9106 = vadd.f32 %v9038, %v9082
        %v9107 = vadd.f32 %v9043, %v9083
        %v9108 = vadd.f32 %v9046, %v9084
        %v9109 = vadd.f32 %v9051, %v9085
        %v9110 = vadd.f32 %v9054, %v9086
        %v9111 = vadd.f32 %v9059, %v9087
        %v9112 = vadd.f32 %v9062, %v9088
        %v9113 = vmax.f32 %v9089, 0.0
        %v9114 = vmax.f32 %v9090, 0.0
        %v9115 = vmax.f32 %v9091, 0.0
        %v9116 = vmax.f32 %v9092, 0.0
        %v9117 = vmax.f32 %v9093, 0.0
        %v9118 = vmax.f32 %v9094, 0.0
        %v9119 = vmax.f32 %v9095, 0.0
        %v9120 = vmax.f32 %v9096, 0.0
        %v9121 = vmax.f32 %v9097, 0.0
        %v9122 = vmax.f32 %v9098, 0.0
        %v9123 = vmax.f32 %v9099, 0.0
        %v9124 = vmax.f32 %v9100, 0.0
        %v9125 = vmax.f32 %v9101, 0.0
        %v9126 = vmax.f32 %v9102, 0.0
        %v9127 = vmax.f32 %v9103, 0.0
        %v9128 = vmax.f32 %v9104, 0.0
        %v9129 = vmax.f32 %v9105, 0.0
        %v9130 = vmax.f32 %v9106, 0.0
        %v9131 = vmax.f32 %v9107, 0.0
        %v9132 = vmax.f32 %v9108, 0.0
        %v9133 = vmax.f32 %v9109, 0.0
        %v9134 = vmax.f32 %v9110, 0.0
        %v9135 = vmax.f32 %v9111, 0.0
        %v9136 = vmax.f32 %v9112, 0.0
        %9137 = vst [vmem:[%s409] sm:$0xff] %v9113
        %9138 = vst [vmem:[%s409 + $0x8] sm:$0xff] %v9114
        %9139 = vst [vmem:[%s409 + $0x10] sm:$0xff] %v9115
        %9140 = vst [vmem:[%s409 + $0x18] sm:$0xff] %v9116
        %9141 = vst [vmem:[%s409 + $0x20] sm:$0xff] %v9117
        %9142 = vst [vmem:[%s409 + $0x28] sm:$0xff] %v9118
        %9143 = vst [vmem:[%s409 + $0x30] sm:$0xff] %v9119
        %9144 = vst [vmem:[%s409 + $0x38] sm:$0xff] %v9120
        %9145 = vst [vmem:[%s409 + $0x40] sm:$0xff] %v9121
        %9146 = vst [vmem:[%s409 + $0x48] sm:$0xff] %v9122
        %9147 = vst [vmem:[%s409 + $0x50] sm:$0xff] %v9123
        %9148 = vst [vmem:[%s409 + $0x58] sm:$0xff] %v9124
        %9149 = vst [vmem:[%s409 + $0x60] sm:$0xff] %v9125
        %9150 = vst [vmem:[%s409 + $0x68] sm:$0xff] %v9126
        %9151 = vst [vmem:[%s409 + $0x70] sm:$0xff] %v9127
        %9152 = vst [vmem:[%s409 + $0x78] sm:$0xff] %v9128
        %9153 = vst [vmem:[%s409 + $0x80] sm:$0xff] %v9129
        %9154 = vst [vmem:[%s409 + $0x88] sm:$0xff] %v9130
        %9155 = vst [vmem:[%s409 + $0x90] sm:$0xff] %v9131
        %9156 = vst [vmem:[%s409 + $0x98] sm:$0xff] %v9132
        %9157 = vst [vmem:[%s409 + $0xa0] sm:$0xff] %v9133
        %9158 = vst [vmem:[%s409 + $0xa8] sm:$0xff] %v9134
        %9159 = vst [vmem:[%s409 + $0xb0] sm:$0xff] %v9135
        %9160 = vst [vmem:[%s409 + $0xb8] sm:$0xff] %v9136
        %s9161 = sand.u32 %s235, 1
        %s9162 = scalar_lea.sflag [#allocation5], %s9161
        %s9163 = sand.u32 %s235, 1
        %s9164 = smul.addr %s9163, 192
        %s9165 = scalar_lea.vmem [#allocation11], %s9164
        // Predicated region
        $region73: #{tpu_custom_call.1} parent=55 // pred_check
          %p9166 = pneg %p245
        $region74: #{tpu_custom_call.1} parent=55 // pred_check_branch
          %9168 = sbr.rel (%p9166) target = $region76
        $region75: #{tpu_custom_call.1} parent=55 // pred_region
          %s9170 = ssub.s32 3072, 3072
          %9171 = vsyncadd %s9162, %s9170
          %s9172 = smul.addr %s28, 24
          %s9173 = smul.addr %s9172, 128
          %s9174 = scalar_lea.hbm %s9, %s9173
          %s9175 = sshll.u32 %s9165, 4
          %s9176 = int_to_ptr.vmem [resolvable:$true] %s9175
          %9181 = dma.vmem_to_hbm [thread:$0]  %s9176, 3072, %s9174, %s9162, 128, 128, 8
        $region76: #{tpu_custom_call.1} parent=55 // pred_fallthru
          _
      $region56: #{tpu_custom_call.1} parent=5 // pred_fallthru
        _
      %p9182 = scmp.le.s32.totalorder 2, %s23
      // Predicated region
      $region77: #{tpu_custom_call.1} parent=5 // pred_check
        %p9183 = pneg %p9182
      $region78: #{tpu_custom_call.1} parent=5 // pred_check_branch
        %9185 = sbr.rel (%p9183) target = $region80
      $region79: #{tpu_custom_call.1} parent=5 // pred_region
        %s9186 = ssub.s32 %s23, 2
        // Predicated region
        $region81: #{tpu_custom_call.1} parent=79 // pred_check
          %p9187 = pneg %p251
        $region82: #{tpu_custom_call.1} parent=79 // pred_check_branch
          %9189 = sbr.rel (%p9187) target = $region84
        $region83: #{tpu_custom_call.1} parent=79 // pred_region
          %s9190 = sand.u32 %s236, 1
          %s9191 = scalar_lea.sflag [#allocation5], %s9190
          %s9192 = sand.u32 %s236, 1
          %s9193 = smul.addr %s9192, 192
          %s9194 = scalar_lea.vmem [#allocation11], %s9193
          %9195 = dma.done %s9191, 3072
        $region84: #{tpu_custom_call.1} parent=79 // pred_fallthru
          _
      $region80: #{tpu_custom_call.1} parent=5 // pred_fallthru
        _
    $region6: #{tpu_custom_call.1} parent=1 // loop_footer
      %s27 = sadd.s32 1, %s23
    $region7: #{tpu_custom_call.1} parent=1 // loop_footer_branch
      %22 = sbr.rel target = $region3
    $region8: #{tpu_custom_call.1} parent=1 // loop_exit
      _
    %9196 = vsyncpa [#allocation4], 1
    %s9197 = scalar_lea.sflag [#allocation4], 1
    %9198 = vsyncpa %s9197, 1
    %9199 = vsyncpa [#allocation7], 1
    %9200 = vsyncpa [#allocation10], 1
    %9201 = vsyncpa [#allocation5], 1
    %s9202 = scalar_lea.sflag [#allocation5], 1
    %9203 = vsyncpa %s9202, 1

</llo_original>
